<compile_context>
chip_gen: v7x
topology: tpu7x:2x2x1
jax: 0.10.0
libtpu: 0.0.40
codegen_flags: <defaults>
</compile_context>

<pallas_src>
import math

import jax
import jax.numpy as jnp
from jax import lax
from jax.experimental import pallas as pl
from jax.experimental.pallas import tpu as pltpu

# ---- model config (small, deterministic) ----
B = 2            # batch
T = 8            # sequence length
C = 32           # n_embd
H = 4            # n_head
HD = C // H      # head_dim
D2 = HD // 2     # rotary half-dim
BT = B * T       # flattened rows
OUT_PAD = 128    # lane-dense output width (>= C, multiple of 128)
ROPE_BASE = 10000.0


def _attention_kernel(x_ref, w_aug_ref, w_proj_ref, cos_ref, sin_ref, bias_ref, o_ref):
    # x_ref    : (BT, C)        VMEM   flattened activations
    # w_aug    : (C, 5C)        VMEM   [Wq | Wk | Wv | Wq_half-swapped | Wk_half-swapped]
    # w_proj   : (H, HD, 128)   VMEM   per-head rows of c_proj, zero-padded to 128 lanes
    # cos/sin  : (BT, 2C)       VMEM   rotary tables (q half pre-scaled by 1/sqrt(HD))
    # bias     : (BT, BT)       VMEM   block-diagonal causal additive bias (0 / -1e30)
    # o_ref    : (BT, 128)      VMEM   lane-dense output slab
    x = x_ref[...]
    w_aug = w_aug_ref[...]
    bias = bias_ref[...]

    # Single QKV(+swapped) projection on the MXU: (BT, C) @ (C, 5C) -> (BT, 5C)
    qkv5 = jnp.dot(x, w_aug, preferred_element_type=jnp.float32)

    # Slab-wide rotary for q and k at once: u*cos + swap_half(u)*[sin, -sin]
    # (the half-swap was folded into the weight columns 3C:5C, so no per-head slicing here).
    qk_rot = qkv5[:, :2 * C] * cos_ref[...] + qkv5[:, 3 * C:] * sin_ref[...]   # (BT, 2C)

    acc = jnp.zeros((BT, OUT_PAD), jnp.float32)
    for h in range(H):                                   # static unroll, H = 4
        qh = qk_rot[:, h * HD:(h + 1) * HD]              # (BT, HD)  already scaled
        kh = qk_rot[:, C + h * HD:C + (h + 1) * HD]      # (BT, HD)
        vh = qkv5[:, 2 * C + h * HD:2 * C + (h + 1) * HD]

        # q @ k^T with the transpose folded into dot_general (no XLU transpose).
        s = lax.dot_general(qh, kh, (((1,), (1,)), ((), ())),
                            preferred_element_type=jnp.float32) + bias          # (BT, BT)
        m = jnp.max(s, axis=-1, keepdims=True)
        p = jnp.exp(s - m)
        l = jnp.sum(p, axis=-1, keepdims=True)
        yh = jnp.dot(p, vh, preferred_element_type=jnp.float32) / l             # (BT, HD)

        # Fold this head's slice of the output projection in directly:
        # avoids concatenating heads and keeps the accumulator lane-dense (128 wide).
        acc = acc + jnp.dot(yh, w_proj_ref[h], preferred_element_type=jnp.float32)

    o_ref[...] = acc.astype(o_ref.dtype)


def _pack_weights(w_attn, w_proj):
    """Host-side (one-time) weight packing."""
    idx = jnp.arange(C)
    swapped = (idx // HD) * HD + (idx % HD + D2) % HD        # per-head rotate-half permutation
    w_q = w_attn[:, :C]
    w_k = w_attn[:, C:2 * C]
    # Exact column gather (no matmul) -> x @ w_aug yields q, k, v, swap(q), swap(k).
    w_aug = jnp.concatenate([w_attn, w_q[:, swapped], w_k[:, swapped]], axis=1)   # (C, 5C)

    # Per-head rows of c_proj, zero-padded on the lane axis so kernel stores are unmasked.
    w_proj_heads = w_proj.reshape(H, HD, C)
    w_proj_pad = jnp.zeros((H, HD, OUT_PAD), jnp.float32).at[:, :, :C].set(w_proj_heads)
    return w_aug, w_proj_pad


def _rotary_tables():
    """(BT, 2C) cos / signed-sin tables; q half carries the 1/sqrt(HD) scale."""
    inv_freq = 1.0 / (ROPE_BASE ** (jnp.arange(0, HD, 2, dtype=jnp.float32) / HD))
    t = jnp.arange(T, dtype=jnp.float32)
    freqs = jnp.outer(t, inv_freq)                               # (T, D2)
    cos, sin = jnp.cos(freqs), jnp.sin(freqs)
    cos_head = jnp.concatenate([cos, cos], axis=1)               # (T, HD)
    sin_head = jnp.concatenate([sin, -sin], axis=1)              # (T, HD) rotate-half signs
    cos_bt = jnp.tile(jnp.tile(cos_head, (1, H)), (B, 1))        # (BT, C)
    sin_bt = jnp.tile(jnp.tile(sin_head, (1, H)), (B, 1))        # (BT, C)
    scale = 1.0 / math.sqrt(HD)
    cos_qk = jnp.concatenate([cos_bt * scale, cos_bt], axis=1)   # (BT, 2C)
    sin_qk = jnp.concatenate([sin_bt * scale, sin_bt], axis=1)   # (BT, 2C)
    return cos_qk, sin_qk


def _causal_bias():
    """Block-diagonal (over batch) causal additive bias, finite negative (no inf/NaN)."""
    r = jnp.arange(BT)
    same_batch = (r[:, None] // T) == (r[None, :] // T)
    causal = (r[:, None] % T) >= (r[None, :] % T)
    return jnp.where(same_batch & causal, 0.0, -1e30).astype(jnp.float32)   # (BT, BT)


def causal_self_attention(x, w_attn, w_proj):
    assert x.shape == (B, T, C)
    w_aug, w_proj_pad = _pack_weights(w_attn, w_proj)
    cos_qk, sin_qk = _rotary_tables()
    bias = _causal_bias()
    x2d = x.reshape(BT, C)

    vmem = pl.BlockSpec(memory_space=pltpu.MemorySpace.VMEM)
    out = pl.pallas_call(
        _attention_kernel,
        out_shape=jax.ShapeDtypeStruct((BT, OUT_PAD), jnp.float32),
        in_specs=[vmem, vmem, vmem, vmem, vmem, vmem],
        out_specs=vmem,
    )(x2d, w_aug, w_proj_pad, cos_qk, sin_qk, bias)

    # Wrapper-side layout plumbing: drop the lane padding and restore (B, T, C).
    return out[:, :C].reshape(B, T, C)


def _reference(x, w_attn, w_proj):
    """Pure-JAX reference of the PyTorch forward (for correctness check)."""
    inv_freq = 1.0 / (ROPE_BASE ** (jnp.arange(0, HD, 2, dtype=jnp.float32) / HD))
    t = jnp.arange(T, dtype=jnp.float32)
    freqs = jnp.outer(t, inv_freq)                                # (T, D2)
    cos = jnp.cos(freqs)[None, :, None, :]
    sin = jnp.sin(freqs)[None, :, None, :]

    qkv = x @ w_attn                                              # (B, T, 3C)
    q, k, v = jnp.split(qkv, 3, axis=2)
    q = q.reshape(B, T, H, HD)
    k = k.reshape(B, T, H, HD)
    v = v.reshape(B, T, H, HD)

    def rot(u):
        u1, u2 = u[..., :D2], u[..., D2:]
        return jnp.concatenate([u1 * cos + u2 * sin, -u1 * sin + u2 * cos], axis=3)

    q, k = rot(q), rot(k)
    q = q.transpose(0, 2, 1, 3)
    k = k.transpose(0, 2, 1, 3)
    v = v.transpose(0, 2, 1, 3)
    scores = jnp.einsum("bhtd,bhsd->bhts", q, k) / math.sqrt(HD)
    mask = jnp.tril(jnp.ones((T, T), dtype=bool))
    scores = jnp.where(mask, scores, -jnp.inf)
    p = jax.nn.softmax(scores, axis=-1)
    y = jnp.einsum("bhts,bhsd->bhtd", p, v)
    y = y.transpose(0, 2, 1, 3).reshape(B, T, C)
    return y @ w_proj


if __name__ == "__main__":
    # Full f32 matmul fidelity so the reference matches the kernel's f32 accumulation.
    jax.config.update("jax_default_matmul_precision", "highest")

    key = jax.random.PRNGKey(0)
    kx, k1, k2 = jax.random.split(key, 3)

    x = jax.random.normal(kx, (B, T, C), dtype=jnp.float32)

    # Deterministic parameter init (uniform, roughly nn.Linear default scale).
    # Weights stored as (in_features, out_features): y = x @ W.
    bound = 1.0 / math.sqrt(C)
    w_attn = jax.random.uniform(k1, (C, 3 * C), jnp.float32, -bound, bound)
    w_proj = jax.random.uniform(k2, (C, C), jnp.float32, -bound, bound)

    out = causal_self_attention(x, w_attn, w_proj)
    out = jax.block_until_ready(out)

    ref = _reference(x, w_attn, w_proj)
    assert jnp.allclose(out, ref, atol=2e-4, rtol=2e-4), "mismatch vs reference"

    print("KERNEL_OK")
</pallas_src>

<mosaic_0001>
module attributes {stable_mosaic.version = 11 : i64} {
  func.func @_attention_kernel(%arg0: memref<16x32xf32, #tpu.memory_space<vmem>>, %arg1: memref<32x160xf32, #tpu.memory_space<vmem>>, %arg2: memref<4x8x128xf32, #tpu.memory_space<vmem>>, %arg3: memref<16x64xf32, #tpu.memory_space<vmem>>, %arg4: memref<16x64xf32, #tpu.memory_space<vmem>>, %arg5: memref<16x16xf32, #tpu.memory_space<vmem>>, %arg6: memref<16x128xf32, #tpu.memory_space<vmem>>) attributes {dimension_semantics = [], scalar_prefetch = 0 : i64, scratch_operands = 0 : i64, tpu.core_type = #tpu.core_type<tc>} {
    %c0 = arith.constant 0 : index
    %c0_0 = arith.constant 0 : index
    %0 = vector.load %arg0[%c0, %c0_0] : memref<16x32xf32, #tpu.memory_space<vmem>>, vector<16x32xf32>
    %c0_1 = arith.constant 0 : index
    %c0_2 = arith.constant 0 : index
    %1 = vector.load %arg1[%c0_1, %c0_2] : memref<32x160xf32, #tpu.memory_space<vmem>>, vector<32x160xf32>
    %c0_3 = arith.constant 0 : index
    %c0_4 = arith.constant 0 : index
    %2 = vector.load %arg5[%c0_3, %c0_4] : memref<16x16xf32, #tpu.memory_space<vmem>>, vector<16x16xf32>
    %cst = arith.constant dense<0.000000e+00> : vector<16x160xf32>
    %3 = tpu.matmul %0, %1, %cst {dimension_numbers = #tpu.dot_dimension_numbers<[1], [0], [0], [1], [0, 0, 1, 1], [], []>, precision = #tpu.contract_precision<fp32>} : vector<16x32xf32>, vector<32x160xf32>, vector<16x160xf32> -> vector<16x160xf32>
    %4 = vector.extract_strided_slice %3 {offsets = [0, 0], sizes = [16, 64], strides = [1, 1]} : vector<16x160xf32> to vector<16x64xf32>
    %c0_5 = arith.constant 0 : index
    %c0_6 = arith.constant 0 : index
    %5 = vector.load %arg3[%c0_5, %c0_6] : memref<16x64xf32, #tpu.memory_space<vmem>>, vector<16x64xf32>
    %6 = arith.mulf %4, %5 : vector<16x64xf32>
    %7 = vector.extract_strided_slice %3 {offsets = [0, 96], sizes = [16, 64], strides = [1, 1]} : vector<16x160xf32> to vector<16x64xf32>
    %c0_7 = arith.constant 0 : index
    %c0_8 = arith.constant 0 : index
    %8 = vector.load %arg4[%c0_7, %c0_8] : memref<16x64xf32, #tpu.memory_space<vmem>>, vector<16x64xf32>
    %9 = arith.mulf %7, %8 : vector<16x64xf32>
    %10 = arith.addf %6, %9 : vector<16x64xf32>
    %cst_9 = arith.constant 0.000000e+00 : f32
    %11 = vector.broadcast %cst_9 : f32 to vector<16x128xf32>
    %12 = vector.extract_strided_slice %10 {offsets = [0, 0], sizes = [16, 8], strides = [1, 1]} : vector<16x64xf32> to vector<16x8xf32>
    %13 = vector.extract_strided_slice %10 {offsets = [0, 32], sizes = [16, 8], strides = [1, 1]} : vector<16x64xf32> to vector<16x8xf32>
    %14 = vector.extract_strided_slice %3 {offsets = [0, 64], sizes = [16, 8], strides = [1, 1]} : vector<16x160xf32> to vector<16x8xf32>
    %cst_10 = arith.constant dense<0.000000e+00> : vector<16x16xf32>
    %15 = tpu.matmul %12, %13, %cst_10 {dimension_numbers = #tpu.dot_dimension_numbers<[1], [1], [0], [0], [0, 0, 1, 0], [], []>, precision = #tpu.contract_precision<fp32>} : vector<16x8xf32>, vector<16x8xf32>, vector<16x16xf32> -> vector<16x16xf32>
    %16 = arith.addf %15, %2 : vector<16x16xf32>
    %cst_11 = arith.constant dense<0xFF800000> : vector<16xf32>
    %17 = vector.multi_reduction <maximumf>, %16, %cst_11 [1] : vector<16x16xf32> to vector<16xf32>
    %18 = vector.shape_cast %17 : vector<16xf32> to vector<16x1xf32>
    %19 = vector.broadcast %18 : vector<16x1xf32> to vector<16x16xf32>
    %20 = arith.subf %16, %19 : vector<16x16xf32>
    %21 = math.exp %20 : vector<16x16xf32>
    %cst_12 = arith.constant dense<0.000000e+00> : vector<16xf32>
    %22 = vector.multi_reduction <add>, %21, %cst_12 [1] : vector<16x16xf32> to vector<16xf32>
    %23 = vector.shape_cast %22 : vector<16xf32> to vector<16x1xf32>
    %cst_13 = arith.constant dense<0.000000e+00> : vector<16x8xf32>
    %24 = tpu.matmul %21, %14, %cst_13 {dimension_numbers = #tpu.dot_dimension_numbers<[1], [0], [0], [1], [0, 0, 1, 1], [], []>, precision = #tpu.contract_precision<fp32>} : vector<16x16xf32>, vector<16x8xf32>, vector<16x8xf32> -> vector<16x8xf32>
    %25 = vector.broadcast %23 : vector<16x1xf32> to vector<16x8xf32>
    %26 = arith.divf %24, %25 : vector<16x8xf32>
    %c0_14 = arith.constant 0 : index
    %c0_15 = arith.constant 0 : index
    %c0_16 = arith.constant 0 : index
    %27 = vector.load %arg2[%c0_14, %c0_15, %c0_16] : memref<4x8x128xf32, #tpu.memory_space<vmem>>, vector<1x8x128xf32>
    %28 = vector.shape_cast %27 : vector<1x8x128xf32> to vector<8x128xf32>
    %cst_17 = arith.constant dense<0.000000e+00> : vector<16x128xf32>
    %29 = tpu.matmul %26, %28, %cst_17 {dimension_numbers = #tpu.dot_dimension_numbers<[1], [0], [0], [1], [0, 0, 1, 1], [], []>, precision = #tpu.contract_precision<fp32>} : vector<16x8xf32>, vector<8x128xf32>, vector<16x128xf32> -> vector<16x128xf32>
    %30 = arith.addf %11, %29 : vector<16x128xf32>
    %31 = vector.extract_strided_slice %10 {offsets = [0, 8], sizes = [16, 8], strides = [1, 1]} : vector<16x64xf32> to vector<16x8xf32>
    %32 = vector.extract_strided_slice %10 {offsets = [0, 40], sizes = [16, 8], strides = [1, 1]} : vector<16x64xf32> to vector<16x8xf32>
    %33 = vector.extract_strided_slice %3 {offsets = [0, 72], sizes = [16, 8], strides = [1, 1]} : vector<16x160xf32> to vector<16x8xf32>
    %cst_18 = arith.constant dense<0.000000e+00> : vector<16x16xf32>
    %34 = tpu.matmul %31, %32, %cst_18 {dimension_numbers = #tpu.dot_dimension_numbers<[1], [1], [0], [0], [0, 0, 1, 0], [], []>, precision = #tpu.contract_precision<fp32>} : vector<16x8xf32>, vector<16x8xf32>, vector<16x16xf32> -> vector<16x16xf32>
    %35 = arith.addf %34, %2 : vector<16x16xf32>
    %cst_19 = arith.constant dense<0xFF800000> : vector<16xf32>
    %36 = vector.multi_reduction <maximumf>, %35, %cst_19 [1] : vector<16x16xf32> to vector<16xf32>
    %37 = vector.shape_cast %36 : vector<16xf32> to vector<16x1xf32>
    %38 = vector.broadcast %37 : vector<16x1xf32> to vector<16x16xf32>
    %39 = arith.subf %35, %38 : vector<16x16xf32>
    %40 = math.exp %39 : vector<16x16xf32>
    %cst_20 = arith.constant dense<0.000000e+00> : vector<16xf32>
    %41 = vector.multi_reduction <add>, %40, %cst_20 [1] : vector<16x16xf32> to vector<16xf32>
    %42 = vector.shape_cast %41 : vector<16xf32> to vector<16x1xf32>
    %cst_21 = arith.constant dense<0.000000e+00> : vector<16x8xf32>
    %43 = tpu.matmul %40, %33, %cst_21 {dimension_numbers = #tpu.dot_dimension_numbers<[1], [0], [0], [1], [0, 0, 1, 1], [], []>, precision = #tpu.contract_precision<fp32>} : vector<16x16xf32>, vector<16x8xf32>, vector<16x8xf32> -> vector<16x8xf32>
    %44 = vector.broadcast %42 : vector<16x1xf32> to vector<16x8xf32>
    %45 = arith.divf %43, %44 : vector<16x8xf32>
    %c1 = arith.constant 1 : index
    %c0_22 = arith.constant 0 : index
    %c0_23 = arith.constant 0 : index
    %46 = vector.load %arg2[%c1, %c0_22, %c0_23] : memref<4x8x128xf32, #tpu.memory_space<vmem>>, vector<1x8x128xf32>
    %47 = vector.shape_cast %46 : vector<1x8x128xf32> to vector<8x128xf32>
    %cst_24 = arith.constant dense<0.000000e+00> : vector<16x128xf32>
    %48 = tpu.matmul %45, %47, %cst_24 {dimension_numbers = #tpu.dot_dimension_numbers<[1], [0], [0], [1], [0, 0, 1, 1], [], []>, precision = #tpu.contract_precision<fp32>} : vector<16x8xf32>, vector<8x128xf32>, vector<16x128xf32> -> vector<16x128xf32>
    %49 = arith.addf %30, %48 : vector<16x128xf32>
    %50 = vector.extract_strided_slice %10 {offsets = [0, 16], sizes = [16, 8], strides = [1, 1]} : vector<16x64xf32> to vector<16x8xf32>
    %51 = vector.extract_strided_slice %10 {offsets = [0, 48], sizes = [16, 8], strides = [1, 1]} : vector<16x64xf32> to vector<16x8xf32>
    %52 = vector.extract_strided_slice %3 {offsets = [0, 80], sizes = [16, 8], strides = [1, 1]} : vector<16x160xf32> to vector<16x8xf32>
    %cst_25 = arith.constant dense<0.000000e+00> : vector<16x16xf32>
    %53 = tpu.matmul %50, %51, %cst_25 {dimension_numbers = #tpu.dot_dimension_numbers<[1], [1], [0], [0], [0, 0, 1, 0], [], []>, precision = #tpu.contract_precision<fp32>} : vector<16x8xf32>, vector<16x8xf32>, vector<16x16xf32> -> vector<16x16xf32>
    %54 = arith.addf %53, %2 : vector<16x16xf32>
    %cst_26 = arith.constant dense<0xFF800000> : vector<16xf32>
    %55 = vector.multi_reduction <maximumf>, %54, %cst_26 [1] : vector<16x16xf32> to vector<16xf32>
    %56 = vector.shape_cast %55 : vector<16xf32> to vector<16x1xf32>
    %57 = vector.broadcast %56 : vector<16x1xf32> to vector<16x16xf32>
    %58 = arith.subf %54, %57 : vector<16x16xf32>
    %59 = math.exp %58 : vector<16x16xf32>
    %cst_27 = arith.constant dense<0.000000e+00> : vector<16xf32>
    %60 = vector.multi_reduction <add>, %59, %cst_27 [1] : vector<16x16xf32> to vector<16xf32>
    %61 = vector.shape_cast %60 : vector<16xf32> to vector<16x1xf32>
    %cst_28 = arith.constant dense<0.000000e+00> : vector<16x8xf32>
    %62 = tpu.matmul %59, %52, %cst_28 {dimension_numbers = #tpu.dot_dimension_numbers<[1], [0], [0], [1], [0, 0, 1, 1], [], []>, precision = #tpu.contract_precision<fp32>} : vector<16x16xf32>, vector<16x8xf32>, vector<16x8xf32> -> vector<16x8xf32>
    %63 = vector.broadcast %61 : vector<16x1xf32> to vector<16x8xf32>
    %64 = arith.divf %62, %63 : vector<16x8xf32>
    %c2 = arith.constant 2 : index
    %c0_29 = arith.constant 0 : index
    %c0_30 = arith.constant 0 : index
    %65 = vector.load %arg2[%c2, %c0_29, %c0_30] : memref<4x8x128xf32, #tpu.memory_space<vmem>>, vector<1x8x128xf32>
    %66 = vector.shape_cast %65 : vector<1x8x128xf32> to vector<8x128xf32>
    %cst_31 = arith.constant dense<0.000000e+00> : vector<16x128xf32>
    %67 = tpu.matmul %64, %66, %cst_31 {dimension_numbers = #tpu.dot_dimension_numbers<[1], [0], [0], [1], [0, 0, 1, 1], [], []>, precision = #tpu.contract_precision<fp32>} : vector<16x8xf32>, vector<8x128xf32>, vector<16x128xf32> -> vector<16x128xf32>
    %68 = arith.addf %49, %67 : vector<16x128xf32>
    %69 = vector.extract_strided_slice %10 {offsets = [0, 24], sizes = [16, 8], strides = [1, 1]} : vector<16x64xf32> to vector<16x8xf32>
    %70 = vector.extract_strided_slice %10 {offsets = [0, 56], sizes = [16, 8], strides = [1, 1]} : vector<16x64xf32> to vector<16x8xf32>
    %71 = vector.extract_strided_slice %3 {offsets = [0, 88], sizes = [16, 8], strides = [1, 1]} : vector<16x160xf32> to vector<16x8xf32>
    %cst_32 = arith.constant dense<0.000000e+00> : vector<16x16xf32>
    %72 = tpu.matmul %69, %70, %cst_32 {dimension_numbers = #tpu.dot_dimension_numbers<[1], [1], [0], [0], [0, 0, 1, 0], [], []>, precision = #tpu.contract_precision<fp32>} : vector<16x8xf32>, vector<16x8xf32>, vector<16x16xf32> -> vector<16x16xf32>
    %73 = arith.addf %72, %2 : vector<16x16xf32>
    %cst_33 = arith.constant dense<0xFF800000> : vector<16xf32>
    %74 = vector.multi_reduction <maximumf>, %73, %cst_33 [1] : vector<16x16xf32> to vector<16xf32>
    %75 = vector.shape_cast %74 : vector<16xf32> to vector<16x1xf32>
    %76 = vector.broadcast %75 : vector<16x1xf32> to vector<16x16xf32>
    %77 = arith.subf %73, %76 : vector<16x16xf32>
    %78 = math.exp %77 : vector<16x16xf32>
    %cst_34 = arith.constant dense<0.000000e+00> : vector<16xf32>
    %79 = vector.multi_reduction <add>, %78, %cst_34 [1] : vector<16x16xf32> to vector<16xf32>
    %80 = vector.shape_cast %79 : vector<16xf32> to vector<16x1xf32>
    %cst_35 = arith.constant dense<0.000000e+00> : vector<16x8xf32>
    %81 = tpu.matmul %78, %71, %cst_35 {dimension_numbers = #tpu.dot_dimension_numbers<[1], [0], [0], [1], [0, 0, 1, 1], [], []>, precision = #tpu.contract_precision<fp32>} : vector<16x16xf32>, vector<16x8xf32>, vector<16x8xf32> -> vector<16x8xf32>
    %82 = vector.broadcast %80 : vector<16x1xf32> to vector<16x8xf32>
    %83 = arith.divf %81, %82 : vector<16x8xf32>
    %c3 = arith.constant 3 : index
    %c0_36 = arith.constant 0 : index
    %c0_37 = arith.constant 0 : index
    %84 = vector.load %arg2[%c3, %c0_36, %c0_37] : memref<4x8x128xf32, #tpu.memory_space<vmem>>, vector<1x8x128xf32>
    %85 = vector.shape_cast %84 : vector<1x8x128xf32> to vector<8x128xf32>
    %cst_38 = arith.constant dense<0.000000e+00> : vector<16x128xf32>
    %86 = tpu.matmul %83, %85, %cst_38 {dimension_numbers = #tpu.dot_dimension_numbers<[1], [0], [0], [1], [0, 0, 1, 1], [], []>, precision = #tpu.contract_precision<fp32>} : vector<16x8xf32>, vector<8x128xf32>, vector<16x128xf32> -> vector<16x128xf32>
    %87 = arith.addf %68, %86 : vector<16x128xf32>
    %c0_39 = arith.constant 0 : index
    %c0_40 = arith.constant 0 : index
    %88 = vector.load %arg6[%c0_39, %c0_40] : memref<16x128xf32, #tpu.memory_space<vmem>>, vector<16x128xf32>
    tpu.vector_store %arg6[%c0_39, %c0_40], %87 {strides = array<i32>} : memref<16x128xf32, #tpu.memory_space<vmem>>, vector<16x128xf32>,
    return
  }
}

</mosaic_0001>

<llo_original>
// kernel: tpu_custom_call.1
$region0: #{tpu_custom_call.1}
  #allocation0 [shape = 'u32[]', space=smem, size = 0x4, offset = 0x4, fixed_abs, tag = 'smem constant byte address 0x4 - core index']
  #allocation1 [shape = 'u32[144,128]{1,0:T(1,128)}', space=vmem, size = 0x12000, scoped, tag = 'internal scratch']
  %s0 = inlined_call_operand.hbm [shape: f32[16,32], index: 0, kind: input, shape index: {}]
  %s1 = inlined_call_operand.hbm [shape: f32[32,160], index: 1, kind: input, shape index: {}]
  %s2 = inlined_call_operand.hbm [shape: f32[4,8,128], index: 2, kind: input, shape index: {}]
  %s3 = inlined_call_operand.hbm [shape: f32[16,64], index: 3, kind: input, shape index: {}]
  %s4 = inlined_call_operand.hbm [shape: f32[16,64], index: 4, kind: input, shape index: {}]
  %s5 = inlined_call_operand.vmem [shape: f32[16,16], index: 5, kind: input, shape index: {}]
  %s6 = inlined_call_operand.hbm [shape: f32[16,128], index: 6, kind: output, shape index: {}]
  %s7 = sld [smem:[#allocation0]]
  $region54: #{tpu_custom_call.1} parent=0
    _
  %s9 = ssub.s32 1, %s7
  %s10 = scalar_select 0, %s9, %s7
  $region1: #{tpu_custom_call.1} parent=0
    #allocation2 [shape = 'u8[8192]{0}', space=vmem, size = 0x2000, scoped, tag = 'input window, operand 0, single buffered']
    #allocation3 [shape = 's32[1]{0}', space=sflag, size = 0x4, scoped, tag = 'scoped memory for tpu_custom_call.1']
    #allocation4 [shape = 's32[1]{0}', space=sflag, size = 0x4, scoped, tag = 'scoped memory for tpu_custom_call.1']
    #allocation5 [shape = 'u8[32768]{0}', space=vmem, size = 0x8000, scoped, tag = 'input window, operand 1, single buffered']
    #allocation6 [shape = 's32[1]{0}', space=sflag, size = 0x4, scoped, tag = 'scoped memory for tpu_custom_call.1']
    #allocation7 [shape = 'u8[16384]{0}', space=vmem, size = 0x4000, scoped, tag = 'input window, operand 2, single buffered']
    #allocation8 [shape = 'u8[8192]{0}', space=vmem, size = 0x2000, scoped, tag = 'input window, operand 3, single buffered']
    #allocation9 [shape = 's32[1]{0}', space=sflag, size = 0x4, scoped, tag = 'scoped memory for tpu_custom_call.1']
    #allocation10 [shape = 'u8[8192]{0}', space=vmem, size = 0x2000, scoped, tag = 'input window, operand 4, single buffered']
    #allocation11 [shape = 'u8[8192]{0}', space=vmem, size = 0x2000, scoped, tag = 'output window, operand 0, single buffered']
    %11 = vsyncpa [#allocation3], 0
    %12 = vsyncpa [#allocation6], 0
    %13 = vsyncpa [#allocation9], 0
    %14 = vsyncpa [#allocation4], 0
    // Predicated region
    $region2: #{tpu_custom_call.1} parent=1 // pred_check
      _
    $region3: #{tpu_custom_call.1} parent=1 // pred_check_branch
      %16 = sbr.rel (0) target = $region5
    $region4: #{tpu_custom_call.1} parent=1 // pred_region
      %s18 = ssub.s32 256, 256
      %19 = vsyncadd [#allocation3], %s18
      %s20 = sshll.u32 [#allocation2], 4
      %s21 = int_to_ptr.vmem [resolvable:$true] %s20
      %26 = dma.hbm_to_vmem [thread:$0]  %s0, 256, %s21, [#allocation3], 128, 128, 8
    $region5: #{tpu_custom_call.1} parent=1 // pred_fallthru
      _
    // Predicated region
    $region6: #{tpu_custom_call.1} parent=1 // pred_check
      _
    $region7: #{tpu_custom_call.1} parent=1 // pred_check_branch
      %28 = sbr.rel (0) target = $region9
    $region8: #{tpu_custom_call.1} parent=1 // pred_region
      %s30 = ssub.s32 1024, 1024
      %31 = vsyncadd [#allocation6], %s30
      %s32 = sshll.u32 [#allocation5], 4
      %s33 = int_to_ptr.vmem [resolvable:$true] %s32
      %38 = dma.hbm_to_vmem [thread:$0]  %s1, 1024, %s33, [#allocation6], 256, 256, 16
    $region9: #{tpu_custom_call.1} parent=1 // pred_fallthru
      _
    // Predicated region
    $region10: #{tpu_custom_call.1} parent=1 // pred_check
      _
    $region11: #{tpu_custom_call.1} parent=1 // pred_check_branch
      %40 = sbr.rel (0) target = $region13
    $region12: #{tpu_custom_call.1} parent=1 // pred_region
      %s42 = ssub.s32 512, 512
      %43 = vsyncadd [#allocation6], %s42
      %s44 = sshll.u32 [#allocation7], 4
      %s45 = int_to_ptr.vmem [resolvable:$true] %s44
      %50 = dma.hbm_to_vmem [thread:$0]  %s2, 512, %s45, [#allocation6], 128, 128, 8
    $region13: #{tpu_custom_call.1} parent=1 // pred_fallthru
      _
    // Predicated region
    $region14: #{tpu_custom_call.1} parent=1 // pred_check
      _
    $region15: #{tpu_custom_call.1} parent=1 // pred_check_branch
      %52 = sbr.rel (0) target = $region17
    $region16: #{tpu_custom_call.1} parent=1 // pred_region
      %s54 = ssub.s32 256, 256
      %55 = vsyncadd [#allocation9], %s54
      %s56 = sshll.u32 [#allocation8], 4
      %s57 = int_to_ptr.vmem [resolvable:$true] %s56
      %62 = dma.hbm_to_vmem [thread:$0]  %s3, 256, %s57, [#allocation9], 128, 128, 8
    $region17: #{tpu_custom_call.1} parent=1 // pred_fallthru
      _
    // Predicated region
    $region18: #{tpu_custom_call.1} parent=1 // pred_check
      _
    $region19: #{tpu_custom_call.1} parent=1 // pred_check_branch
      %64 = sbr.rel (0) target = $region21
    $region20: #{tpu_custom_call.1} parent=1 // pred_region
      %s66 = ssub.s32 256, 256
      %67 = vsyncadd [#allocation9], %s66
      %s68 = sshll.u32 [#allocation10], 4
      %s69 = int_to_ptr.vmem [resolvable:$true] %s68
      %74 = dma.hbm_to_vmem [thread:$0]  %s4, 256, %s69, [#allocation9], 128, 128, 8
    $region21: #{tpu_custom_call.1} parent=1 // pred_fallthru
      _
    // Predicated region
    $region22: #{tpu_custom_call.1} parent=1 // pred_check
      _
    $region23: #{tpu_custom_call.1} parent=1 // pred_check_branch
      %76 = sbr.rel (0) target = $region25
    $region24: #{tpu_custom_call.1} parent=1 // pred_region
      _
    $region25: #{tpu_custom_call.1} parent=1 // pred_fallthru
      _
    // Predicated region
    $region26: #{tpu_custom_call.1} parent=1 // pred_check
      _
    $region27: #{tpu_custom_call.1} parent=1 // pred_check_branch
      %78 = sbr.rel (0) target = $region29
    $region28: #{tpu_custom_call.1} parent=1 // pred_region
      %79 = dma.done [#allocation3], 256
    $region29: #{tpu_custom_call.1} parent=1 // pred_fallthru
      _
    // Predicated region
    $region30: #{tpu_custom_call.1} parent=1 // pred_check
      _
    $region31: #{tpu_custom_call.1} parent=1 // pred_check_branch
      %81 = sbr.rel (0) target = $region33
    $region32: #{tpu_custom_call.1} parent=1 // pred_region
      %82 = dma.done [#allocation6], 1024
    $region33: #{tpu_custom_call.1} parent=1 // pred_fallthru
      _
    // Predicated region
    $region34: #{tpu_custom_call.1} parent=1 // pred_check
      _
    $region35: #{tpu_custom_call.1} parent=1 // pred_check_branch
      %84 = sbr.rel (0) target = $region37
    $region36: #{tpu_custom_call.1} parent=1 // pred_region
      %85 = dma.done [#allocation6], 512
    $region37: #{tpu_custom_call.1} parent=1 // pred_fallthru
      _
    // Predicated region
    $region38: #{tpu_custom_call.1} parent=1 // pred_check
      _
    $region39: #{tpu_custom_call.1} parent=1 // pred_check_branch
      %87 = sbr.rel (0) target = $region41
    $region40: #{tpu_custom_call.1} parent=1 // pred_region
      %88 = dma.done [#allocation9], 256
    $region41: #{tpu_custom_call.1} parent=1 // pred_fallthru
      _
    // Predicated region
    $region42: #{tpu_custom_call.1} parent=1 // pred_check
      _
    $region43: #{tpu_custom_call.1} parent=1 // pred_check_branch
      %90 = sbr.rel (0) target = $region45
    $region44: #{tpu_custom_call.1} parent=1 // pred_region
      %91 = dma.done [#allocation9], 256
    $region45: #{tpu_custom_call.1} parent=1 // pred_fallthru
      _
    %v92 = vld [vmem:[#allocation2] sm:$0xff]
    %v93 = vld [vmem:[#allocation2 + $0x8] sm:$0xff]
    %v94 = vld [vmem:[#allocation5] sm:$0xff]
    %v95 = vld [vmem:[#allocation5 + $0x8] sm:$0xff]
    %v96 = vld [vmem:[#allocation5 + $0x10] sm:$0xff]
    %v97 = vld [vmem:[#allocation5 + $0x18] sm:$0xff]
    %v98 = vld [vmem:[#allocation5 + $0x20] sm:$0xff]
    %v99 = vld [vmem:[#allocation5 + $0x28] sm:$0xff]
    %v100 = vld [vmem:[#allocation5 + $0x30] sm:$0xff]
    %v101 = vld [vmem:[#allocation5 + $0x38] sm:$0xff]
    %v102 = vld [vmem:[%s5] sm:$0xff]
    %v103 = vld [vmem:[%s5 + $0x8] sm:$0xff]
    %vm104 = vcmask 261120
    %v106 = vsel %vm104, %v92, 0
    %v109 = vsel %vm104, %v93, 0
    %v111 = vand.u32 %v95, 4294901760
    %112 = vmatprep.subr.mxu0 %v111
    %v113 = vand.u32 %v94, 4294901760
    %114 = vmatpush1.msra.mxu0 %v113
    %v115 = vand.u32 %v97, 4294901760
    %116 = vmatprep.subr.mxu0 %v115
    %v117 = vand.u32 %v96, 4294901760
    %118 = vmatpush1.msra.mxu0 %v117
    %v119 = vand.u32 %v99, 4294901760
    %120 = vmatprep.subr.mxu0 %v119
    %v121 = vand.u32 %v98, 4294901760
    %122 = vmatpush1.msra.mxu0 %v121
    %v123 = vand.u32 %v101, 4294901760
    %124 = vmatprep.subr.mxu0 %v123
    %v125 = vand.u32 %v100, 4294901760
    %126 = vmatpush1.msra.mxu0 %v125
    %127 = vmatprep.subr.mxu0 0.0
    %128 = vmatpush1.msra.mxu0 0.0
    %129 = vmatprep.subr.mxu0 0.0
    %130 = vmatpush1.msra.mxu0 0.0
    %131 = vmatprep.subr.mxu0 0.0
    %132 = vmatpush1.msra.mxu0 0.0
    %133 = vmatprep.subr.mxu0 0.0
    %134 = vmatpush1.msra.mxu0 0.0
    %135 = vmatprep.subr.mxu0 0.0
    %136 = vmatpush1.msra.mxu0 0.0
    %137 = vmatprep.subr.mxu0 0.0
    %138 = vmatpush1.msra.mxu0 0.0
    %139 = vmatprep.subr.mxu0 0.0
    %140 = vmatpush1.msra.mxu0 0.0
    %141 = vmatprep.subr.mxu0 0.0
    %142 = vmatpush1.msra.mxu0 0.0
    %143 = vmatprep.subr.mxu0 0.0
    %144 = vmatpush1.msra.mxu0 0.0
    %145 = vmatprep.subr.mxu0 0.0
    %146 = vmatpush1.msra.mxu0 0.0
    %147 = vmatprep.subr.mxu0 0.0
    %148 = vmatpush1.msra.mxu0 0.0
    %149 = vmatprep.subr.mxu0 0.0
    %150 = vmatpush1.msra.mxu0 0.0
    %151 = vmatprep.subr.mxu0 0.0
    %152 = vmatpush1.msra.mxu0 0.0
    %153 = vmatprep.subr.mxu0 0.0
    %154 = vmatpush1.msra.mxu0 0.0
    %155 = vmatprep.subr.mxu0 0.0
    %156 = vmatpush1.msra.mxu0 0.0
    %157 = vmatprep.subr.mxu0 0.0
    %158 = vmatpush1.msra.mxu0 0.0
    %159 = vmatprep.subr.mxu0 0.0
    %160 = vmatpush1.msra.mxu0 0.0
    %161 = vmatprep.subr.mxu0 0.0
    %162 = vmatpush1.msra.mxu0 0.0
    %163 = vmatprep.subr.mxu0 0.0
    %164 = vmatpush1.msra.mxu0 0.0
    %165 = vmatprep.subr.mxu0 0.0
    %166 = vmatpush1.msra.mxu0 0.0
    %167 = vmatprep.subr.mxu0 0.0
    %168 = vmatpush1.msra.mxu0 0.0
    %169 = vmatprep.subr.mxu0 0.0
    %170 = vmatpush1.msra.mxu0 0.0
    %171 = vmatprep.subr.mxu0 0.0
    %172 = vmatpush1.msra.mxu0 0.0
    %173 = vmatprep.subr.mxu0 0.0
    %174 = vmatpush1.msra.mxu0 0.0
    %175 = vmatprep.subr.mxu0 0.0
    %176 = vmatpush1.msra.mxu0 0.0
    %177 = vmatprep.subr.mxu0 0.0
    %178 = vmatpush1.msra.mxu0 0.0
    %179 = vmatprep.subr.mxu0 0.0
    %180 = vmatpush1.msra.mxu0 0.0
    %181 = vmatprep.subr.mxu0 0.0
    %182 = vmatpush1.msra.mxu0 0.0
    %183 = vmatprep.mubr.f32.mxu0 0.0
    %v184 = vand.u32 %v106, 4294901760
    %v185 = vsub.f32 %v106, %v184
    %v186 = vand.u32 %v185, 4294901760
    %v187 = vsub.f32 %v185, %v186
    %v188 = vand.u32 %v187, 4294901760
    %189 = vmatmul.mubr.f32.gmra.mrb[0].mxu0 %v188
    %v190 = vpop.f32.mrb[0].mxu0
    %v191 = vadd.f32 0.0, %v190
    %v192 = vpop.f32.mrb[0].mxu0
    %v193 = vadd.f32 0.0, %v192
    %194 = vmatprep.mubr.f32.mxu0 0.0
    %v195 = vand.u32 %v109, 4294901760
    %v196 = vsub.f32 %v109, %v195
    %v197 = vand.u32 %v196, 4294901760
    %v198 = vsub.f32 %v196, %v197
    %v199 = vand.u32 %v198, 4294901760
    %200 = vmatmul.mubr.f32.gmra.mrb[0].mxu0 %v199
    %v201 = vpop.f32.mrb[0].mxu0
    %v202 = vadd.f32 0.0, %v201
    %v203 = vpop.f32.mrb[0].mxu0
    %v204 = vadd.f32 0.0, %v203
    %205 = vdwg.mxu0
    %v206 = vand.u32 %v95, 4294901760
    %v207 = vsub.f32 %v95, %v206
    %v208 = vand.u32 %v207, 4294901760
    %v209 = vsub.f32 %v207, %v208
    %v210 = vand.u32 %v209, 4294901760
    %211 = vmatprep.subr.mxu0 %v210
    %v212 = vand.u32 %v94, 4294901760
    %v213 = vsub.f32 %v94, %v212
    %v214 = vand.u32 %v213, 4294901760
    %v215 = vsub.f32 %v213, %v214
    %v216 = vand.u32 %v215, 4294901760
    %217 = vmatpush1.msra.mxu0 %v216
    %v218 = vand.u32 %v97, 4294901760
    %v219 = vsub.f32 %v97, %v218
    %v220 = vand.u32 %v219, 4294901760
    %v221 = vsub.f32 %v219, %v220
    %v222 = vand.u32 %v221, 4294901760
    %223 = vmatprep.subr.mxu0 %v222
    %v224 = vand.u32 %v96, 4294901760
    %v225 = vsub.f32 %v96, %v224
    %v226 = vand.u32 %v225, 4294901760
    %v227 = vsub.f32 %v225, %v226
    %v228 = vand.u32 %v227, 4294901760
    %229 = vmatpush1.msra.mxu0 %v228
    %v230 = vand.u32 %v99, 4294901760
    %v231 = vsub.f32 %v99, %v230
    %v232 = vand.u32 %v231, 4294901760
    %v233 = vsub.f32 %v231, %v232
    %v234 = vand.u32 %v233, 4294901760
    %235 = vmatprep.subr.mxu0 %v234
    %v236 = vand.u32 %v98, 4294901760
    %v237 = vsub.f32 %v98, %v236
    %v238 = vand.u32 %v237, 4294901760
    %v239 = vsub.f32 %v237, %v238
    %v240 = vand.u32 %v239, 4294901760
    %241 = vmatpush1.msra.mxu0 %v240
    %v242 = vand.u32 %v101, 4294901760
    %v243 = vsub.f32 %v101, %v242
    %v244 = vand.u32 %v243, 4294901760
    %v245 = vsub.f32 %v243, %v244
    %v246 = vand.u32 %v245, 4294901760
    %247 = vmatprep.subr.mxu0 %v246
    %v248 = vand.u32 %v100, 4294901760
    %v249 = vsub.f32 %v100, %v248
    %v250 = vand.u32 %v249, 4294901760
    %v251 = vsub.f32 %v249, %v250
    %v252 = vand.u32 %v251, 4294901760
    %253 = vmatpush1.msra.mxu0 %v252
    %254 = vmatprep.subr.mxu0 0.0
    %255 = vmatpush1.msra.mxu0 0.0
    %256 = vmatprep.subr.mxu0 0.0
    %257 = vmatpush1.msra.mxu0 0.0
    %258 = vmatprep.subr.mxu0 0.0
    %259 = vmatpush1.msra.mxu0 0.0
    %260 = vmatprep.subr.mxu0 0.0
    %261 = vmatpush1.msra.mxu0 0.0
    %262 = vmatprep.subr.mxu0 0.0
    %263 = vmatpush1.msra.mxu0 0.0
    %264 = vmatprep.subr.mxu0 0.0
    %265 = vmatpush1.msra.mxu0 0.0
    %266 = vmatprep.subr.mxu0 0.0
    %267 = vmatpush1.msra.mxu0 0.0
    %268 = vmatprep.subr.mxu0 0.0
    %269 = vmatpush1.msra.mxu0 0.0
    %270 = vmatprep.subr.mxu0 0.0
    %271 = vmatpush1.msra.mxu0 0.0
    %272 = vmatprep.subr.mxu0 0.0
    %273 = vmatpush1.msra.mxu0 0.0
    %274 = vmatprep.subr.mxu0 0.0
    %275 = vmatpush1.msra.mxu0 0.0
    %276 = vmatprep.subr.mxu0 0.0
    %277 = vmatpush1.msra.mxu0 0.0
    %278 = vmatprep.subr.mxu0 0.0
    %279 = vmatpush1.msra.mxu0 0.0
    %280 = vmatprep.subr.mxu0 0.0
    %281 = vmatpush1.msra.mxu0 0.0
    %282 = vmatprep.subr.mxu0 0.0
    %283 = vmatpush1.msra.mxu0 0.0
    %284 = vmatprep.subr.mxu0 0.0
    %285 = vmatpush1.msra.mxu0 0.0
    %286 = vmatprep.subr.mxu0 0.0
    %287 = vmatpush1.msra.mxu0 0.0
    %288 = vmatprep.subr.mxu0 0.0
    %289 = vmatpush1.msra.mxu0 0.0
    %290 = vmatprep.subr.mxu0 0.0
    %291 = vmatpush1.msra.mxu0 0.0
    %292 = vmatprep.subr.mxu0 0.0
    %293 = vmatpush1.msra.mxu0 0.0
    %294 = vmatprep.subr.mxu0 0.0
    %295 = vmatpush1.msra.mxu0 0.0
    %296 = vmatprep.subr.mxu0 0.0
    %297 = vmatpush1.msra.mxu0 0.0
    %298 = vmatprep.subr.mxu0 0.0
    %299 = vmatpush1.msra.mxu0 0.0
    %300 = vmatprep.subr.mxu0 0.0
    %301 = vmatpush1.msra.mxu0 0.0
    %302 = vmatprep.subr.mxu0 0.0
    %303 = vmatpush1.msra.mxu0 0.0
    %304 = vmatprep.subr.mxu0 0.0
    %305 = vmatpush1.msra.mxu0 0.0
    %306 = vmatprep.subr.mxu0 0.0
    %307 = vmatpush1.msra.mxu0 0.0
    %308 = vmatprep.subr.mxu0 0.0
    %309 = vmatpush1.msra.mxu0 0.0
    %310 = vmatprep.mubr.f32.mxu0 0.0
    %v311 = vand.u32 %v106, 4294901760
    %312 = vmatmul.mubr.f32.gmra.mrb[0].mxu0 %v311
    %v313 = vpop.f32.mrb[0].mxu0
    %v314 = vadd.f32 %v191, %v313
    %v315 = vpop.f32.mrb[0].mxu0
    %v316 = vadd.f32 %v193, %v315
    %317 = vmatprep.mubr.f32.mxu0 0.0
    %v318 = vand.u32 %v109, 4294901760
    %319 = vmatmul.mubr.f32.gmra.mrb[0].mxu0 %v318
    %v320 = vpop.f32.mrb[0].mxu0
    %v321 = vadd.f32 %v202, %v320
    %v322 = vpop.f32.mrb[0].mxu0
    %v323 = vadd.f32 %v204, %v322
    %324 = vdwg.mxu0
    %v325 = vand.u32 %v95, 4294901760
    %v326 = vsub.f32 %v95, %v325
    %327 = vmatprep.subr.mxu0 %v326
    %v328 = vand.u32 %v94, 4294901760
    %v329 = vsub.f32 %v94, %v328
    %330 = vmatpush1.msra.mxu0 %v329
    %v331 = vand.u32 %v97, 4294901760
    %v332 = vsub.f32 %v97, %v331
    %333 = vmatprep.subr.mxu0 %v332
    %v334 = vand.u32 %v96, 4294901760
    %v335 = vsub.f32 %v96, %v334
    %336 = vmatpush1.msra.mxu0 %v335
    %v337 = vand.u32 %v99, 4294901760
    %v338 = vsub.f32 %v99, %v337
    %339 = vmatprep.subr.mxu0 %v338
    %v340 = vand.u32 %v98, 4294901760
    %v341 = vsub.f32 %v98, %v340
    %342 = vmatpush1.msra.mxu0 %v341
    %v343 = vand.u32 %v101, 4294901760
    %v344 = vsub.f32 %v101, %v343
    %345 = vmatprep.subr.mxu0 %v344
    %v346 = vand.u32 %v100, 4294901760
    %v347 = vsub.f32 %v100, %v346
    %348 = vmatpush1.msra.mxu0 %v347
    %349 = vmatprep.subr.mxu0 0.0
    %350 = vmatpush1.msra.mxu0 0.0
    %351 = vmatprep.subr.mxu0 0.0
    %352 = vmatpush1.msra.mxu0 0.0
    %353 = vmatprep.subr.mxu0 0.0
    %354 = vmatpush1.msra.mxu0 0.0
    %355 = vmatprep.subr.mxu0 0.0
    %356 = vmatpush1.msra.mxu0 0.0
    %357 = vmatprep.subr.mxu0 0.0
    %358 = vmatpush1.msra.mxu0 0.0
    %359 = vmatprep.subr.mxu0 0.0
    %360 = vmatpush1.msra.mxu0 0.0
    %361 = vmatprep.subr.mxu0 0.0
    %362 = vmatpush1.msra.mxu0 0.0
    %363 = vmatprep.subr.mxu0 0.0
    %364 = vmatpush1.msra.mxu0 0.0
    %365 = vmatprep.subr.mxu0 0.0
    %366 = vmatpush1.msra.mxu0 0.0
    %367 = vmatprep.subr.mxu0 0.0
    %368 = vmatpush1.msra.mxu0 0.0
    %369 = vmatprep.subr.mxu0 0.0
    %370 = vmatpush1.msra.mxu0 0.0
    %371 = vmatprep.subr.mxu0 0.0
    %372 = vmatpush1.msra.mxu0 0.0
    %373 = vmatprep.subr.mxu0 0.0
    %374 = vmatpush1.msra.mxu0 0.0
    %375 = vmatprep.subr.mxu0 0.0
    %376 = vmatpush1.msra.mxu0 0.0
    %377 = vmatprep.subr.mxu0 0.0
    %378 = vmatpush1.msra.mxu0 0.0
    %379 = vmatprep.subr.mxu0 0.0
    %380 = vmatpush1.msra.mxu0 0.0
    %381 = vmatprep.subr.mxu0 0.0
    %382 = vmatpush1.msra.mxu0 0.0
    %383 = vmatprep.subr.mxu0 0.0
    %384 = vmatpush1.msra.mxu0 0.0
    %385 = vmatprep.subr.mxu0 0.0
    %386 = vmatpush1.msra.mxu0 0.0
    %387 = vmatprep.subr.mxu0 0.0
    %388 = vmatpush1.msra.mxu0 0.0
    %389 = vmatprep.subr.mxu0 0.0
    %390 = vmatpush1.msra.mxu0 0.0
    %391 = vmatprep.subr.mxu0 0.0
    %392 = vmatpush1.msra.mxu0 0.0
    %393 = vmatprep.subr.mxu0 0.0
    %394 = vmatpush1.msra.mxu0 0.0
    %395 = vmatprep.subr.mxu0 0.0
    %396 = vmatpush1.msra.mxu0 0.0
    %397 = vmatprep.subr.mxu0 0.0
    %398 = vmatpush1.msra.mxu0 0.0
    %399 = vmatprep.subr.mxu0 0.0
    %400 = vmatpush1.msra.mxu0 0.0
    %401 = vmatprep.subr.mxu0 0.0
    %402 = vmatpush1.msra.mxu0 0.0
    %403 = vmatprep.subr.mxu0 0.0
    %404 = vmatpush1.msra.mxu0 0.0
    %405 = vmatprep.mubr.f32.mxu0 0.0
    %v406 = vand.u32 %v106, 4294901760
    %v407 = vsub.f32 %v106, %v406
    %408 = vmatmul.mubr.f32.gmra.mrb[0].mxu0 %v407
    %v409 = vpop.f32.mrb[0].mxu0
    %v410 = vadd.f32 %v314, %v409
    %v411 = vpop.f32.mrb[0].mxu0
    %v412 = vadd.f32 %v316, %v411
    %413 = vmatprep.mubr.f32.mxu0 0.0
    %v414 = vand.u32 %v109, 4294901760
    %v415 = vsub.f32 %v109, %v414
    %416 = vmatmul.mubr.f32.gmra.mrb[0].mxu0 %v415
    %v417 = vpop.f32.mrb[0].mxu0
    %v418 = vadd.f32 %v321, %v417
    %v419 = vpop.f32.mrb[0].mxu0
    %v420 = vadd.f32 %v323, %v419
    %421 = vdwg.mxu0
    %v422 = vand.u32 %v95, 4294901760
    %423 = vmatprep.subr.mxu0 %v422
    %v424 = vand.u32 %v94, 4294901760
    %425 = vmatpush1.msra.mxu0 %v424
    %v426 = vand.u32 %v97, 4294901760
    %427 = vmatprep.subr.mxu0 %v426
    %v428 = vand.u32 %v96, 4294901760
    %429 = vmatpush1.msra.mxu0 %v428
    %v430 = vand.u32 %v99, 4294901760
    %431 = vmatprep.subr.mxu0 %v430
    %v432 = vand.u32 %v98, 4294901760
    %433 = vmatpush1.msra.mxu0 %v432
    %v434 = vand.u32 %v101, 4294901760
    %435 = vmatprep.subr.mxu0 %v434
    %v436 = vand.u32 %v100, 4294901760
    %437 = vmatpush1.msra.mxu0 %v436
    %438 = vmatprep.subr.mxu0 0.0
    %439 = vmatpush1.msra.mxu0 0.0
    %440 = vmatprep.subr.mxu0 0.0
    %441 = vmatpush1.msra.mxu0 0.0
    %442 = vmatprep.subr.mxu0 0.0
    %443 = vmatpush1.msra.mxu0 0.0
    %444 = vmatprep.subr.mxu0 0.0
    %445 = vmatpush1.msra.mxu0 0.0
    %446 = vmatprep.subr.mxu0 0.0
    %447 = vmatpush1.msra.mxu0 0.0
    %448 = vmatprep.subr.mxu0 0.0
    %449 = vmatpush1.msra.mxu0 0.0
    %450 = vmatprep.subr.mxu0 0.0
    %451 = vmatpush1.msra.mxu0 0.0
    %452 = vmatprep.subr.mxu0 0.0
    %453 = vmatpush1.msra.mxu0 0.0
    %454 = vmatprep.subr.mxu0 0.0
    %455 = vmatpush1.msra.mxu0 0.0
    %456 = vmatprep.subr.mxu0 0.0
    %457 = vmatpush1.msra.mxu0 0.0
    %458 = vmatprep.subr.mxu0 0.0
    %459 = vmatpush1.msra.mxu0 0.0
    %460 = vmatprep.subr.mxu0 0.0
    %461 = vmatpush1.msra.mxu0 0.0
    %462 = vmatprep.subr.mxu0 0.0
    %463 = vmatpush1.msra.mxu0 0.0
    %464 = vmatprep.subr.mxu0 0.0
    %465 = vmatpush1.msra.mxu0 0.0
    %466 = vmatprep.subr.mxu0 0.0
    %467 = vmatpush1.msra.mxu0 0.0
    %468 = vmatprep.subr.mxu0 0.0
    %469 = vmatpush1.msra.mxu0 0.0
    %470 = vmatprep.subr.mxu0 0.0
    %471 = vmatpush1.msra.mxu0 0.0
    %472 = vmatprep.subr.mxu0 0.0
    %473 = vmatpush1.msra.mxu0 0.0
    %474 = vmatprep.subr.mxu0 0.0
    %475 = vmatpush1.msra.mxu0 0.0
    %476 = vmatprep.subr.mxu0 0.0
    %477 = vmatpush1.msra.mxu0 0.0
    %478 = vmatprep.subr.mxu0 0.0
    %479 = vmatpush1.msra.mxu0 0.0
    %480 = vmatprep.subr.mxu0 0.0
    %481 = vmatpush1.msra.mxu0 0.0
    %482 = vmatprep.subr.mxu0 0.0
    %483 = vmatpush1.msra.mxu0 0.0
    %484 = vmatprep.subr.mxu0 0.0
    %485 = vmatpush1.msra.mxu0 0.0
    %486 = vmatprep.subr.mxu0 0.0
    %487 = vmatpush1.msra.mxu0 0.0
    %488 = vmatprep.subr.mxu0 0.0
    %489 = vmatpush1.msra.mxu0 0.0
    %490 = vmatprep.subr.mxu0 0.0
    %491 = vmatpush1.msra.mxu0 0.0
    %492 = vmatprep.subr.mxu0 0.0
    %493 = vmatpush1.msra.mxu0 0.0
    %494 = vmatprep.mubr.f32.mxu0 0.0
    %v495 = vand.u32 %v106, 4294901760
    %v496 = vsub.f32 %v106, %v495
    %v497 = vand.u32 %v496, 4294901760
    %498 = vmatmul.mubr.f32.gmra.mrb[0].mxu0 %v497
    %v499 = vpop.f32.mrb[0].mxu0
    %v500 = vadd.f32 %v410, %v499
    %v501 = vpop.f32.mrb[0].mxu0
    %v502 = vadd.f32 %v412, %v501
    %503 = vmatprep.mubr.f32.mxu0 0.0
    %v504 = vand.u32 %v109, 4294901760
    %v505 = vsub.f32 %v109, %v504
    %v506 = vand.u32 %v505, 4294901760
    %507 = vmatmul.mubr.f32.gmra.mrb[0].mxu0 %v506
    %v508 = vpop.f32.mrb[0].mxu0
    %v509 = vadd.f32 %v418, %v508
    %v510 = vpop.f32.mrb[0].mxu0
    %v511 = vadd.f32 %v420, %v510
    %512 = vdwg.mxu0
    %v513 = vand.u32 %v95, 4294901760
    %v514 = vsub.f32 %v95, %v513
    %v515 = vand.u32 %v514, 4294901760
    %516 = vmatprep.subr.mxu0 %v515
    %v517 = vand.u32 %v94, 4294901760
    %v518 = vsub.f32 %v94, %v517
    %v519 = vand.u32 %v518, 4294901760
    %520 = vmatpush1.msra.mxu0 %v519
    %v521 = vand.u32 %v97, 4294901760
    %v522 = vsub.f32 %v97, %v521
    %v523 = vand.u32 %v522, 4294901760
    %524 = vmatprep.subr.mxu0 %v523
    %v525 = vand.u32 %v96, 4294901760
    %v526 = vsub.f32 %v96, %v525
    %v527 = vand.u32 %v526, 4294901760
    %528 = vmatpush1.msra.mxu0 %v527
    %v529 = vand.u32 %v99, 4294901760
    %v530 = vsub.f32 %v99, %v529
    %v531 = vand.u32 %v530, 4294901760
    %532 = vmatprep.subr.mxu0 %v531
    %v533 = vand.u32 %v98, 4294901760
    %v534 = vsub.f32 %v98, %v533
    %v535 = vand.u32 %v534, 4294901760
    %536 = vmatpush1.msra.mxu0 %v535
    %v537 = vand.u32 %v101, 4294901760
    %v538 = vsub.f32 %v101, %v537
    %v539 = vand.u32 %v538, 4294901760
    %540 = vmatprep.subr.mxu0 %v539
    %v541 = vand.u32 %v100, 4294901760
    %v542 = vsub.f32 %v100, %v541
    %v543 = vand.u32 %v542, 4294901760
    %544 = vmatpush1.msra.mxu0 %v543
    %545 = vmatprep.subr.mxu0 0.0
    %546 = vmatpush1.msra.mxu0 0.0
    %547 = vmatprep.subr.mxu0 0.0
    %548 = vmatpush1.msra.mxu0 0.0
    %549 = vmatprep.subr.mxu0 0.0
    %550 = vmatpush1.msra.mxu0 0.0
    %551 = vmatprep.subr.mxu0 0.0
    %552 = vmatpush1.msra.mxu0 0.0
    %553 = vmatprep.subr.mxu0 0.0
    %554 = vmatpush1.msra.mxu0 0.0
    %555 = vmatprep.subr.mxu0 0.0
    %556 = vmatpush1.msra.mxu0 0.0
    %557 = vmatprep.subr.mxu0 0.0
    %558 = vmatpush1.msra.mxu0 0.0
    %559 = vmatprep.subr.mxu0 0.0
    %560 = vmatpush1.msra.mxu0 0.0
    %561 = vmatprep.subr.mxu0 0.0
    %562 = vmatpush1.msra.mxu0 0.0
    %563 = vmatprep.subr.mxu0 0.0
    %564 = vmatpush1.msra.mxu0 0.0
    %565 = vmatprep.subr.mxu0 0.0
    %566 = vmatpush1.msra.mxu0 0.0
    %567 = vmatprep.subr.mxu0 0.0
    %568 = vmatpush1.msra.mxu0 0.0
    %569 = vmatprep.subr.mxu0 0.0
    %570 = vmatpush1.msra.mxu0 0.0
    %571 = vmatprep.subr.mxu0 0.0
    %572 = vmatpush1.msra.mxu0 0.0
    %573 = vmatprep.subr.mxu0 0.0
    %574 = vmatpush1.msra.mxu0 0.0
    %575 = vmatprep.subr.mxu0 0.0
    %576 = vmatpush1.msra.mxu0 0.0
    %577 = vmatprep.subr.mxu0 0.0
    %578 = vmatpush1.msra.mxu0 0.0
    %579 = vmatprep.subr.mxu0 0.0
    %580 = vmatpush1.msra.mxu0 0.0
    %581 = vmatprep.subr.mxu0 0.0
    %582 = vmatpush1.msra.mxu0 0.0
    %583 = vmatprep.subr.mxu0 0.0
    %584 = vmatpush1.msra.mxu0 0.0
    %585 = vmatprep.subr.mxu0 0.0
    %586 = vmatpush1.msra.mxu0 0.0
    %587 = vmatprep.subr.mxu0 0.0
    %588 = vmatpush1.msra.mxu0 0.0
    %589 = vmatprep.subr.mxu0 0.0
    %590 = vmatpush1.msra.mxu0 0.0
    %591 = vmatprep.subr.mxu0 0.0
    %592 = vmatpush1.msra.mxu0 0.0
    %593 = vmatprep.subr.mxu0 0.0
    %594 = vmatpush1.msra.mxu0 0.0
    %595 = vmatprep.subr.mxu0 0.0
    %596 = vmatpush1.msra.mxu0 0.0
    %597 = vmatprep.subr.mxu0 0.0
    %598 = vmatpush1.msra.mxu0 0.0
    %599 = vmatprep.subr.mxu0 0.0
    %600 = vmatpush1.msra.mxu0 0.0
    %601 = vmatprep.mubr.f32.mxu0 0.0
    %v602 = vand.u32 %v106, 4294901760
    %603 = vmatmul.mubr.f32.gmra.mrb[0].mxu0 %v602
    %v604 = vpop.f32.mrb[0].mxu0
    %v605 = vadd.f32 %v500, %v604
    %v606 = vpop.f32.mrb[0].mxu0
    %v607 = vadd.f32 %v502, %v606
    %608 = vmatprep.mubr.f32.mxu0 0.0
    %v609 = vand.u32 %v109, 4294901760
    %610 = vmatmul.mubr.f32.gmra.mrb[0].mxu0 %v609
    %v611 = vpop.f32.mrb[0].mxu0
    %v612 = vadd.f32 %v509, %v611
    %v613 = vpop.f32.mrb[0].mxu0
    %v614 = vadd.f32 %v511, %v613
    %615 = vdwg.mxu0
    %v616 = vand.u32 %v95, 4294901760
    %617 = vmatprep.subr.mxu0 %v616
    %v618 = vand.u32 %v94, 4294901760
    %619 = vmatpush1.msra.mxu0 %v618
    %v620 = vand.u32 %v97, 4294901760
    %621 = vmatprep.subr.mxu0 %v620
    %v622 = vand.u32 %v96, 4294901760
    %623 = vmatpush1.msra.mxu0 %v622
    %v624 = vand.u32 %v99, 4294901760
    %625 = vmatprep.subr.mxu0 %v624
    %v626 = vand.u32 %v98, 4294901760
    %627 = vmatpush1.msra.mxu0 %v626
    %v628 = vand.u32 %v101, 4294901760
    %629 = vmatprep.subr.mxu0 %v628
    %v630 = vand.u32 %v100, 4294901760
    %631 = vmatpush1.msra.mxu0 %v630
    %632 = vmatprep.subr.mxu0 0.0
    %633 = vmatpush1.msra.mxu0 0.0
    %634 = vmatprep.subr.mxu0 0.0
    %635 = vmatpush1.msra.mxu0 0.0
    %636 = vmatprep.subr.mxu0 0.0
    %637 = vmatpush1.msra.mxu0 0.0
    %638 = vmatprep.subr.mxu0 0.0
    %639 = vmatpush1.msra.mxu0 0.0
    %640 = vmatprep.subr.mxu0 0.0
    %641 = vmatpush1.msra.mxu0 0.0
    %642 = vmatprep.subr.mxu0 0.0
    %643 = vmatpush1.msra.mxu0 0.0
    %644 = vmatprep.subr.mxu0 0.0
    %645 = vmatpush1.msra.mxu0 0.0
    %646 = vmatprep.subr.mxu0 0.0
    %647 = vmatpush1.msra.mxu0 0.0
    %648 = vmatprep.subr.mxu0 0.0
    %649 = vmatpush1.msra.mxu0 0.0
    %650 = vmatprep.subr.mxu0 0.0
    %651 = vmatpush1.msra.mxu0 0.0
    %652 = vmatprep.subr.mxu0 0.0
    %653 = vmatpush1.msra.mxu0 0.0
    %654 = vmatprep.subr.mxu0 0.0
    %655 = vmatpush1.msra.mxu0 0.0
    %656 = vmatprep.subr.mxu0 0.0
    %657 = vmatpush1.msra.mxu0 0.0
    %658 = vmatprep.subr.mxu0 0.0
    %659 = vmatpush1.msra.mxu0 0.0
    %660 = vmatprep.subr.mxu0 0.0
    %661 = vmatpush1.msra.mxu0 0.0
    %662 = vmatprep.subr.mxu0 0.0
    %663 = vmatpush1.msra.mxu0 0.0
    %664 = vmatprep.subr.mxu0 0.0
    %665 = vmatpush1.msra.mxu0 0.0
    %666 = vmatprep.subr.mxu0 0.0
    %667 = vmatpush1.msra.mxu0 0.0
    %668 = vmatprep.subr.mxu0 0.0
    %669 = vmatpush1.msra.mxu0 0.0
    %670 = vmatprep.subr.mxu0 0.0
    %671 = vmatpush1.msra.mxu0 0.0
    %672 = vmatprep.subr.mxu0 0.0
    %673 = vmatpush1.msra.mxu0 0.0
    %674 = vmatprep.subr.mxu0 0.0
    %675 = vmatpush1.msra.mxu0 0.0
    %676 = vmatprep.subr.mxu0 0.0
    %677 = vmatpush1.msra.mxu0 0.0
    %678 = vmatprep.subr.mxu0 0.0
    %679 = vmatpush1.msra.mxu0 0.0
    %680 = vmatprep.subr.mxu0 0.0
    %681 = vmatpush1.msra.mxu0 0.0
    %682 = vmatprep.subr.mxu0 0.0
    %683 = vmatpush1.msra.mxu0 0.0
    %684 = vmatprep.subr.mxu0 0.0
    %685 = vmatpush1.msra.mxu0 0.0
    %686 = vmatprep.subr.mxu0 0.0
    %687 = vmatpush1.msra.mxu0 0.0
    %688 = vmatprep.mubr.f32.mxu0 0.0
    %v689 = vand.u32 %v106, 4294901760
    %690 = vmatmul.mubr.f32.gmra.mrb[0].mxu0 %v689
    %v691 = vpop.f32.mrb[0].mxu0
    %v692 = vadd.f32 %v605, %v691
    %v693 = vpop.f32.mrb[0].mxu0
    %v694 = vadd.f32 %v607, %v693
    %695 = vmatprep.mubr.f32.mxu0 0.0
    %v696 = vand.u32 %v109, 4294901760
    %697 = vmatmul.mubr.f32.gmra.mrb[0].mxu0 %v696
    %v698 = vpop.f32.mrb[0].mxu0
    %v699 = vadd.f32 %v612, %v698
    %v700 = vpop.f32.mrb[0].mxu0
    %v701 = vadd.f32 %v614, %v700
    %702 = vdwg.mxu0
    %v703 = vld [vmem:[#allocation8] sm:$0xff]
    %v704 = vld [vmem:[#allocation8 + $0x8] sm:$0xff]
    %v705 = vmul.f32 %v692, %v703
    %v706 = vmul.f32 %v699, %v704
    %v707 = vld [vmem:[#allocation10] sm:$0xff]
    %v708 = vld [vmem:[#allocation10 + $0x8] sm:$0xff]
    %711 = vrot.lane.b32.xlu0 %v707, 96
    %v712 = vpop.permute.xlu0 %711
    %713 = vrot.lane.b32.xlu0 %v708, 96
    %v714 = vpop.permute.xlu0 %713
    %v717 = vmul.f32 %v692, %v712
    %v718 = vmul.f32 %v694, %v712
    %v719 = vmul.f32 %v699, %v714
    %v720 = vmul.f32 %v701, %v714
    %725 = vrot.lane.b32.xlu0 %v717, 32
    %v726 = vpop.permute.xlu0 %725
    %727 = vrot.lane.b32.xlu0 %v718, 32
    %v728 = vpop.permute.xlu0 %727
    %729 = vrot.lane.b32.xlu0 %v719, 32
    %v730 = vpop.permute.xlu0 %729
    %731 = vrot.lane.b32.xlu0 %v720, 32
    %v732 = vpop.permute.xlu0 %731
    %v733 = vsel %vm104, %v726, %v728
    %v734 = vsel %vm104, %v730, %v732
    %v737 = vadd.f32 %v705, %v733
    %v738 = vadd.f32 %v706, %v734
    %741 = vrot.lane.b32.xlu0 %v737, 96
    %v742 = vpop.permute.xlu0 %741
    %743 = vrot.lane.b32.xlu0 %v738, 96
    %v744 = vpop.permute.xlu0 %743
    %vm745 = vcmask 64512
    %v746 = vsel %vm745, %v737, 0
    %v748 = vsel %vm745, %v738, 0
    %v750 = vsel %vm745, %v742, 0
    %v752 = vsel %vm745, %v744, 0
    %754 = vmatprep.subr.mxu0 0.0
    %v755 = vand.u32 %v750, 4294901760
    %756 = vmatpush1.xpose.msra.mxu0 %v755
    %757 = vmatprep.subr.mxu0 0.0
    %v758 = vand.u32 %v752, 4294901760
    %759 = vmatpush1.xpose.msra.mxu0 %v758
    %760 = vmatprep.subr.mxu0 0.0
    %761 = vmatpush1.xpose.msra.mxu0 0.0
    %762 = vmatprep.subr.mxu0 0.0
    %763 = vmatpush1.xpose.msra.mxu0 0.0
    %764 = vmatprep.subr.mxu0 0.0
    %765 = vmatpush1.xpose.msra.mxu0 0.0
    %766 = vmatprep.subr.mxu0 0.0
    %767 = vmatpush1.xpose.msra.mxu0 0.0
    %768 = vmatprep.subr.mxu0 0.0
    %769 = vmatpush1.xpose.msra.mxu0 0.0
    %770 = vmatprep.subr.mxu0 0.0
    %771 = vmatpush1.xpose.msra.mxu0 0.0
    %772 = vmatprep.subr.mxu0 0.0
    %773 = vmatpush1.xpose.msra.mxu0 0.0
    %774 = vmatprep.subr.mxu0 0.0
    %775 = vmatpush1.xpose.msra.mxu0 0.0
    %776 = vmatprep.subr.mxu0 0.0
    %777 = vmatpush1.xpose.msra.mxu0 0.0
    %778 = vmatprep.subr.mxu0 0.0
    %779 = vmatpush1.xpose.msra.mxu0 0.0
    %780 = vmatprep.subr.mxu0 0.0
    %781 = vmatpush1.xpose.msra.mxu0 0.0
    %782 = vmatprep.subr.mxu0 0.0
    %783 = vmatpush1.xpose.msra.mxu0 0.0
    %784 = vmatprep.subr.mxu0 0.0
    %785 = vmatpush1.xpose.msra.mxu0 0.0
    %786 = vmatprep.subr.mxu0 0.0
    %787 = vmatpush1.xpose.msra.mxu0 0.0
    %788 = vmatprep.subr.mxu0 0.0
    %789 = vmatpush1.xpose.msra.mxu0 0.0
    %790 = vmatprep.subr.mxu0 0.0
    %791 = vmatpush1.xpose.msra.mxu0 0.0
    %792 = vmatprep.subr.mxu0 0.0
    %793 = vmatpush1.xpose.msra.mxu0 0.0
    %794 = vmatprep.subr.mxu0 0.0
    %795 = vmatpush1.xpose.msra.mxu0 0.0
    %796 = vmatprep.subr.mxu0 0.0
    %797 = vmatpush1.xpose.msra.mxu0 0.0
    %798 = vmatprep.subr.mxu0 0.0
    %799 = vmatpush1.xpose.msra.mxu0 0.0
    %800 = vmatprep.subr.mxu0 0.0
    %801 = vmatpush1.xpose.msra.mxu0 0.0
    %802 = vmatprep.subr.mxu0 0.0
    %803 = vmatpush1.xpose.msra.mxu0 0.0
    %804 = vmatprep.subr.mxu0 0.0
    %805 = vmatpush1.xpose.msra.mxu0 0.0
    %806 = vmatprep.subr.mxu0 0.0
    %807 = vmatpush1.xpose.msra.mxu0 0.0
    %808 = vmatprep.subr.mxu0 0.0
    %809 = vmatpush1.xpose.msra.mxu0 0.0
    %810 = vmatprep.subr.mxu0 0.0
    %811 = vmatpush1.xpose.msra.mxu0 0.0
    %812 = vmatprep.subr.mxu0 0.0
    %813 = vmatpush1.xpose.msra.mxu0 0.0
    %814 = vmatprep.subr.mxu0 0.0
    %815 = vmatpush1.xpose.msra.mxu0 0.0
    %816 = vmatprep.subr.mxu0 0.0
    %817 = vmatpush1.xpose.msra.mxu0 0.0
    %818 = vmatprep.subr.mxu0 0.0
    %819 = vmatpush1.xpose.msra.mxu0 0.0
    %820 = vmatprep.mubr.f32.mxu0 0.0
    %v821 = vand.u32 %v746, 4294901760
    %v822 = vsub.f32 %v746, %v821
    %v823 = vand.u32 %v822, 4294901760
    %v824 = vsub.f32 %v822, %v823
    %v825 = vand.u32 %v824, 4294901760
    %826 = vmatmul.mubr.f32.gmra.mrb[0].mxu0 %v825
    %v827 = vpop.f32.mrb[0].mxu0
    %v828 = vadd.f32 %v102, %v827
    %v829 = vpop.f32.mrb[0].mxu0
    %830 = vmatprep.mubr.f32.mxu0 0.0
    %v831 = vand.u32 %v748, 4294901760
    %v832 = vsub.f32 %v748, %v831
    %v833 = vand.u32 %v832, 4294901760
    %v834 = vsub.f32 %v832, %v833
    %v835 = vand.u32 %v834, 4294901760
    %836 = vmatmul.mubr.f32.gmra.mrb[0].mxu0 %v835
    %v837 = vpop.f32.mrb[0].mxu0
    %v838 = vadd.f32 %v103, %v837
    %v839 = vpop.f32.mrb[0].mxu0
    %840 = vdwg.mxu0
    %841 = vmatprep.subr.mxu0 0.0
    %v842 = vand.u32 %v750, 4294901760
    %v843 = vsub.f32 %v750, %v842
    %v844 = vand.u32 %v843, 4294901760
    %v845 = vsub.f32 %v843, %v844
    %v846 = vand.u32 %v845, 4294901760
    %847 = vmatpush1.xpose.msra.mxu0 %v846
    %848 = vmatprep.subr.mxu0 0.0
    %v849 = vand.u32 %v752, 4294901760
    %v850 = vsub.f32 %v752, %v849
    %v851 = vand.u32 %v850, 4294901760
    %v852 = vsub.f32 %v850, %v851
    %v853 = vand.u32 %v852, 4294901760
    %854 = vmatpush1.xpose.msra.mxu0 %v853
    %855 = vmatprep.subr.mxu0 0.0
    %856 = vmatpush1.xpose.msra.mxu0 0.0
    %857 = vmatprep.subr.mxu0 0.0
    %858 = vmatpush1.xpose.msra.mxu0 0.0
    %859 = vmatprep.subr.mxu0 0.0
    %860 = vmatpush1.xpose.msra.mxu0 0.0
    %861 = vmatprep.subr.mxu0 0.0
    %862 = vmatpush1.xpose.msra.mxu0 0.0
    %863 = vmatprep.subr.mxu0 0.0
    %864 = vmatpush1.xpose.msra.mxu0 0.0
    %865 = vmatprep.subr.mxu0 0.0
    %866 = vmatpush1.xpose.msra.mxu0 0.0
    %867 = vmatprep.subr.mxu0 0.0
    %868 = vmatpush1.xpose.msra.mxu0 0.0
    %869 = vmatprep.subr.mxu0 0.0
    %870 = vmatpush1.xpose.msra.mxu0 0.0
    %871 = vmatprep.subr.mxu0 0.0
    %872 = vmatpush1.xpose.msra.mxu0 0.0
    %873 = vmatprep.subr.mxu0 0.0
    %874 = vmatpush1.xpose.msra.mxu0 0.0
    %875 = vmatprep.subr.mxu0 0.0
    %876 = vmatpush1.xpose.msra.mxu0 0.0
    %877 = vmatprep.subr.mxu0 0.0
    %878 = vmatpush1.xpose.msra.mxu0 0.0
    %879 = vmatprep.subr.mxu0 0.0
    %880 = vmatpush1.xpose.msra.mxu0 0.0
    %881 = vmatprep.subr.mxu0 0.0
    %882 = vmatpush1.xpose.msra.mxu0 0.0
    %883 = vmatprep.subr.mxu0 0.0
    %884 = vmatpush1.xpose.msra.mxu0 0.0
    %885 = vmatprep.subr.mxu0 0.0
    %886 = vmatpush1.xpose.msra.mxu0 0.0
    %887 = vmatprep.subr.mxu0 0.0
    %888 = vmatpush1.xpose.msra.mxu0 0.0
    %889 = vmatprep.subr.mxu0 0.0
    %890 = vmatpush1.xpose.msra.mxu0 0.0
    %891 = vmatprep.subr.mxu0 0.0
    %892 = vmatpush1.xpose.msra.mxu0 0.0
    %893 = vmatprep.subr.mxu0 0.0
    %894 = vmatpush1.xpose.msra.mxu0 0.0
    %895 = vmatprep.subr.mxu0 0.0
    %896 = vmatpush1.xpose.msra.mxu0 0.0
    %897 = vmatprep.subr.mxu0 0.0
    %898 = vmatpush1.xpose.msra.mxu0 0.0
    %899 = vmatprep.subr.mxu0 0.0
    %900 = vmatpush1.xpose.msra.mxu0 0.0
    %901 = vmatprep.subr.mxu0 0.0
    %902 = vmatpush1.xpose.msra.mxu0 0.0
    %903 = vmatprep.subr.mxu0 0.0
    %904 = vmatpush1.xpose.msra.mxu0 0.0
    %905 = vmatprep.subr.mxu0 0.0
    %906 = vmatpush1.xpose.msra.mxu0 0.0
    %907 = vmatprep.subr.mxu0 0.0
    %908 = vmatpush1.xpose.msra.mxu0 0.0
    %909 = vmatprep.subr.mxu0 0.0
    %910 = vmatpush1.xpose.msra.mxu0 0.0
    %911 = vmatprep.subr.mxu0 0.0
    %912 = vmatpush1.xpose.msra.mxu0 0.0
    %913 = vmatprep.subr.mxu0 0.0
    %914 = vmatpush1.xpose.msra.mxu0 0.0
    %915 = vmatprep.mubr.f32.mxu0 0.0
    %v916 = vand.u32 %v746, 4294901760
    %917 = vmatmul.mubr.f32.gmra.mrb[0].mxu0 %v916
    %v918 = vpop.f32.mrb[0].mxu0
    %v919 = vadd.f32 %v828, %v918
    %v920 = vpop.f32.mrb[0].mxu0
    %921 = vmatprep.mubr.f32.mxu0 0.0
    %v922 = vand.u32 %v748, 4294901760
    %923 = vmatmul.mubr.f32.gmra.mrb[0].mxu0 %v922
    %v924 = vpop.f32.mrb[0].mxu0
    %v925 = vadd.f32 %v838, %v924
    %v926 = vpop.f32.mrb[0].mxu0
    %927 = vdwg.mxu0
    %928 = vmatprep.subr.mxu0 0.0
    %v929 = vand.u32 %v750, 4294901760
    %v930 = vsub.f32 %v750, %v929
    %931 = vmatpush1.xpose.msra.mxu0 %v930
    %932 = vmatprep.subr.mxu0 0.0
    %v933 = vand.u32 %v752, 4294901760
    %v934 = vsub.f32 %v752, %v933
    %935 = vmatpush1.xpose.msra.mxu0 %v934
    %936 = vmatprep.subr.mxu0 0.0
    %937 = vmatpush1.xpose.msra.mxu0 0.0
    %938 = vmatprep.subr.mxu0 0.0
    %939 = vmatpush1.xpose.msra.mxu0 0.0
    %940 = vmatprep.subr.mxu0 0.0
    %941 = vmatpush1.xpose.msra.mxu0 0.0
    %942 = vmatprep.subr.mxu0 0.0
    %943 = vmatpush1.xpose.msra.mxu0 0.0
    %944 = vmatprep.subr.mxu0 0.0
    %945 = vmatpush1.xpose.msra.mxu0 0.0
    %946 = vmatprep.subr.mxu0 0.0
    %947 = vmatpush1.xpose.msra.mxu0 0.0
    %948 = vmatprep.subr.mxu0 0.0
    %949 = vmatpush1.xpose.msra.mxu0 0.0
    %950 = vmatprep.subr.mxu0 0.0
    %951 = vmatpush1.xpose.msra.mxu0 0.0
    %952 = vmatprep.subr.mxu0 0.0
    %953 = vmatpush1.xpose.msra.mxu0 0.0
    %954 = vmatprep.subr.mxu0 0.0
    %955 = vmatpush1.xpose.msra.mxu0 0.0
    %956 = vmatprep.subr.mxu0 0.0
    %957 = vmatpush1.xpose.msra.mxu0 0.0
    %958 = vmatprep.subr.mxu0 0.0
    %959 = vmatpush1.xpose.msra.mxu0 0.0
    %960 = vmatprep.subr.mxu0 0.0
    %961 = vmatpush1.xpose.msra.mxu0 0.0
    %962 = vmatprep.subr.mxu0 0.0
    %963 = vmatpush1.xpose.msra.mxu0 0.0
    %964 = vmatprep.subr.mxu0 0.0
    %965 = vmatpush1.xpose.msra.mxu0 0.0
    %966 = vmatprep.subr.mxu0 0.0
    %967 = vmatpush1.xpose.msra.mxu0 0.0
    %968 = vmatprep.subr.mxu0 0.0
    %969 = vmatpush1.xpose.msra.mxu0 0.0
    %970 = vmatprep.subr.mxu0 0.0
    %971 = vmatpush1.xpose.msra.mxu0 0.0
    %972 = vmatprep.subr.mxu0 0.0
    %973 = vmatpush1.xpose.msra.mxu0 0.0
    %974 = vmatprep.subr.mxu0 0.0
    %975 = vmatpush1.xpose.msra.mxu0 0.0
    %976 = vmatprep.subr.mxu0 0.0
    %977 = vmatpush1.xpose.msra.mxu0 0.0
    %978 = vmatprep.subr.mxu0 0.0
    %979 = vmatpush1.xpose.msra.mxu0 0.0
    %980 = vmatprep.subr.mxu0 0.0
    %981 = vmatpush1.xpose.msra.mxu0 0.0
    %982 = vmatprep.subr.mxu0 0.0
    %983 = vmatpush1.xpose.msra.mxu0 0.0
    %984 = vmatprep.subr.mxu0 0.0
    %985 = vmatpush1.xpose.msra.mxu0 0.0
    %986 = vmatprep.subr.mxu0 0.0
    %987 = vmatpush1.xpose.msra.mxu0 0.0
    %988 = vmatprep.subr.mxu0 0.0
    %989 = vmatpush1.xpose.msra.mxu0 0.0
    %990 = vmatprep.subr.mxu0 0.0
    %991 = vmatpush1.xpose.msra.mxu0 0.0
    %992 = vmatprep.subr.mxu0 0.0
    %993 = vmatpush1.xpose.msra.mxu0 0.0
    %994 = vmatprep.subr.mxu0 0.0
    %995 = vmatpush1.xpose.msra.mxu0 0.0
    %996 = vmatprep.mubr.f32.mxu0 0.0
    %v997 = vand.u32 %v746, 4294901760
    %v998 = vsub.f32 %v746, %v997
    %999 = vmatmul.mubr.f32.gmra.mrb[0].mxu0 %v998
    %v1000 = vpop.f32.mrb[0].mxu0
    %v1001 = vadd.f32 %v919, %v1000
    %v1002 = vpop.f32.mrb[0].mxu0
    %1003 = vmatprep.mubr.f32.mxu0 0.0
    %v1004 = vand.u32 %v748, 4294901760
    %v1005 = vsub.f32 %v748, %v1004
    %1006 = vmatmul.mubr.f32.gmra.mrb[0].mxu0 %v1005
    %v1007 = vpop.f32.mrb[0].mxu0
    %v1008 = vadd.f32 %v925, %v1007
    %v1009 = vpop.f32.mrb[0].mxu0
    %1010 = vdwg.mxu0
    %1011 = vmatprep.subr.mxu0 0.0
    %v1012 = vand.u32 %v750, 4294901760
    %1013 = vmatpush1.xpose.msra.mxu0 %v1012
    %1014 = vmatprep.subr.mxu0 0.0
    %v1015 = vand.u32 %v752, 4294901760
    %1016 = vmatpush1.xpose.msra.mxu0 %v1015
    %1017 = vmatprep.subr.mxu0 0.0
    %1018 = vmatpush1.xpose.msra.mxu0 0.0
    %1019 = vmatprep.subr.mxu0 0.0
    %1020 = vmatpush1.xpose.msra.mxu0 0.0
    %1021 = vmatprep.subr.mxu0 0.0
    %1022 = vmatpush1.xpose.msra.mxu0 0.0
    %1023 = vmatprep.subr.mxu0 0.0
    %1024 = vmatpush1.xpose.msra.mxu0 0.0
    %1025 = vmatprep.subr.mxu0 0.0
    %1026 = vmatpush1.xpose.msra.mxu0 0.0
    %1027 = vmatprep.subr.mxu0 0.0
    %1028 = vmatpush1.xpose.msra.mxu0 0.0
    %1029 = vmatprep.subr.mxu0 0.0
    %1030 = vmatpush1.xpose.msra.mxu0 0.0
    %1031 = vmatprep.subr.mxu0 0.0
    %1032 = vmatpush1.xpose.msra.mxu0 0.0
    %1033 = vmatprep.subr.mxu0 0.0
    %1034 = vmatpush1.xpose.msra.mxu0 0.0
    %1035 = vmatprep.subr.mxu0 0.0
    %1036 = vmatpush1.xpose.msra.mxu0 0.0
    %1037 = vmatprep.subr.mxu0 0.0
    %1038 = vmatpush1.xpose.msra.mxu0 0.0
    %1039 = vmatprep.subr.mxu0 0.0
    %1040 = vmatpush1.xpose.msra.mxu0 0.0
    %1041 = vmatprep.subr.mxu0 0.0
    %1042 = vmatpush1.xpose.msra.mxu0 0.0
    %1043 = vmatprep.subr.mxu0 0.0
    %1044 = vmatpush1.xpose.msra.mxu0 0.0
    %1045 = vmatprep.subr.mxu0 0.0
    %1046 = vmatpush1.xpose.msra.mxu0 0.0
    %1047 = vmatprep.subr.mxu0 0.0
    %1048 = vmatpush1.xpose.msra.mxu0 0.0
    %1049 = vmatprep.subr.mxu0 0.0
    %1050 = vmatpush1.xpose.msra.mxu0 0.0
    %1051 = vmatprep.subr.mxu0 0.0
    %1052 = vmatpush1.xpose.msra.mxu0 0.0
    %1053 = vmatprep.subr.mxu0 0.0
    %1054 = vmatpush1.xpose.msra.mxu0 0.0
    %1055 = vmatprep.subr.mxu0 0.0
    %1056 = vmatpush1.xpose.msra.mxu0 0.0
    %1057 = vmatprep.subr.mxu0 0.0
    %1058 = vmatpush1.xpose.msra.mxu0 0.0
    %1059 = vmatprep.subr.mxu0 0.0
    %1060 = vmatpush1.xpose.msra.mxu0 0.0
    %1061 = vmatprep.subr.mxu0 0.0
    %1062 = vmatpush1.xpose.msra.mxu0 0.0
    %1063 = vmatprep.subr.mxu0 0.0
    %1064 = vmatpush1.xpose.msra.mxu0 0.0
    %1065 = vmatprep.subr.mxu0 0.0
    %1066 = vmatpush1.xpose.msra.mxu0 0.0
    %1067 = vmatprep.subr.mxu0 0.0
    %1068 = vmatpush1.xpose.msra.mxu0 0.0
    %1069 = vmatprep.subr.mxu0 0.0
    %1070 = vmatpush1.xpose.msra.mxu0 0.0
    %1071 = vmatprep.subr.mxu0 0.0
    %1072 = vmatpush1.xpose.msra.mxu0 0.0
    %1073 = vmatprep.subr.mxu0 0.0
    %1074 = vmatpush1.xpose.msra.mxu0 0.0
    %1075 = vmatprep.subr.mxu0 0.0
    %1076 = vmatpush1.xpose.msra.mxu0 0.0
    %1077 = vmatprep.mubr.f32.mxu0 0.0
    %v1078 = vand.u32 %v746, 4294901760
    %v1079 = vsub.f32 %v746, %v1078
    %v1080 = vand.u32 %v1079, 4294901760
    %1081 = vmatmul.mubr.f32.gmra.mrb[0].mxu0 %v1080
    %v1082 = vpop.f32.mrb[0].mxu0
    %v1083 = vadd.f32 %v1001, %v1082
    %v1084 = vpop.f32.mrb[0].mxu0
    %1085 = vmatprep.mubr.f32.mxu0 0.0
    %v1086 = vand.u32 %v748, 4294901760
    %v1087 = vsub.f32 %v748, %v1086
    %v1088 = vand.u32 %v1087, 4294901760
    %1089 = vmatmul.mubr.f32.gmra.mrb[0].mxu0 %v1088
    %v1090 = vpop.f32.mrb[0].mxu0
    %v1091 = vadd.f32 %v1008, %v1090
    %v1092 = vpop.f32.mrb[0].mxu0
    %1093 = vdwg.mxu0
    %1094 = vmatprep.subr.mxu0 0.0
    %v1095 = vand.u32 %v750, 4294901760
    %v1096 = vsub.f32 %v750, %v1095
    %v1097 = vand.u32 %v1096, 4294901760
    %1098 = vmatpush1.xpose.msra.mxu0 %v1097
    %1099 = vmatprep.subr.mxu0 0.0
    %v1100 = vand.u32 %v752, 4294901760
    %v1101 = vsub.f32 %v752, %v1100
    %v1102 = vand.u32 %v1101, 4294901760
    %1103 = vmatpush1.xpose.msra.mxu0 %v1102
    %1104 = vmatprep.subr.mxu0 0.0
    %1105 = vmatpush1.xpose.msra.mxu0 0.0
    %1106 = vmatprep.subr.mxu0 0.0
    %1107 = vmatpush1.xpose.msra.mxu0 0.0
    %1108 = vmatprep.subr.mxu0 0.0
    %1109 = vmatpush1.xpose.msra.mxu0 0.0
    %1110 = vmatprep.subr.mxu0 0.0
    %1111 = vmatpush1.xpose.msra.mxu0 0.0
    %1112 = vmatprep.subr.mxu0 0.0
    %1113 = vmatpush1.xpose.msra.mxu0 0.0
    %1114 = vmatprep.subr.mxu0 0.0
    %1115 = vmatpush1.xpose.msra.mxu0 0.0
    %1116 = vmatprep.subr.mxu0 0.0
    %1117 = vmatpush1.xpose.msra.mxu0 0.0
    %1118 = vmatprep.subr.mxu0 0.0
    %1119 = vmatpush1.xpose.msra.mxu0 0.0
    %1120 = vmatprep.subr.mxu0 0.0
    %1121 = vmatpush1.xpose.msra.mxu0 0.0
    %1122 = vmatprep.subr.mxu0 0.0
    %1123 = vmatpush1.xpose.msra.mxu0 0.0
    %1124 = vmatprep.subr.mxu0 0.0
    %1125 = vmatpush1.xpose.msra.mxu0 0.0
    %1126 = vmatprep.subr.mxu0 0.0
    %1127 = vmatpush1.xpose.msra.mxu0 0.0
    %1128 = vmatprep.subr.mxu0 0.0
    %1129 = vmatpush1.xpose.msra.mxu0 0.0
    %1130 = vmatprep.subr.mxu0 0.0
    %1131 = vmatpush1.xpose.msra.mxu0 0.0
    %1132 = vmatprep.subr.mxu0 0.0
    %1133 = vmatpush1.xpose.msra.mxu0 0.0
    %1134 = vmatprep.subr.mxu0 0.0
    %1135 = vmatpush1.xpose.msra.mxu0 0.0
    %1136 = vmatprep.subr.mxu0 0.0
    %1137 = vmatpush1.xpose.msra.mxu0 0.0
    %1138 = vmatprep.subr.mxu0 0.0
    %1139 = vmatpush1.xpose.msra.mxu0 0.0
    %1140 = vmatprep.subr.mxu0 0.0
    %1141 = vmatpush1.xpose.msra.mxu0 0.0
    %1142 = vmatprep.subr.mxu0 0.0
    %1143 = vmatpush1.xpose.msra.mxu0 0.0
    %1144 = vmatprep.subr.mxu0 0.0
    %1145 = vmatpush1.xpose.msra.mxu0 0.0
    %1146 = vmatprep.subr.mxu0 0.0
    %1147 = vmatpush1.xpose.msra.mxu0 0.0
    %1148 = vmatprep.subr.mxu0 0.0
    %1149 = vmatpush1.xpose.msra.mxu0 0.0
    %1150 = vmatprep.subr.mxu0 0.0
    %1151 = vmatpush1.xpose.msra.mxu0 0.0
    %1152 = vmatprep.subr.mxu0 0.0
    %1153 = vmatpush1.xpose.msra.mxu0 0.0
    %1154 = vmatprep.subr.mxu0 0.0
    %1155 = vmatpush1.xpose.msra.mxu0 0.0
    %1156 = vmatprep.subr.mxu0 0.0
    %1157 = vmatpush1.xpose.msra.mxu0 0.0
    %1158 = vmatprep.subr.mxu0 0.0
    %1159 = vmatpush1.xpose.msra.mxu0 0.0
    %1160 = vmatprep.subr.mxu0 0.0
    %1161 = vmatpush1.xpose.msra.mxu0 0.0
    %1162 = vmatprep.subr.mxu0 0.0
    %1163 = vmatpush1.xpose.msra.mxu0 0.0
    %1164 = vmatprep.mubr.f32.mxu0 0.0
    %v1165 = vand.u32 %v746, 4294901760
    %1166 = vmatmul.mubr.f32.gmra.mrb[0].mxu0 %v1165
    %v1167 = vpop.f32.mrb[0].mxu0
    %v1168 = vadd.f32 %v1083, %v1167
    %v1169 = vpop.f32.mrb[0].mxu0
    %1170 = vmatprep.mubr.f32.mxu0 0.0
    %v1171 = vand.u32 %v748, 4294901760
    %1172 = vmatmul.mubr.f32.gmra.mrb[0].mxu0 %v1171
    %v1173 = vpop.f32.mrb[0].mxu0
    %v1174 = vadd.f32 %v1091, %v1173
    %v1175 = vpop.f32.mrb[0].mxu0
    %1176 = vdwg.mxu0
    %1177 = vmatprep.subr.mxu0 0.0
    %v1178 = vand.u32 %v750, 4294901760
    %1179 = vmatpush1.xpose.msra.mxu0 %v1178
    %1180 = vmatprep.subr.mxu0 0.0
    %v1181 = vand.u32 %v752, 4294901760
    %1182 = vmatpush1.xpose.msra.mxu0 %v1181
    %1183 = vmatprep.subr.mxu0 0.0
    %1184 = vmatpush1.xpose.msra.mxu0 0.0
    %1185 = vmatprep.subr.mxu0 0.0
    %1186 = vmatpush1.xpose.msra.mxu0 0.0
    %1187 = vmatprep.subr.mxu0 0.0
    %1188 = vmatpush1.xpose.msra.mxu0 0.0
    %1189 = vmatprep.subr.mxu0 0.0
    %1190 = vmatpush1.xpose.msra.mxu0 0.0
    %1191 = vmatprep.subr.mxu0 0.0
    %1192 = vmatpush1.xpose.msra.mxu0 0.0
    %1193 = vmatprep.subr.mxu0 0.0
    %1194 = vmatpush1.xpose.msra.mxu0 0.0
    %1195 = vmatprep.subr.mxu0 0.0
    %1196 = vmatpush1.xpose.msra.mxu0 0.0
    %1197 = vmatprep.subr.mxu0 0.0
    %1198 = vmatpush1.xpose.msra.mxu0 0.0
    %1199 = vmatprep.subr.mxu0 0.0
    %1200 = vmatpush1.xpose.msra.mxu0 0.0
    %1201 = vmatprep.subr.mxu0 0.0
    %1202 = vmatpush1.xpose.msra.mxu0 0.0
    %1203 = vmatprep.subr.mxu0 0.0
    %1204 = vmatpush1.xpose.msra.mxu0 0.0
    %1205 = vmatprep.subr.mxu0 0.0
    %1206 = vmatpush1.xpose.msra.mxu0 0.0
    %1207 = vmatprep.subr.mxu0 0.0
    %1208 = vmatpush1.xpose.msra.mxu0 0.0
    %1209 = vmatprep.subr.mxu0 0.0
    %1210 = vmatpush1.xpose.msra.mxu0 0.0
    %1211 = vmatprep.subr.mxu0 0.0
    %1212 = vmatpush1.xpose.msra.mxu0 0.0
    %1213 = vmatprep.subr.mxu0 0.0
    %1214 = vmatpush1.xpose.msra.mxu0 0.0
    %1215 = vmatprep.subr.mxu0 0.0
    %1216 = vmatpush1.xpose.msra.mxu0 0.0
    %1217 = vmatprep.subr.mxu0 0.0
    %1218 = vmatpush1.xpose.msra.mxu0 0.0
    %1219 = vmatprep.subr.mxu0 0.0
    %1220 = vmatpush1.xpose.msra.mxu0 0.0
    %1221 = vmatprep.subr.mxu0 0.0
    %1222 = vmatpush1.xpose.msra.mxu0 0.0
    %1223 = vmatprep.subr.mxu0 0.0
    %1224 = vmatpush1.xpose.msra.mxu0 0.0
    %1225 = vmatprep.subr.mxu0 0.0
    %1226 = vmatpush1.xpose.msra.mxu0 0.0
    %1227 = vmatprep.subr.mxu0 0.0
    %1228 = vmatpush1.xpose.msra.mxu0 0.0
    %1229 = vmatprep.subr.mxu0 0.0
    %1230 = vmatpush1.xpose.msra.mxu0 0.0
    %1231 = vmatprep.subr.mxu0 0.0
    %1232 = vmatpush1.xpose.msra.mxu0 0.0
    %1233 = vmatprep.subr.mxu0 0.0
    %1234 = vmatpush1.xpose.msra.mxu0 0.0
    %1235 = vmatprep.subr.mxu0 0.0
    %1236 = vmatpush1.xpose.msra.mxu0 0.0
    %1237 = vmatprep.subr.mxu0 0.0
    %1238 = vmatpush1.xpose.msra.mxu0 0.0
    %1239 = vmatprep.subr.mxu0 0.0
    %1240 = vmatpush1.xpose.msra.mxu0 0.0
    %1241 = vmatprep.subr.mxu0 0.0
    %1242 = vmatpush1.xpose.msra.mxu0 0.0
    %1243 = vmatprep.mubr.f32.mxu0 0.0
    %v1244 = vand.u32 %v746, 4294901760
    %1245 = vmatmul.mubr.f32.gmra.mrb[0].mxu0 %v1244
    %v1246 = vpop.f32.mrb[0].mxu0
    %v1247 = vadd.f32 %v1168, %v1246
    %v1248 = vpop.f32.mrb[0].mxu0
    %1249 = vmatprep.mubr.f32.mxu0 0.0
    %v1250 = vand.u32 %v748, 4294901760
    %1251 = vmatmul.mubr.f32.gmra.mrb[0].mxu0 %v1250
    %v1252 = vpop.f32.mrb[0].mxu0
    %v1253 = vadd.f32 %v1174, %v1252
    %v1254 = vpop.f32.mrb[0].mxu0
    %1255 = vdwg.mxu0
    %vm1256 = vcmask 130048
    %v1257 = vsel %vm1256, %v1247, -inf
    %1258 = vmax.xlane.f32.xlu0 %v1257
    %v1259 = vpop.xlane.xlu0 %1258
    %v1260 = vsel %vm1256, %v1253, -inf
    %1261 = vmax.xlane.f32.xlu0 %v1260
    %v1262 = vpop.xlane.xlu0 %1261
    %v1263 = vsub.f32 %v1247, %v1259
    %v1264 = vsub.f32 %v1253, %v1262
    %v1265 = vmul.f32 %v1263, 1.442695
    %v1266 = vpow.pop %v1265
    %v1267 = vmul.f32 %v1264, 1.442695
    %v1268 = vpow.pop %v1267
    %v1269 = vsel %vm1256, %v1266, 0.0
    %1270 = vadd.xlane.f32.xlu0 %v1269
    %v1271 = vpop.xlane.xlu0 %1270
    %v1272 = vsel %vm1256, %v1268, 0.0
    %1273 = vadd.xlane.f32.xlu0 %v1272
    %v1274 = vpop.xlane.xlu0 %1273
    %1277 = vrot.lane.b32.xlu0 %v692, 64
    %v1278 = vpop.permute.xlu0 %1277
    %1279 = vrot.lane.b32.xlu0 %v699, 64
    %v1280 = vpop.permute.xlu0 %1279
    %v1284 = vsel %vm1256, %v1266, 0
    %v1287 = vsel %vm1256, %v1268, 0
    %1289 = vmatprep.subr.mxu0 0.0
    %v1290 = vand.u32 %v1278, 4294901760
    %1291 = vmatpush1.msra.mxu0 %v1290
    %1292 = vmatprep.subr.mxu0 0.0
    %v1293 = vand.u32 %v1280, 4294901760
    %1294 = vmatpush1.msra.mxu0 %v1293
    %1295 = vmatprep.subr.mxu0 0.0
    %1296 = vmatpush1.msra.mxu0 0.0
    %1297 = vmatprep.subr.mxu0 0.0
    %1298 = vmatpush1.msra.mxu0 0.0
    %1299 = vmatprep.subr.mxu0 0.0
    %1300 = vmatpush1.msra.mxu0 0.0
    %1301 = vmatprep.subr.mxu0 0.0
    %1302 = vmatpush1.msra.mxu0 0.0
    %1303 = vmatprep.subr.mxu0 0.0
    %1304 = vmatpush1.msra.mxu0 0.0
    %1305 = vmatprep.subr.mxu0 0.0
    %1306 = vmatpush1.msra.mxu0 0.0
    %1307 = vmatprep.subr.mxu0 0.0
    %1308 = vmatpush1.msra.mxu0 0.0
    %1309 = vmatprep.subr.mxu0 0.0
    %1310 = vmatpush1.msra.mxu0 0.0
    %1311 = vmatprep.subr.mxu0 0.0
    %1312 = vmatpush1.msra.mxu0 0.0
    %1313 = vmatprep.subr.mxu0 0.0
    %1314 = vmatpush1.msra.mxu0 0.0
    %1315 = vmatprep.subr.mxu0 0.0
    %1316 = vmatpush1.msra.mxu0 0.0
    %1317 = vmatprep.subr.mxu0 0.0
    %1318 = vmatpush1.msra.mxu0 0.0
    %1319 = vmatprep.subr.mxu0 0.0
    %1320 = vmatpush1.msra.mxu0 0.0
    %1321 = vmatprep.subr.mxu0 0.0
    %1322 = vmatpush1.msra.mxu0 0.0
    %1323 = vmatprep.subr.mxu0 0.0
    %1324 = vmatpush1.msra.mxu0 0.0
    %1325 = vmatprep.subr.mxu0 0.0
    %1326 = vmatpush1.msra.mxu0 0.0
    %1327 = vmatprep.subr.mxu0 0.0
    %1328 = vmatpush1.msra.mxu0 0.0
    %1329 = vmatprep.subr.mxu0 0.0
    %1330 = vmatpush1.msra.mxu0 0.0
    %1331 = vmatprep.subr.mxu0 0.0
    %1332 = vmatpush1.msra.mxu0 0.0
    %1333 = vmatprep.subr.mxu0 0.0
    %1334 = vmatpush1.msra.mxu0 0.0
    %1335 = vmatprep.subr.mxu0 0.0
    %1336 = vmatpush1.msra.mxu0 0.0
    %1337 = vmatprep.subr.mxu0 0.0
    %1338 = vmatpush1.msra.mxu0 0.0
    %1339 = vmatprep.subr.mxu0 0.0
    %1340 = vmatpush1.msra.mxu0 0.0
    %1341 = vmatprep.subr.mxu0 0.0
    %1342 = vmatpush1.msra.mxu0 0.0
    %1343 = vmatprep.subr.mxu0 0.0
    %1344 = vmatpush1.msra.mxu0 0.0
    %1345 = vmatprep.subr.mxu0 0.0
    %1346 = vmatpush1.msra.mxu0 0.0
    %1347 = vmatprep.subr.mxu0 0.0
    %1348 = vmatpush1.msra.mxu0 0.0
    %1349 = vmatprep.subr.mxu0 0.0
    %1350 = vmatpush1.msra.mxu0 0.0
    %1351 = vmatprep.subr.mxu0 0.0
    %1352 = vmatpush1.msra.mxu0 0.0
    %1353 = vmatprep.subr.mxu0 0.0
    %1354 = vmatpush1.msra.mxu0 0.0
    %1355 = vmatprep.mubr.f32.mxu0 0.0
    %v1356 = vand.u32 %v1284, 4294901760
    %v1357 = vsub.f32 %v1284, %v1356
    %v1358 = vand.u32 %v1357, 4294901760
    %v1359 = vsub.f32 %v1357, %v1358
    %v1360 = vand.u32 %v1359, 4294901760
    %1361 = vmatmul.mubr.f32.gmra.mrb[0].mxu0 %v1360
    %v1362 = vpop.f32.mrb[0].mxu0
    %v1363 = vadd.f32 0.0, %v1362
    %v1364 = vpop.f32.mrb[0].mxu0
    %1365 = vmatprep.mubr.f32.mxu0 0.0
    %v1366 = vand.u32 %v1287, 4294901760
    %v1367 = vsub.f32 %v1287, %v1366
    %v1368 = vand.u32 %v1367, 4294901760
    %v1369 = vsub.f32 %v1367, %v1368
    %v1370 = vand.u32 %v1369, 4294901760
    %1371 = vmatmul.mubr.f32.gmra.mrb[0].mxu0 %v1370
    %v1372 = vpop.f32.mrb[0].mxu0
    %v1373 = vadd.f32 0.0, %v1372
    %v1374 = vpop.f32.mrb[0].mxu0
    %1375 = vdwg.mxu0
    %1376 = vmatprep.subr.mxu0 0.0
    %v1377 = vand.u32 %v1278, 4294901760
    %v1378 = vsub.f32 %v1278, %v1377
    %v1379 = vand.u32 %v1378, 4294901760
    %v1380 = vsub.f32 %v1378, %v1379
    %v1381 = vand.u32 %v1380, 4294901760
    %1382 = vmatpush1.msra.mxu0 %v1381
    %1383 = vmatprep.subr.mxu0 0.0
    %v1384 = vand.u32 %v1280, 4294901760
    %v1385 = vsub.f32 %v1280, %v1384
    %v1386 = vand.u32 %v1385, 4294901760
    %v1387 = vsub.f32 %v1385, %v1386
    %v1388 = vand.u32 %v1387, 4294901760
    %1389 = vmatpush1.msra.mxu0 %v1388
    %1390 = vmatprep.subr.mxu0 0.0
    %1391 = vmatpush1.msra.mxu0 0.0
    %1392 = vmatprep.subr.mxu0 0.0
    %1393 = vmatpush1.msra.mxu0 0.0
    %1394 = vmatprep.subr.mxu0 0.0
    %1395 = vmatpush1.msra.mxu0 0.0
    %1396 = vmatprep.subr.mxu0 0.0
    %1397 = vmatpush1.msra.mxu0 0.0
    %1398 = vmatprep.subr.mxu0 0.0
    %1399 = vmatpush1.msra.mxu0 0.0
    %1400 = vmatprep.subr.mxu0 0.0
    %1401 = vmatpush1.msra.mxu0 0.0
    %1402 = vmatprep.subr.mxu0 0.0
    %1403 = vmatpush1.msra.mxu0 0.0
    %1404 = vmatprep.subr.mxu0 0.0
    %1405 = vmatpush1.msra.mxu0 0.0
    %1406 = vmatprep.subr.mxu0 0.0
    %1407 = vmatpush1.msra.mxu0 0.0
    %1408 = vmatprep.subr.mxu0 0.0
    %1409 = vmatpush1.msra.mxu0 0.0
    %1410 = vmatprep.subr.mxu0 0.0
    %1411 = vmatpush1.msra.mxu0 0.0
    %1412 = vmatprep.subr.mxu0 0.0
    %1413 = vmatpush1.msra.mxu0 0.0
    %1414 = vmatprep.subr.mxu0 0.0
    %1415 = vmatpush1.msra.mxu0 0.0
    %1416 = vmatprep.subr.mxu0 0.0
    %1417 = vmatpush1.msra.mxu0 0.0
    %1418 = vmatprep.subr.mxu0 0.0
    %1419 = vmatpush1.msra.mxu0 0.0
    %1420 = vmatprep.subr.mxu0 0.0
    %1421 = vmatpush1.msra.mxu0 0.0
    %1422 = vmatprep.subr.mxu0 0.0
    %1423 = vmatpush1.msra.mxu0 0.0
    %1424 = vmatprep.subr.mxu0 0.0
    %1425 = vmatpush1.msra.mxu0 0.0
    %1426 = vmatprep.subr.mxu0 0.0
    %1427 = vmatpush1.msra.mxu0 0.0
    %1428 = vmatprep.subr.mxu0 0.0
    %1429 = vmatpush1.msra.mxu0 0.0
    %1430 = vmatprep.subr.mxu0 0.0
    %1431 = vmatpush1.msra.mxu0 0.0
    %1432 = vmatprep.subr.mxu0 0.0
    %1433 = vmatpush1.msra.mxu0 0.0
    %1434 = vmatprep.subr.mxu0 0.0
    %1435 = vmatpush1.msra.mxu0 0.0
    %1436 = vmatprep.subr.mxu0 0.0
    %1437 = vmatpush1.msra.mxu0 0.0
    %1438 = vmatprep.subr.mxu0 0.0
    %1439 = vmatpush1.msra.mxu0 0.0
    %1440 = vmatprep.subr.mxu0 0.0
    %1441 = vmatpush1.msra.mxu0 0.0
    %1442 = vmatprep.subr.mxu0 0.0
    %1443 = vmatpush1.msra.mxu0 0.0
    %1444 = vmatprep.subr.mxu0 0.0
    %1445 = vmatpush1.msra.mxu0 0.0
    %1446 = vmatprep.subr.mxu0 0.0
    %1447 = vmatpush1.msra.mxu0 0.0
    %1448 = vmatprep.subr.mxu0 0.0
    %1449 = vmatpush1.msra.mxu0 0.0
    %1450 = vmatprep.mubr.f32.mxu0 0.0
    %v1451 = vand.u32 %v1284, 4294901760
    %1452 = vmatmul.mubr.f32.gmra.mrb[0].mxu0 %v1451
    %v1453 = vpop.f32.mrb[0].mxu0
    %v1454 = vadd.f32 %v1363, %v1453
    %v1455 = vpop.f32.mrb[0].mxu0
    %1456 = vmatprep.mubr.f32.mxu0 0.0
    %v1457 = vand.u32 %v1287, 4294901760
    %1458 = vmatmul.mubr.f32.gmra.mrb[0].mxu0 %v1457
    %v1459 = vpop.f32.mrb[0].mxu0
    %v1460 = vadd.f32 %v1373, %v1459
    %v1461 = vpop.f32.mrb[0].mxu0
    %1462 = vdwg.mxu0
    %1463 = vmatprep.subr.mxu0 0.0
    %v1464 = vand.u32 %v1278, 4294901760
    %v1465 = vsub.f32 %v1278, %v1464
    %1466 = vmatpush1.msra.mxu0 %v1465
    %1467 = vmatprep.subr.mxu0 0.0
    %v1468 = vand.u32 %v1280, 4294901760
    %v1469 = vsub.f32 %v1280, %v1468
    %1470 = vmatpush1.msra.mxu0 %v1469
    %1471 = vmatprep.subr.mxu0 0.0
    %1472 = vmatpush1.msra.mxu0 0.0
    %1473 = vmatprep.subr.mxu0 0.0
    %1474 = vmatpush1.msra.mxu0 0.0
    %1475 = vmatprep.subr.mxu0 0.0
    %1476 = vmatpush1.msra.mxu0 0.0
    %1477 = vmatprep.subr.mxu0 0.0
    %1478 = vmatpush1.msra.mxu0 0.0
    %1479 = vmatprep.subr.mxu0 0.0
    %1480 = vmatpush1.msra.mxu0 0.0
    %1481 = vmatprep.subr.mxu0 0.0
    %1482 = vmatpush1.msra.mxu0 0.0
    %1483 = vmatprep.subr.mxu0 0.0
    %1484 = vmatpush1.msra.mxu0 0.0
    %1485 = vmatprep.subr.mxu0 0.0
    %1486 = vmatpush1.msra.mxu0 0.0
    %1487 = vmatprep.subr.mxu0 0.0
    %1488 = vmatpush1.msra.mxu0 0.0
    %1489 = vmatprep.subr.mxu0 0.0
    %1490 = vmatpush1.msra.mxu0 0.0
    %1491 = vmatprep.subr.mxu0 0.0
    %1492 = vmatpush1.msra.mxu0 0.0
    %1493 = vmatprep.subr.mxu0 0.0
    %1494 = vmatpush1.msra.mxu0 0.0
    %1495 = vmatprep.subr.mxu0 0.0
    %1496 = vmatpush1.msra.mxu0 0.0
    %1497 = vmatprep.subr.mxu0 0.0
    %1498 = vmatpush1.msra.mxu0 0.0
    %1499 = vmatprep.subr.mxu0 0.0
    %1500 = vmatpush1.msra.mxu0 0.0
    %1501 = vmatprep.subr.mxu0 0.0
    %1502 = vmatpush1.msra.mxu0 0.0
    %1503 = vmatprep.subr.mxu0 0.0
    %1504 = vmatpush1.msra.mxu0 0.0
    %1505 = vmatprep.subr.mxu0 0.0
    %1506 = vmatpush1.msra.mxu0 0.0
    %1507 = vmatprep.subr.mxu0 0.0
    %1508 = vmatpush1.msra.mxu0 0.0
    %1509 = vmatprep.subr.mxu0 0.0
    %1510 = vmatpush1.msra.mxu0 0.0
    %1511 = vmatprep.subr.mxu0 0.0
    %1512 = vmatpush1.msra.mxu0 0.0
    %1513 = vmatprep.subr.mxu0 0.0
    %1514 = vmatpush1.msra.mxu0 0.0
    %1515 = vmatprep.subr.mxu0 0.0
    %1516 = vmatpush1.msra.mxu0 0.0
    %1517 = vmatprep.subr.mxu0 0.0
    %1518 = vmatpush1.msra.mxu0 0.0
    %1519 = vmatprep.subr.mxu0 0.0
    %1520 = vmatpush1.msra.mxu0 0.0
    %1521 = vmatprep.subr.mxu0 0.0
    %1522 = vmatpush1.msra.mxu0 0.0
    %1523 = vmatprep.subr.mxu0 0.0
    %1524 = vmatpush1.msra.mxu0 0.0
    %1525 = vmatprep.subr.mxu0 0.0
    %1526 = vmatpush1.msra.mxu0 0.0
    %1527 = vmatprep.subr.mxu0 0.0
    %1528 = vmatpush1.msra.mxu0 0.0
    %1529 = vmatprep.subr.mxu0 0.0
    %1530 = vmatpush1.msra.mxu0 0.0
    %1531 = vmatprep.mubr.f32.mxu0 0.0
    %v1532 = vand.u32 %v1284, 4294901760
    %v1533 = vsub.f32 %v1284, %v1532
    %1534 = vmatmul.mubr.f32.gmra.mrb[0].mxu0 %v1533
    %v1535 = vpop.f32.mrb[0].mxu0
    %v1536 = vadd.f32 %v1454, %v1535
    %v1537 = vpop.f32.mrb[0].mxu0
    %1538 = vmatprep.mubr.f32.mxu0 0.0
    %v1539 = vand.u32 %v1287, 4294901760
    %v1540 = vsub.f32 %v1287, %v1539
    %1541 = vmatmul.mubr.f32.gmra.mrb[0].mxu0 %v1540
    %v1542 = vpop.f32.mrb[0].mxu0
    %v1543 = vadd.f32 %v1460, %v1542
    %v1544 = vpop.f32.mrb[0].mxu0
    %1545 = vdwg.mxu0
    %1546 = vmatprep.subr.mxu0 0.0
    %v1547 = vand.u32 %v1278, 4294901760
    %1548 = vmatpush1.msra.mxu0 %v1547
    %1549 = vmatprep.subr.mxu0 0.0
    %v1550 = vand.u32 %v1280, 4294901760
    %1551 = vmatpush1.msra.mxu0 %v1550
    %1552 = vmatprep.subr.mxu0 0.0
    %1553 = vmatpush1.msra.mxu0 0.0
    %1554 = vmatprep.subr.mxu0 0.0
    %1555 = vmatpush1.msra.mxu0 0.0
    %1556 = vmatprep.subr.mxu0 0.0
    %1557 = vmatpush1.msra.mxu0 0.0
    %1558 = vmatprep.subr.mxu0 0.0
    %1559 = vmatpush1.msra.mxu0 0.0
    %1560 = vmatprep.subr.mxu0 0.0
    %1561 = vmatpush1.msra.mxu0 0.0
    %1562 = vmatprep.subr.mxu0 0.0
    %1563 = vmatpush1.msra.mxu0 0.0
    %1564 = vmatprep.subr.mxu0 0.0
    %1565 = vmatpush1.msra.mxu0 0.0
    %1566 = vmatprep.subr.mxu0 0.0
    %1567 = vmatpush1.msra.mxu0 0.0
    %1568 = vmatprep.subr.mxu0 0.0
    %1569 = vmatpush1.msra.mxu0 0.0
    %1570 = vmatprep.subr.mxu0 0.0
    %1571 = vmatpush1.msra.mxu0 0.0
    %1572 = vmatprep.subr.mxu0 0.0
    %1573 = vmatpush1.msra.mxu0 0.0
    %1574 = vmatprep.subr.mxu0 0.0
    %1575 = vmatpush1.msra.mxu0 0.0
    %1576 = vmatprep.subr.mxu0 0.0
    %1577 = vmatpush1.msra.mxu0 0.0
    %1578 = vmatprep.subr.mxu0 0.0
    %1579 = vmatpush1.msra.mxu0 0.0
    %1580 = vmatprep.subr.mxu0 0.0
    %1581 = vmatpush1.msra.mxu0 0.0
    %1582 = vmatprep.subr.mxu0 0.0
    %1583 = vmatpush1.msra.mxu0 0.0
    %1584 = vmatprep.subr.mxu0 0.0
    %1585 = vmatpush1.msra.mxu0 0.0
    %1586 = vmatprep.subr.mxu0 0.0
    %1587 = vmatpush1.msra.mxu0 0.0
    %1588 = vmatprep.subr.mxu0 0.0
    %1589 = vmatpush1.msra.mxu0 0.0
    %1590 = vmatprep.subr.mxu0 0.0
    %1591 = vmatpush1.msra.mxu0 0.0
    %1592 = vmatprep.subr.mxu0 0.0
    %1593 = vmatpush1.msra.mxu0 0.0
    %1594 = vmatprep.subr.mxu0 0.0
    %1595 = vmatpush1.msra.mxu0 0.0
    %1596 = vmatprep.subr.mxu0 0.0
    %1597 = vmatpush1.msra.mxu0 0.0
    %1598 = vmatprep.subr.mxu0 0.0
    %1599 = vmatpush1.msra.mxu0 0.0
    %1600 = vmatprep.subr.mxu0 0.0
    %1601 = vmatpush1.msra.mxu0 0.0
    %1602 = vmatprep.subr.mxu0 0.0
    %1603 = vmatpush1.msra.mxu0 0.0
    %1604 = vmatprep.subr.mxu0 0.0
    %1605 = vmatpush1.msra.mxu0 0.0
    %1606 = vmatprep.subr.mxu0 0.0
    %1607 = vmatpush1.msra.mxu0 0.0
    %1608 = vmatprep.subr.mxu0 0.0
    %1609 = vmatpush1.msra.mxu0 0.0
    %1610 = vmatprep.subr.mxu0 0.0
    %1611 = vmatpush1.msra.mxu0 0.0
    %1612 = vmatprep.mubr.f32.mxu0 0.0
    %v1613 = vand.u32 %v1284, 4294901760
    %v1614 = vsub.f32 %v1284, %v1613
    %v1615 = vand.u32 %v1614, 4294901760
    %1616 = vmatmul.mubr.f32.gmra.mrb[0].mxu0 %v1615
    %v1617 = vpop.f32.mrb[0].mxu0
    %v1618 = vadd.f32 %v1536, %v1617
    %v1619 = vpop.f32.mrb[0].mxu0
    %1620 = vmatprep.mubr.f32.mxu0 0.0
    %v1621 = vand.u32 %v1287, 4294901760
    %v1622 = vsub.f32 %v1287, %v1621
    %v1623 = vand.u32 %v1622, 4294901760
    %1624 = vmatmul.mubr.f32.gmra.mrb[0].mxu0 %v1623
    %v1625 = vpop.f32.mrb[0].mxu0
    %v1626 = vadd.f32 %v1543, %v1625
    %v1627 = vpop.f32.mrb[0].mxu0
    %1628 = vdwg.mxu0
    %1629 = vmatprep.subr.mxu0 0.0
    %v1630 = vand.u32 %v1278, 4294901760
    %v1631 = vsub.f32 %v1278, %v1630
    %v1632 = vand.u32 %v1631, 4294901760
    %1633 = vmatpush1.msra.mxu0 %v1632
    %1634 = vmatprep.subr.mxu0 0.0
    %v1635 = vand.u32 %v1280, 4294901760
    %v1636 = vsub.f32 %v1280, %v1635
    %v1637 = vand.u32 %v1636, 4294901760
    %1638 = vmatpush1.msra.mxu0 %v1637
    %1639 = vmatprep.subr.mxu0 0.0
    %1640 = vmatpush1.msra.mxu0 0.0
    %1641 = vmatprep.subr.mxu0 0.0
    %1642 = vmatpush1.msra.mxu0 0.0
    %1643 = vmatprep.subr.mxu0 0.0
    %1644 = vmatpush1.msra.mxu0 0.0
    %1645 = vmatprep.subr.mxu0 0.0
    %1646 = vmatpush1.msra.mxu0 0.0
    %1647 = vmatprep.subr.mxu0 0.0
    %1648 = vmatpush1.msra.mxu0 0.0
    %1649 = vmatprep.subr.mxu0 0.0
    %1650 = vmatpush1.msra.mxu0 0.0
    %1651 = vmatprep.subr.mxu0 0.0
    %1652 = vmatpush1.msra.mxu0 0.0
    %1653 = vmatprep.subr.mxu0 0.0
    %1654 = vmatpush1.msra.mxu0 0.0
    %1655 = vmatprep.subr.mxu0 0.0
    %1656 = vmatpush1.msra.mxu0 0.0
    %1657 = vmatprep.subr.mxu0 0.0
    %1658 = vmatpush1.msra.mxu0 0.0
    %1659 = vmatprep.subr.mxu0 0.0
    %1660 = vmatpush1.msra.mxu0 0.0
    %1661 = vmatprep.subr.mxu0 0.0
    %1662 = vmatpush1.msra.mxu0 0.0
    %1663 = vmatprep.subr.mxu0 0.0
    %1664 = vmatpush1.msra.mxu0 0.0
    %1665 = vmatprep.subr.mxu0 0.0
    %1666 = vmatpush1.msra.mxu0 0.0
    %1667 = vmatprep.subr.mxu0 0.0
    %1668 = vmatpush1.msra.mxu0 0.0
    %1669 = vmatprep.subr.mxu0 0.0
    %1670 = vmatpush1.msra.mxu0 0.0
    %1671 = vmatprep.subr.mxu0 0.0
    %1672 = vmatpush1.msra.mxu0 0.0
    %1673 = vmatprep.subr.mxu0 0.0
    %1674 = vmatpush1.msra.mxu0 0.0
    %1675 = vmatprep.subr.mxu0 0.0
    %1676 = vmatpush1.msra.mxu0 0.0
    %1677 = vmatprep.subr.mxu0 0.0
    %1678 = vmatpush1.msra.mxu0 0.0
    %1679 = vmatprep.subr.mxu0 0.0
    %1680 = vmatpush1.msra.mxu0 0.0
    %1681 = vmatprep.subr.mxu0 0.0
    %1682 = vmatpush1.msra.mxu0 0.0
    %1683 = vmatprep.subr.mxu0 0.0
    %1684 = vmatpush1.msra.mxu0 0.0
    %1685 = vmatprep.subr.mxu0 0.0
    %1686 = vmatpush1.msra.mxu0 0.0
    %1687 = vmatprep.subr.mxu0 0.0
    %1688 = vmatpush1.msra.mxu0 0.0
    %1689 = vmatprep.subr.mxu0 0.0
    %1690 = vmatpush1.msra.mxu0 0.0
    %1691 = vmatprep.subr.mxu0 0.0
    %1692 = vmatpush1.msra.mxu0 0.0
    %1693 = vmatprep.subr.mxu0 0.0
    %1694 = vmatpush1.msra.mxu0 0.0
    %1695 = vmatprep.subr.mxu0 0.0
    %1696 = vmatpush1.msra.mxu0 0.0
    %1697 = vmatprep.subr.mxu0 0.0
    %1698 = vmatpush1.msra.mxu0 0.0
    %1699 = vmatprep.mubr.f32.mxu0 0.0
    %v1700 = vand.u32 %v1284, 4294901760
    %1701 = vmatmul.mubr.f32.gmra.mrb[0].mxu0 %v1700
    %v1702 = vpop.f32.mrb[0].mxu0
    %v1703 = vadd.f32 %v1618, %v1702
    %v1704 = vpop.f32.mrb[0].mxu0
    %1705 = vmatprep.mubr.f32.mxu0 0.0
    %v1706 = vand.u32 %v1287, 4294901760
    %1707 = vmatmul.mubr.f32.gmra.mrb[0].mxu0 %v1706
    %v1708 = vpop.f32.mrb[0].mxu0
    %v1709 = vadd.f32 %v1626, %v1708
    %v1710 = vpop.f32.mrb[0].mxu0
    %1711 = vdwg.mxu0
    %1712 = vmatprep.subr.mxu0 0.0
    %v1713 = vand.u32 %v1278, 4294901760
    %1714 = vmatpush1.msra.mxu0 %v1713
    %1715 = vmatprep.subr.mxu0 0.0
    %v1716 = vand.u32 %v1280, 4294901760
    %1717 = vmatpush1.msra.mxu0 %v1716
    %1718 = vmatprep.subr.mxu0 0.0
    %1719 = vmatpush1.msra.mxu0 0.0
    %1720 = vmatprep.subr.mxu0 0.0
    %1721 = vmatpush1.msra.mxu0 0.0
    %1722 = vmatprep.subr.mxu0 0.0
    %1723 = vmatpush1.msra.mxu0 0.0
    %1724 = vmatprep.subr.mxu0 0.0
    %1725 = vmatpush1.msra.mxu0 0.0
    %1726 = vmatprep.subr.mxu0 0.0
    %1727 = vmatpush1.msra.mxu0 0.0
    %1728 = vmatprep.subr.mxu0 0.0
    %1729 = vmatpush1.msra.mxu0 0.0
    %1730 = vmatprep.subr.mxu0 0.0
    %1731 = vmatpush1.msra.mxu0 0.0
    %1732 = vmatprep.subr.mxu0 0.0
    %1733 = vmatpush1.msra.mxu0 0.0
    %1734 = vmatprep.subr.mxu0 0.0
    %1735 = vmatpush1.msra.mxu0 0.0
    %1736 = vmatprep.subr.mxu0 0.0
    %1737 = vmatpush1.msra.mxu0 0.0
    %1738 = vmatprep.subr.mxu0 0.0
    %1739 = vmatpush1.msra.mxu0 0.0
    %1740 = vmatprep.subr.mxu0 0.0
    %1741 = vmatpush1.msra.mxu0 0.0
    %1742 = vmatprep.subr.mxu0 0.0
    %1743 = vmatpush1.msra.mxu0 0.0
    %1744 = vmatprep.subr.mxu0 0.0
    %1745 = vmatpush1.msra.mxu0 0.0
    %1746 = vmatprep.subr.mxu0 0.0
    %1747 = vmatpush1.msra.mxu0 0.0
    %1748 = vmatprep.subr.mxu0 0.0
    %1749 = vmatpush1.msra.mxu0 0.0
    %1750 = vmatprep.subr.mxu0 0.0
    %1751 = vmatpush1.msra.mxu0 0.0
    %1752 = vmatprep.subr.mxu0 0.0
    %1753 = vmatpush1.msra.mxu0 0.0
    %1754 = vmatprep.subr.mxu0 0.0
    %1755 = vmatpush1.msra.mxu0 0.0
    %1756 = vmatprep.subr.mxu0 0.0
    %1757 = vmatpush1.msra.mxu0 0.0
    %1758 = vmatprep.subr.mxu0 0.0
    %1759 = vmatpush1.msra.mxu0 0.0
    %1760 = vmatprep.subr.mxu0 0.0
    %1761 = vmatpush1.msra.mxu0 0.0
    %1762 = vmatprep.subr.mxu0 0.0
    %1763 = vmatpush1.msra.mxu0 0.0
    %1764 = vmatprep.subr.mxu0 0.0
    %1765 = vmatpush1.msra.mxu0 0.0
    %1766 = vmatprep.subr.mxu0 0.0
    %1767 = vmatpush1.msra.mxu0 0.0
    %1768 = vmatprep.subr.mxu0 0.0
    %1769 = vmatpush1.msra.mxu0 0.0
    %1770 = vmatprep.subr.mxu0 0.0
    %1771 = vmatpush1.msra.mxu0 0.0
    %1772 = vmatprep.subr.mxu0 0.0
    %1773 = vmatpush1.msra.mxu0 0.0
    %1774 = vmatprep.subr.mxu0 0.0
    %1775 = vmatpush1.msra.mxu0 0.0
    %1776 = vmatprep.subr.mxu0 0.0
    %1777 = vmatpush1.msra.mxu0 0.0
    %1778 = vmatprep.mubr.f32.mxu0 0.0
    %v1779 = vand.u32 %v1284, 4294901760
    %1780 = vmatmul.mubr.f32.gmra.mrb[0].mxu0 %v1779
    %v1781 = vpop.f32.mrb[0].mxu0
    %v1782 = vadd.f32 %v1703, %v1781
    %v1783 = vpop.f32.mrb[0].mxu0
    %1784 = vmatprep.mubr.f32.mxu0 0.0
    %v1785 = vand.u32 %v1287, 4294901760
    %1786 = vmatmul.mubr.f32.gmra.mrb[0].mxu0 %v1785
    %v1787 = vpop.f32.mrb[0].mxu0
    %v1788 = vadd.f32 %v1709, %v1787
    %v1789 = vpop.f32.mrb[0].mxu0
    %1790 = vdwg.mxu0
    %v1791 = vrcp.pop %v1271
    %v1792 = vmul.f32 %v1782, %v1791
    %v1793 = vrcp.pop %v1274
    %v1794 = vmul.f32 %v1788, %v1793
    %v1795 = vld [vmem:[#allocation7] sm:$0xff]
    %1796 = vrot.lane.b32.xlu0 %v737, 120
    %v1797 = vpop.permute.xlu0 %1796
    %1798 = vrot.lane.b32.xlu0 %v738, 120
    %v1799 = vpop.permute.xlu0 %1798
    %1800 = vrot.lane.b32.xlu0 %v737, 88
    %v1801 = vpop.permute.xlu0 %1800
    %1802 = vrot.lane.b32.xlu0 %v738, 88
    %v1803 = vpop.permute.xlu0 %1802
    %v1804 = vsel %vm745, %v1797, 0
    %v1806 = vsel %vm745, %v1799, 0
    %v1808 = vsel %vm745, %v1801, 0
    %v1810 = vsel %vm745, %v1803, 0
    %1812 = vmatprep.subr.mxu0 0.0
    %v1813 = vand.u32 %v1808, 4294901760
    %1814 = vmatpush1.xpose.msra.mxu0 %v1813
    %1815 = vmatprep.subr.mxu0 0.0
    %v1816 = vand.u32 %v1810, 4294901760
    %1817 = vmatpush1.xpose.msra.mxu0 %v1816
    %1818 = vmatprep.subr.mxu0 0.0
    %1819 = vmatpush1.xpose.msra.mxu0 0.0
    %1820 = vmatprep.subr.mxu0 0.0
    %1821 = vmatpush1.xpose.msra.mxu0 0.0
    %1822 = vmatprep.subr.mxu0 0.0
    %1823 = vmatpush1.xpose.msra.mxu0 0.0
    %1824 = vmatprep.subr.mxu0 0.0
    %1825 = vmatpush1.xpose.msra.mxu0 0.0
    %1826 = vmatprep.subr.mxu0 0.0
    %1827 = vmatpush1.xpose.msra.mxu0 0.0
    %1828 = vmatprep.subr.mxu0 0.0
    %1829 = vmatpush1.xpose.msra.mxu0 0.0
    %1830 = vmatprep.subr.mxu0 0.0
    %1831 = vmatpush1.xpose.msra.mxu0 0.0
    %1832 = vmatprep.subr.mxu0 0.0
    %1833 = vmatpush1.xpose.msra.mxu0 0.0
    %1834 = vmatprep.subr.mxu0 0.0
    %1835 = vmatpush1.xpose.msra.mxu0 0.0
    %1836 = vmatprep.subr.mxu0 0.0
    %1837 = vmatpush1.xpose.msra.mxu0 0.0
    %1838 = vmatprep.subr.mxu0 0.0
    %1839 = vmatpush1.xpose.msra.mxu0 0.0
    %1840 = vmatprep.subr.mxu0 0.0
    %1841 = vmatpush1.xpose.msra.mxu0 0.0
    %1842 = vmatprep.subr.mxu0 0.0
    %1843 = vmatpush1.xpose.msra.mxu0 0.0
    %1844 = vmatprep.subr.mxu0 0.0
    %1845 = vmatpush1.xpose.msra.mxu0 0.0
    %1846 = vmatprep.subr.mxu0 0.0
    %1847 = vmatpush1.xpose.msra.mxu0 0.0
    %1848 = vmatprep.subr.mxu0 0.0
    %1849 = vmatpush1.xpose.msra.mxu0 0.0
    %1850 = vmatprep.subr.mxu0 0.0
    %1851 = vmatpush1.xpose.msra.mxu0 0.0
    %1852 = vmatprep.subr.mxu0 0.0
    %1853 = vmatpush1.xpose.msra.mxu0 0.0
    %1854 = vmatprep.subr.mxu0 0.0
    %1855 = vmatpush1.xpose.msra.mxu0 0.0
    %1856 = vmatprep.subr.mxu0 0.0
    %1857 = vmatpush1.xpose.msra.mxu0 0.0
    %1858 = vmatprep.subr.mxu0 0.0
    %1859 = vmatpush1.xpose.msra.mxu0 0.0
    %1860 = vmatprep.subr.mxu0 0.0
    %1861 = vmatpush1.xpose.msra.mxu0 0.0
    %1862 = vmatprep.subr.mxu0 0.0
    %1863 = vmatpush1.xpose.msra.mxu0 0.0
    %1864 = vmatprep.subr.mxu0 0.0
    %1865 = vmatpush1.xpose.msra.mxu0 0.0
    %1866 = vmatprep.subr.mxu0 0.0
    %1867 = vmatpush1.xpose.msra.mxu0 0.0
    %1868 = vmatprep.subr.mxu0 0.0
    %1869 = vmatpush1.xpose.msra.mxu0 0.0
    %1870 = vmatprep.subr.mxu0 0.0
    %1871 = vmatpush1.xpose.msra.mxu0 0.0
    %1872 = vmatprep.subr.mxu0 0.0
    %1873 = vmatpush1.xpose.msra.mxu0 0.0
    %1874 = vmatprep.subr.mxu0 0.0
    %1875 = vmatpush1.xpose.msra.mxu0 0.0
    %1876 = vmatprep.subr.mxu0 0.0
    %1877 = vmatpush1.xpose.msra.mxu0 0.0
    %1878 = vmatprep.mubr.f32.mxu0 0.0
    %v1879 = vand.u32 %v1804, 4294901760
    %v1880 = vsub.f32 %v1804, %v1879
    %v1881 = vand.u32 %v1880, 4294901760
    %v1882 = vsub.f32 %v1880, %v1881
    %v1883 = vand.u32 %v1882, 4294901760
    %1884 = vmatmul.mubr.f32.gmra.mrb[0].mxu0 %v1883
    %v1885 = vpop.f32.mrb[0].mxu0
    %v1886 = vadd.f32 %v102, %v1885
    %v1887 = vpop.f32.mrb[0].mxu0
    %1888 = vmatprep.mubr.f32.mxu0 0.0
    %v1889 = vand.u32 %v1806, 4294901760
    %v1890 = vsub.f32 %v1806, %v1889
    %v1891 = vand.u32 %v1890, 4294901760
    %v1892 = vsub.f32 %v1890, %v1891
    %v1893 = vand.u32 %v1892, 4294901760
    %1894 = vmatmul.mubr.f32.gmra.mrb[0].mxu0 %v1893
    %v1895 = vpop.f32.mrb[0].mxu0
    %v1896 = vadd.f32 %v103, %v1895
    %v1897 = vpop.f32.mrb[0].mxu0
    %1898 = vdwg.mxu0
    %1899 = vmatprep.subr.mxu0 0.0
    %v1900 = vand.u32 %v1808, 4294901760
    %v1901 = vsub.f32 %v1808, %v1900
    %v1902 = vand.u32 %v1901, 4294901760
    %v1903 = vsub.f32 %v1901, %v1902
    %v1904 = vand.u32 %v1903, 4294901760
    %1905 = vmatpush1.xpose.msra.mxu0 %v1904
    %1906 = vmatprep.subr.mxu0 0.0
    %v1907 = vand.u32 %v1810, 4294901760
    %v1908 = vsub.f32 %v1810, %v1907
    %v1909 = vand.u32 %v1908, 4294901760
    %v1910 = vsub.f32 %v1908, %v1909
    %v1911 = vand.u32 %v1910, 4294901760
    %1912 = vmatpush1.xpose.msra.mxu0 %v1911
    %1913 = vmatprep.subr.mxu0 0.0
    %1914 = vmatpush1.xpose.msra.mxu0 0.0
    %1915 = vmatprep.subr.mxu0 0.0
    %1916 = vmatpush1.xpose.msra.mxu0 0.0
    %1917 = vmatprep.subr.mxu0 0.0
    %1918 = vmatpush1.xpose.msra.mxu0 0.0
    %1919 = vmatprep.subr.mxu0 0.0
    %1920 = vmatpush1.xpose.msra.mxu0 0.0
    %1921 = vmatprep.subr.mxu0 0.0
    %1922 = vmatpush1.xpose.msra.mxu0 0.0
    %1923 = vmatprep.subr.mxu0 0.0
    %1924 = vmatpush1.xpose.msra.mxu0 0.0
    %1925 = vmatprep.subr.mxu0 0.0
    %1926 = vmatpush1.xpose.msra.mxu0 0.0
    %1927 = vmatprep.subr.mxu0 0.0
    %1928 = vmatpush1.xpose.msra.mxu0 0.0
    %1929 = vmatprep.subr.mxu0 0.0
    %1930 = vmatpush1.xpose.msra.mxu0 0.0
    %1931 = vmatprep.subr.mxu0 0.0
    %1932 = vmatpush1.xpose.msra.mxu0 0.0
    %1933 = vmatprep.subr.mxu0 0.0
    %1934 = vmatpush1.xpose.msra.mxu0 0.0
    %1935 = vmatprep.subr.mxu0 0.0
    %1936 = vmatpush1.xpose.msra.mxu0 0.0
    %1937 = vmatprep.subr.mxu0 0.0
    %1938 = vmatpush1.xpose.msra.mxu0 0.0
    %1939 = vmatprep.subr.mxu0 0.0
    %1940 = vmatpush1.xpose.msra.mxu0 0.0
    %1941 = vmatprep.subr.mxu0 0.0
    %1942 = vmatpush1.xpose.msra.mxu0 0.0
    %1943 = vmatprep.subr.mxu0 0.0
    %1944 = vmatpush1.xpose.msra.mxu0 0.0
    %1945 = vmatprep.subr.mxu0 0.0
    %1946 = vmatpush1.xpose.msra.mxu0 0.0
    %1947 = vmatprep.subr.mxu0 0.0
    %1948 = vmatpush1.xpose.msra.mxu0 0.0
    %1949 = vmatprep.subr.mxu0 0.0
    %1950 = vmatpush1.xpose.msra.mxu0 0.0
    %1951 = vmatprep.subr.mxu0 0.0
    %1952 = vmatpush1.xpose.msra.mxu0 0.0
    %1953 = vmatprep.subr.mxu0 0.0
    %1954 = vmatpush1.xpose.msra.mxu0 0.0
    %1955 = vmatprep.subr.mxu0 0.0
    %1956 = vmatpush1.xpose.msra.mxu0 0.0
    %1957 = vmatprep.subr.mxu0 0.0
    %1958 = vmatpush1.xpose.msra.mxu0 0.0
    %1959 = vmatprep.subr.mxu0 0.0
    %1960 = vmatpush1.xpose.msra.mxu0 0.0
    %1961 = vmatprep.subr.mxu0 0.0
    %1962 = vmatpush1.xpose.msra.mxu0 0.0
    %1963 = vmatprep.subr.mxu0 0.0
    %1964 = vmatpush1.xpose.msra.mxu0 0.0
    %1965 = vmatprep.subr.mxu0 0.0
    %1966 = vmatpush1.xpose.msra.mxu0 0.0
    %1967 = vmatprep.subr.mxu0 0.0
    %1968 = vmatpush1.xpose.msra.mxu0 0.0
    %1969 = vmatprep.subr.mxu0 0.0
    %1970 = vmatpush1.xpose.msra.mxu0 0.0
    %1971 = vmatprep.subr.mxu0 0.0
    %1972 = vmatpush1.xpose.msra.mxu0 0.0
    %1973 = vmatprep.mubr.f32.mxu0 0.0
    %v1974 = vand.u32 %v1804, 4294901760
    %1975 = vmatmul.mubr.f32.gmra.mrb[0].mxu0 %v1974
    %v1976 = vpop.f32.mrb[0].mxu0
    %v1977 = vadd.f32 %v1886, %v1976
    %v1978 = vpop.f32.mrb[0].mxu0
    %1979 = vmatprep.mubr.f32.mxu0 0.0
    %v1980 = vand.u32 %v1806, 4294901760
    %1981 = vmatmul.mubr.f32.gmra.mrb[0].mxu0 %v1980
    %v1982 = vpop.f32.mrb[0].mxu0
    %v1983 = vadd.f32 %v1896, %v1982
    %v1984 = vpop.f32.mrb[0].mxu0
    %1985 = vdwg.mxu0
    %1986 = vmatprep.subr.mxu0 0.0
    %v1987 = vand.u32 %v1808, 4294901760
    %v1988 = vsub.f32 %v1808, %v1987
    %1989 = vmatpush1.xpose.msra.mxu0 %v1988
    %1990 = vmatprep.subr.mxu0 0.0
    %v1991 = vand.u32 %v1810, 4294901760
    %v1992 = vsub.f32 %v1810, %v1991
    %1993 = vmatpush1.xpose.msra.mxu0 %v1992
    %1994 = vmatprep.subr.mxu0 0.0
    %1995 = vmatpush1.xpose.msra.mxu0 0.0
    %1996 = vmatprep.subr.mxu0 0.0
    %1997 = vmatpush1.xpose.msra.mxu0 0.0
    %1998 = vmatprep.subr.mxu0 0.0
    %1999 = vmatpush1.xpose.msra.mxu0 0.0
    %2000 = vmatprep.subr.mxu0 0.0
    %2001 = vmatpush1.xpose.msra.mxu0 0.0
    %2002 = vmatprep.subr.mxu0 0.0
    %2003 = vmatpush1.xpose.msra.mxu0 0.0
    %2004 = vmatprep.subr.mxu0 0.0
    %2005 = vmatpush1.xpose.msra.mxu0 0.0
    %2006 = vmatprep.subr.mxu0 0.0
    %2007 = vmatpush1.xpose.msra.mxu0 0.0
    %2008 = vmatprep.subr.mxu0 0.0
    %2009 = vmatpush1.xpose.msra.mxu0 0.0
    %2010 = vmatprep.subr.mxu0 0.0
    %2011 = vmatpush1.xpose.msra.mxu0 0.0
    %2012 = vmatprep.subr.mxu0 0.0
    %2013 = vmatpush1.xpose.msra.mxu0 0.0
    %2014 = vmatprep.subr.mxu0 0.0
    %2015 = vmatpush1.xpose.msra.mxu0 0.0
    %2016 = vmatprep.subr.mxu0 0.0
    %2017 = vmatpush1.xpose.msra.mxu0 0.0
    %2018 = vmatprep.subr.mxu0 0.0
    %2019 = vmatpush1.xpose.msra.mxu0 0.0
    %2020 = vmatprep.subr.mxu0 0.0
    %2021 = vmatpush1.xpose.msra.mxu0 0.0
    %2022 = vmatprep.subr.mxu0 0.0
    %2023 = vmatpush1.xpose.msra.mxu0 0.0
    %2024 = vmatprep.subr.mxu0 0.0
    %2025 = vmatpush1.xpose.msra.mxu0 0.0
    %2026 = vmatprep.subr.mxu0 0.0
    %2027 = vmatpush1.xpose.msra.mxu0 0.0
    %2028 = vmatprep.subr.mxu0 0.0
    %2029 = vmatpush1.xpose.msra.mxu0 0.0
    %2030 = vmatprep.subr.mxu0 0.0
    %2031 = vmatpush1.xpose.msra.mxu0 0.0
    %2032 = vmatprep.subr.mxu0 0.0
    %2033 = vmatpush1.xpose.msra.mxu0 0.0
    %2034 = vmatprep.subr.mxu0 0.0
    %2035 = vmatpush1.xpose.msra.mxu0 0.0
    %2036 = vmatprep.subr.mxu0 0.0
    %2037 = vmatpush1.xpose.msra.mxu0 0.0
    %2038 = vmatprep.subr.mxu0 0.0
    %2039 = vmatpush1.xpose.msra.mxu0 0.0
    %2040 = vmatprep.subr.mxu0 0.0
    %2041 = vmatpush1.xpose.msra.mxu0 0.0
    %2042 = vmatprep.subr.mxu0 0.0
    %2043 = vmatpush1.xpose.msra.mxu0 0.0
    %2044 = vmatprep.subr.mxu0 0.0
    %2045 = vmatpush1.xpose.msra.mxu0 0.0
    %2046 = vmatprep.subr.mxu0 0.0
    %2047 = vmatpush1.xpose.msra.mxu0 0.0
    %2048 = vmatprep.subr.mxu0 0.0
    %2049 = vmatpush1.xpose.msra.mxu0 0.0
    %2050 = vmatprep.subr.mxu0 0.0
    %2051 = vmatpush1.xpose.msra.mxu0 0.0
    %2052 = vmatprep.subr.mxu0 0.0
    %2053 = vmatpush1.xpose.msra.mxu0 0.0
    %2054 = vmatprep.mubr.f32.mxu0 0.0
    %v2055 = vand.u32 %v1804, 4294901760
    %v2056 = vsub.f32 %v1804, %v2055
    %2057 = vmatmul.mubr.f32.gmra.mrb[0].mxu0 %v2056
    %v2058 = vpop.f32.mrb[0].mxu0
    %v2059 = vadd.f32 %v1977, %v2058
    %v2060 = vpop.f32.mrb[0].mxu0
    %2061 = vmatprep.mubr.f32.mxu0 0.0
    %v2062 = vand.u32 %v1806, 4294901760
    %v2063 = vsub.f32 %v1806, %v2062
    %2064 = vmatmul.mubr.f32.gmra.mrb[0].mxu0 %v2063
    %v2065 = vpop.f32.mrb[0].mxu0
    %v2066 = vadd.f32 %v1983, %v2065
    %v2067 = vpop.f32.mrb[0].mxu0
    %2068 = vdwg.mxu0
    %2069 = vmatprep.subr.mxu0 0.0
    %v2070 = vand.u32 %v1808, 4294901760
    %2071 = vmatpush1.xpose.msra.mxu0 %v2070
    %2072 = vmatprep.subr.mxu0 0.0
    %v2073 = vand.u32 %v1810, 4294901760
    %2074 = vmatpush1.xpose.msra.mxu0 %v2073
    %2075 = vmatprep.subr.mxu0 0.0
    %2076 = vmatpush1.xpose.msra.mxu0 0.0
    %2077 = vmatprep.subr.mxu0 0.0
    %2078 = vmatpush1.xpose.msra.mxu0 0.0
    %2079 = vmatprep.subr.mxu0 0.0
    %2080 = vmatpush1.xpose.msra.mxu0 0.0
    %2081 = vmatprep.subr.mxu0 0.0
    %2082 = vmatpush1.xpose.msra.mxu0 0.0
    %2083 = vmatprep.subr.mxu0 0.0
    %2084 = vmatpush1.xpose.msra.mxu0 0.0
    %2085 = vmatprep.subr.mxu0 0.0
    %2086 = vmatpush1.xpose.msra.mxu0 0.0
    %2087 = vmatprep.subr.mxu0 0.0
    %2088 = vmatpush1.xpose.msra.mxu0 0.0
    %2089 = vmatprep.subr.mxu0 0.0
    %2090 = vmatpush1.xpose.msra.mxu0 0.0
    %2091 = vmatprep.subr.mxu0 0.0
    %2092 = vmatpush1.xpose.msra.mxu0 0.0
    %2093 = vmatprep.subr.mxu0 0.0
    %2094 = vmatpush1.xpose.msra.mxu0 0.0
    %2095 = vmatprep.subr.mxu0 0.0
    %2096 = vmatpush1.xpose.msra.mxu0 0.0
    %2097 = vmatprep.subr.mxu0 0.0
    %2098 = vmatpush1.xpose.msra.mxu0 0.0
    %2099 = vmatprep.subr.mxu0 0.0
    %2100 = vmatpush1.xpose.msra.mxu0 0.0
    %2101 = vmatprep.subr.mxu0 0.0
    %2102 = vmatpush1.xpose.msra.mxu0 0.0
    %2103 = vmatprep.subr.mxu0 0.0
    %2104 = vmatpush1.xpose.msra.mxu0 0.0
    %2105 = vmatprep.subr.mxu0 0.0
    %2106 = vmatpush1.xpose.msra.mxu0 0.0
    %2107 = vmatprep.subr.mxu0 0.0
    %2108 = vmatpush1.xpose.msra.mxu0 0.0
    %2109 = vmatprep.subr.mxu0 0.0
    %2110 = vmatpush1.xpose.msra.mxu0 0.0
    %2111 = vmatprep.subr.mxu0 0.0
    %2112 = vmatpush1.xpose.msra.mxu0 0.0
    %2113 = vmatprep.subr.mxu0 0.0
    %2114 = vmatpush1.xpose.msra.mxu0 0.0
    %2115 = vmatprep.subr.mxu0 0.0
    %2116 = vmatpush1.xpose.msra.mxu0 0.0
    %2117 = vmatprep.subr.mxu0 0.0
    %2118 = vmatpush1.xpose.msra.mxu0 0.0
    %2119 = vmatprep.subr.mxu0 0.0
    %2120 = vmatpush1.xpose.msra.mxu0 0.0
    %2121 = vmatprep.subr.mxu0 0.0
    %2122 = vmatpush1.xpose.msra.mxu0 0.0
    %2123 = vmatprep.subr.mxu0 0.0
    %2124 = vmatpush1.xpose.msra.mxu0 0.0
    %2125 = vmatprep.subr.mxu0 0.0
    %2126 = vmatpush1.xpose.msra.mxu0 0.0
    %2127 = vmatprep.subr.mxu0 0.0
    %2128 = vmatpush1.xpose.msra.mxu0 0.0
    %2129 = vmatprep.subr.mxu0 0.0
    %2130 = vmatpush1.xpose.msra.mxu0 0.0
    %2131 = vmatprep.subr.mxu0 0.0
    %2132 = vmatpush1.xpose.msra.mxu0 0.0
    %2133 = vmatprep.subr.mxu0 0.0
    %2134 = vmatpush1.xpose.msra.mxu0 0.0
    %2135 = vmatprep.mubr.f32.mxu0 0.0
    %v2136 = vand.u32 %v1804, 4294901760
    %v2137 = vsub.f32 %v1804, %v2136
    %v2138 = vand.u32 %v2137, 4294901760
    %2139 = vmatmul.mubr.f32.gmra.mrb[0].mxu0 %v2138
    %v2140 = vpop.f32.mrb[0].mxu0
    %v2141 = vadd.f32 %v2059, %v2140
    %v2142 = vpop.f32.mrb[0].mxu0
    %2143 = vmatprep.mubr.f32.mxu0 0.0
    %v2144 = vand.u32 %v1806, 4294901760
    %v2145 = vsub.f32 %v1806, %v2144
    %v2146 = vand.u32 %v2145, 4294901760
    %2147 = vmatmul.mubr.f32.gmra.mrb[0].mxu0 %v2146
    %v2148 = vpop.f32.mrb[0].mxu0
    %v2149 = vadd.f32 %v2066, %v2148
    %v2150 = vpop.f32.mrb[0].mxu0
    %2151 = vdwg.mxu0
    %2152 = vmatprep.subr.mxu0 0.0
    %v2153 = vand.u32 %v1808, 4294901760
    %v2154 = vsub.f32 %v1808, %v2153
    %v2155 = vand.u32 %v2154, 4294901760
    %2156 = vmatpush1.xpose.msra.mxu0 %v2155
    %2157 = vmatprep.subr.mxu0 0.0
    %v2158 = vand.u32 %v1810, 4294901760
    %v2159 = vsub.f32 %v1810, %v2158
    %v2160 = vand.u32 %v2159, 4294901760
    %2161 = vmatpush1.xpose.msra.mxu0 %v2160
    %2162 = vmatprep.subr.mxu0 0.0
    %2163 = vmatpush1.xpose.msra.mxu0 0.0
    %2164 = vmatprep.subr.mxu0 0.0
    %2165 = vmatpush1.xpose.msra.mxu0 0.0
    %2166 = vmatprep.subr.mxu0 0.0
    %2167 = vmatpush1.xpose.msra.mxu0 0.0
    %2168 = vmatprep.subr.mxu0 0.0
    %2169 = vmatpush1.xpose.msra.mxu0 0.0
    %2170 = vmatprep.subr.mxu0 0.0
    %2171 = vmatpush1.xpose.msra.mxu0 0.0
    %2172 = vmatprep.subr.mxu0 0.0
    %2173 = vmatpush1.xpose.msra.mxu0 0.0
    %2174 = vmatprep.subr.mxu0 0.0
    %2175 = vmatpush1.xpose.msra.mxu0 0.0
    %2176 = vmatprep.subr.mxu0 0.0
    %2177 = vmatpush1.xpose.msra.mxu0 0.0
    %2178 = vmatprep.subr.mxu0 0.0
    %2179 = vmatpush1.xpose.msra.mxu0 0.0
    %2180 = vmatprep.subr.mxu0 0.0
    %2181 = vmatpush1.xpose.msra.mxu0 0.0
    %2182 = vmatprep.subr.mxu0 0.0
    %2183 = vmatpush1.xpose.msra.mxu0 0.0
    %2184 = vmatprep.subr.mxu0 0.0
    %2185 = vmatpush1.xpose.msra.mxu0 0.0
    %2186 = vmatprep.subr.mxu0 0.0
    %2187 = vmatpush1.xpose.msra.mxu0 0.0
    %2188 = vmatprep.subr.mxu0 0.0
    %2189 = vmatpush1.xpose.msra.mxu0 0.0
    %2190 = vmatprep.subr.mxu0 0.0
    %2191 = vmatpush1.xpose.msra.mxu0 0.0
    %2192 = vmatprep.subr.mxu0 0.0
    %2193 = vmatpush1.xpose.msra.mxu0 0.0
    %2194 = vmatprep.subr.mxu0 0.0
    %2195 = vmatpush1.xpose.msra.mxu0 0.0
    %2196 = vmatprep.subr.mxu0 0.0
    %2197 = vmatpush1.xpose.msra.mxu0 0.0
    %2198 = vmatprep.subr.mxu0 0.0
    %2199 = vmatpush1.xpose.msra.mxu0 0.0
    %2200 = vmatprep.subr.mxu0 0.0
    %2201 = vmatpush1.xpose.msra.mxu0 0.0
    %2202 = vmatprep.subr.mxu0 0.0
    %2203 = vmatpush1.xpose.msra.mxu0 0.0
    %2204 = vmatprep.subr.mxu0 0.0
    %2205 = vmatpush1.xpose.msra.mxu0 0.0
    %2206 = vmatprep.subr.mxu0 0.0
    %2207 = vmatpush1.xpose.msra.mxu0 0.0
    %2208 = vmatprep.subr.mxu0 0.0
    %2209 = vmatpush1.xpose.msra.mxu0 0.0
    %2210 = vmatprep.subr.mxu0 0.0
    %2211 = vmatpush1.xpose.msra.mxu0 0.0
    %2212 = vmatprep.subr.mxu0 0.0
    %2213 = vmatpush1.xpose.msra.mxu0 0.0
    %2214 = vmatprep.subr.mxu0 0.0
    %2215 = vmatpush1.xpose.msra.mxu0 0.0
    %2216 = vmatprep.subr.mxu0 0.0
    %2217 = vmatpush1.xpose.msra.mxu0 0.0
    %2218 = vmatprep.subr.mxu0 0.0
    %2219 = vmatpush1.xpose.msra.mxu0 0.0
    %2220 = vmatprep.subr.mxu0 0.0
    %2221 = vmatpush1.xpose.msra.mxu0 0.0
    %2222 = vmatprep.mubr.f32.mxu0 0.0
    %v2223 = vand.u32 %v1804, 4294901760
    %2224 = vmatmul.mubr.f32.gmra.mrb[0].mxu0 %v2223
    %v2225 = vpop.f32.mrb[0].mxu0
    %v2226 = vadd.f32 %v2141, %v2225
    %v2227 = vpop.f32.mrb[0].mxu0
    %2228 = vmatprep.mubr.f32.mxu0 0.0
    %v2229 = vand.u32 %v1806, 4294901760
    %2230 = vmatmul.mubr.f32.gmra.mrb[0].mxu0 %v2229
    %v2231 = vpop.f32.mrb[0].mxu0
    %v2232 = vadd.f32 %v2149, %v2231
    %v2233 = vpop.f32.mrb[0].mxu0
    %2234 = vdwg.mxu0
    %2235 = vmatprep.subr.mxu0 0.0
    %v2236 = vand.u32 %v1808, 4294901760
    %2237 = vmatpush1.xpose.msra.mxu0 %v2236
    %2238 = vmatprep.subr.mxu0 0.0
    %v2239 = vand.u32 %v1810, 4294901760
    %2240 = vmatpush1.xpose.msra.mxu0 %v2239
    %2241 = vmatprep.subr.mxu0 0.0
    %2242 = vmatpush1.xpose.msra.mxu0 0.0
    %2243 = vmatprep.subr.mxu0 0.0
    %2244 = vmatpush1.xpose.msra.mxu0 0.0
    %2245 = vmatprep.subr.mxu0 0.0
    %2246 = vmatpush1.xpose.msra.mxu0 0.0
    %2247 = vmatprep.subr.mxu0 0.0
    %2248 = vmatpush1.xpose.msra.mxu0 0.0
    %2249 = vmatprep.subr.mxu0 0.0
    %2250 = vmatpush1.xpose.msra.mxu0 0.0
    %2251 = vmatprep.subr.mxu0 0.0
    %2252 = vmatpush1.xpose.msra.mxu0 0.0
    %2253 = vmatprep.subr.mxu0 0.0
    %2254 = vmatpush1.xpose.msra.mxu0 0.0
    %2255 = vmatprep.subr.mxu0 0.0
    %2256 = vmatpush1.xpose.msra.mxu0 0.0
    %2257 = vmatprep.subr.mxu0 0.0
    %2258 = vmatpush1.xpose.msra.mxu0 0.0
    %2259 = vmatprep.subr.mxu0 0.0
    %2260 = vmatpush1.xpose.msra.mxu0 0.0
    %2261 = vmatprep.subr.mxu0 0.0
    %2262 = vmatpush1.xpose.msra.mxu0 0.0
    %2263 = vmatprep.subr.mxu0 0.0
    %2264 = vmatpush1.xpose.msra.mxu0 0.0
    %2265 = vmatprep.subr.mxu0 0.0
    %2266 = vmatpush1.xpose.msra.mxu0 0.0
    %2267 = vmatprep.subr.mxu0 0.0
    %2268 = vmatpush1.xpose.msra.mxu0 0.0
    %2269 = vmatprep.subr.mxu0 0.0
    %2270 = vmatpush1.xpose.msra.mxu0 0.0
    %2271 = vmatprep.subr.mxu0 0.0
    %2272 = vmatpush1.xpose.msra.mxu0 0.0
    %2273 = vmatprep.subr.mxu0 0.0
    %2274 = vmatpush1.xpose.msra.mxu0 0.0
    %2275 = vmatprep.subr.mxu0 0.0
    %2276 = vmatpush1.xpose.msra.mxu0 0.0
    %2277 = vmatprep.subr.mxu0 0.0
    %2278 = vmatpush1.xpose.msra.mxu0 0.0
    %2279 = vmatprep.subr.mxu0 0.0
    %2280 = vmatpush1.xpose.msra.mxu0 0.0
    %2281 = vmatprep.subr.mxu0 0.0
    %2282 = vmatpush1.xpose.msra.mxu0 0.0
    %2283 = vmatprep.subr.mxu0 0.0
    %2284 = vmatpush1.xpose.msra.mxu0 0.0
    %2285 = vmatprep.subr.mxu0 0.0
    %2286 = vmatpush1.xpose.msra.mxu0 0.0
    %2287 = vmatprep.subr.mxu0 0.0
    %2288 = vmatpush1.xpose.msra.mxu0 0.0
    %2289 = vmatprep.subr.mxu0 0.0
    %2290 = vmatpush1.xpose.msra.mxu0 0.0
    %2291 = vmatprep.subr.mxu0 0.0
    %2292 = vmatpush1.xpose.msra.mxu0 0.0
    %2293 = vmatprep.subr.mxu0 0.0
    %2294 = vmatpush1.xpose.msra.mxu0 0.0
    %2295 = vmatprep.subr.mxu0 0.0
    %2296 = vmatpush1.xpose.msra.mxu0 0.0
    %2297 = vmatprep.subr.mxu0 0.0
    %2298 = vmatpush1.xpose.msra.mxu0 0.0
    %2299 = vmatprep.subr.mxu0 0.0
    %2300 = vmatpush1.xpose.msra.mxu0 0.0
    %2301 = vmatprep.mubr.f32.mxu0 0.0
    %v2302 = vand.u32 %v1804, 4294901760
    %2303 = vmatmul.mubr.f32.gmra.mrb[0].mxu0 %v2302
    %v2304 = vpop.f32.mrb[0].mxu0
    %v2305 = vadd.f32 %v2226, %v2304
    %v2306 = vpop.f32.mrb[0].mxu0
    %2307 = vmatprep.mubr.f32.mxu0 0.0
    %v2308 = vand.u32 %v1806, 4294901760
    %2309 = vmatmul.mubr.f32.gmra.mrb[0].mxu0 %v2308
    %v2310 = vpop.f32.mrb[0].mxu0
    %v2311 = vadd.f32 %v2232, %v2310
    %v2312 = vpop.f32.mrb[0].mxu0
    %2313 = vdwg.mxu0
    %v2314 = vsel %vm1256, %v2305, -inf
    %2315 = vmax.xlane.f32.xlu0 %v2314
    %v2316 = vpop.xlane.xlu0 %2315
    %v2317 = vsel %vm1256, %v2311, -inf
    %2318 = vmax.xlane.f32.xlu0 %v2317
    %v2319 = vpop.xlane.xlu0 %2318
    %v2320 = vsub.f32 %v2305, %v2316
    %v2321 = vsub.f32 %v2311, %v2319
    %v2322 = vmul.f32 %v2320, 1.442695
    %v2323 = vpow.pop %v2322
    %v2324 = vmul.f32 %v2321, 1.442695
    %v2325 = vpow.pop %v2324
    %v2326 = vsel %vm1256, %v2323, 0.0
    %2327 = vadd.xlane.f32.xlu0 %v2326
    %v2328 = vpop.xlane.xlu0 %2327
    %v2329 = vsel %vm1256, %v2325, 0.0
    %2330 = vadd.xlane.f32.xlu0 %v2329
    %v2331 = vpop.xlane.xlu0 %2330
    %2332 = vrot.lane.b32.xlu0 %v692, 56
    %v2333 = vpop.permute.xlu0 %2332
    %2334 = vrot.lane.b32.xlu0 %v699, 56
    %v2335 = vpop.permute.xlu0 %2334
    %v2339 = vsel %vm1256, %v2323, 0
    %v2342 = vsel %vm1256, %v2325, 0
    %2344 = vmatprep.subr.mxu0 0.0
    %v2345 = vand.u32 %v2333, 4294901760
    %2346 = vmatpush1.msra.mxu0 %v2345
    %2347 = vmatprep.subr.mxu0 0.0
    %v2348 = vand.u32 %v2335, 4294901760
    %2349 = vmatpush1.msra.mxu0 %v2348
    %2350 = vmatprep.subr.mxu0 0.0
    %2351 = vmatpush1.msra.mxu0 0.0
    %2352 = vmatprep.subr.mxu0 0.0
    %2353 = vmatpush1.msra.mxu0 0.0
    %2354 = vmatprep.subr.mxu0 0.0
    %2355 = vmatpush1.msra.mxu0 0.0
    %2356 = vmatprep.subr.mxu0 0.0
    %2357 = vmatpush1.msra.mxu0 0.0
    %2358 = vmatprep.subr.mxu0 0.0
    %2359 = vmatpush1.msra.mxu0 0.0
    %2360 = vmatprep.subr.mxu0 0.0
    %2361 = vmatpush1.msra.mxu0 0.0
    %2362 = vmatprep.subr.mxu0 0.0
    %2363 = vmatpush1.msra.mxu0 0.0
    %2364 = vmatprep.subr.mxu0 0.0
    %2365 = vmatpush1.msra.mxu0 0.0
    %2366 = vmatprep.subr.mxu0 0.0
    %2367 = vmatpush1.msra.mxu0 0.0
    %2368 = vmatprep.subr.mxu0 0.0
    %2369 = vmatpush1.msra.mxu0 0.0
    %2370 = vmatprep.subr.mxu0 0.0
    %2371 = vmatpush1.msra.mxu0 0.0
    %2372 = vmatprep.subr.mxu0 0.0
    %2373 = vmatpush1.msra.mxu0 0.0
    %2374 = vmatprep.subr.mxu0 0.0
    %2375 = vmatpush1.msra.mxu0 0.0
    %2376 = vmatprep.subr.mxu0 0.0
    %2377 = vmatpush1.msra.mxu0 0.0
    %2378 = vmatprep.subr.mxu0 0.0
    %2379 = vmatpush1.msra.mxu0 0.0
    %2380 = vmatprep.subr.mxu0 0.0
    %2381 = vmatpush1.msra.mxu0 0.0
    %2382 = vmatprep.subr.mxu0 0.0
    %2383 = vmatpush1.msra.mxu0 0.0
    %2384 = vmatprep.subr.mxu0 0.0
    %2385 = vmatpush1.msra.mxu0 0.0
    %2386 = vmatprep.subr.mxu0 0.0
    %2387 = vmatpush1.msra.mxu0 0.0
    %2388 = vmatprep.subr.mxu0 0.0
    %2389 = vmatpush1.msra.mxu0 0.0
    %2390 = vmatprep.subr.mxu0 0.0
    %2391 = vmatpush1.msra.mxu0 0.0
    %2392 = vmatprep.subr.mxu0 0.0
    %2393 = vmatpush1.msra.mxu0 0.0
    %2394 = vmatprep.subr.mxu0 0.0
    %2395 = vmatpush1.msra.mxu0 0.0
    %2396 = vmatprep.subr.mxu0 0.0
    %2397 = vmatpush1.msra.mxu0 0.0
    %2398 = vmatprep.subr.mxu0 0.0
    %2399 = vmatpush1.msra.mxu0 0.0
    %2400 = vmatprep.subr.mxu0 0.0
    %2401 = vmatpush1.msra.mxu0 0.0
    %2402 = vmatprep.subr.mxu0 0.0
    %2403 = vmatpush1.msra.mxu0 0.0
    %2404 = vmatprep.subr.mxu0 0.0
    %2405 = vmatpush1.msra.mxu0 0.0
    %2406 = vmatprep.subr.mxu0 0.0
    %2407 = vmatpush1.msra.mxu0 0.0
    %2408 = vmatprep.subr.mxu0 0.0
    %2409 = vmatpush1.msra.mxu0 0.0
    %2410 = vmatprep.mubr.f32.mxu0 0.0
    %v2411 = vand.u32 %v2339, 4294901760
    %v2412 = vsub.f32 %v2339, %v2411
    %v2413 = vand.u32 %v2412, 4294901760
    %v2414 = vsub.f32 %v2412, %v2413
    %v2415 = vand.u32 %v2414, 4294901760
    %2416 = vmatmul.mubr.f32.gmra.mrb[0].mxu0 %v2415
    %v2417 = vpop.f32.mrb[0].mxu0
    %v2418 = vadd.f32 0.0, %v2417
    %v2419 = vpop.f32.mrb[0].mxu0
    %2420 = vmatprep.mubr.f32.mxu0 0.0
    %v2421 = vand.u32 %v2342, 4294901760
    %v2422 = vsub.f32 %v2342, %v2421
    %v2423 = vand.u32 %v2422, 4294901760
    %v2424 = vsub.f32 %v2422, %v2423
    %v2425 = vand.u32 %v2424, 4294901760
    %2426 = vmatmul.mubr.f32.gmra.mrb[0].mxu0 %v2425
    %v2427 = vpop.f32.mrb[0].mxu0
    %v2428 = vadd.f32 0.0, %v2427
    %v2429 = vpop.f32.mrb[0].mxu0
    %2430 = vdwg.mxu0
    %2431 = vmatprep.subr.mxu0 0.0
    %v2432 = vand.u32 %v2333, 4294901760
    %v2433 = vsub.f32 %v2333, %v2432
    %v2434 = vand.u32 %v2433, 4294901760
    %v2435 = vsub.f32 %v2433, %v2434
    %v2436 = vand.u32 %v2435, 4294901760
    %2437 = vmatpush1.msra.mxu0 %v2436
    %2438 = vmatprep.subr.mxu0 0.0
    %v2439 = vand.u32 %v2335, 4294901760
    %v2440 = vsub.f32 %v2335, %v2439
    %v2441 = vand.u32 %v2440, 4294901760
    %v2442 = vsub.f32 %v2440, %v2441
    %v2443 = vand.u32 %v2442, 4294901760
    %2444 = vmatpush1.msra.mxu0 %v2443
    %2445 = vmatprep.subr.mxu0 0.0
    %2446 = vmatpush1.msra.mxu0 0.0
    %2447 = vmatprep.subr.mxu0 0.0
    %2448 = vmatpush1.msra.mxu0 0.0
    %2449 = vmatprep.subr.mxu0 0.0
    %2450 = vmatpush1.msra.mxu0 0.0
    %2451 = vmatprep.subr.mxu0 0.0
    %2452 = vmatpush1.msra.mxu0 0.0
    %2453 = vmatprep.subr.mxu0 0.0
    %2454 = vmatpush1.msra.mxu0 0.0
    %2455 = vmatprep.subr.mxu0 0.0
    %2456 = vmatpush1.msra.mxu0 0.0
    %2457 = vmatprep.subr.mxu0 0.0
    %2458 = vmatpush1.msra.mxu0 0.0
    %2459 = vmatprep.subr.mxu0 0.0
    %2460 = vmatpush1.msra.mxu0 0.0
    %2461 = vmatprep.subr.mxu0 0.0
    %2462 = vmatpush1.msra.mxu0 0.0
    %2463 = vmatprep.subr.mxu0 0.0
    %2464 = vmatpush1.msra.mxu0 0.0
    %2465 = vmatprep.subr.mxu0 0.0
    %2466 = vmatpush1.msra.mxu0 0.0
    %2467 = vmatprep.subr.mxu0 0.0
    %2468 = vmatpush1.msra.mxu0 0.0
    %2469 = vmatprep.subr.mxu0 0.0
    %2470 = vmatpush1.msra.mxu0 0.0
    %2471 = vmatprep.subr.mxu0 0.0
    %2472 = vmatpush1.msra.mxu0 0.0
    %2473 = vmatprep.subr.mxu0 0.0
    %2474 = vmatpush1.msra.mxu0 0.0
    %2475 = vmatprep.subr.mxu0 0.0
    %2476 = vmatpush1.msra.mxu0 0.0
    %2477 = vmatprep.subr.mxu0 0.0
    %2478 = vmatpush1.msra.mxu0 0.0
    %2479 = vmatprep.subr.mxu0 0.0
    %2480 = vmatpush1.msra.mxu0 0.0
    %2481 = vmatprep.subr.mxu0 0.0
    %2482 = vmatpush1.msra.mxu0 0.0
    %2483 = vmatprep.subr.mxu0 0.0
    %2484 = vmatpush1.msra.mxu0 0.0
    %2485 = vmatprep.subr.mxu0 0.0
    %2486 = vmatpush1.msra.mxu0 0.0
    %2487 = vmatprep.subr.mxu0 0.0
    %2488 = vmatpush1.msra.mxu0 0.0
    %2489 = vmatprep.subr.mxu0 0.0
    %2490 = vmatpush1.msra.mxu0 0.0
    %2491 = vmatprep.subr.mxu0 0.0
    %2492 = vmatpush1.msra.mxu0 0.0
    %2493 = vmatprep.subr.mxu0 0.0
    %2494 = vmatpush1.msra.mxu0 0.0
    %2495 = vmatprep.subr.mxu0 0.0
    %2496 = vmatpush1.msra.mxu0 0.0
    %2497 = vmatprep.subr.mxu0 0.0
    %2498 = vmatpush1.msra.mxu0 0.0
    %2499 = vmatprep.subr.mxu0 0.0
    %2500 = vmatpush1.msra.mxu0 0.0
    %2501 = vmatprep.subr.mxu0 0.0
    %2502 = vmatpush1.msra.mxu0 0.0
    %2503 = vmatprep.subr.mxu0 0.0
    %2504 = vmatpush1.msra.mxu0 0.0
    %2505 = vmatprep.mubr.f32.mxu0 0.0
    %v2506 = vand.u32 %v2339, 4294901760
    %2507 = vmatmul.mubr.f32.gmra.mrb[0].mxu0 %v2506
    %v2508 = vpop.f32.mrb[0].mxu0
    %v2509 = vadd.f32 %v2418, %v2508
    %v2510 = vpop.f32.mrb[0].mxu0
    %2511 = vmatprep.mubr.f32.mxu0 0.0
    %v2512 = vand.u32 %v2342, 4294901760
    %2513 = vmatmul.mubr.f32.gmra.mrb[0].mxu0 %v2512
    %v2514 = vpop.f32.mrb[0].mxu0
    %v2515 = vadd.f32 %v2428, %v2514
    %v2516 = vpop.f32.mrb[0].mxu0
    %2517 = vdwg.mxu0
    %2518 = vmatprep.subr.mxu0 0.0
    %v2519 = vand.u32 %v2333, 4294901760
    %v2520 = vsub.f32 %v2333, %v2519
    %2521 = vmatpush1.msra.mxu0 %v2520
    %2522 = vmatprep.subr.mxu0 0.0
    %v2523 = vand.u32 %v2335, 4294901760
    %v2524 = vsub.f32 %v2335, %v2523
    %2525 = vmatpush1.msra.mxu0 %v2524
    %2526 = vmatprep.subr.mxu0 0.0
    %2527 = vmatpush1.msra.mxu0 0.0
    %2528 = vmatprep.subr.mxu0 0.0
    %2529 = vmatpush1.msra.mxu0 0.0
    %2530 = vmatprep.subr.mxu0 0.0
    %2531 = vmatpush1.msra.mxu0 0.0
    %2532 = vmatprep.subr.mxu0 0.0
    %2533 = vmatpush1.msra.mxu0 0.0
    %2534 = vmatprep.subr.mxu0 0.0
    %2535 = vmatpush1.msra.mxu0 0.0
    %2536 = vmatprep.subr.mxu0 0.0
    %2537 = vmatpush1.msra.mxu0 0.0
    %2538 = vmatprep.subr.mxu0 0.0
    %2539 = vmatpush1.msra.mxu0 0.0
    %2540 = vmatprep.subr.mxu0 0.0
    %2541 = vmatpush1.msra.mxu0 0.0
    %2542 = vmatprep.subr.mxu0 0.0
    %2543 = vmatpush1.msra.mxu0 0.0
    %2544 = vmatprep.subr.mxu0 0.0
    %2545 = vmatpush1.msra.mxu0 0.0
    %2546 = vmatprep.subr.mxu0 0.0
    %2547 = vmatpush1.msra.mxu0 0.0
    %2548 = vmatprep.subr.mxu0 0.0
    %2549 = vmatpush1.msra.mxu0 0.0
    %2550 = vmatprep.subr.mxu0 0.0
    %2551 = vmatpush1.msra.mxu0 0.0
    %2552 = vmatprep.subr.mxu0 0.0
    %2553 = vmatpush1.msra.mxu0 0.0
    %2554 = vmatprep.subr.mxu0 0.0
    %2555 = vmatpush1.msra.mxu0 0.0
    %2556 = vmatprep.subr.mxu0 0.0
    %2557 = vmatpush1.msra.mxu0 0.0
    %2558 = vmatprep.subr.mxu0 0.0
    %2559 = vmatpush1.msra.mxu0 0.0
    %2560 = vmatprep.subr.mxu0 0.0
    %2561 = vmatpush1.msra.mxu0 0.0
    %2562 = vmatprep.subr.mxu0 0.0
    %2563 = vmatpush1.msra.mxu0 0.0
    %2564 = vmatprep.subr.mxu0 0.0
    %2565 = vmatpush1.msra.mxu0 0.0
    %2566 = vmatprep.subr.mxu0 0.0
    %2567 = vmatpush1.msra.mxu0 0.0
    %2568 = vmatprep.subr.mxu0 0.0
    %2569 = vmatpush1.msra.mxu0 0.0
    %2570 = vmatprep.subr.mxu0 0.0
    %2571 = vmatpush1.msra.mxu0 0.0
    %2572 = vmatprep.subr.mxu0 0.0
    %2573 = vmatpush1.msra.mxu0 0.0
    %2574 = vmatprep.subr.mxu0 0.0
    %2575 = vmatpush1.msra.mxu0 0.0
    %2576 = vmatprep.subr.mxu0 0.0
    %2577 = vmatpush1.msra.mxu0 0.0
    %2578 = vmatprep.subr.mxu0 0.0
    %2579 = vmatpush1.msra.mxu0 0.0
    %2580 = vmatprep.subr.mxu0 0.0
    %2581 = vmatpush1.msra.mxu0 0.0
    %2582 = vmatprep.subr.mxu0 0.0
    %2583 = vmatpush1.msra.mxu0 0.0
    %2584 = vmatprep.subr.mxu0 0.0
    %2585 = vmatpush1.msra.mxu0 0.0
    %2586 = vmatprep.mubr.f32.mxu0 0.0
    %v2587 = vand.u32 %v2339, 4294901760
    %v2588 = vsub.f32 %v2339, %v2587
    %2589 = vmatmul.mubr.f32.gmra.mrb[0].mxu0 %v2588
    %v2590 = vpop.f32.mrb[0].mxu0
    %v2591 = vadd.f32 %v2509, %v2590
    %v2592 = vpop.f32.mrb[0].mxu0
    %2593 = vmatprep.mubr.f32.mxu0 0.0
    %v2594 = vand.u32 %v2342, 4294901760
    %v2595 = vsub.f32 %v2342, %v2594
    %2596 = vmatmul.mubr.f32.gmra.mrb[0].mxu0 %v2595
    %v2597 = vpop.f32.mrb[0].mxu0
    %v2598 = vadd.f32 %v2515, %v2597
    %v2599 = vpop.f32.mrb[0].mxu0
    %2600 = vdwg.mxu0
    %2601 = vmatprep.subr.mxu0 0.0
    %v2602 = vand.u32 %v2333, 4294901760
    %2603 = vmatpush1.msra.mxu0 %v2602
    %2604 = vmatprep.subr.mxu0 0.0
    %v2605 = vand.u32 %v2335, 4294901760
    %2606 = vmatpush1.msra.mxu0 %v2605
    %2607 = vmatprep.subr.mxu0 0.0
    %2608 = vmatpush1.msra.mxu0 0.0
    %2609 = vmatprep.subr.mxu0 0.0
    %2610 = vmatpush1.msra.mxu0 0.0
    %2611 = vmatprep.subr.mxu0 0.0
    %2612 = vmatpush1.msra.mxu0 0.0
    %2613 = vmatprep.subr.mxu0 0.0
    %2614 = vmatpush1.msra.mxu0 0.0
    %2615 = vmatprep.subr.mxu0 0.0
    %2616 = vmatpush1.msra.mxu0 0.0
    %2617 = vmatprep.subr.mxu0 0.0
    %2618 = vmatpush1.msra.mxu0 0.0
    %2619 = vmatprep.subr.mxu0 0.0
    %2620 = vmatpush1.msra.mxu0 0.0
    %2621 = vmatprep.subr.mxu0 0.0
    %2622 = vmatpush1.msra.mxu0 0.0
    %2623 = vmatprep.subr.mxu0 0.0
    %2624 = vmatpush1.msra.mxu0 0.0
    %2625 = vmatprep.subr.mxu0 0.0
    %2626 = vmatpush1.msra.mxu0 0.0
    %2627 = vmatprep.subr.mxu0 0.0
    %2628 = vmatpush1.msra.mxu0 0.0
    %2629 = vmatprep.subr.mxu0 0.0
    %2630 = vmatpush1.msra.mxu0 0.0
    %2631 = vmatprep.subr.mxu0 0.0
    %2632 = vmatpush1.msra.mxu0 0.0
    %2633 = vmatprep.subr.mxu0 0.0
    %2634 = vmatpush1.msra.mxu0 0.0
    %2635 = vmatprep.subr.mxu0 0.0
    %2636 = vmatpush1.msra.mxu0 0.0
    %2637 = vmatprep.subr.mxu0 0.0
    %2638 = vmatpush1.msra.mxu0 0.0
    %2639 = vmatprep.subr.mxu0 0.0
    %2640 = vmatpush1.msra.mxu0 0.0
    %2641 = vmatprep.subr.mxu0 0.0
    %2642 = vmatpush1.msra.mxu0 0.0
    %2643 = vmatprep.subr.mxu0 0.0
    %2644 = vmatpush1.msra.mxu0 0.0
    %2645 = vmatprep.subr.mxu0 0.0
    %2646 = vmatpush1.msra.mxu0 0.0
    %2647 = vmatprep.subr.mxu0 0.0
    %2648 = vmatpush1.msra.mxu0 0.0
    %2649 = vmatprep.subr.mxu0 0.0
    %2650 = vmatpush1.msra.mxu0 0.0
    %2651 = vmatprep.subr.mxu0 0.0
    %2652 = vmatpush1.msra.mxu0 0.0
    %2653 = vmatprep.subr.mxu0 0.0
    %2654 = vmatpush1.msra.mxu0 0.0
    %2655 = vmatprep.subr.mxu0 0.0
    %2656 = vmatpush1.msra.mxu0 0.0
    %2657 = vmatprep.subr.mxu0 0.0
    %2658 = vmatpush1.msra.mxu0 0.0
    %2659 = vmatprep.subr.mxu0 0.0
    %2660 = vmatpush1.msra.mxu0 0.0
    %2661 = vmatprep.subr.mxu0 0.0
    %2662 = vmatpush1.msra.mxu0 0.0
    %2663 = vmatprep.subr.mxu0 0.0
    %2664 = vmatpush1.msra.mxu0 0.0
    %2665 = vmatprep.subr.mxu0 0.0
    %2666 = vmatpush1.msra.mxu0 0.0
    %2667 = vmatprep.mubr.f32.mxu0 0.0
    %v2668 = vand.u32 %v2339, 4294901760
    %v2669 = vsub.f32 %v2339, %v2668
    %v2670 = vand.u32 %v2669, 4294901760
    %2671 = vmatmul.mubr.f32.gmra.mrb[0].mxu0 %v2670
    %v2672 = vpop.f32.mrb[0].mxu0
    %v2673 = vadd.f32 %v2591, %v2672
    %v2674 = vpop.f32.mrb[0].mxu0
    %2675 = vmatprep.mubr.f32.mxu0 0.0
    %v2676 = vand.u32 %v2342, 4294901760
    %v2677 = vsub.f32 %v2342, %v2676
    %v2678 = vand.u32 %v2677, 4294901760
    %2679 = vmatmul.mubr.f32.gmra.mrb[0].mxu0 %v2678
    %v2680 = vpop.f32.mrb[0].mxu0
    %v2681 = vadd.f32 %v2598, %v2680
    %v2682 = vpop.f32.mrb[0].mxu0
    %2683 = vdwg.mxu0
    %2684 = vmatprep.subr.mxu0 0.0
    %v2685 = vand.u32 %v2333, 4294901760
    %v2686 = vsub.f32 %v2333, %v2685
    %v2687 = vand.u32 %v2686, 4294901760
    %2688 = vmatpush1.msra.mxu0 %v2687
    %2689 = vmatprep.subr.mxu0 0.0
    %v2690 = vand.u32 %v2335, 4294901760
    %v2691 = vsub.f32 %v2335, %v2690
    %v2692 = vand.u32 %v2691, 4294901760
    %2693 = vmatpush1.msra.mxu0 %v2692
    %2694 = vmatprep.subr.mxu0 0.0
    %2695 = vmatpush1.msra.mxu0 0.0
    %2696 = vmatprep.subr.mxu0 0.0
    %2697 = vmatpush1.msra.mxu0 0.0
    %2698 = vmatprep.subr.mxu0 0.0
    %2699 = vmatpush1.msra.mxu0 0.0
    %2700 = vmatprep.subr.mxu0 0.0
    %2701 = vmatpush1.msra.mxu0 0.0
    %2702 = vmatprep.subr.mxu0 0.0
    %2703 = vmatpush1.msra.mxu0 0.0
    %2704 = vmatprep.subr.mxu0 0.0
    %2705 = vmatpush1.msra.mxu0 0.0
    %2706 = vmatprep.subr.mxu0 0.0
    %2707 = vmatpush1.msra.mxu0 0.0
    %2708 = vmatprep.subr.mxu0 0.0
    %2709 = vmatpush1.msra.mxu0 0.0
    %2710 = vmatprep.subr.mxu0 0.0
    %2711 = vmatpush1.msra.mxu0 0.0
    %2712 = vmatprep.subr.mxu0 0.0
    %2713 = vmatpush1.msra.mxu0 0.0
    %2714 = vmatprep.subr.mxu0 0.0
    %2715 = vmatpush1.msra.mxu0 0.0
    %2716 = vmatprep.subr.mxu0 0.0
    %2717 = vmatpush1.msra.mxu0 0.0
    %2718 = vmatprep.subr.mxu0 0.0
    %2719 = vmatpush1.msra.mxu0 0.0
    %2720 = vmatprep.subr.mxu0 0.0
    %2721 = vmatpush1.msra.mxu0 0.0
    %2722 = vmatprep.subr.mxu0 0.0
    %2723 = vmatpush1.msra.mxu0 0.0
    %2724 = vmatprep.subr.mxu0 0.0
    %2725 = vmatpush1.msra.mxu0 0.0
    %2726 = vmatprep.subr.mxu0 0.0
    %2727 = vmatpush1.msra.mxu0 0.0
    %2728 = vmatprep.subr.mxu0 0.0
    %2729 = vmatpush1.msra.mxu0 0.0
    %2730 = vmatprep.subr.mxu0 0.0
    %2731 = vmatpush1.msra.mxu0 0.0
    %2732 = vmatprep.subr.mxu0 0.0
    %2733 = vmatpush1.msra.mxu0 0.0
    %2734 = vmatprep.subr.mxu0 0.0
    %2735 = vmatpush1.msra.mxu0 0.0
    %2736 = vmatprep.subr.mxu0 0.0
    %2737 = vmatpush1.msra.mxu0 0.0
    %2738 = vmatprep.subr.mxu0 0.0
    %2739 = vmatpush1.msra.mxu0 0.0
    %2740 = vmatprep.subr.mxu0 0.0
    %2741 = vmatpush1.msra.mxu0 0.0
    %2742 = vmatprep.subr.mxu0 0.0
    %2743 = vmatpush1.msra.mxu0 0.0
    %2744 = vmatprep.subr.mxu0 0.0
    %2745 = vmatpush1.msra.mxu0 0.0
    %2746 = vmatprep.subr.mxu0 0.0
    %2747 = vmatpush1.msra.mxu0 0.0
    %2748 = vmatprep.subr.mxu0 0.0
    %2749 = vmatpush1.msra.mxu0 0.0
    %2750 = vmatprep.subr.mxu0 0.0
    %2751 = vmatpush1.msra.mxu0 0.0
    %2752 = vmatprep.subr.mxu0 0.0
    %2753 = vmatpush1.msra.mxu0 0.0
    %2754 = vmatprep.mubr.f32.mxu0 0.0
    %v2755 = vand.u32 %v2339, 4294901760
    %2756 = vmatmul.mubr.f32.gmra.mrb[0].mxu0 %v2755
    %v2757 = vpop.f32.mrb[0].mxu0
    %v2758 = vadd.f32 %v2673, %v2757
    %v2759 = vpop.f32.mrb[0].mxu0
    %2760 = vmatprep.mubr.f32.mxu0 0.0
    %v2761 = vand.u32 %v2342, 4294901760
    %2762 = vmatmul.mubr.f32.gmra.mrb[0].mxu0 %v2761
    %v2763 = vpop.f32.mrb[0].mxu0
    %v2764 = vadd.f32 %v2681, %v2763
    %v2765 = vpop.f32.mrb[0].mxu0
    %2766 = vdwg.mxu0
    %2767 = vmatprep.subr.mxu0 0.0
    %v2768 = vand.u32 %v2333, 4294901760
    %2769 = vmatpush1.msra.mxu0 %v2768
    %2770 = vmatprep.subr.mxu0 0.0
    %v2771 = vand.u32 %v2335, 4294901760
    %2772 = vmatpush1.msra.mxu0 %v2771
    %2773 = vmatprep.subr.mxu0 0.0
    %2774 = vmatpush1.msra.mxu0 0.0
    %2775 = vmatprep.subr.mxu0 0.0
    %2776 = vmatpush1.msra.mxu0 0.0
    %2777 = vmatprep.subr.mxu0 0.0
    %2778 = vmatpush1.msra.mxu0 0.0
    %2779 = vmatprep.subr.mxu0 0.0
    %2780 = vmatpush1.msra.mxu0 0.0
    %2781 = vmatprep.subr.mxu0 0.0
    %2782 = vmatpush1.msra.mxu0 0.0
    %2783 = vmatprep.subr.mxu0 0.0
    %2784 = vmatpush1.msra.mxu0 0.0
    %2785 = vmatprep.subr.mxu0 0.0
    %2786 = vmatpush1.msra.mxu0 0.0
    %2787 = vmatprep.subr.mxu0 0.0
    %2788 = vmatpush1.msra.mxu0 0.0
    %2789 = vmatprep.subr.mxu0 0.0
    %2790 = vmatpush1.msra.mxu0 0.0
    %2791 = vmatprep.subr.mxu0 0.0
    %2792 = vmatpush1.msra.mxu0 0.0
    %2793 = vmatprep.subr.mxu0 0.0
    %2794 = vmatpush1.msra.mxu0 0.0
    %2795 = vmatprep.subr.mxu0 0.0
    %2796 = vmatpush1.msra.mxu0 0.0
    %2797 = vmatprep.subr.mxu0 0.0
    %2798 = vmatpush1.msra.mxu0 0.0
    %2799 = vmatprep.subr.mxu0 0.0
    %2800 = vmatpush1.msra.mxu0 0.0
    %2801 = vmatprep.subr.mxu0 0.0
    %2802 = vmatpush1.msra.mxu0 0.0
    %2803 = vmatprep.subr.mxu0 0.0
    %2804 = vmatpush1.msra.mxu0 0.0
    %2805 = vmatprep.subr.mxu0 0.0
    %2806 = vmatpush1.msra.mxu0 0.0
    %2807 = vmatprep.subr.mxu0 0.0
    %2808 = vmatpush1.msra.mxu0 0.0
    %2809 = vmatprep.subr.mxu0 0.0
    %2810 = vmatpush1.msra.mxu0 0.0
    %2811 = vmatprep.subr.mxu0 0.0
    %2812 = vmatpush1.msra.mxu0 0.0
    %2813 = vmatprep.subr.mxu0 0.0
    %2814 = vmatpush1.msra.mxu0 0.0
    %2815 = vmatprep.subr.mxu0 0.0
    %2816 = vmatpush1.msra.mxu0 0.0
    %2817 = vmatprep.subr.mxu0 0.0
    %2818 = vmatpush1.msra.mxu0 0.0
    %2819 = vmatprep.subr.mxu0 0.0
    %2820 = vmatpush1.msra.mxu0 0.0
    %2821 = vmatprep.subr.mxu0 0.0
    %2822 = vmatpush1.msra.mxu0 0.0
    %2823 = vmatprep.subr.mxu0 0.0
    %2824 = vmatpush1.msra.mxu0 0.0
    %2825 = vmatprep.subr.mxu0 0.0
    %2826 = vmatpush1.msra.mxu0 0.0
    %2827 = vmatprep.subr.mxu0 0.0
    %2828 = vmatpush1.msra.mxu0 0.0
    %2829 = vmatprep.subr.mxu0 0.0
    %2830 = vmatpush1.msra.mxu0 0.0
    %2831 = vmatprep.subr.mxu0 0.0
    %2832 = vmatpush1.msra.mxu0 0.0
    %2833 = vmatprep.mubr.f32.mxu0 0.0
    %v2834 = vand.u32 %v2339, 4294901760
    %2835 = vmatmul.mubr.f32.gmra.mrb[0].mxu0 %v2834
    %v2836 = vpop.f32.mrb[0].mxu0
    %v2837 = vadd.f32 %v2758, %v2836
    %v2838 = vpop.f32.mrb[0].mxu0
    %2839 = vmatprep.mubr.f32.mxu0 0.0
    %v2840 = vand.u32 %v2342, 4294901760
    %2841 = vmatmul.mubr.f32.gmra.mrb[0].mxu0 %v2840
    %v2842 = vpop.f32.mrb[0].mxu0
    %v2843 = vadd.f32 %v2764, %v2842
    %v2844 = vpop.f32.mrb[0].mxu0
    %2845 = vdwg.mxu0
    %v2846 = vrcp.pop %v2328
    %v2847 = vmul.f32 %v2837, %v2846
    %v2848 = vrcp.pop %v2331
    %v2849 = vmul.f32 %v2843, %v2848
    %s2850 = scalar_lea.vmem [#allocation7], 8
    %v2851 = vld [vmem:[%s2850] sm:$0xff]
    %v2853 = vsel %vm745, %v2847, 0
    %v2856 = vsel %vm745, %v2849, 0
    %2858 = vmatprep.subr.mxu0 0.0
    %v2859 = vand.u32 %v2851, 4294901760
    %2860 = vmatpush1.msra.mxu0 %v2859
    %2861 = vmatprep.subr.mxu0 0.0
    %2862 = vmatpush1.msra.mxu0 0.0
    %2863 = vmatprep.subr.mxu0 0.0
    %2864 = vmatpush1.msra.mxu0 0.0
    %2865 = vmatprep.subr.mxu0 0.0
    %2866 = vmatpush1.msra.mxu0 0.0
    %2867 = vmatprep.subr.mxu0 0.0
    %2868 = vmatpush1.msra.mxu0 0.0
    %2869 = vmatprep.subr.mxu0 0.0
    %2870 = vmatpush1.msra.mxu0 0.0
    %2871 = vmatprep.subr.mxu0 0.0
    %2872 = vmatpush1.msra.mxu0 0.0
    %2873 = vmatprep.subr.mxu0 0.0
    %2874 = vmatpush1.msra.mxu0 0.0
    %2875 = vmatprep.subr.mxu0 0.0
    %2876 = vmatpush1.msra.mxu0 0.0
    %2877 = vmatprep.subr.mxu0 0.0
    %2878 = vmatpush1.msra.mxu0 0.0
    %2879 = vmatprep.subr.mxu0 0.0
    %2880 = vmatpush1.msra.mxu0 0.0
    %2881 = vmatprep.subr.mxu0 0.0
    %2882 = vmatpush1.msra.mxu0 0.0
    %2883 = vmatprep.subr.mxu0 0.0
    %2884 = vmatpush1.msra.mxu0 0.0
    %2885 = vmatprep.subr.mxu0 0.0
    %2886 = vmatpush1.msra.mxu0 0.0
    %2887 = vmatprep.subr.mxu0 0.0
    %2888 = vmatpush1.msra.mxu0 0.0
    %2889 = vmatprep.subr.mxu0 0.0
    %2890 = vmatpush1.msra.mxu0 0.0
    %2891 = vmatprep.subr.mxu0 0.0
    %2892 = vmatpush1.msra.mxu0 0.0
    %2893 = vmatprep.subr.mxu0 0.0
    %2894 = vmatpush1.msra.mxu0 0.0
    %2895 = vmatprep.subr.mxu0 0.0
    %2896 = vmatpush1.msra.mxu0 0.0
    %2897 = vmatprep.subr.mxu0 0.0
    %2898 = vmatpush1.msra.mxu0 0.0
    %2899 = vmatprep.subr.mxu0 0.0
    %2900 = vmatpush1.msra.mxu0 0.0
    %2901 = vmatprep.subr.mxu0 0.0
    %2902 = vmatpush1.msra.mxu0 0.0
    %2903 = vmatprep.subr.mxu0 0.0
    %2904 = vmatpush1.msra.mxu0 0.0
    %2905 = vmatprep.subr.mxu0 0.0
    %2906 = vmatpush1.msra.mxu0 0.0
    %2907 = vmatprep.subr.mxu0 0.0
    %2908 = vmatpush1.msra.mxu0 0.0
    %2909 = vmatprep.subr.mxu0 0.0
    %2910 = vmatpush1.msra.mxu0 0.0
    %2911 = vmatprep.subr.mxu0 0.0
    %2912 = vmatpush1.msra.mxu0 0.0
    %2913 = vmatprep.subr.mxu0 0.0
    %2914 = vmatpush1.msra.mxu0 0.0
    %2915 = vmatprep.subr.mxu0 0.0
    %2916 = vmatpush1.msra.mxu0 0.0
    %2917 = vmatprep.subr.mxu0 0.0
    %2918 = vmatpush1.msra.mxu0 0.0
    %2919 = vmatprep.subr.mxu0 0.0
    %2920 = vmatpush1.msra.mxu0 0.0
    %2921 = vmatprep.subr.mxu0 0.0
    %2922 = vmatpush1.msra.mxu0 0.0
    %2923 = vmatprep.mubr.f32.mxu0 0.0
    %v2924 = vand.u32 %v2853, 4294901760
    %v2925 = vsub.f32 %v2853, %v2924
    %v2926 = vand.u32 %v2925, 4294901760
    %v2927 = vsub.f32 %v2925, %v2926
    %v2928 = vand.u32 %v2927, 4294901760
    %2929 = vmatmul.mubr.f32.gmra.mrb[0].mxu0 %v2928
    %v2930 = vpop.f32.mrb[0].mxu0
    %v2931 = vadd.f32 0.0, %v2930
    %v2932 = vpop.f32.mrb[0].mxu0
    %2933 = vmatprep.mubr.f32.mxu0 0.0
    %v2934 = vand.u32 %v2856, 4294901760
    %v2935 = vsub.f32 %v2856, %v2934
    %v2936 = vand.u32 %v2935, 4294901760
    %v2937 = vsub.f32 %v2935, %v2936
    %v2938 = vand.u32 %v2937, 4294901760
    %2939 = vmatmul.mubr.f32.gmra.mrb[0].mxu0 %v2938
    %v2940 = vpop.f32.mrb[0].mxu0
    %v2941 = vadd.f32 0.0, %v2940
    %v2942 = vpop.f32.mrb[0].mxu0
    %2943 = vdwg.mxu0
    %2944 = vmatprep.subr.mxu0 0.0
    %v2945 = vand.u32 %v2851, 4294901760
    %v2946 = vsub.f32 %v2851, %v2945
    %v2947 = vand.u32 %v2946, 4294901760
    %v2948 = vsub.f32 %v2946, %v2947
    %v2949 = vand.u32 %v2948, 4294901760
    %2950 = vmatpush1.msra.mxu0 %v2949
    %2951 = vmatprep.subr.mxu0 0.0
    %2952 = vmatpush1.msra.mxu0 0.0
    %2953 = vmatprep.subr.mxu0 0.0
    %2954 = vmatpush1.msra.mxu0 0.0
    %2955 = vmatprep.subr.mxu0 0.0
    %2956 = vmatpush1.msra.mxu0 0.0
    %2957 = vmatprep.subr.mxu0 0.0
    %2958 = vmatpush1.msra.mxu0 0.0
    %2959 = vmatprep.subr.mxu0 0.0
    %2960 = vmatpush1.msra.mxu0 0.0
    %2961 = vmatprep.subr.mxu0 0.0
    %2962 = vmatpush1.msra.mxu0 0.0
    %2963 = vmatprep.subr.mxu0 0.0
    %2964 = vmatpush1.msra.mxu0 0.0
    %2965 = vmatprep.subr.mxu0 0.0
    %2966 = vmatpush1.msra.mxu0 0.0
    %2967 = vmatprep.subr.mxu0 0.0
    %2968 = vmatpush1.msra.mxu0 0.0
    %2969 = vmatprep.subr.mxu0 0.0
    %2970 = vmatpush1.msra.mxu0 0.0
    %2971 = vmatprep.subr.mxu0 0.0
    %2972 = vmatpush1.msra.mxu0 0.0
    %2973 = vmatprep.subr.mxu0 0.0
    %2974 = vmatpush1.msra.mxu0 0.0
    %2975 = vmatprep.subr.mxu0 0.0
    %2976 = vmatpush1.msra.mxu0 0.0
    %2977 = vmatprep.subr.mxu0 0.0
    %2978 = vmatpush1.msra.mxu0 0.0
    %2979 = vmatprep.subr.mxu0 0.0
    %2980 = vmatpush1.msra.mxu0 0.0
    %2981 = vmatprep.subr.mxu0 0.0
    %2982 = vmatpush1.msra.mxu0 0.0
    %2983 = vmatprep.subr.mxu0 0.0
    %2984 = vmatpush1.msra.mxu0 0.0
    %2985 = vmatprep.subr.mxu0 0.0
    %2986 = vmatpush1.msra.mxu0 0.0
    %2987 = vmatprep.subr.mxu0 0.0
    %2988 = vmatpush1.msra.mxu0 0.0
    %2989 = vmatprep.subr.mxu0 0.0
    %2990 = vmatpush1.msra.mxu0 0.0
    %2991 = vmatprep.subr.mxu0 0.0
    %2992 = vmatpush1.msra.mxu0 0.0
    %2993 = vmatprep.subr.mxu0 0.0
    %2994 = vmatpush1.msra.mxu0 0.0
    %2995 = vmatprep.subr.mxu0 0.0
    %2996 = vmatpush1.msra.mxu0 0.0
    %2997 = vmatprep.subr.mxu0 0.0
    %2998 = vmatpush1.msra.mxu0 0.0
    %2999 = vmatprep.subr.mxu0 0.0
    %3000 = vmatpush1.msra.mxu0 0.0
    %3001 = vmatprep.subr.mxu0 0.0
    %3002 = vmatpush1.msra.mxu0 0.0
    %3003 = vmatprep.subr.mxu0 0.0
    %3004 = vmatpush1.msra.mxu0 0.0
    %3005 = vmatprep.subr.mxu0 0.0
    %3006 = vmatpush1.msra.mxu0 0.0
    %3007 = vmatprep.subr.mxu0 0.0
    %3008 = vmatpush1.msra.mxu0 0.0
    %3009 = vmatprep.subr.mxu0 0.0
    %3010 = vmatpush1.msra.mxu0 0.0
    %3011 = vmatprep.subr.mxu0 0.0
    %3012 = vmatpush1.msra.mxu0 0.0
    %3013 = vmatprep.mubr.f32.mxu0 0.0
    %v3014 = vand.u32 %v2853, 4294901760
    %3015 = vmatmul.mubr.f32.gmra.mrb[0].mxu0 %v3014
    %v3016 = vpop.f32.mrb[0].mxu0
    %v3017 = vadd.f32 %v2931, %v3016
    %v3018 = vpop.f32.mrb[0].mxu0
    %3019 = vmatprep.mubr.f32.mxu0 0.0
    %v3020 = vand.u32 %v2856, 4294901760
    %3021 = vmatmul.mubr.f32.gmra.mrb[0].mxu0 %v3020
    %v3022 = vpop.f32.mrb[0].mxu0
    %v3023 = vadd.f32 %v2941, %v3022
    %v3024 = vpop.f32.mrb[0].mxu0
    %3025 = vdwg.mxu0
    %3026 = vmatprep.subr.mxu0 0.0
    %v3027 = vand.u32 %v2851, 4294901760
    %v3028 = vsub.f32 %v2851, %v3027
    %3029 = vmatpush1.msra.mxu0 %v3028
    %3030 = vmatprep.subr.mxu0 0.0
    %3031 = vmatpush1.msra.mxu0 0.0
    %3032 = vmatprep.subr.mxu0 0.0
    %3033 = vmatpush1.msra.mxu0 0.0
    %3034 = vmatprep.subr.mxu0 0.0
    %3035 = vmatpush1.msra.mxu0 0.0
    %3036 = vmatprep.subr.mxu0 0.0
    %3037 = vmatpush1.msra.mxu0 0.0
    %3038 = vmatprep.subr.mxu0 0.0
    %3039 = vmatpush1.msra.mxu0 0.0
    %3040 = vmatprep.subr.mxu0 0.0
    %3041 = vmatpush1.msra.mxu0 0.0
    %3042 = vmatprep.subr.mxu0 0.0
    %3043 = vmatpush1.msra.mxu0 0.0
    %3044 = vmatprep.subr.mxu0 0.0
    %3045 = vmatpush1.msra.mxu0 0.0
    %3046 = vmatprep.subr.mxu0 0.0
    %3047 = vmatpush1.msra.mxu0 0.0
    %3048 = vmatprep.subr.mxu0 0.0
    %3049 = vmatpush1.msra.mxu0 0.0
    %3050 = vmatprep.subr.mxu0 0.0
    %3051 = vmatpush1.msra.mxu0 0.0
    %3052 = vmatprep.subr.mxu0 0.0
    %3053 = vmatpush1.msra.mxu0 0.0
    %3054 = vmatprep.subr.mxu0 0.0
    %3055 = vmatpush1.msra.mxu0 0.0
    %3056 = vmatprep.subr.mxu0 0.0
    %3057 = vmatpush1.msra.mxu0 0.0
    %3058 = vmatprep.subr.mxu0 0.0
    %3059 = vmatpush1.msra.mxu0 0.0
    %3060 = vmatprep.subr.mxu0 0.0
    %3061 = vmatpush1.msra.mxu0 0.0
    %3062 = vmatprep.subr.mxu0 0.0
    %3063 = vmatpush1.msra.mxu0 0.0
    %3064 = vmatprep.subr.mxu0 0.0
    %3065 = vmatpush1.msra.mxu0 0.0
    %3066 = vmatprep.subr.mxu0 0.0
    %3067 = vmatpush1.msra.mxu0 0.0
    %3068 = vmatprep.subr.mxu0 0.0
    %3069 = vmatpush1.msra.mxu0 0.0
    %3070 = vmatprep.subr.mxu0 0.0
    %3071 = vmatpush1.msra.mxu0 0.0
    %3072 = vmatprep.subr.mxu0 0.0
    %3073 = vmatpush1.msra.mxu0 0.0
    %3074 = vmatprep.subr.mxu0 0.0
    %3075 = vmatpush1.msra.mxu0 0.0
    %3076 = vmatprep.subr.mxu0 0.0
    %3077 = vmatpush1.msra.mxu0 0.0
    %3078 = vmatprep.subr.mxu0 0.0
    %3079 = vmatpush1.msra.mxu0 0.0
    %3080 = vmatprep.subr.mxu0 0.0
    %3081 = vmatpush1.msra.mxu0 0.0
    %3082 = vmatprep.subr.mxu0 0.0
    %3083 = vmatpush1.msra.mxu0 0.0
    %3084 = vmatprep.subr.mxu0 0.0
    %3085 = vmatpush1.msra.mxu0 0.0
    %3086 = vmatprep.subr.mxu0 0.0
    %3087 = vmatpush1.msra.mxu0 0.0
    %3088 = vmatprep.subr.mxu0 0.0
    %3089 = vmatpush1.msra.mxu0 0.0
    %3090 = vmatprep.subr.mxu0 0.0
    %3091 = vmatpush1.msra.mxu0 0.0
    %3092 = vmatprep.mubr.f32.mxu0 0.0
    %v3093 = vand.u32 %v2853, 4294901760
    %v3094 = vsub.f32 %v2853, %v3093
    %3095 = vmatmul.mubr.f32.gmra.mrb[0].mxu0 %v3094
    %v3096 = vpop.f32.mrb[0].mxu0
    %v3097 = vadd.f32 %v3017, %v3096
    %v3098 = vpop.f32.mrb[0].mxu0
    %3099 = vmatprep.mubr.f32.mxu0 0.0
    %v3100 = vand.u32 %v2856, 4294901760
    %v3101 = vsub.f32 %v2856, %v3100
    %3102 = vmatmul.mubr.f32.gmra.mrb[0].mxu0 %v3101
    %v3103 = vpop.f32.mrb[0].mxu0
    %v3104 = vadd.f32 %v3023, %v3103
    %v3105 = vpop.f32.mrb[0].mxu0
    %3106 = vdwg.mxu0
    %3107 = vmatprep.subr.mxu0 0.0
    %v3108 = vand.u32 %v2851, 4294901760
    %3109 = vmatpush1.msra.mxu0 %v3108
    %3110 = vmatprep.subr.mxu0 0.0
    %3111 = vmatpush1.msra.mxu0 0.0
    %3112 = vmatprep.subr.mxu0 0.0
    %3113 = vmatpush1.msra.mxu0 0.0
    %3114 = vmatprep.subr.mxu0 0.0
    %3115 = vmatpush1.msra.mxu0 0.0
    %3116 = vmatprep.subr.mxu0 0.0
    %3117 = vmatpush1.msra.mxu0 0.0
    %3118 = vmatprep.subr.mxu0 0.0
    %3119 = vmatpush1.msra.mxu0 0.0
    %3120 = vmatprep.subr.mxu0 0.0
    %3121 = vmatpush1.msra.mxu0 0.0
    %3122 = vmatprep.subr.mxu0 0.0
    %3123 = vmatpush1.msra.mxu0 0.0
    %3124 = vmatprep.subr.mxu0 0.0
    %3125 = vmatpush1.msra.mxu0 0.0
    %3126 = vmatprep.subr.mxu0 0.0
    %3127 = vmatpush1.msra.mxu0 0.0
    %3128 = vmatprep.subr.mxu0 0.0
    %3129 = vmatpush1.msra.mxu0 0.0
    %3130 = vmatprep.subr.mxu0 0.0
    %3131 = vmatpush1.msra.mxu0 0.0
    %3132 = vmatprep.subr.mxu0 0.0
    %3133 = vmatpush1.msra.mxu0 0.0
    %3134 = vmatprep.subr.mxu0 0.0
    %3135 = vmatpush1.msra.mxu0 0.0
    %3136 = vmatprep.subr.mxu0 0.0
    %3137 = vmatpush1.msra.mxu0 0.0
    %3138 = vmatprep.subr.mxu0 0.0
    %3139 = vmatpush1.msra.mxu0 0.0
    %3140 = vmatprep.subr.mxu0 0.0
    %3141 = vmatpush1.msra.mxu0 0.0
    %3142 = vmatprep.subr.mxu0 0.0
    %3143 = vmatpush1.msra.mxu0 0.0
    %3144 = vmatprep.subr.mxu0 0.0
    %3145 = vmatpush1.msra.mxu0 0.0
    %3146 = vmatprep.subr.mxu0 0.0
    %3147 = vmatpush1.msra.mxu0 0.0
    %3148 = vmatprep.subr.mxu0 0.0
    %3149 = vmatpush1.msra.mxu0 0.0
    %3150 = vmatprep.subr.mxu0 0.0
    %3151 = vmatpush1.msra.mxu0 0.0
    %3152 = vmatprep.subr.mxu0 0.0
    %3153 = vmatpush1.msra.mxu0 0.0
    %3154 = vmatprep.subr.mxu0 0.0
    %3155 = vmatpush1.msra.mxu0 0.0
    %3156 = vmatprep.subr.mxu0 0.0
    %3157 = vmatpush1.msra.mxu0 0.0
    %3158 = vmatprep.subr.mxu0 0.0
    %3159 = vmatpush1.msra.mxu0 0.0
    %3160 = vmatprep.subr.mxu0 0.0
    %3161 = vmatpush1.msra.mxu0 0.0
    %3162 = vmatprep.subr.mxu0 0.0
    %3163 = vmatpush1.msra.mxu0 0.0
    %3164 = vmatprep.subr.mxu0 0.0
    %3165 = vmatpush1.msra.mxu0 0.0
    %3166 = vmatprep.subr.mxu0 0.0
    %3167 = vmatpush1.msra.mxu0 0.0
    %3168 = vmatprep.subr.mxu0 0.0
    %3169 = vmatpush1.msra.mxu0 0.0
    %3170 = vmatprep.subr.mxu0 0.0
    %3171 = vmatpush1.msra.mxu0 0.0
    %3172 = vmatprep.mubr.f32.mxu0 0.0
    %v3173 = vand.u32 %v2853, 4294901760
    %v3174 = vsub.f32 %v2853, %v3173
    %v3175 = vand.u32 %v3174, 4294901760
    %3176 = vmatmul.mubr.f32.gmra.mrb[0].mxu0 %v3175
    %v3177 = vpop.f32.mrb[0].mxu0
    %v3178 = vadd.f32 %v3097, %v3177
    %v3179 = vpop.f32.mrb[0].mxu0
    %3180 = vmatprep.mubr.f32.mxu0 0.0
    %v3181 = vand.u32 %v2856, 4294901760
    %v3182 = vsub.f32 %v2856, %v3181
    %v3183 = vand.u32 %v3182, 4294901760
    %3184 = vmatmul.mubr.f32.gmra.mrb[0].mxu0 %v3183
    %v3185 = vpop.f32.mrb[0].mxu0
    %v3186 = vadd.f32 %v3104, %v3185
    %v3187 = vpop.f32.mrb[0].mxu0
    %3188 = vdwg.mxu0
    %3189 = vmatprep.subr.mxu0 0.0
    %v3190 = vand.u32 %v2851, 4294901760
    %v3191 = vsub.f32 %v2851, %v3190
    %v3192 = vand.u32 %v3191, 4294901760
    %3193 = vmatpush1.msra.mxu0 %v3192
    %3194 = vmatprep.subr.mxu0 0.0
    %3195 = vmatpush1.msra.mxu0 0.0
    %3196 = vmatprep.subr.mxu0 0.0
    %3197 = vmatpush1.msra.mxu0 0.0
    %3198 = vmatprep.subr.mxu0 0.0
    %3199 = vmatpush1.msra.mxu0 0.0
    %3200 = vmatprep.subr.mxu0 0.0
    %3201 = vmatpush1.msra.mxu0 0.0
    %3202 = vmatprep.subr.mxu0 0.0
    %3203 = vmatpush1.msra.mxu0 0.0
    %3204 = vmatprep.subr.mxu0 0.0
    %3205 = vmatpush1.msra.mxu0 0.0
    %3206 = vmatprep.subr.mxu0 0.0
    %3207 = vmatpush1.msra.mxu0 0.0
    %3208 = vmatprep.subr.mxu0 0.0
    %3209 = vmatpush1.msra.mxu0 0.0
    %3210 = vmatprep.subr.mxu0 0.0
    %3211 = vmatpush1.msra.mxu0 0.0
    %3212 = vmatprep.subr.mxu0 0.0
    %3213 = vmatpush1.msra.mxu0 0.0
    %3214 = vmatprep.subr.mxu0 0.0
    %3215 = vmatpush1.msra.mxu0 0.0
    %3216 = vmatprep.subr.mxu0 0.0
    %3217 = vmatpush1.msra.mxu0 0.0
    %3218 = vmatprep.subr.mxu0 0.0
    %3219 = vmatpush1.msra.mxu0 0.0
    %3220 = vmatprep.subr.mxu0 0.0
    %3221 = vmatpush1.msra.mxu0 0.0
    %3222 = vmatprep.subr.mxu0 0.0
    %3223 = vmatpush1.msra.mxu0 0.0
    %3224 = vmatprep.subr.mxu0 0.0
    %3225 = vmatpush1.msra.mxu0 0.0
    %3226 = vmatprep.subr.mxu0 0.0
    %3227 = vmatpush1.msra.mxu0 0.0
    %3228 = vmatprep.subr.mxu0 0.0
    %3229 = vmatpush1.msra.mxu0 0.0
    %3230 = vmatprep.subr.mxu0 0.0
    %3231 = vmatpush1.msra.mxu0 0.0
    %3232 = vmatprep.subr.mxu0 0.0
    %3233 = vmatpush1.msra.mxu0 0.0
    %3234 = vmatprep.subr.mxu0 0.0
    %3235 = vmatpush1.msra.mxu0 0.0
    %3236 = vmatprep.subr.mxu0 0.0
    %3237 = vmatpush1.msra.mxu0 0.0
    %3238 = vmatprep.subr.mxu0 0.0
    %3239 = vmatpush1.msra.mxu0 0.0
    %3240 = vmatprep.subr.mxu0 0.0
    %3241 = vmatpush1.msra.mxu0 0.0
    %3242 = vmatprep.subr.mxu0 0.0
    %3243 = vmatpush1.msra.mxu0 0.0
    %3244 = vmatprep.subr.mxu0 0.0
    %3245 = vmatpush1.msra.mxu0 0.0
    %3246 = vmatprep.subr.mxu0 0.0
    %3247 = vmatpush1.msra.mxu0 0.0
    %3248 = vmatprep.subr.mxu0 0.0
    %3249 = vmatpush1.msra.mxu0 0.0
    %3250 = vmatprep.subr.mxu0 0.0
    %3251 = vmatpush1.msra.mxu0 0.0
    %3252 = vmatprep.subr.mxu0 0.0
    %3253 = vmatpush1.msra.mxu0 0.0
    %3254 = vmatprep.subr.mxu0 0.0
    %3255 = vmatpush1.msra.mxu0 0.0
    %3256 = vmatprep.mubr.f32.mxu0 0.0
    %v3257 = vand.u32 %v2853, 4294901760
    %3258 = vmatmul.mubr.f32.gmra.mrb[0].mxu0 %v3257
    %v3259 = vpop.f32.mrb[0].mxu0
    %v3260 = vadd.f32 %v3178, %v3259
    %v3261 = vpop.f32.mrb[0].mxu0
    %3262 = vmatprep.mubr.f32.mxu0 0.0
    %v3263 = vand.u32 %v2856, 4294901760
    %3264 = vmatmul.mubr.f32.gmra.mrb[0].mxu0 %v3263
    %v3265 = vpop.f32.mrb[0].mxu0
    %v3266 = vadd.f32 %v3186, %v3265
    %v3267 = vpop.f32.mrb[0].mxu0
    %3268 = vdwg.mxu0
    %3269 = vmatprep.subr.mxu0 0.0
    %v3270 = vand.u32 %v2851, 4294901760
    %3271 = vmatpush1.msra.mxu0 %v3270
    %3272 = vmatprep.subr.mxu0 0.0
    %3273 = vmatpush1.msra.mxu0 0.0
    %3274 = vmatprep.subr.mxu0 0.0
    %3275 = vmatpush1.msra.mxu0 0.0
    %3276 = vmatprep.subr.mxu0 0.0
    %3277 = vmatpush1.msra.mxu0 0.0
    %3278 = vmatprep.subr.mxu0 0.0
    %3279 = vmatpush1.msra.mxu0 0.0
    %3280 = vmatprep.subr.mxu0 0.0
    %3281 = vmatpush1.msra.mxu0 0.0
    %3282 = vmatprep.subr.mxu0 0.0
    %3283 = vmatpush1.msra.mxu0 0.0
    %3284 = vmatprep.subr.mxu0 0.0
    %3285 = vmatpush1.msra.mxu0 0.0
    %3286 = vmatprep.subr.mxu0 0.0
    %3287 = vmatpush1.msra.mxu0 0.0
    %3288 = vmatprep.subr.mxu0 0.0
    %3289 = vmatpush1.msra.mxu0 0.0
    %3290 = vmatprep.subr.mxu0 0.0
    %3291 = vmatpush1.msra.mxu0 0.0
    %3292 = vmatprep.subr.mxu0 0.0
    %3293 = vmatpush1.msra.mxu0 0.0
    %3294 = vmatprep.subr.mxu0 0.0
    %3295 = vmatpush1.msra.mxu0 0.0
    %3296 = vmatprep.subr.mxu0 0.0
    %3297 = vmatpush1.msra.mxu0 0.0
    %3298 = vmatprep.subr.mxu0 0.0
    %3299 = vmatpush1.msra.mxu0 0.0
    %3300 = vmatprep.subr.mxu0 0.0
    %3301 = vmatpush1.msra.mxu0 0.0
    %3302 = vmatprep.subr.mxu0 0.0
    %3303 = vmatpush1.msra.mxu0 0.0
    %3304 = vmatprep.subr.mxu0 0.0
    %3305 = vmatpush1.msra.mxu0 0.0
    %3306 = vmatprep.subr.mxu0 0.0
    %3307 = vmatpush1.msra.mxu0 0.0
    %3308 = vmatprep.subr.mxu0 0.0
    %3309 = vmatpush1.msra.mxu0 0.0
    %3310 = vmatprep.subr.mxu0 0.0
    %3311 = vmatpush1.msra.mxu0 0.0
    %3312 = vmatprep.subr.mxu0 0.0
    %3313 = vmatpush1.msra.mxu0 0.0
    %3314 = vmatprep.subr.mxu0 0.0
    %3315 = vmatpush1.msra.mxu0 0.0
    %3316 = vmatprep.subr.mxu0 0.0
    %3317 = vmatpush1.msra.mxu0 0.0
    %3318 = vmatprep.subr.mxu0 0.0
    %3319 = vmatpush1.msra.mxu0 0.0
    %3320 = vmatprep.subr.mxu0 0.0
    %3321 = vmatpush1.msra.mxu0 0.0
    %3322 = vmatprep.subr.mxu0 0.0
    %3323 = vmatpush1.msra.mxu0 0.0
    %3324 = vmatprep.subr.mxu0 0.0
    %3325 = vmatpush1.msra.mxu0 0.0
    %3326 = vmatprep.subr.mxu0 0.0
    %3327 = vmatpush1.msra.mxu0 0.0
    %3328 = vmatprep.subr.mxu0 0.0
    %3329 = vmatpush1.msra.mxu0 0.0
    %3330 = vmatprep.subr.mxu0 0.0
    %3331 = vmatpush1.msra.mxu0 0.0
    %3332 = vmatprep.subr.mxu0 0.0
    %3333 = vmatpush1.msra.mxu0 0.0
    %3334 = vmatprep.mubr.f32.mxu0 0.0
    %v3335 = vand.u32 %v2853, 4294901760
    %3336 = vmatmul.mubr.f32.gmra.mrb[0].mxu0 %v3335
    %v3337 = vpop.f32.mrb[0].mxu0
    %v3338 = vadd.f32 %v3260, %v3337
    %v3339 = vpop.f32.mrb[0].mxu0
    %3340 = vmatprep.mubr.f32.mxu0 0.0
    %v3341 = vand.u32 %v2856, 4294901760
    %3342 = vmatmul.mubr.f32.gmra.mrb[0].mxu0 %v3341
    %v3343 = vpop.f32.mrb[0].mxu0
    %v3344 = vadd.f32 %v3266, %v3343
    %v3345 = vpop.f32.mrb[0].mxu0
    %3346 = vdwg.mxu0
    %v3348 = vsel %vm745, %v1792, 0
    %v3351 = vsel %vm745, %v1794, 0
    %3353 = vmatprep.subr.mxu0 0.0
    %v3354 = vand.u32 %v1795, 4294901760
    %3355 = vmatpush1.msra.mxu0 %v3354
    %3356 = vmatprep.subr.mxu0 0.0
    %3357 = vmatpush1.msra.mxu0 0.0
    %3358 = vmatprep.subr.mxu0 0.0
    %3359 = vmatpush1.msra.mxu0 0.0
    %3360 = vmatprep.subr.mxu0 0.0
    %3361 = vmatpush1.msra.mxu0 0.0
    %3362 = vmatprep.subr.mxu0 0.0
    %3363 = vmatpush1.msra.mxu0 0.0
    %3364 = vmatprep.subr.mxu0 0.0
    %3365 = vmatpush1.msra.mxu0 0.0
    %3366 = vmatprep.subr.mxu0 0.0
    %3367 = vmatpush1.msra.mxu0 0.0
    %3368 = vmatprep.subr.mxu0 0.0
    %3369 = vmatpush1.msra.mxu0 0.0
    %3370 = vmatprep.subr.mxu0 0.0
    %3371 = vmatpush1.msra.mxu0 0.0
    %3372 = vmatprep.subr.mxu0 0.0
    %3373 = vmatpush1.msra.mxu0 0.0
    %3374 = vmatprep.subr.mxu0 0.0
    %3375 = vmatpush1.msra.mxu0 0.0
    %3376 = vmatprep.subr.mxu0 0.0
    %3377 = vmatpush1.msra.mxu0 0.0
    %3378 = vmatprep.subr.mxu0 0.0
    %3379 = vmatpush1.msra.mxu0 0.0
    %3380 = vmatprep.subr.mxu0 0.0
    %3381 = vmatpush1.msra.mxu0 0.0
    %3382 = vmatprep.subr.mxu0 0.0
    %3383 = vmatpush1.msra.mxu0 0.0
    %3384 = vmatprep.subr.mxu0 0.0
    %3385 = vmatpush1.msra.mxu0 0.0
    %3386 = vmatprep.subr.mxu0 0.0
    %3387 = vmatpush1.msra.mxu0 0.0
    %3388 = vmatprep.subr.mxu0 0.0
    %3389 = vmatpush1.msra.mxu0 0.0
    %3390 = vmatprep.subr.mxu0 0.0
    %3391 = vmatpush1.msra.mxu0 0.0
    %3392 = vmatprep.subr.mxu0 0.0
    %3393 = vmatpush1.msra.mxu0 0.0
    %3394 = vmatprep.subr.mxu0 0.0
    %3395 = vmatpush1.msra.mxu0 0.0
    %3396 = vmatprep.subr.mxu0 0.0
    %3397 = vmatpush1.msra.mxu0 0.0
    %3398 = vmatprep.subr.mxu0 0.0
    %3399 = vmatpush1.msra.mxu0 0.0
    %3400 = vmatprep.subr.mxu0 0.0
    %3401 = vmatpush1.msra.mxu0 0.0
    %3402 = vmatprep.subr.mxu0 0.0
    %3403 = vmatpush1.msra.mxu0 0.0
    %3404 = vmatprep.subr.mxu0 0.0
    %3405 = vmatpush1.msra.mxu0 0.0
    %3406 = vmatprep.subr.mxu0 0.0
    %3407 = vmatpush1.msra.mxu0 0.0
    %3408 = vmatprep.subr.mxu0 0.0
    %3409 = vmatpush1.msra.mxu0 0.0
    %3410 = vmatprep.subr.mxu0 0.0
    %3411 = vmatpush1.msra.mxu0 0.0
    %3412 = vmatprep.subr.mxu0 0.0
    %3413 = vmatpush1.msra.mxu0 0.0
    %3414 = vmatprep.subr.mxu0 0.0
    %3415 = vmatpush1.msra.mxu0 0.0
    %3416 = vmatprep.subr.mxu0 0.0
    %3417 = vmatpush1.msra.mxu0 0.0
    %3418 = vmatprep.mubr.f32.mxu0 0.0
    %v3419 = vand.u32 %v3348, 4294901760
    %v3420 = vsub.f32 %v3348, %v3419
    %v3421 = vand.u32 %v3420, 4294901760
    %v3422 = vsub.f32 %v3420, %v3421
    %v3423 = vand.u32 %v3422, 4294901760
    %3424 = vmatmul.mubr.f32.gmra.mrb[0].mxu0 %v3423
    %v3425 = vpop.f32.mrb[0].mxu0
    %v3426 = vadd.f32 %v3338, %v3425
    %v3427 = vpop.f32.mrb[0].mxu0
    %3428 = vmatprep.mubr.f32.mxu0 0.0
    %v3429 = vand.u32 %v3351, 4294901760
    %v3430 = vsub.f32 %v3351, %v3429
    %v3431 = vand.u32 %v3430, 4294901760
    %v3432 = vsub.f32 %v3430, %v3431
    %v3433 = vand.u32 %v3432, 4294901760
    %3434 = vmatmul.mubr.f32.gmra.mrb[0].mxu0 %v3433
    %v3435 = vpop.f32.mrb[0].mxu0
    %v3436 = vadd.f32 %v3344, %v3435
    %v3437 = vpop.f32.mrb[0].mxu0
    %3438 = vdwg.mxu0
    %3439 = vmatprep.subr.mxu0 0.0
    %v3440 = vand.u32 %v1795, 4294901760
    %v3441 = vsub.f32 %v1795, %v3440
    %v3442 = vand.u32 %v3441, 4294901760
    %v3443 = vsub.f32 %v3441, %v3442
    %v3444 = vand.u32 %v3443, 4294901760
    %3445 = vmatpush1.msra.mxu0 %v3444
    %3446 = vmatprep.subr.mxu0 0.0
    %3447 = vmatpush1.msra.mxu0 0.0
    %3448 = vmatprep.subr.mxu0 0.0
    %3449 = vmatpush1.msra.mxu0 0.0
    %3450 = vmatprep.subr.mxu0 0.0
    %3451 = vmatpush1.msra.mxu0 0.0
    %3452 = vmatprep.subr.mxu0 0.0
    %3453 = vmatpush1.msra.mxu0 0.0
    %3454 = vmatprep.subr.mxu0 0.0
    %3455 = vmatpush1.msra.mxu0 0.0
    %3456 = vmatprep.subr.mxu0 0.0
    %3457 = vmatpush1.msra.mxu0 0.0
    %3458 = vmatprep.subr.mxu0 0.0
    %3459 = vmatpush1.msra.mxu0 0.0
    %3460 = vmatprep.subr.mxu0 0.0
    %3461 = vmatpush1.msra.mxu0 0.0
    %3462 = vmatprep.subr.mxu0 0.0
    %3463 = vmatpush1.msra.mxu0 0.0
    %3464 = vmatprep.subr.mxu0 0.0
    %3465 = vmatpush1.msra.mxu0 0.0
    %3466 = vmatprep.subr.mxu0 0.0
    %3467 = vmatpush1.msra.mxu0 0.0
    %3468 = vmatprep.subr.mxu0 0.0
    %3469 = vmatpush1.msra.mxu0 0.0
    %3470 = vmatprep.subr.mxu0 0.0
    %3471 = vmatpush1.msra.mxu0 0.0
    %3472 = vmatprep.subr.mxu0 0.0
    %3473 = vmatpush1.msra.mxu0 0.0
    %3474 = vmatprep.subr.mxu0 0.0
    %3475 = vmatpush1.msra.mxu0 0.0
    %3476 = vmatprep.subr.mxu0 0.0
    %3477 = vmatpush1.msra.mxu0 0.0
    %3478 = vmatprep.subr.mxu0 0.0
    %3479 = vmatpush1.msra.mxu0 0.0
    %3480 = vmatprep.subr.mxu0 0.0
    %3481 = vmatpush1.msra.mxu0 0.0
    %3482 = vmatprep.subr.mxu0 0.0
    %3483 = vmatpush1.msra.mxu0 0.0
    %3484 = vmatprep.subr.mxu0 0.0
    %3485 = vmatpush1.msra.mxu0 0.0
    %3486 = vmatprep.subr.mxu0 0.0
    %3487 = vmatpush1.msra.mxu0 0.0
    %3488 = vmatprep.subr.mxu0 0.0
    %3489 = vmatpush1.msra.mxu0 0.0
    %3490 = vmatprep.subr.mxu0 0.0
    %3491 = vmatpush1.msra.mxu0 0.0
    %3492 = vmatprep.subr.mxu0 0.0
    %3493 = vmatpush1.msra.mxu0 0.0
    %3494 = vmatprep.subr.mxu0 0.0
    %3495 = vmatpush1.msra.mxu0 0.0
    %3496 = vmatprep.subr.mxu0 0.0
    %3497 = vmatpush1.msra.mxu0 0.0
    %3498 = vmatprep.subr.mxu0 0.0
    %3499 = vmatpush1.msra.mxu0 0.0
    %3500 = vmatprep.subr.mxu0 0.0
    %3501 = vmatpush1.msra.mxu0 0.0
    %3502 = vmatprep.subr.mxu0 0.0
    %3503 = vmatpush1.msra.mxu0 0.0
    %3504 = vmatprep.subr.mxu0 0.0
    %3505 = vmatpush1.msra.mxu0 0.0
    %3506 = vmatprep.subr.mxu0 0.0
    %3507 = vmatpush1.msra.mxu0 0.0
    %3508 = vmatprep.mubr.f32.mxu0 0.0
    %v3509 = vand.u32 %v3348, 4294901760
    %3510 = vmatmul.mubr.f32.gmra.mrb[0].mxu0 %v3509
    %v3511 = vpop.f32.mrb[0].mxu0
    %v3512 = vadd.f32 %v3426, %v3511
    %v3513 = vpop.f32.mrb[0].mxu0
    %3514 = vmatprep.mubr.f32.mxu0 0.0
    %v3515 = vand.u32 %v3351, 4294901760
    %3516 = vmatmul.mubr.f32.gmra.mrb[0].mxu0 %v3515
    %v3517 = vpop.f32.mrb[0].mxu0
    %v3518 = vadd.f32 %v3436, %v3517
    %v3519 = vpop.f32.mrb[0].mxu0
    %3520 = vdwg.mxu0
    %3521 = vmatprep.subr.mxu0 0.0
    %v3522 = vand.u32 %v1795, 4294901760
    %v3523 = vsub.f32 %v1795, %v3522
    %3524 = vmatpush1.msra.mxu0 %v3523
    %3525 = vmatprep.subr.mxu0 0.0
    %3526 = vmatpush1.msra.mxu0 0.0
    %3527 = vmatprep.subr.mxu0 0.0
    %3528 = vmatpush1.msra.mxu0 0.0
    %3529 = vmatprep.subr.mxu0 0.0
    %3530 = vmatpush1.msra.mxu0 0.0
    %3531 = vmatprep.subr.mxu0 0.0
    %3532 = vmatpush1.msra.mxu0 0.0
    %3533 = vmatprep.subr.mxu0 0.0
    %3534 = vmatpush1.msra.mxu0 0.0
    %3535 = vmatprep.subr.mxu0 0.0
    %3536 = vmatpush1.msra.mxu0 0.0
    %3537 = vmatprep.subr.mxu0 0.0
    %3538 = vmatpush1.msra.mxu0 0.0
    %3539 = vmatprep.subr.mxu0 0.0
    %3540 = vmatpush1.msra.mxu0 0.0
    %3541 = vmatprep.subr.mxu0 0.0
    %3542 = vmatpush1.msra.mxu0 0.0
    %3543 = vmatprep.subr.mxu0 0.0
    %3544 = vmatpush1.msra.mxu0 0.0
    %3545 = vmatprep.subr.mxu0 0.0
    %3546 = vmatpush1.msra.mxu0 0.0
    %3547 = vmatprep.subr.mxu0 0.0
    %3548 = vmatpush1.msra.mxu0 0.0
    %3549 = vmatprep.subr.mxu0 0.0
    %3550 = vmatpush1.msra.mxu0 0.0
    %3551 = vmatprep.subr.mxu0 0.0
    %3552 = vmatpush1.msra.mxu0 0.0
    %3553 = vmatprep.subr.mxu0 0.0
    %3554 = vmatpush1.msra.mxu0 0.0
    %3555 = vmatprep.subr.mxu0 0.0
    %3556 = vmatpush1.msra.mxu0 0.0
    %3557 = vmatprep.subr.mxu0 0.0
    %3558 = vmatpush1.msra.mxu0 0.0
    %3559 = vmatprep.subr.mxu0 0.0
    %3560 = vmatpush1.msra.mxu0 0.0
    %3561 = vmatprep.subr.mxu0 0.0
    %3562 = vmatpush1.msra.mxu0 0.0
    %3563 = vmatprep.subr.mxu0 0.0
    %3564 = vmatpush1.msra.mxu0 0.0
    %3565 = vmatprep.subr.mxu0 0.0
    %3566 = vmatpush1.msra.mxu0 0.0
    %3567 = vmatprep.subr.mxu0 0.0
    %3568 = vmatpush1.msra.mxu0 0.0
    %3569 = vmatprep.subr.mxu0 0.0
    %3570 = vmatpush1.msra.mxu0 0.0
    %3571 = vmatprep.subr.mxu0 0.0
    %3572 = vmatpush1.msra.mxu0 0.0
    %3573 = vmatprep.subr.mxu0 0.0
    %3574 = vmatpush1.msra.mxu0 0.0
    %3575 = vmatprep.subr.mxu0 0.0
    %3576 = vmatpush1.msra.mxu0 0.0
    %3577 = vmatprep.subr.mxu0 0.0
    %3578 = vmatpush1.msra.mxu0 0.0
    %3579 = vmatprep.subr.mxu0 0.0
    %3580 = vmatpush1.msra.mxu0 0.0
    %3581 = vmatprep.subr.mxu0 0.0
    %3582 = vmatpush1.msra.mxu0 0.0
    %3583 = vmatprep.subr.mxu0 0.0
    %3584 = vmatpush1.msra.mxu0 0.0
    %3585 = vmatprep.subr.mxu0 0.0
    %3586 = vmatpush1.msra.mxu0 0.0
    %3587 = vmatprep.mubr.f32.mxu0 0.0
    %v3588 = vand.u32 %v3348, 4294901760
    %v3589 = vsub.f32 %v3348, %v3588
    %3590 = vmatmul.mubr.f32.gmra.mrb[0].mxu0 %v3589
    %v3591 = vpop.f32.mrb[0].mxu0
    %v3592 = vadd.f32 %v3512, %v3591
    %v3593 = vpop.f32.mrb[0].mxu0
    %3594 = vmatprep.mubr.f32.mxu0 0.0
    %v3595 = vand.u32 %v3351, 4294901760
    %v3596 = vsub.f32 %v3351, %v3595
    %3597 = vmatmul.mubr.f32.gmra.mrb[0].mxu0 %v3596
    %v3598 = vpop.f32.mrb[0].mxu0
    %v3599 = vadd.f32 %v3518, %v3598
    %v3600 = vpop.f32.mrb[0].mxu0
    %3601 = vdwg.mxu0
    %3602 = vmatprep.subr.mxu0 0.0
    %v3603 = vand.u32 %v1795, 4294901760
    %3604 = vmatpush1.msra.mxu0 %v3603
    %3605 = vmatprep.subr.mxu0 0.0
    %3606 = vmatpush1.msra.mxu0 0.0
    %3607 = vmatprep.subr.mxu0 0.0
    %3608 = vmatpush1.msra.mxu0 0.0
    %3609 = vmatprep.subr.mxu0 0.0
    %3610 = vmatpush1.msra.mxu0 0.0
    %3611 = vmatprep.subr.mxu0 0.0
    %3612 = vmatpush1.msra.mxu0 0.0
    %3613 = vmatprep.subr.mxu0 0.0
    %3614 = vmatpush1.msra.mxu0 0.0
    %3615 = vmatprep.subr.mxu0 0.0
    %3616 = vmatpush1.msra.mxu0 0.0
    %3617 = vmatprep.subr.mxu0 0.0
    %3618 = vmatpush1.msra.mxu0 0.0
    %3619 = vmatprep.subr.mxu0 0.0
    %3620 = vmatpush1.msra.mxu0 0.0
    %3621 = vmatprep.subr.mxu0 0.0
    %3622 = vmatpush1.msra.mxu0 0.0
    %3623 = vmatprep.subr.mxu0 0.0
    %3624 = vmatpush1.msra.mxu0 0.0
    %3625 = vmatprep.subr.mxu0 0.0
    %3626 = vmatpush1.msra.mxu0 0.0
    %3627 = vmatprep.subr.mxu0 0.0
    %3628 = vmatpush1.msra.mxu0 0.0
    %3629 = vmatprep.subr.mxu0 0.0
    %3630 = vmatpush1.msra.mxu0 0.0
    %3631 = vmatprep.subr.mxu0 0.0
    %3632 = vmatpush1.msra.mxu0 0.0
    %3633 = vmatprep.subr.mxu0 0.0
    %3634 = vmatpush1.msra.mxu0 0.0
    %3635 = vmatprep.subr.mxu0 0.0
    %3636 = vmatpush1.msra.mxu0 0.0
    %3637 = vmatprep.subr.mxu0 0.0
    %3638 = vmatpush1.msra.mxu0 0.0
    %3639 = vmatprep.subr.mxu0 0.0
    %3640 = vmatpush1.msra.mxu0 0.0
    %3641 = vmatprep.subr.mxu0 0.0
    %3642 = vmatpush1.msra.mxu0 0.0
    %3643 = vmatprep.subr.mxu0 0.0
    %3644 = vmatpush1.msra.mxu0 0.0
    %3645 = vmatprep.subr.mxu0 0.0
    %3646 = vmatpush1.msra.mxu0 0.0
    %3647 = vmatprep.subr.mxu0 0.0
    %3648 = vmatpush1.msra.mxu0 0.0
    %3649 = vmatprep.subr.mxu0 0.0
    %3650 = vmatpush1.msra.mxu0 0.0
    %3651 = vmatprep.subr.mxu0 0.0
    %3652 = vmatpush1.msra.mxu0 0.0
    %3653 = vmatprep.subr.mxu0 0.0
    %3654 = vmatpush1.msra.mxu0 0.0
    %3655 = vmatprep.subr.mxu0 0.0
    %3656 = vmatpush1.msra.mxu0 0.0
    %3657 = vmatprep.subr.mxu0 0.0
    %3658 = vmatpush1.msra.mxu0 0.0
    %3659 = vmatprep.subr.mxu0 0.0
    %3660 = vmatpush1.msra.mxu0 0.0
    %3661 = vmatprep.subr.mxu0 0.0
    %3662 = vmatpush1.msra.mxu0 0.0
    %3663 = vmatprep.subr.mxu0 0.0
    %3664 = vmatpush1.msra.mxu0 0.0
    %3665 = vmatprep.subr.mxu0 0.0
    %3666 = vmatpush1.msra.mxu0 0.0
    %3667 = vmatprep.mubr.f32.mxu0 0.0
    %v3668 = vand.u32 %v3348, 4294901760
    %v3669 = vsub.f32 %v3348, %v3668
    %v3670 = vand.u32 %v3669, 4294901760
    %3671 = vmatmul.mubr.f32.gmra.mrb[0].mxu0 %v3670
    %v3672 = vpop.f32.mrb[0].mxu0
    %v3673 = vadd.f32 %v3592, %v3672
    %v3674 = vpop.f32.mrb[0].mxu0
    %3675 = vmatprep.mubr.f32.mxu0 0.0
    %v3676 = vand.u32 %v3351, 4294901760
    %v3677 = vsub.f32 %v3351, %v3676
    %v3678 = vand.u32 %v3677, 4294901760
    %3679 = vmatmul.mubr.f32.gmra.mrb[0].mxu0 %v3678
    %v3680 = vpop.f32.mrb[0].mxu0
    %v3681 = vadd.f32 %v3599, %v3680
    %v3682 = vpop.f32.mrb[0].mxu0
    %3683 = vdwg.mxu0
    %3684 = vmatprep.subr.mxu0 0.0
    %v3685 = vand.u32 %v1795, 4294901760
    %v3686 = vsub.f32 %v1795, %v3685
    %v3687 = vand.u32 %v3686, 4294901760
    %3688 = vmatpush1.msra.mxu0 %v3687
    %3689 = vmatprep.subr.mxu0 0.0
    %3690 = vmatpush1.msra.mxu0 0.0
    %3691 = vmatprep.subr.mxu0 0.0
    %3692 = vmatpush1.msra.mxu0 0.0
    %3693 = vmatprep.subr.mxu0 0.0
    %3694 = vmatpush1.msra.mxu0 0.0
    %3695 = vmatprep.subr.mxu0 0.0
    %3696 = vmatpush1.msra.mxu0 0.0
    %3697 = vmatprep.subr.mxu0 0.0
    %3698 = vmatpush1.msra.mxu0 0.0
    %3699 = vmatprep.subr.mxu0 0.0
    %3700 = vmatpush1.msra.mxu0 0.0
    %3701 = vmatprep.subr.mxu0 0.0
    %3702 = vmatpush1.msra.mxu0 0.0
    %3703 = vmatprep.subr.mxu0 0.0
    %3704 = vmatpush1.msra.mxu0 0.0
    %3705 = vmatprep.subr.mxu0 0.0
    %3706 = vmatpush1.msra.mxu0 0.0
    %3707 = vmatprep.subr.mxu0 0.0
    %3708 = vmatpush1.msra.mxu0 0.0
    %3709 = vmatprep.subr.mxu0 0.0
    %3710 = vmatpush1.msra.mxu0 0.0
    %3711 = vmatprep.subr.mxu0 0.0
    %3712 = vmatpush1.msra.mxu0 0.0
    %3713 = vmatprep.subr.mxu0 0.0
    %3714 = vmatpush1.msra.mxu0 0.0
    %3715 = vmatprep.subr.mxu0 0.0
    %3716 = vmatpush1.msra.mxu0 0.0
    %3717 = vmatprep.subr.mxu0 0.0
    %3718 = vmatpush1.msra.mxu0 0.0
    %3719 = vmatprep.subr.mxu0 0.0
    %3720 = vmatpush1.msra.mxu0 0.0
    %3721 = vmatprep.subr.mxu0 0.0
    %3722 = vmatpush1.msra.mxu0 0.0
    %3723 = vmatprep.subr.mxu0 0.0
    %3724 = vmatpush1.msra.mxu0 0.0
    %3725 = vmatprep.subr.mxu0 0.0
    %3726 = vmatpush1.msra.mxu0 0.0
    %3727 = vmatprep.subr.mxu0 0.0
    %3728 = vmatpush1.msra.mxu0 0.0
    %3729 = vmatprep.subr.mxu0 0.0
    %3730 = vmatpush1.msra.mxu0 0.0
    %3731 = vmatprep.subr.mxu0 0.0
    %3732 = vmatpush1.msra.mxu0 0.0
    %3733 = vmatprep.subr.mxu0 0.0
    %3734 = vmatpush1.msra.mxu0 0.0
    %3735 = vmatprep.subr.mxu0 0.0
    %3736 = vmatpush1.msra.mxu0 0.0
    %3737 = vmatprep.subr.mxu0 0.0
    %3738 = vmatpush1.msra.mxu0 0.0
    %3739 = vmatprep.subr.mxu0 0.0
    %3740 = vmatpush1.msra.mxu0 0.0
    %3741 = vmatprep.subr.mxu0 0.0
    %3742 = vmatpush1.msra.mxu0 0.0
    %3743 = vmatprep.subr.mxu0 0.0
    %3744 = vmatpush1.msra.mxu0 0.0
    %3745 = vmatprep.subr.mxu0 0.0
    %3746 = vmatpush1.msra.mxu0 0.0
    %3747 = vmatprep.subr.mxu0 0.0
    %3748 = vmatpush1.msra.mxu0 0.0
    %3749 = vmatprep.subr.mxu0 0.0
    %3750 = vmatpush1.msra.mxu0 0.0
    %3751 = vmatprep.mubr.f32.mxu0 0.0
    %v3752 = vand.u32 %v3348, 4294901760
    %3753 = vmatmul.mubr.f32.gmra.mrb[0].mxu0 %v3752
    %v3754 = vpop.f32.mrb[0].mxu0
    %v3755 = vadd.f32 %v3673, %v3754
    %v3756 = vpop.f32.mrb[0].mxu0
    %3757 = vmatprep.mubr.f32.mxu0 0.0
    %v3758 = vand.u32 %v3351, 4294901760
    %3759 = vmatmul.mubr.f32.gmra.mrb[0].mxu0 %v3758
    %v3760 = vpop.f32.mrb[0].mxu0
    %v3761 = vadd.f32 %v3681, %v3760
    %v3762 = vpop.f32.mrb[0].mxu0
    %3763 = vdwg.mxu0
    %3764 = vmatprep.subr.mxu0 0.0
    %v3765 = vand.u32 %v1795, 4294901760
    %3766 = vmatpush1.msra.mxu0 %v3765
    %3767 = vmatprep.subr.mxu0 0.0
    %3768 = vmatpush1.msra.mxu0 0.0
    %3769 = vmatprep.subr.mxu0 0.0
    %3770 = vmatpush1.msra.mxu0 0.0
    %3771 = vmatprep.subr.mxu0 0.0
    %3772 = vmatpush1.msra.mxu0 0.0
    %3773 = vmatprep.subr.mxu0 0.0
    %3774 = vmatpush1.msra.mxu0 0.0
    %3775 = vmatprep.subr.mxu0 0.0
    %3776 = vmatpush1.msra.mxu0 0.0
    %3777 = vmatprep.subr.mxu0 0.0
    %3778 = vmatpush1.msra.mxu0 0.0
    %3779 = vmatprep.subr.mxu0 0.0
    %3780 = vmatpush1.msra.mxu0 0.0
    %3781 = vmatprep.subr.mxu0 0.0
    %3782 = vmatpush1.msra.mxu0 0.0
    %3783 = vmatprep.subr.mxu0 0.0
    %3784 = vmatpush1.msra.mxu0 0.0
    %3785 = vmatprep.subr.mxu0 0.0
    %3786 = vmatpush1.msra.mxu0 0.0
    %3787 = vmatprep.subr.mxu0 0.0
    %3788 = vmatpush1.msra.mxu0 0.0
    %3789 = vmatprep.subr.mxu0 0.0
    %3790 = vmatpush1.msra.mxu0 0.0
    %3791 = vmatprep.subr.mxu0 0.0
    %3792 = vmatpush1.msra.mxu0 0.0
    %3793 = vmatprep.subr.mxu0 0.0
    %3794 = vmatpush1.msra.mxu0 0.0
    %3795 = vmatprep.subr.mxu0 0.0
    %3796 = vmatpush1.msra.mxu0 0.0
    %3797 = vmatprep.subr.mxu0 0.0
    %3798 = vmatpush1.msra.mxu0 0.0
    %3799 = vmatprep.subr.mxu0 0.0
    %3800 = vmatpush1.msra.mxu0 0.0
    %3801 = vmatprep.subr.mxu0 0.0
    %3802 = vmatpush1.msra.mxu0 0.0
    %3803 = vmatprep.subr.mxu0 0.0
    %3804 = vmatpush1.msra.mxu0 0.0
    %3805 = vmatprep.subr.mxu0 0.0
    %3806 = vmatpush1.msra.mxu0 0.0
    %3807 = vmatprep.subr.mxu0 0.0
    %3808 = vmatpush1.msra.mxu0 0.0
    %3809 = vmatprep.subr.mxu0 0.0
    %3810 = vmatpush1.msra.mxu0 0.0
    %3811 = vmatprep.subr.mxu0 0.0
    %3812 = vmatpush1.msra.mxu0 0.0
    %3813 = vmatprep.subr.mxu0 0.0
    %3814 = vmatpush1.msra.mxu0 0.0
    %3815 = vmatprep.subr.mxu0 0.0
    %3816 = vmatpush1.msra.mxu0 0.0
    %3817 = vmatprep.subr.mxu0 0.0
    %3818 = vmatpush1.msra.mxu0 0.0
    %3819 = vmatprep.subr.mxu0 0.0
    %3820 = vmatpush1.msra.mxu0 0.0
    %3821 = vmatprep.subr.mxu0 0.0
    %3822 = vmatpush1.msra.mxu0 0.0
    %3823 = vmatprep.subr.mxu0 0.0
    %3824 = vmatpush1.msra.mxu0 0.0
    %3825 = vmatprep.subr.mxu0 0.0
    %3826 = vmatpush1.msra.mxu0 0.0
    %3827 = vmatprep.subr.mxu0 0.0
    %3828 = vmatpush1.msra.mxu0 0.0
    %3829 = vmatprep.mubr.f32.mxu0 0.0
    %v3830 = vand.u32 %v3348, 4294901760
    %3831 = vmatmul.mubr.f32.gmra.mrb[0].mxu0 %v3830
    %v3832 = vpop.f32.mrb[0].mxu0
    %v3833 = vadd.f32 %v3755, %v3832
    %v3834 = vpop.f32.mrb[0].mxu0
    %3835 = vmatprep.mubr.f32.mxu0 0.0
    %v3836 = vand.u32 %v3351, 4294901760
    %3837 = vmatmul.mubr.f32.gmra.mrb[0].mxu0 %v3836
    %v3838 = vpop.f32.mrb[0].mxu0
    %v3839 = vadd.f32 %v3761, %v3838
    %v3840 = vpop.f32.mrb[0].mxu0
    %3841 = vdwg.mxu0
    %3842 = vrot.lane.b32.xlu0 %v737, 112
    %v3843 = vpop.permute.xlu0 %3842
    %3844 = vrot.lane.b32.xlu0 %v738, 112
    %v3845 = vpop.permute.xlu0 %3844
    %3846 = vrot.lane.b32.xlu0 %v737, 80
    %v3847 = vpop.permute.xlu0 %3846
    %3848 = vrot.lane.b32.xlu0 %v738, 80
    %v3849 = vpop.permute.xlu0 %3848
    %v3850 = vsel %vm745, %v3843, 0
    %v3852 = vsel %vm745, %v3845, 0
    %v3854 = vsel %vm745, %v3847, 0
    %v3856 = vsel %vm745, %v3849, 0
    %3858 = vmatprep.subr.mxu0 0.0
    %v3859 = vand.u32 %v3854, 4294901760
    %3860 = vmatpush1.xpose.msra.mxu0 %v3859
    %3861 = vmatprep.subr.mxu0 0.0
    %v3862 = vand.u32 %v3856, 4294901760
    %3863 = vmatpush1.xpose.msra.mxu0 %v3862
    %3864 = vmatprep.subr.mxu0 0.0
    %3865 = vmatpush1.xpose.msra.mxu0 0.0
    %3866 = vmatprep.subr.mxu0 0.0
    %3867 = vmatpush1.xpose.msra.mxu0 0.0
    %3868 = vmatprep.subr.mxu0 0.0
    %3869 = vmatpush1.xpose.msra.mxu0 0.0
    %3870 = vmatprep.subr.mxu0 0.0
    %3871 = vmatpush1.xpose.msra.mxu0 0.0
    %3872 = vmatprep.subr.mxu0 0.0
    %3873 = vmatpush1.xpose.msra.mxu0 0.0
    %3874 = vmatprep.subr.mxu0 0.0
    %3875 = vmatpush1.xpose.msra.mxu0 0.0
    %3876 = vmatprep.subr.mxu0 0.0
    %3877 = vmatpush1.xpose.msra.mxu0 0.0
    %3878 = vmatprep.subr.mxu0 0.0
    %3879 = vmatpush1.xpose.msra.mxu0 0.0
    %3880 = vmatprep.subr.mxu0 0.0
    %3881 = vmatpush1.xpose.msra.mxu0 0.0
    %3882 = vmatprep.subr.mxu0 0.0
    %3883 = vmatpush1.xpose.msra.mxu0 0.0
    %3884 = vmatprep.subr.mxu0 0.0
    %3885 = vmatpush1.xpose.msra.mxu0 0.0
    %3886 = vmatprep.subr.mxu0 0.0
    %3887 = vmatpush1.xpose.msra.mxu0 0.0
    %3888 = vmatprep.subr.mxu0 0.0
    %3889 = vmatpush1.xpose.msra.mxu0 0.0
    %3890 = vmatprep.subr.mxu0 0.0
    %3891 = vmatpush1.xpose.msra.mxu0 0.0
    %3892 = vmatprep.subr.mxu0 0.0
    %3893 = vmatpush1.xpose.msra.mxu0 0.0
    %3894 = vmatprep.subr.mxu0 0.0
    %3895 = vmatpush1.xpose.msra.mxu0 0.0
    %3896 = vmatprep.subr.mxu0 0.0
    %3897 = vmatpush1.xpose.msra.mxu0 0.0
    %3898 = vmatprep.subr.mxu0 0.0
    %3899 = vmatpush1.xpose.msra.mxu0 0.0
    %3900 = vmatprep.subr.mxu0 0.0
    %3901 = vmatpush1.xpose.msra.mxu0 0.0
    %3902 = vmatprep.subr.mxu0 0.0
    %3903 = vmatpush1.xpose.msra.mxu0 0.0
    %3904 = vmatprep.subr.mxu0 0.0
    %3905 = vmatpush1.xpose.msra.mxu0 0.0
    %3906 = vmatprep.subr.mxu0 0.0
    %3907 = vmatpush1.xpose.msra.mxu0 0.0
    %3908 = vmatprep.subr.mxu0 0.0
    %3909 = vmatpush1.xpose.msra.mxu0 0.0
    %3910 = vmatprep.subr.mxu0 0.0
    %3911 = vmatpush1.xpose.msra.mxu0 0.0
    %3912 = vmatprep.subr.mxu0 0.0
    %3913 = vmatpush1.xpose.msra.mxu0 0.0
    %3914 = vmatprep.subr.mxu0 0.0
    %3915 = vmatpush1.xpose.msra.mxu0 0.0
    %3916 = vmatprep.subr.mxu0 0.0
    %3917 = vmatpush1.xpose.msra.mxu0 0.0
    %3918 = vmatprep.subr.mxu0 0.0
    %3919 = vmatpush1.xpose.msra.mxu0 0.0
    %3920 = vmatprep.subr.mxu0 0.0
    %3921 = vmatpush1.xpose.msra.mxu0 0.0
    %3922 = vmatprep.subr.mxu0 0.0
    %3923 = vmatpush1.xpose.msra.mxu0 0.0
    %3924 = vmatprep.mubr.f32.mxu0 0.0
    %v3925 = vand.u32 %v3850, 4294901760
    %v3926 = vsub.f32 %v3850, %v3925
    %v3927 = vand.u32 %v3926, 4294901760
    %v3928 = vsub.f32 %v3926, %v3927
    %v3929 = vand.u32 %v3928, 4294901760
    %3930 = vmatmul.mubr.f32.gmra.mrb[0].mxu0 %v3929
    %v3931 = vpop.f32.mrb[0].mxu0
    %v3932 = vadd.f32 %v102, %v3931
    %v3933 = vpop.f32.mrb[0].mxu0
    %3934 = vmatprep.mubr.f32.mxu0 0.0
    %v3935 = vand.u32 %v3852, 4294901760
    %v3936 = vsub.f32 %v3852, %v3935
    %v3937 = vand.u32 %v3936, 4294901760
    %v3938 = vsub.f32 %v3936, %v3937
    %v3939 = vand.u32 %v3938, 4294901760
    %3940 = vmatmul.mubr.f32.gmra.mrb[0].mxu0 %v3939
    %v3941 = vpop.f32.mrb[0].mxu0
    %v3942 = vadd.f32 %v103, %v3941
    %v3943 = vpop.f32.mrb[0].mxu0
    %3944 = vdwg.mxu0
    %3945 = vmatprep.subr.mxu0 0.0
    %v3946 = vand.u32 %v3854, 4294901760
    %v3947 = vsub.f32 %v3854, %v3946
    %v3948 = vand.u32 %v3947, 4294901760
    %v3949 = vsub.f32 %v3947, %v3948
    %v3950 = vand.u32 %v3949, 4294901760
    %3951 = vmatpush1.xpose.msra.mxu0 %v3950
    %3952 = vmatprep.subr.mxu0 0.0
    %v3953 = vand.u32 %v3856, 4294901760
    %v3954 = vsub.f32 %v3856, %v3953
    %v3955 = vand.u32 %v3954, 4294901760
    %v3956 = vsub.f32 %v3954, %v3955
    %v3957 = vand.u32 %v3956, 4294901760
    %3958 = vmatpush1.xpose.msra.mxu0 %v3957
    %3959 = vmatprep.subr.mxu0 0.0
    %3960 = vmatpush1.xpose.msra.mxu0 0.0
    %3961 = vmatprep.subr.mxu0 0.0
    %3962 = vmatpush1.xpose.msra.mxu0 0.0
    %3963 = vmatprep.subr.mxu0 0.0
    %3964 = vmatpush1.xpose.msra.mxu0 0.0
    %3965 = vmatprep.subr.mxu0 0.0
    %3966 = vmatpush1.xpose.msra.mxu0 0.0
    %3967 = vmatprep.subr.mxu0 0.0
    %3968 = vmatpush1.xpose.msra.mxu0 0.0
    %3969 = vmatprep.subr.mxu0 0.0
    %3970 = vmatpush1.xpose.msra.mxu0 0.0
    %3971 = vmatprep.subr.mxu0 0.0
    %3972 = vmatpush1.xpose.msra.mxu0 0.0
    %3973 = vmatprep.subr.mxu0 0.0
    %3974 = vmatpush1.xpose.msra.mxu0 0.0
    %3975 = vmatprep.subr.mxu0 0.0
    %3976 = vmatpush1.xpose.msra.mxu0 0.0
    %3977 = vmatprep.subr.mxu0 0.0
    %3978 = vmatpush1.xpose.msra.mxu0 0.0
    %3979 = vmatprep.subr.mxu0 0.0
    %3980 = vmatpush1.xpose.msra.mxu0 0.0
    %3981 = vmatprep.subr.mxu0 0.0
    %3982 = vmatpush1.xpose.msra.mxu0 0.0
    %3983 = vmatprep.subr.mxu0 0.0
    %3984 = vmatpush1.xpose.msra.mxu0 0.0
    %3985 = vmatprep.subr.mxu0 0.0
    %3986 = vmatpush1.xpose.msra.mxu0 0.0
    %3987 = vmatprep.subr.mxu0 0.0
    %3988 = vmatpush1.xpose.msra.mxu0 0.0
    %3989 = vmatprep.subr.mxu0 0.0
    %3990 = vmatpush1.xpose.msra.mxu0 0.0
    %3991 = vmatprep.subr.mxu0 0.0
    %3992 = vmatpush1.xpose.msra.mxu0 0.0
    %3993 = vmatprep.subr.mxu0 0.0
    %3994 = vmatpush1.xpose.msra.mxu0 0.0
    %3995 = vmatprep.subr.mxu0 0.0
    %3996 = vmatpush1.xpose.msra.mxu0 0.0
    %3997 = vmatprep.subr.mxu0 0.0
    %3998 = vmatpush1.xpose.msra.mxu0 0.0
    %3999 = vmatprep.subr.mxu0 0.0
    %4000 = vmatpush1.xpose.msra.mxu0 0.0
    %4001 = vmatprep.subr.mxu0 0.0
    %4002 = vmatpush1.xpose.msra.mxu0 0.0
    %4003 = vmatprep.subr.mxu0 0.0
    %4004 = vmatpush1.xpose.msra.mxu0 0.0
    %4005 = vmatprep.subr.mxu0 0.0
    %4006 = vmatpush1.xpose.msra.mxu0 0.0
    %4007 = vmatprep.subr.mxu0 0.0
    %4008 = vmatpush1.xpose.msra.mxu0 0.0
    %4009 = vmatprep.subr.mxu0 0.0
    %4010 = vmatpush1.xpose.msra.mxu0 0.0
    %4011 = vmatprep.subr.mxu0 0.0
    %4012 = vmatpush1.xpose.msra.mxu0 0.0
    %4013 = vmatprep.subr.mxu0 0.0
    %4014 = vmatpush1.xpose.msra.mxu0 0.0
    %4015 = vmatprep.subr.mxu0 0.0
    %4016 = vmatpush1.xpose.msra.mxu0 0.0
    %4017 = vmatprep.subr.mxu0 0.0
    %4018 = vmatpush1.xpose.msra.mxu0 0.0
    %4019 = vmatprep.mubr.f32.mxu0 0.0
    %v4020 = vand.u32 %v3850, 4294901760
    %4021 = vmatmul.mubr.f32.gmra.mrb[0].mxu0 %v4020
    %v4022 = vpop.f32.mrb[0].mxu0
    %v4023 = vadd.f32 %v3932, %v4022
    %v4024 = vpop.f32.mrb[0].mxu0
    %4025 = vmatprep.mubr.f32.mxu0 0.0
    %v4026 = vand.u32 %v3852, 4294901760
    %4027 = vmatmul.mubr.f32.gmra.mrb[0].mxu0 %v4026
    %v4028 = vpop.f32.mrb[0].mxu0
    %v4029 = vadd.f32 %v3942, %v4028
    %v4030 = vpop.f32.mrb[0].mxu0
    %4031 = vdwg.mxu0
    %4032 = vmatprep.subr.mxu0 0.0
    %v4033 = vand.u32 %v3854, 4294901760
    %v4034 = vsub.f32 %v3854, %v4033
    %4035 = vmatpush1.xpose.msra.mxu0 %v4034
    %4036 = vmatprep.subr.mxu0 0.0
    %v4037 = vand.u32 %v3856, 4294901760
    %v4038 = vsub.f32 %v3856, %v4037
    %4039 = vmatpush1.xpose.msra.mxu0 %v4038
    %4040 = vmatprep.subr.mxu0 0.0
    %4041 = vmatpush1.xpose.msra.mxu0 0.0
    %4042 = vmatprep.subr.mxu0 0.0
    %4043 = vmatpush1.xpose.msra.mxu0 0.0
    %4044 = vmatprep.subr.mxu0 0.0
    %4045 = vmatpush1.xpose.msra.mxu0 0.0
    %4046 = vmatprep.subr.mxu0 0.0
    %4047 = vmatpush1.xpose.msra.mxu0 0.0
    %4048 = vmatprep.subr.mxu0 0.0
    %4049 = vmatpush1.xpose.msra.mxu0 0.0
    %4050 = vmatprep.subr.mxu0 0.0
    %4051 = vmatpush1.xpose.msra.mxu0 0.0
    %4052 = vmatprep.subr.mxu0 0.0
    %4053 = vmatpush1.xpose.msra.mxu0 0.0
    %4054 = vmatprep.subr.mxu0 0.0
    %4055 = vmatpush1.xpose.msra.mxu0 0.0
    %4056 = vmatprep.subr.mxu0 0.0
    %4057 = vmatpush1.xpose.msra.mxu0 0.0
    %4058 = vmatprep.subr.mxu0 0.0
    %4059 = vmatpush1.xpose.msra.mxu0 0.0
    %4060 = vmatprep.subr.mxu0 0.0
    %4061 = vmatpush1.xpose.msra.mxu0 0.0
    %4062 = vmatprep.subr.mxu0 0.0
    %4063 = vmatpush1.xpose.msra.mxu0 0.0
    %4064 = vmatprep.subr.mxu0 0.0
    %4065 = vmatpush1.xpose.msra.mxu0 0.0
    %4066 = vmatprep.subr.mxu0 0.0
    %4067 = vmatpush1.xpose.msra.mxu0 0.0
    %4068 = vmatprep.subr.mxu0 0.0
    %4069 = vmatpush1.xpose.msra.mxu0 0.0
    %4070 = vmatprep.subr.mxu0 0.0
    %4071 = vmatpush1.xpose.msra.mxu0 0.0
    %4072 = vmatprep.subr.mxu0 0.0
    %4073 = vmatpush1.xpose.msra.mxu0 0.0
    %4074 = vmatprep.subr.mxu0 0.0
    %4075 = vmatpush1.xpose.msra.mxu0 0.0
    %4076 = vmatprep.subr.mxu0 0.0
    %4077 = vmatpush1.xpose.msra.mxu0 0.0
    %4078 = vmatprep.subr.mxu0 0.0
    %4079 = vmatpush1.xpose.msra.mxu0 0.0
    %4080 = vmatprep.subr.mxu0 0.0
    %4081 = vmatpush1.xpose.msra.mxu0 0.0
    %4082 = vmatprep.subr.mxu0 0.0
    %4083 = vmatpush1.xpose.msra.mxu0 0.0
    %4084 = vmatprep.subr.mxu0 0.0
    %4085 = vmatpush1.xpose.msra.mxu0 0.0
    %4086 = vmatprep.subr.mxu0 0.0
    %4087 = vmatpush1.xpose.msra.mxu0 0.0
    %4088 = vmatprep.subr.mxu0 0.0
    %4089 = vmatpush1.xpose.msra.mxu0 0.0
    %4090 = vmatprep.subr.mxu0 0.0
    %4091 = vmatpush1.xpose.msra.mxu0 0.0
    %4092 = vmatprep.subr.mxu0 0.0
    %4093 = vmatpush1.xpose.msra.mxu0 0.0
    %4094 = vmatprep.subr.mxu0 0.0
    %4095 = vmatpush1.xpose.msra.mxu0 0.0
    %4096 = vmatprep.subr.mxu0 0.0
    %4097 = vmatpush1.xpose.msra.mxu0 0.0
    %4098 = vmatprep.subr.mxu0 0.0
    %4099 = vmatpush1.xpose.msra.mxu0 0.0
    %4100 = vmatprep.mubr.f32.mxu0 0.0
    %v4101 = vand.u32 %v3850, 4294901760
    %v4102 = vsub.f32 %v3850, %v4101
    %4103 = vmatmul.mubr.f32.gmra.mrb[0].mxu0 %v4102
    %v4104 = vpop.f32.mrb[0].mxu0
    %v4105 = vadd.f32 %v4023, %v4104
    %v4106 = vpop.f32.mrb[0].mxu0
    %4107 = vmatprep.mubr.f32.mxu0 0.0
    %v4108 = vand.u32 %v3852, 4294901760
    %v4109 = vsub.f32 %v3852, %v4108
    %4110 = vmatmul.mubr.f32.gmra.mrb[0].mxu0 %v4109
    %v4111 = vpop.f32.mrb[0].mxu0
    %v4112 = vadd.f32 %v4029, %v4111
    %v4113 = vpop.f32.mrb[0].mxu0
    %4114 = vdwg.mxu0
    %4115 = vmatprep.subr.mxu0 0.0
    %v4116 = vand.u32 %v3854, 4294901760
    %4117 = vmatpush1.xpose.msra.mxu0 %v4116
    %4118 = vmatprep.subr.mxu0 0.0
    %v4119 = vand.u32 %v3856, 4294901760
    %4120 = vmatpush1.xpose.msra.mxu0 %v4119
    %4121 = vmatprep.subr.mxu0 0.0
    %4122 = vmatpush1.xpose.msra.mxu0 0.0
    %4123 = vmatprep.subr.mxu0 0.0
    %4124 = vmatpush1.xpose.msra.mxu0 0.0
    %4125 = vmatprep.subr.mxu0 0.0
    %4126 = vmatpush1.xpose.msra.mxu0 0.0
    %4127 = vmatprep.subr.mxu0 0.0
    %4128 = vmatpush1.xpose.msra.mxu0 0.0
    %4129 = vmatprep.subr.mxu0 0.0
    %4130 = vmatpush1.xpose.msra.mxu0 0.0
    %4131 = vmatprep.subr.mxu0 0.0
    %4132 = vmatpush1.xpose.msra.mxu0 0.0
    %4133 = vmatprep.subr.mxu0 0.0
    %4134 = vmatpush1.xpose.msra.mxu0 0.0
    %4135 = vmatprep.subr.mxu0 0.0
    %4136 = vmatpush1.xpose.msra.mxu0 0.0
    %4137 = vmatprep.subr.mxu0 0.0
    %4138 = vmatpush1.xpose.msra.mxu0 0.0
    %4139 = vmatprep.subr.mxu0 0.0
    %4140 = vmatpush1.xpose.msra.mxu0 0.0
    %4141 = vmatprep.subr.mxu0 0.0
    %4142 = vmatpush1.xpose.msra.mxu0 0.0
    %4143 = vmatprep.subr.mxu0 0.0
    %4144 = vmatpush1.xpose.msra.mxu0 0.0
    %4145 = vmatprep.subr.mxu0 0.0
    %4146 = vmatpush1.xpose.msra.mxu0 0.0
    %4147 = vmatprep.subr.mxu0 0.0
    %4148 = vmatpush1.xpose.msra.mxu0 0.0
    %4149 = vmatprep.subr.mxu0 0.0
    %4150 = vmatpush1.xpose.msra.mxu0 0.0
    %4151 = vmatprep.subr.mxu0 0.0
    %4152 = vmatpush1.xpose.msra.mxu0 0.0
    %4153 = vmatprep.subr.mxu0 0.0
    %4154 = vmatpush1.xpose.msra.mxu0 0.0
    %4155 = vmatprep.subr.mxu0 0.0
    %4156 = vmatpush1.xpose.msra.mxu0 0.0
    %4157 = vmatprep.subr.mxu0 0.0
    %4158 = vmatpush1.xpose.msra.mxu0 0.0
    %4159 = vmatprep.subr.mxu0 0.0
    %4160 = vmatpush1.xpose.msra.mxu0 0.0
    %4161 = vmatprep.subr.mxu0 0.0
    %4162 = vmatpush1.xpose.msra.mxu0 0.0
    %4163 = vmatprep.subr.mxu0 0.0
    %4164 = vmatpush1.xpose.msra.mxu0 0.0
    %4165 = vmatprep.subr.mxu0 0.0
    %4166 = vmatpush1.xpose.msra.mxu0 0.0
    %4167 = vmatprep.subr.mxu0 0.0
    %4168 = vmatpush1.xpose.msra.mxu0 0.0
    %4169 = vmatprep.subr.mxu0 0.0
    %4170 = vmatpush1.xpose.msra.mxu0 0.0
    %4171 = vmatprep.subr.mxu0 0.0
    %4172 = vmatpush1.xpose.msra.mxu0 0.0
    %4173 = vmatprep.subr.mxu0 0.0
    %4174 = vmatpush1.xpose.msra.mxu0 0.0
    %4175 = vmatprep.subr.mxu0 0.0
    %4176 = vmatpush1.xpose.msra.mxu0 0.0
    %4177 = vmatprep.subr.mxu0 0.0
    %4178 = vmatpush1.xpose.msra.mxu0 0.0
    %4179 = vmatprep.subr.mxu0 0.0
    %4180 = vmatpush1.xpose.msra.mxu0 0.0
    %4181 = vmatprep.mubr.f32.mxu0 0.0
    %v4182 = vand.u32 %v3850, 4294901760
    %v4183 = vsub.f32 %v3850, %v4182
    %v4184 = vand.u32 %v4183, 4294901760
    %4185 = vmatmul.mubr.f32.gmra.mrb[0].mxu0 %v4184
    %v4186 = vpop.f32.mrb[0].mxu0
    %v4187 = vadd.f32 %v4105, %v4186
    %v4188 = vpop.f32.mrb[0].mxu0
    %4189 = vmatprep.mubr.f32.mxu0 0.0
    %v4190 = vand.u32 %v3852, 4294901760
    %v4191 = vsub.f32 %v3852, %v4190
    %v4192 = vand.u32 %v4191, 4294901760
    %4193 = vmatmul.mubr.f32.gmra.mrb[0].mxu0 %v4192
    %v4194 = vpop.f32.mrb[0].mxu0
    %v4195 = vadd.f32 %v4112, %v4194
    %v4196 = vpop.f32.mrb[0].mxu0
    %4197 = vdwg.mxu0
    %4198 = vmatprep.subr.mxu0 0.0
    %v4199 = vand.u32 %v3854, 4294901760
    %v4200 = vsub.f32 %v3854, %v4199
    %v4201 = vand.u32 %v4200, 4294901760
    %4202 = vmatpush1.xpose.msra.mxu0 %v4201
    %4203 = vmatprep.subr.mxu0 0.0
    %v4204 = vand.u32 %v3856, 4294901760
    %v4205 = vsub.f32 %v3856, %v4204
    %v4206 = vand.u32 %v4205, 4294901760
    %4207 = vmatpush1.xpose.msra.mxu0 %v4206
    %4208 = vmatprep.subr.mxu0 0.0
    %4209 = vmatpush1.xpose.msra.mxu0 0.0
    %4210 = vmatprep.subr.mxu0 0.0
    %4211 = vmatpush1.xpose.msra.mxu0 0.0
    %4212 = vmatprep.subr.mxu0 0.0
    %4213 = vmatpush1.xpose.msra.mxu0 0.0
    %4214 = vmatprep.subr.mxu0 0.0
    %4215 = vmatpush1.xpose.msra.mxu0 0.0
    %4216 = vmatprep.subr.mxu0 0.0
    %4217 = vmatpush1.xpose.msra.mxu0 0.0
    %4218 = vmatprep.subr.mxu0 0.0
    %4219 = vmatpush1.xpose.msra.mxu0 0.0
    %4220 = vmatprep.subr.mxu0 0.0
    %4221 = vmatpush1.xpose.msra.mxu0 0.0
    %4222 = vmatprep.subr.mxu0 0.0
    %4223 = vmatpush1.xpose.msra.mxu0 0.0
    %4224 = vmatprep.subr.mxu0 0.0
    %4225 = vmatpush1.xpose.msra.mxu0 0.0
    %4226 = vmatprep.subr.mxu0 0.0
    %4227 = vmatpush1.xpose.msra.mxu0 0.0
    %4228 = vmatprep.subr.mxu0 0.0
    %4229 = vmatpush1.xpose.msra.mxu0 0.0
    %4230 = vmatprep.subr.mxu0 0.0
    %4231 = vmatpush1.xpose.msra.mxu0 0.0
    %4232 = vmatprep.subr.mxu0 0.0
    %4233 = vmatpush1.xpose.msra.mxu0 0.0
    %4234 = vmatprep.subr.mxu0 0.0
    %4235 = vmatpush1.xpose.msra.mxu0 0.0
    %4236 = vmatprep.subr.mxu0 0.0
    %4237 = vmatpush1.xpose.msra.mxu0 0.0
    %4238 = vmatprep.subr.mxu0 0.0
    %4239 = vmatpush1.xpose.msra.mxu0 0.0
    %4240 = vmatprep.subr.mxu0 0.0
    %4241 = vmatpush1.xpose.msra.mxu0 0.0
    %4242 = vmatprep.subr.mxu0 0.0
    %4243 = vmatpush1.xpose.msra.mxu0 0.0
    %4244 = vmatprep.subr.mxu0 0.0
    %4245 = vmatpush1.xpose.msra.mxu0 0.0
    %4246 = vmatprep.subr.mxu0 0.0
    %4247 = vmatpush1.xpose.msra.mxu0 0.0
    %4248 = vmatprep.subr.mxu0 0.0
    %4249 = vmatpush1.xpose.msra.mxu0 0.0
    %4250 = vmatprep.subr.mxu0 0.0
    %4251 = vmatpush1.xpose.msra.mxu0 0.0
    %4252 = vmatprep.subr.mxu0 0.0
    %4253 = vmatpush1.xpose.msra.mxu0 0.0
    %4254 = vmatprep.subr.mxu0 0.0
    %4255 = vmatpush1.xpose.msra.mxu0 0.0
    %4256 = vmatprep.subr.mxu0 0.0
    %4257 = vmatpush1.xpose.msra.mxu0 0.0
    %4258 = vmatprep.subr.mxu0 0.0
    %4259 = vmatpush1.xpose.msra.mxu0 0.0
    %4260 = vmatprep.subr.mxu0 0.0
    %4261 = vmatpush1.xpose.msra.mxu0 0.0
    %4262 = vmatprep.subr.mxu0 0.0
    %4263 = vmatpush1.xpose.msra.mxu0 0.0
    %4264 = vmatprep.subr.mxu0 0.0
    %4265 = vmatpush1.xpose.msra.mxu0 0.0
    %4266 = vmatprep.subr.mxu0 0.0
    %4267 = vmatpush1.xpose.msra.mxu0 0.0
    %4268 = vmatprep.mubr.f32.mxu0 0.0
    %v4269 = vand.u32 %v3850, 4294901760
    %4270 = vmatmul.mubr.f32.gmra.mrb[0].mxu0 %v4269
    %v4271 = vpop.f32.mrb[0].mxu0
    %v4272 = vadd.f32 %v4187, %v4271
    %v4273 = vpop.f32.mrb[0].mxu0
    %4274 = vmatprep.mubr.f32.mxu0 0.0
    %v4275 = vand.u32 %v3852, 4294901760
    %4276 = vmatmul.mubr.f32.gmra.mrb[0].mxu0 %v4275
    %v4277 = vpop.f32.mrb[0].mxu0
    %v4278 = vadd.f32 %v4195, %v4277
    %v4279 = vpop.f32.mrb[0].mxu0
    %4280 = vdwg.mxu0
    %4281 = vmatprep.subr.mxu0 0.0
    %v4282 = vand.u32 %v3854, 4294901760
    %4283 = vmatpush1.xpose.msra.mxu0 %v4282
    %4284 = vmatprep.subr.mxu0 0.0
    %v4285 = vand.u32 %v3856, 4294901760
    %4286 = vmatpush1.xpose.msra.mxu0 %v4285
    %4287 = vmatprep.subr.mxu0 0.0
    %4288 = vmatpush1.xpose.msra.mxu0 0.0
    %4289 = vmatprep.subr.mxu0 0.0
    %4290 = vmatpush1.xpose.msra.mxu0 0.0
    %4291 = vmatprep.subr.mxu0 0.0
    %4292 = vmatpush1.xpose.msra.mxu0 0.0
    %4293 = vmatprep.subr.mxu0 0.0
    %4294 = vmatpush1.xpose.msra.mxu0 0.0
    %4295 = vmatprep.subr.mxu0 0.0
    %4296 = vmatpush1.xpose.msra.mxu0 0.0
    %4297 = vmatprep.subr.mxu0 0.0
    %4298 = vmatpush1.xpose.msra.mxu0 0.0
    %4299 = vmatprep.subr.mxu0 0.0
    %4300 = vmatpush1.xpose.msra.mxu0 0.0
    %4301 = vmatprep.subr.mxu0 0.0
    %4302 = vmatpush1.xpose.msra.mxu0 0.0
    %4303 = vmatprep.subr.mxu0 0.0
    %4304 = vmatpush1.xpose.msra.mxu0 0.0
    %4305 = vmatprep.subr.mxu0 0.0
    %4306 = vmatpush1.xpose.msra.mxu0 0.0
    %4307 = vmatprep.subr.mxu0 0.0
    %4308 = vmatpush1.xpose.msra.mxu0 0.0
    %4309 = vmatprep.subr.mxu0 0.0
    %4310 = vmatpush1.xpose.msra.mxu0 0.0
    %4311 = vmatprep.subr.mxu0 0.0
    %4312 = vmatpush1.xpose.msra.mxu0 0.0
    %4313 = vmatprep.subr.mxu0 0.0
    %4314 = vmatpush1.xpose.msra.mxu0 0.0
    %4315 = vmatprep.subr.mxu0 0.0
    %4316 = vmatpush1.xpose.msra.mxu0 0.0
    %4317 = vmatprep.subr.mxu0 0.0
    %4318 = vmatpush1.xpose.msra.mxu0 0.0
    %4319 = vmatprep.subr.mxu0 0.0
    %4320 = vmatpush1.xpose.msra.mxu0 0.0
    %4321 = vmatprep.subr.mxu0 0.0
    %4322 = vmatpush1.xpose.msra.mxu0 0.0
    %4323 = vmatprep.subr.mxu0 0.0
    %4324 = vmatpush1.xpose.msra.mxu0 0.0
    %4325 = vmatprep.subr.mxu0 0.0
    %4326 = vmatpush1.xpose.msra.mxu0 0.0
    %4327 = vmatprep.subr.mxu0 0.0
    %4328 = vmatpush1.xpose.msra.mxu0 0.0
    %4329 = vmatprep.subr.mxu0 0.0
    %4330 = vmatpush1.xpose.msra.mxu0 0.0
    %4331 = vmatprep.subr.mxu0 0.0
    %4332 = vmatpush1.xpose.msra.mxu0 0.0
    %4333 = vmatprep.subr.mxu0 0.0
    %4334 = vmatpush1.xpose.msra.mxu0 0.0
    %4335 = vmatprep.subr.mxu0 0.0
    %4336 = vmatpush1.xpose.msra.mxu0 0.0
    %4337 = vmatprep.subr.mxu0 0.0
    %4338 = vmatpush1.xpose.msra.mxu0 0.0
    %4339 = vmatprep.subr.mxu0 0.0
    %4340 = vmatpush1.xpose.msra.mxu0 0.0
    %4341 = vmatprep.subr.mxu0 0.0
    %4342 = vmatpush1.xpose.msra.mxu0 0.0
    %4343 = vmatprep.subr.mxu0 0.0
    %4344 = vmatpush1.xpose.msra.mxu0 0.0
    %4345 = vmatprep.subr.mxu0 0.0
    %4346 = vmatpush1.xpose.msra.mxu0 0.0
    %4347 = vmatprep.mubr.f32.mxu0 0.0
    %v4348 = vand.u32 %v3850, 4294901760
    %4349 = vmatmul.mubr.f32.gmra.mrb[0].mxu0 %v4348
    %v4350 = vpop.f32.mrb[0].mxu0
    %v4351 = vadd.f32 %v4272, %v4350
    %v4352 = vpop.f32.mrb[0].mxu0
    %4353 = vmatprep.mubr.f32.mxu0 0.0
    %v4354 = vand.u32 %v3852, 4294901760
    %4355 = vmatmul.mubr.f32.gmra.mrb[0].mxu0 %v4354
    %v4356 = vpop.f32.mrb[0].mxu0
    %v4357 = vadd.f32 %v4278, %v4356
    %v4358 = vpop.f32.mrb[0].mxu0
    %4359 = vdwg.mxu0
    %v4360 = vsel %vm1256, %v4351, -inf
    %4361 = vmax.xlane.f32.xlu0 %v4360
    %v4362 = vpop.xlane.xlu0 %4361
    %v4363 = vsel %vm1256, %v4357, -inf
    %4364 = vmax.xlane.f32.xlu0 %v4363
    %v4365 = vpop.xlane.xlu0 %4364
    %v4366 = vsub.f32 %v4351, %v4362
    %v4367 = vsub.f32 %v4357, %v4365
    %v4368 = vmul.f32 %v4366, 1.442695
    %v4369 = vpow.pop %v4368
    %v4370 = vmul.f32 %v4367, 1.442695
    %v4371 = vpow.pop %v4370
    %v4372 = vsel %vm1256, %v4369, 0.0
    %4373 = vadd.xlane.f32.xlu0 %v4372
    %v4374 = vpop.xlane.xlu0 %4373
    %v4375 = vsel %vm1256, %v4371, 0.0
    %4376 = vadd.xlane.f32.xlu0 %v4375
    %v4377 = vpop.xlane.xlu0 %4376
    %4378 = vrot.lane.b32.xlu0 %v692, 48
    %v4379 = vpop.permute.xlu0 %4378
    %4380 = vrot.lane.b32.xlu0 %v699, 48
    %v4381 = vpop.permute.xlu0 %4380
    %v4385 = vsel %vm1256, %v4369, 0
    %v4388 = vsel %vm1256, %v4371, 0
    %4390 = vmatprep.subr.mxu0 0.0
    %v4391 = vand.u32 %v4379, 4294901760
    %4392 = vmatpush1.msra.mxu0 %v4391
    %4393 = vmatprep.subr.mxu0 0.0
    %v4394 = vand.u32 %v4381, 4294901760
    %4395 = vmatpush1.msra.mxu0 %v4394
    %4396 = vmatprep.subr.mxu0 0.0
    %4397 = vmatpush1.msra.mxu0 0.0
    %4398 = vmatprep.subr.mxu0 0.0
    %4399 = vmatpush1.msra.mxu0 0.0
    %4400 = vmatprep.subr.mxu0 0.0
    %4401 = vmatpush1.msra.mxu0 0.0
    %4402 = vmatprep.subr.mxu0 0.0
    %4403 = vmatpush1.msra.mxu0 0.0
    %4404 = vmatprep.subr.mxu0 0.0
    %4405 = vmatpush1.msra.mxu0 0.0
    %4406 = vmatprep.subr.mxu0 0.0
    %4407 = vmatpush1.msra.mxu0 0.0
    %4408 = vmatprep.subr.mxu0 0.0
    %4409 = vmatpush1.msra.mxu0 0.0
    %4410 = vmatprep.subr.mxu0 0.0
    %4411 = vmatpush1.msra.mxu0 0.0
    %4412 = vmatprep.subr.mxu0 0.0
    %4413 = vmatpush1.msra.mxu0 0.0
    %4414 = vmatprep.subr.mxu0 0.0
    %4415 = vmatpush1.msra.mxu0 0.0
    %4416 = vmatprep.subr.mxu0 0.0
    %4417 = vmatpush1.msra.mxu0 0.0
    %4418 = vmatprep.subr.mxu0 0.0
    %4419 = vmatpush1.msra.mxu0 0.0
    %4420 = vmatprep.subr.mxu0 0.0
    %4421 = vmatpush1.msra.mxu0 0.0
    %4422 = vmatprep.subr.mxu0 0.0
    %4423 = vmatpush1.msra.mxu0 0.0
    %4424 = vmatprep.subr.mxu0 0.0
    %4425 = vmatpush1.msra.mxu0 0.0
    %4426 = vmatprep.subr.mxu0 0.0
    %4427 = vmatpush1.msra.mxu0 0.0
    %4428 = vmatprep.subr.mxu0 0.0
    %4429 = vmatpush1.msra.mxu0 0.0
    %4430 = vmatprep.subr.mxu0 0.0
    %4431 = vmatpush1.msra.mxu0 0.0
    %4432 = vmatprep.subr.mxu0 0.0
    %4433 = vmatpush1.msra.mxu0 0.0
    %4434 = vmatprep.subr.mxu0 0.0
    %4435 = vmatpush1.msra.mxu0 0.0
    %4436 = vmatprep.subr.mxu0 0.0
    %4437 = vmatpush1.msra.mxu0 0.0
    %4438 = vmatprep.subr.mxu0 0.0
    %4439 = vmatpush1.msra.mxu0 0.0
    %4440 = vmatprep.subr.mxu0 0.0
    %4441 = vmatpush1.msra.mxu0 0.0
    %4442 = vmatprep.subr.mxu0 0.0
    %4443 = vmatpush1.msra.mxu0 0.0
    %4444 = vmatprep.subr.mxu0 0.0
    %4445 = vmatpush1.msra.mxu0 0.0
    %4446 = vmatprep.subr.mxu0 0.0
    %4447 = vmatpush1.msra.mxu0 0.0
    %4448 = vmatprep.subr.mxu0 0.0
    %4449 = vmatpush1.msra.mxu0 0.0
    %4450 = vmatprep.subr.mxu0 0.0
    %4451 = vmatpush1.msra.mxu0 0.0
    %4452 = vmatprep.subr.mxu0 0.0
    %4453 = vmatpush1.msra.mxu0 0.0
    %4454 = vmatprep.subr.mxu0 0.0
    %4455 = vmatpush1.msra.mxu0 0.0
    %4456 = vmatprep.mubr.f32.mxu0 0.0
    %v4457 = vand.u32 %v4385, 4294901760
    %v4458 = vsub.f32 %v4385, %v4457
    %v4459 = vand.u32 %v4458, 4294901760
    %v4460 = vsub.f32 %v4458, %v4459
    %v4461 = vand.u32 %v4460, 4294901760
    %4462 = vmatmul.mubr.f32.gmra.mrb[0].mxu0 %v4461
    %v4463 = vpop.f32.mrb[0].mxu0
    %v4464 = vadd.f32 0.0, %v4463
    %v4465 = vpop.f32.mrb[0].mxu0
    %4466 = vmatprep.mubr.f32.mxu0 0.0
    %v4467 = vand.u32 %v4388, 4294901760
    %v4468 = vsub.f32 %v4388, %v4467
    %v4469 = vand.u32 %v4468, 4294901760
    %v4470 = vsub.f32 %v4468, %v4469
    %v4471 = vand.u32 %v4470, 4294901760
    %4472 = vmatmul.mubr.f32.gmra.mrb[0].mxu0 %v4471
    %v4473 = vpop.f32.mrb[0].mxu0
    %v4474 = vadd.f32 0.0, %v4473
    %v4475 = vpop.f32.mrb[0].mxu0
    %4476 = vdwg.mxu0
    %4477 = vmatprep.subr.mxu0 0.0
    %v4478 = vand.u32 %v4379, 4294901760
    %v4479 = vsub.f32 %v4379, %v4478
    %v4480 = vand.u32 %v4479, 4294901760
    %v4481 = vsub.f32 %v4479, %v4480
    %v4482 = vand.u32 %v4481, 4294901760
    %4483 = vmatpush1.msra.mxu0 %v4482
    %4484 = vmatprep.subr.mxu0 0.0
    %v4485 = vand.u32 %v4381, 4294901760
    %v4486 = vsub.f32 %v4381, %v4485
    %v4487 = vand.u32 %v4486, 4294901760
    %v4488 = vsub.f32 %v4486, %v4487
    %v4489 = vand.u32 %v4488, 4294901760
    %4490 = vmatpush1.msra.mxu0 %v4489
    %4491 = vmatprep.subr.mxu0 0.0
    %4492 = vmatpush1.msra.mxu0 0.0
    %4493 = vmatprep.subr.mxu0 0.0
    %4494 = vmatpush1.msra.mxu0 0.0
    %4495 = vmatprep.subr.mxu0 0.0
    %4496 = vmatpush1.msra.mxu0 0.0
    %4497 = vmatprep.subr.mxu0 0.0
    %4498 = vmatpush1.msra.mxu0 0.0
    %4499 = vmatprep.subr.mxu0 0.0
    %4500 = vmatpush1.msra.mxu0 0.0
    %4501 = vmatprep.subr.mxu0 0.0
    %4502 = vmatpush1.msra.mxu0 0.0
    %4503 = vmatprep.subr.mxu0 0.0
    %4504 = vmatpush1.msra.mxu0 0.0
    %4505 = vmatprep.subr.mxu0 0.0
    %4506 = vmatpush1.msra.mxu0 0.0
    %4507 = vmatprep.subr.mxu0 0.0
    %4508 = vmatpush1.msra.mxu0 0.0
    %4509 = vmatprep.subr.mxu0 0.0
    %4510 = vmatpush1.msra.mxu0 0.0
    %4511 = vmatprep.subr.mxu0 0.0
    %4512 = vmatpush1.msra.mxu0 0.0
    %4513 = vmatprep.subr.mxu0 0.0
    %4514 = vmatpush1.msra.mxu0 0.0
    %4515 = vmatprep.subr.mxu0 0.0
    %4516 = vmatpush1.msra.mxu0 0.0
    %4517 = vmatprep.subr.mxu0 0.0
    %4518 = vmatpush1.msra.mxu0 0.0
    %4519 = vmatprep.subr.mxu0 0.0
    %4520 = vmatpush1.msra.mxu0 0.0
    %4521 = vmatprep.subr.mxu0 0.0
    %4522 = vmatpush1.msra.mxu0 0.0
    %4523 = vmatprep.subr.mxu0 0.0
    %4524 = vmatpush1.msra.mxu0 0.0
    %4525 = vmatprep.subr.mxu0 0.0
    %4526 = vmatpush1.msra.mxu0 0.0
    %4527 = vmatprep.subr.mxu0 0.0
    %4528 = vmatpush1.msra.mxu0 0.0
    %4529 = vmatprep.subr.mxu0 0.0
    %4530 = vmatpush1.msra.mxu0 0.0
    %4531 = vmatprep.subr.mxu0 0.0
    %4532 = vmatpush1.msra.mxu0 0.0
    %4533 = vmatprep.subr.mxu0 0.0
    %4534 = vmatpush1.msra.mxu0 0.0
    %4535 = vmatprep.subr.mxu0 0.0
    %4536 = vmatpush1.msra.mxu0 0.0
    %4537 = vmatprep.subr.mxu0 0.0
    %4538 = vmatpush1.msra.mxu0 0.0
    %4539 = vmatprep.subr.mxu0 0.0
    %4540 = vmatpush1.msra.mxu0 0.0
    %4541 = vmatprep.subr.mxu0 0.0
    %4542 = vmatpush1.msra.mxu0 0.0
    %4543 = vmatprep.subr.mxu0 0.0
    %4544 = vmatpush1.msra.mxu0 0.0
    %4545 = vmatprep.subr.mxu0 0.0
    %4546 = vmatpush1.msra.mxu0 0.0
    %4547 = vmatprep.subr.mxu0 0.0
    %4548 = vmatpush1.msra.mxu0 0.0
    %4549 = vmatprep.subr.mxu0 0.0
    %4550 = vmatpush1.msra.mxu0 0.0
    %4551 = vmatprep.mubr.f32.mxu0 0.0
    %v4552 = vand.u32 %v4385, 4294901760
    %4553 = vmatmul.mubr.f32.gmra.mrb[0].mxu0 %v4552
    %v4554 = vpop.f32.mrb[0].mxu0
    %v4555 = vadd.f32 %v4464, %v4554
    %v4556 = vpop.f32.mrb[0].mxu0
    %4557 = vmatprep.mubr.f32.mxu0 0.0
    %v4558 = vand.u32 %v4388, 4294901760
    %4559 = vmatmul.mubr.f32.gmra.mrb[0].mxu0 %v4558
    %v4560 = vpop.f32.mrb[0].mxu0
    %v4561 = vadd.f32 %v4474, %v4560
    %v4562 = vpop.f32.mrb[0].mxu0
    %4563 = vdwg.mxu0
    %4564 = vmatprep.subr.mxu0 0.0
    %v4565 = vand.u32 %v4379, 4294901760
    %v4566 = vsub.f32 %v4379, %v4565
    %4567 = vmatpush1.msra.mxu0 %v4566
    %4568 = vmatprep.subr.mxu0 0.0
    %v4569 = vand.u32 %v4381, 4294901760
    %v4570 = vsub.f32 %v4381, %v4569
    %4571 = vmatpush1.msra.mxu0 %v4570
    %4572 = vmatprep.subr.mxu0 0.0
    %4573 = vmatpush1.msra.mxu0 0.0
    %4574 = vmatprep.subr.mxu0 0.0
    %4575 = vmatpush1.msra.mxu0 0.0
    %4576 = vmatprep.subr.mxu0 0.0
    %4577 = vmatpush1.msra.mxu0 0.0
    %4578 = vmatprep.subr.mxu0 0.0
    %4579 = vmatpush1.msra.mxu0 0.0
    %4580 = vmatprep.subr.mxu0 0.0
    %4581 = vmatpush1.msra.mxu0 0.0
    %4582 = vmatprep.subr.mxu0 0.0
    %4583 = vmatpush1.msra.mxu0 0.0
    %4584 = vmatprep.subr.mxu0 0.0
    %4585 = vmatpush1.msra.mxu0 0.0
    %4586 = vmatprep.subr.mxu0 0.0
    %4587 = vmatpush1.msra.mxu0 0.0
    %4588 = vmatprep.subr.mxu0 0.0
    %4589 = vmatpush1.msra.mxu0 0.0
    %4590 = vmatprep.subr.mxu0 0.0
    %4591 = vmatpush1.msra.mxu0 0.0
    %4592 = vmatprep.subr.mxu0 0.0
    %4593 = vmatpush1.msra.mxu0 0.0
    %4594 = vmatprep.subr.mxu0 0.0
    %4595 = vmatpush1.msra.mxu0 0.0
    %4596 = vmatprep.subr.mxu0 0.0
    %4597 = vmatpush1.msra.mxu0 0.0
    %4598 = vmatprep.subr.mxu0 0.0
    %4599 = vmatpush1.msra.mxu0 0.0
    %4600 = vmatprep.subr.mxu0 0.0
    %4601 = vmatpush1.msra.mxu0 0.0
    %4602 = vmatprep.subr.mxu0 0.0
    %4603 = vmatpush1.msra.mxu0 0.0
    %4604 = vmatprep.subr.mxu0 0.0
    %4605 = vmatpush1.msra.mxu0 0.0
    %4606 = vmatprep.subr.mxu0 0.0
    %4607 = vmatpush1.msra.mxu0 0.0
    %4608 = vmatprep.subr.mxu0 0.0
    %4609 = vmatpush1.msra.mxu0 0.0
    %4610 = vmatprep.subr.mxu0 0.0
    %4611 = vmatpush1.msra.mxu0 0.0
    %4612 = vmatprep.subr.mxu0 0.0
    %4613 = vmatpush1.msra.mxu0 0.0
    %4614 = vmatprep.subr.mxu0 0.0
    %4615 = vmatpush1.msra.mxu0 0.0
    %4616 = vmatprep.subr.mxu0 0.0
    %4617 = vmatpush1.msra.mxu0 0.0
    %4618 = vmatprep.subr.mxu0 0.0
    %4619 = vmatpush1.msra.mxu0 0.0
    %4620 = vmatprep.subr.mxu0 0.0
    %4621 = vmatpush1.msra.mxu0 0.0
    %4622 = vmatprep.subr.mxu0 0.0
    %4623 = vmatpush1.msra.mxu0 0.0
    %4624 = vmatprep.subr.mxu0 0.0
    %4625 = vmatpush1.msra.mxu0 0.0
    %4626 = vmatprep.subr.mxu0 0.0
    %4627 = vmatpush1.msra.mxu0 0.0
    %4628 = vmatprep.subr.mxu0 0.0
    %4629 = vmatpush1.msra.mxu0 0.0
    %4630 = vmatprep.subr.mxu0 0.0
    %4631 = vmatpush1.msra.mxu0 0.0
    %4632 = vmatprep.mubr.f32.mxu0 0.0
    %v4633 = vand.u32 %v4385, 4294901760
    %v4634 = vsub.f32 %v4385, %v4633
    %4635 = vmatmul.mubr.f32.gmra.mrb[0].mxu0 %v4634
    %v4636 = vpop.f32.mrb[0].mxu0
    %v4637 = vadd.f32 %v4555, %v4636
    %v4638 = vpop.f32.mrb[0].mxu0
    %4639 = vmatprep.mubr.f32.mxu0 0.0
    %v4640 = vand.u32 %v4388, 4294901760
    %v4641 = vsub.f32 %v4388, %v4640
    %4642 = vmatmul.mubr.f32.gmra.mrb[0].mxu0 %v4641
    %v4643 = vpop.f32.mrb[0].mxu0
    %v4644 = vadd.f32 %v4561, %v4643
    %v4645 = vpop.f32.mrb[0].mxu0
    %4646 = vdwg.mxu0
    %4647 = vmatprep.subr.mxu0 0.0
    %v4648 = vand.u32 %v4379, 4294901760
    %4649 = vmatpush1.msra.mxu0 %v4648
    %4650 = vmatprep.subr.mxu0 0.0
    %v4651 = vand.u32 %v4381, 4294901760
    %4652 = vmatpush1.msra.mxu0 %v4651
    %4653 = vmatprep.subr.mxu0 0.0
    %4654 = vmatpush1.msra.mxu0 0.0
    %4655 = vmatprep.subr.mxu0 0.0
    %4656 = vmatpush1.msra.mxu0 0.0
    %4657 = vmatprep.subr.mxu0 0.0
    %4658 = vmatpush1.msra.mxu0 0.0
    %4659 = vmatprep.subr.mxu0 0.0
    %4660 = vmatpush1.msra.mxu0 0.0
    %4661 = vmatprep.subr.mxu0 0.0
    %4662 = vmatpush1.msra.mxu0 0.0
    %4663 = vmatprep.subr.mxu0 0.0
    %4664 = vmatpush1.msra.mxu0 0.0
    %4665 = vmatprep.subr.mxu0 0.0
    %4666 = vmatpush1.msra.mxu0 0.0
    %4667 = vmatprep.subr.mxu0 0.0
    %4668 = vmatpush1.msra.mxu0 0.0
    %4669 = vmatprep.subr.mxu0 0.0
    %4670 = vmatpush1.msra.mxu0 0.0
    %4671 = vmatprep.subr.mxu0 0.0
    %4672 = vmatpush1.msra.mxu0 0.0
    %4673 = vmatprep.subr.mxu0 0.0
    %4674 = vmatpush1.msra.mxu0 0.0
    %4675 = vmatprep.subr.mxu0 0.0
    %4676 = vmatpush1.msra.mxu0 0.0
    %4677 = vmatprep.subr.mxu0 0.0
    %4678 = vmatpush1.msra.mxu0 0.0
    %4679 = vmatprep.subr.mxu0 0.0
    %4680 = vmatpush1.msra.mxu0 0.0
    %4681 = vmatprep.subr.mxu0 0.0
    %4682 = vmatpush1.msra.mxu0 0.0
    %4683 = vmatprep.subr.mxu0 0.0
    %4684 = vmatpush1.msra.mxu0 0.0
    %4685 = vmatprep.subr.mxu0 0.0
    %4686 = vmatpush1.msra.mxu0 0.0
    %4687 = vmatprep.subr.mxu0 0.0
    %4688 = vmatpush1.msra.mxu0 0.0
    %4689 = vmatprep.subr.mxu0 0.0
    %4690 = vmatpush1.msra.mxu0 0.0
    %4691 = vmatprep.subr.mxu0 0.0
    %4692 = vmatpush1.msra.mxu0 0.0
    %4693 = vmatprep.subr.mxu0 0.0
    %4694 = vmatpush1.msra.mxu0 0.0
    %4695 = vmatprep.subr.mxu0 0.0
    %4696 = vmatpush1.msra.mxu0 0.0
    %4697 = vmatprep.subr.mxu0 0.0
    %4698 = vmatpush1.msra.mxu0 0.0
    %4699 = vmatprep.subr.mxu0 0.0
    %4700 = vmatpush1.msra.mxu0 0.0
    %4701 = vmatprep.subr.mxu0 0.0
    %4702 = vmatpush1.msra.mxu0 0.0
    %4703 = vmatprep.subr.mxu0 0.0
    %4704 = vmatpush1.msra.mxu0 0.0
    %4705 = vmatprep.subr.mxu0 0.0
    %4706 = vmatpush1.msra.mxu0 0.0
    %4707 = vmatprep.subr.mxu0 0.0
    %4708 = vmatpush1.msra.mxu0 0.0
    %4709 = vmatprep.subr.mxu0 0.0
    %4710 = vmatpush1.msra.mxu0 0.0
    %4711 = vmatprep.subr.mxu0 0.0
    %4712 = vmatpush1.msra.mxu0 0.0
    %4713 = vmatprep.mubr.f32.mxu0 0.0
    %v4714 = vand.u32 %v4385, 4294901760
    %v4715 = vsub.f32 %v4385, %v4714
    %v4716 = vand.u32 %v4715, 4294901760
    %4717 = vmatmul.mubr.f32.gmra.mrb[0].mxu0 %v4716
    %v4718 = vpop.f32.mrb[0].mxu0
    %v4719 = vadd.f32 %v4637, %v4718
    %v4720 = vpop.f32.mrb[0].mxu0
    %4721 = vmatprep.mubr.f32.mxu0 0.0
    %v4722 = vand.u32 %v4388, 4294901760
    %v4723 = vsub.f32 %v4388, %v4722
    %v4724 = vand.u32 %v4723, 4294901760
    %4725 = vmatmul.mubr.f32.gmra.mrb[0].mxu0 %v4724
    %v4726 = vpop.f32.mrb[0].mxu0
    %v4727 = vadd.f32 %v4644, %v4726
    %v4728 = vpop.f32.mrb[0].mxu0
    %4729 = vdwg.mxu0
    %4730 = vmatprep.subr.mxu0 0.0
    %v4731 = vand.u32 %v4379, 4294901760
    %v4732 = vsub.f32 %v4379, %v4731
    %v4733 = vand.u32 %v4732, 4294901760
    %4734 = vmatpush1.msra.mxu0 %v4733
    %4735 = vmatprep.subr.mxu0 0.0
    %v4736 = vand.u32 %v4381, 4294901760
    %v4737 = vsub.f32 %v4381, %v4736
    %v4738 = vand.u32 %v4737, 4294901760
    %4739 = vmatpush1.msra.mxu0 %v4738
    %4740 = vmatprep.subr.mxu0 0.0
    %4741 = vmatpush1.msra.mxu0 0.0
    %4742 = vmatprep.subr.mxu0 0.0
    %4743 = vmatpush1.msra.mxu0 0.0
    %4744 = vmatprep.subr.mxu0 0.0
    %4745 = vmatpush1.msra.mxu0 0.0
    %4746 = vmatprep.subr.mxu0 0.0
    %4747 = vmatpush1.msra.mxu0 0.0
    %4748 = vmatprep.subr.mxu0 0.0
    %4749 = vmatpush1.msra.mxu0 0.0
    %4750 = vmatprep.subr.mxu0 0.0
    %4751 = vmatpush1.msra.mxu0 0.0
    %4752 = vmatprep.subr.mxu0 0.0
    %4753 = vmatpush1.msra.mxu0 0.0
    %4754 = vmatprep.subr.mxu0 0.0
    %4755 = vmatpush1.msra.mxu0 0.0
    %4756 = vmatprep.subr.mxu0 0.0
    %4757 = vmatpush1.msra.mxu0 0.0
    %4758 = vmatprep.subr.mxu0 0.0
    %4759 = vmatpush1.msra.mxu0 0.0
    %4760 = vmatprep.subr.mxu0 0.0
    %4761 = vmatpush1.msra.mxu0 0.0
    %4762 = vmatprep.subr.mxu0 0.0
    %4763 = vmatpush1.msra.mxu0 0.0
    %4764 = vmatprep.subr.mxu0 0.0
    %4765 = vmatpush1.msra.mxu0 0.0
    %4766 = vmatprep.subr.mxu0 0.0
    %4767 = vmatpush1.msra.mxu0 0.0
    %4768 = vmatprep.subr.mxu0 0.0
    %4769 = vmatpush1.msra.mxu0 0.0
    %4770 = vmatprep.subr.mxu0 0.0
    %4771 = vmatpush1.msra.mxu0 0.0
    %4772 = vmatprep.subr.mxu0 0.0
    %4773 = vmatpush1.msra.mxu0 0.0
    %4774 = vmatprep.subr.mxu0 0.0
    %4775 = vmatpush1.msra.mxu0 0.0
    %4776 = vmatprep.subr.mxu0 0.0
    %4777 = vmatpush1.msra.mxu0 0.0
    %4778 = vmatprep.subr.mxu0 0.0
    %4779 = vmatpush1.msra.mxu0 0.0
    %4780 = vmatprep.subr.mxu0 0.0
    %4781 = vmatpush1.msra.mxu0 0.0
    %4782 = vmatprep.subr.mxu0 0.0
    %4783 = vmatpush1.msra.mxu0 0.0
    %4784 = vmatprep.subr.mxu0 0.0
    %4785 = vmatpush1.msra.mxu0 0.0
    %4786 = vmatprep.subr.mxu0 0.0
    %4787 = vmatpush1.msra.mxu0 0.0
    %4788 = vmatprep.subr.mxu0 0.0
    %4789 = vmatpush1.msra.mxu0 0.0
    %4790 = vmatprep.subr.mxu0 0.0
    %4791 = vmatpush1.msra.mxu0 0.0
    %4792 = vmatprep.subr.mxu0 0.0
    %4793 = vmatpush1.msra.mxu0 0.0
    %4794 = vmatprep.subr.mxu0 0.0
    %4795 = vmatpush1.msra.mxu0 0.0
    %4796 = vmatprep.subr.mxu0 0.0
    %4797 = vmatpush1.msra.mxu0 0.0
    %4798 = vmatprep.subr.mxu0 0.0
    %4799 = vmatpush1.msra.mxu0 0.0
    %4800 = vmatprep.mubr.f32.mxu0 0.0
    %v4801 = vand.u32 %v4385, 4294901760
    %4802 = vmatmul.mubr.f32.gmra.mrb[0].mxu0 %v4801
    %v4803 = vpop.f32.mrb[0].mxu0
    %v4804 = vadd.f32 %v4719, %v4803
    %v4805 = vpop.f32.mrb[0].mxu0
    %4806 = vmatprep.mubr.f32.mxu0 0.0
    %v4807 = vand.u32 %v4388, 4294901760
    %4808 = vmatmul.mubr.f32.gmra.mrb[0].mxu0 %v4807
    %v4809 = vpop.f32.mrb[0].mxu0
    %v4810 = vadd.f32 %v4727, %v4809
    %v4811 = vpop.f32.mrb[0].mxu0
    %4812 = vdwg.mxu0
    %4813 = vmatprep.subr.mxu0 0.0
    %v4814 = vand.u32 %v4379, 4294901760
    %4815 = vmatpush1.msra.mxu0 %v4814
    %4816 = vmatprep.subr.mxu0 0.0
    %v4817 = vand.u32 %v4381, 4294901760
    %4818 = vmatpush1.msra.mxu0 %v4817
    %4819 = vmatprep.subr.mxu0 0.0
    %4820 = vmatpush1.msra.mxu0 0.0
    %4821 = vmatprep.subr.mxu0 0.0
    %4822 = vmatpush1.msra.mxu0 0.0
    %4823 = vmatprep.subr.mxu0 0.0
    %4824 = vmatpush1.msra.mxu0 0.0
    %4825 = vmatprep.subr.mxu0 0.0
    %4826 = vmatpush1.msra.mxu0 0.0
    %4827 = vmatprep.subr.mxu0 0.0
    %4828 = vmatpush1.msra.mxu0 0.0
    %4829 = vmatprep.subr.mxu0 0.0
    %4830 = vmatpush1.msra.mxu0 0.0
    %4831 = vmatprep.subr.mxu0 0.0
    %4832 = vmatpush1.msra.mxu0 0.0
    %4833 = vmatprep.subr.mxu0 0.0
    %4834 = vmatpush1.msra.mxu0 0.0
    %4835 = vmatprep.subr.mxu0 0.0
    %4836 = vmatpush1.msra.mxu0 0.0
    %4837 = vmatprep.subr.mxu0 0.0
    %4838 = vmatpush1.msra.mxu0 0.0
    %4839 = vmatprep.subr.mxu0 0.0
    %4840 = vmatpush1.msra.mxu0 0.0
    %4841 = vmatprep.subr.mxu0 0.0
    %4842 = vmatpush1.msra.mxu0 0.0
    %4843 = vmatprep.subr.mxu0 0.0
    %4844 = vmatpush1.msra.mxu0 0.0
    %4845 = vmatprep.subr.mxu0 0.0
    %4846 = vmatpush1.msra.mxu0 0.0
    %4847 = vmatprep.subr.mxu0 0.0
    %4848 = vmatpush1.msra.mxu0 0.0
    %4849 = vmatprep.subr.mxu0 0.0
    %4850 = vmatpush1.msra.mxu0 0.0
    %4851 = vmatprep.subr.mxu0 0.0
    %4852 = vmatpush1.msra.mxu0 0.0
    %4853 = vmatprep.subr.mxu0 0.0
    %4854 = vmatpush1.msra.mxu0 0.0
    %4855 = vmatprep.subr.mxu0 0.0
    %4856 = vmatpush1.msra.mxu0 0.0
    %4857 = vmatprep.subr.mxu0 0.0
    %4858 = vmatpush1.msra.mxu0 0.0
    %4859 = vmatprep.subr.mxu0 0.0
    %4860 = vmatpush1.msra.mxu0 0.0
    %4861 = vmatprep.subr.mxu0 0.0
    %4862 = vmatpush1.msra.mxu0 0.0
    %4863 = vmatprep.subr.mxu0 0.0
    %4864 = vmatpush1.msra.mxu0 0.0
    %4865 = vmatprep.subr.mxu0 0.0
    %4866 = vmatpush1.msra.mxu0 0.0
    %4867 = vmatprep.subr.mxu0 0.0
    %4868 = vmatpush1.msra.mxu0 0.0
    %4869 = vmatprep.subr.mxu0 0.0
    %4870 = vmatpush1.msra.mxu0 0.0
    %4871 = vmatprep.subr.mxu0 0.0
    %4872 = vmatpush1.msra.mxu0 0.0
    %4873 = vmatprep.subr.mxu0 0.0
    %4874 = vmatpush1.msra.mxu0 0.0
    %4875 = vmatprep.subr.mxu0 0.0
    %4876 = vmatpush1.msra.mxu0 0.0
    %4877 = vmatprep.subr.mxu0 0.0
    %4878 = vmatpush1.msra.mxu0 0.0
    %4879 = vmatprep.mubr.f32.mxu0 0.0
    %v4880 = vand.u32 %v4385, 4294901760
    %4881 = vmatmul.mubr.f32.gmra.mrb[0].mxu0 %v4880
    %v4882 = vpop.f32.mrb[0].mxu0
    %v4883 = vadd.f32 %v4804, %v4882
    %v4884 = vpop.f32.mrb[0].mxu0
    %4885 = vmatprep.mubr.f32.mxu0 0.0
    %v4886 = vand.u32 %v4388, 4294901760
    %4887 = vmatmul.mubr.f32.gmra.mrb[0].mxu0 %v4886
    %v4888 = vpop.f32.mrb[0].mxu0
    %v4889 = vadd.f32 %v4810, %v4888
    %v4890 = vpop.f32.mrb[0].mxu0
    %4891 = vdwg.mxu0
    %v4892 = vrcp.pop %v4374
    %v4893 = vmul.f32 %v4883, %v4892
    %v4894 = vrcp.pop %v4377
    %v4895 = vmul.f32 %v4889, %v4894
    %s4896 = scalar_lea.vmem [#allocation7], 16
    %v4897 = vld [vmem:[%s4896] sm:$0xff]
    %v4899 = vsel %vm745, %v4893, 0
    %v4902 = vsel %vm745, %v4895, 0
    %4904 = vmatprep.subr.mxu0 0.0
    %v4905 = vand.u32 %v4897, 4294901760
    %4906 = vmatpush1.msra.mxu0 %v4905
    %4907 = vmatprep.subr.mxu0 0.0
    %4908 = vmatpush1.msra.mxu0 0.0
    %4909 = vmatprep.subr.mxu0 0.0
    %4910 = vmatpush1.msra.mxu0 0.0
    %4911 = vmatprep.subr.mxu0 0.0
    %4912 = vmatpush1.msra.mxu0 0.0
    %4913 = vmatprep.subr.mxu0 0.0
    %4914 = vmatpush1.msra.mxu0 0.0
    %4915 = vmatprep.subr.mxu0 0.0
    %4916 = vmatpush1.msra.mxu0 0.0
    %4917 = vmatprep.subr.mxu0 0.0
    %4918 = vmatpush1.msra.mxu0 0.0
    %4919 = vmatprep.subr.mxu0 0.0
    %4920 = vmatpush1.msra.mxu0 0.0
    %4921 = vmatprep.subr.mxu0 0.0
    %4922 = vmatpush1.msra.mxu0 0.0
    %4923 = vmatprep.subr.mxu0 0.0
    %4924 = vmatpush1.msra.mxu0 0.0
    %4925 = vmatprep.subr.mxu0 0.0
    %4926 = vmatpush1.msra.mxu0 0.0
    %4927 = vmatprep.subr.mxu0 0.0
    %4928 = vmatpush1.msra.mxu0 0.0
    %4929 = vmatprep.subr.mxu0 0.0
    %4930 = vmatpush1.msra.mxu0 0.0
    %4931 = vmatprep.subr.mxu0 0.0
    %4932 = vmatpush1.msra.mxu0 0.0
    %4933 = vmatprep.subr.mxu0 0.0
    %4934 = vmatpush1.msra.mxu0 0.0
    %4935 = vmatprep.subr.mxu0 0.0
    %4936 = vmatpush1.msra.mxu0 0.0
    %4937 = vmatprep.subr.mxu0 0.0
    %4938 = vmatpush1.msra.mxu0 0.0
    %4939 = vmatprep.subr.mxu0 0.0
    %4940 = vmatpush1.msra.mxu0 0.0
    %4941 = vmatprep.subr.mxu0 0.0
    %4942 = vmatpush1.msra.mxu0 0.0
    %4943 = vmatprep.subr.mxu0 0.0
    %4944 = vmatpush1.msra.mxu0 0.0
    %4945 = vmatprep.subr.mxu0 0.0
    %4946 = vmatpush1.msra.mxu0 0.0
    %4947 = vmatprep.subr.mxu0 0.0
    %4948 = vmatpush1.msra.mxu0 0.0
    %4949 = vmatprep.subr.mxu0 0.0
    %4950 = vmatpush1.msra.mxu0 0.0
    %4951 = vmatprep.subr.mxu0 0.0
    %4952 = vmatpush1.msra.mxu0 0.0
    %4953 = vmatprep.subr.mxu0 0.0
    %4954 = vmatpush1.msra.mxu0 0.0
    %4955 = vmatprep.subr.mxu0 0.0
    %4956 = vmatpush1.msra.mxu0 0.0
    %4957 = vmatprep.subr.mxu0 0.0
    %4958 = vmatpush1.msra.mxu0 0.0
    %4959 = vmatprep.subr.mxu0 0.0
    %4960 = vmatpush1.msra.mxu0 0.0
    %4961 = vmatprep.subr.mxu0 0.0
    %4962 = vmatpush1.msra.mxu0 0.0
    %4963 = vmatprep.subr.mxu0 0.0
    %4964 = vmatpush1.msra.mxu0 0.0
    %4965 = vmatprep.subr.mxu0 0.0
    %4966 = vmatpush1.msra.mxu0 0.0
    %4967 = vmatprep.subr.mxu0 0.0
    %4968 = vmatpush1.msra.mxu0 0.0
    %4969 = vmatprep.mubr.f32.mxu0 0.0
    %v4970 = vand.u32 %v4899, 4294901760
    %v4971 = vsub.f32 %v4899, %v4970
    %v4972 = vand.u32 %v4971, 4294901760
    %v4973 = vsub.f32 %v4971, %v4972
    %v4974 = vand.u32 %v4973, 4294901760
    %4975 = vmatmul.mubr.f32.gmra.mrb[0].mxu0 %v4974
    %v4976 = vpop.f32.mrb[0].mxu0
    %v4977 = vadd.f32 0.0, %v4976
    %v4978 = vpop.f32.mrb[0].mxu0
    %4979 = vmatprep.mubr.f32.mxu0 0.0
    %v4980 = vand.u32 %v4902, 4294901760
    %v4981 = vsub.f32 %v4902, %v4980
    %v4982 = vand.u32 %v4981, 4294901760
    %v4983 = vsub.f32 %v4981, %v4982
    %v4984 = vand.u32 %v4983, 4294901760
    %4985 = vmatmul.mubr.f32.gmra.mrb[0].mxu0 %v4984
    %v4986 = vpop.f32.mrb[0].mxu0
    %v4987 = vadd.f32 0.0, %v4986
    %v4988 = vpop.f32.mrb[0].mxu0
    %4989 = vdwg.mxu0
    %4990 = vmatprep.subr.mxu0 0.0
    %v4991 = vand.u32 %v4897, 4294901760
    %v4992 = vsub.f32 %v4897, %v4991
    %v4993 = vand.u32 %v4992, 4294901760
    %v4994 = vsub.f32 %v4992, %v4993
    %v4995 = vand.u32 %v4994, 4294901760
    %4996 = vmatpush1.msra.mxu0 %v4995
    %4997 = vmatprep.subr.mxu0 0.0
    %4998 = vmatpush1.msra.mxu0 0.0
    %4999 = vmatprep.subr.mxu0 0.0
    %5000 = vmatpush1.msra.mxu0 0.0
    %5001 = vmatprep.subr.mxu0 0.0
    %5002 = vmatpush1.msra.mxu0 0.0
    %5003 = vmatprep.subr.mxu0 0.0
    %5004 = vmatpush1.msra.mxu0 0.0
    %5005 = vmatprep.subr.mxu0 0.0
    %5006 = vmatpush1.msra.mxu0 0.0
    %5007 = vmatprep.subr.mxu0 0.0
    %5008 = vmatpush1.msra.mxu0 0.0
    %5009 = vmatprep.subr.mxu0 0.0
    %5010 = vmatpush1.msra.mxu0 0.0
    %5011 = vmatprep.subr.mxu0 0.0
    %5012 = vmatpush1.msra.mxu0 0.0
    %5013 = vmatprep.subr.mxu0 0.0
    %5014 = vmatpush1.msra.mxu0 0.0
    %5015 = vmatprep.subr.mxu0 0.0
    %5016 = vmatpush1.msra.mxu0 0.0
    %5017 = vmatprep.subr.mxu0 0.0
    %5018 = vmatpush1.msra.mxu0 0.0
    %5019 = vmatprep.subr.mxu0 0.0
    %5020 = vmatpush1.msra.mxu0 0.0
    %5021 = vmatprep.subr.mxu0 0.0
    %5022 = vmatpush1.msra.mxu0 0.0
    %5023 = vmatprep.subr.mxu0 0.0
    %5024 = vmatpush1.msra.mxu0 0.0
    %5025 = vmatprep.subr.mxu0 0.0
    %5026 = vmatpush1.msra.mxu0 0.0
    %5027 = vmatprep.subr.mxu0 0.0
    %5028 = vmatpush1.msra.mxu0 0.0
    %5029 = vmatprep.subr.mxu0 0.0
    %5030 = vmatpush1.msra.mxu0 0.0
    %5031 = vmatprep.subr.mxu0 0.0
    %5032 = vmatpush1.msra.mxu0 0.0
    %5033 = vmatprep.subr.mxu0 0.0
    %5034 = vmatpush1.msra.mxu0 0.0
    %5035 = vmatprep.subr.mxu0 0.0
    %5036 = vmatpush1.msra.mxu0 0.0
    %5037 = vmatprep.subr.mxu0 0.0
    %5038 = vmatpush1.msra.mxu0 0.0
    %5039 = vmatprep.subr.mxu0 0.0
    %5040 = vmatpush1.msra.mxu0 0.0
    %5041 = vmatprep.subr.mxu0 0.0
    %5042 = vmatpush1.msra.mxu0 0.0
    %5043 = vmatprep.subr.mxu0 0.0
    %5044 = vmatpush1.msra.mxu0 0.0
    %5045 = vmatprep.subr.mxu0 0.0
    %5046 = vmatpush1.msra.mxu0 0.0
    %5047 = vmatprep.subr.mxu0 0.0
    %5048 = vmatpush1.msra.mxu0 0.0
    %5049 = vmatprep.subr.mxu0 0.0
    %5050 = vmatpush1.msra.mxu0 0.0
    %5051 = vmatprep.subr.mxu0 0.0
    %5052 = vmatpush1.msra.mxu0 0.0
    %5053 = vmatprep.subr.mxu0 0.0
    %5054 = vmatpush1.msra.mxu0 0.0
    %5055 = vmatprep.subr.mxu0 0.0
    %5056 = vmatpush1.msra.mxu0 0.0
    %5057 = vmatprep.subr.mxu0 0.0
    %5058 = vmatpush1.msra.mxu0 0.0
    %5059 = vmatprep.mubr.f32.mxu0 0.0
    %v5060 = vand.u32 %v4899, 4294901760
    %5061 = vmatmul.mubr.f32.gmra.mrb[0].mxu0 %v5060
    %v5062 = vpop.f32.mrb[0].mxu0
    %v5063 = vadd.f32 %v4977, %v5062
    %v5064 = vpop.f32.mrb[0].mxu0
    %5065 = vmatprep.mubr.f32.mxu0 0.0
    %v5066 = vand.u32 %v4902, 4294901760
    %5067 = vmatmul.mubr.f32.gmra.mrb[0].mxu0 %v5066
    %v5068 = vpop.f32.mrb[0].mxu0
    %v5069 = vadd.f32 %v4987, %v5068
    %v5070 = vpop.f32.mrb[0].mxu0
    %5071 = vdwg.mxu0
    %5072 = vmatprep.subr.mxu0 0.0
    %v5073 = vand.u32 %v4897, 4294901760
    %v5074 = vsub.f32 %v4897, %v5073
    %5075 = vmatpush1.msra.mxu0 %v5074
    %5076 = vmatprep.subr.mxu0 0.0
    %5077 = vmatpush1.msra.mxu0 0.0
    %5078 = vmatprep.subr.mxu0 0.0
    %5079 = vmatpush1.msra.mxu0 0.0
    %5080 = vmatprep.subr.mxu0 0.0
    %5081 = vmatpush1.msra.mxu0 0.0
    %5082 = vmatprep.subr.mxu0 0.0
    %5083 = vmatpush1.msra.mxu0 0.0
    %5084 = vmatprep.subr.mxu0 0.0
    %5085 = vmatpush1.msra.mxu0 0.0
    %5086 = vmatprep.subr.mxu0 0.0
    %5087 = vmatpush1.msra.mxu0 0.0
    %5088 = vmatprep.subr.mxu0 0.0
    %5089 = vmatpush1.msra.mxu0 0.0
    %5090 = vmatprep.subr.mxu0 0.0
    %5091 = vmatpush1.msra.mxu0 0.0
    %5092 = vmatprep.subr.mxu0 0.0
    %5093 = vmatpush1.msra.mxu0 0.0
    %5094 = vmatprep.subr.mxu0 0.0
    %5095 = vmatpush1.msra.mxu0 0.0
    %5096 = vmatprep.subr.mxu0 0.0
    %5097 = vmatpush1.msra.mxu0 0.0
    %5098 = vmatprep.subr.mxu0 0.0
    %5099 = vmatpush1.msra.mxu0 0.0
    %5100 = vmatprep.subr.mxu0 0.0
    %5101 = vmatpush1.msra.mxu0 0.0
    %5102 = vmatprep.subr.mxu0 0.0
    %5103 = vmatpush1.msra.mxu0 0.0
    %5104 = vmatprep.subr.mxu0 0.0
    %5105 = vmatpush1.msra.mxu0 0.0
    %5106 = vmatprep.subr.mxu0 0.0
    %5107 = vmatpush1.msra.mxu0 0.0
    %5108 = vmatprep.subr.mxu0 0.0
    %5109 = vmatpush1.msra.mxu0 0.0
    %5110 = vmatprep.subr.mxu0 0.0
    %5111 = vmatpush1.msra.mxu0 0.0
    %5112 = vmatprep.subr.mxu0 0.0
    %5113 = vmatpush1.msra.mxu0 0.0
    %5114 = vmatprep.subr.mxu0 0.0
    %5115 = vmatpush1.msra.mxu0 0.0
    %5116 = vmatprep.subr.mxu0 0.0
    %5117 = vmatpush1.msra.mxu0 0.0
    %5118 = vmatprep.subr.mxu0 0.0
    %5119 = vmatpush1.msra.mxu0 0.0
    %5120 = vmatprep.subr.mxu0 0.0
    %5121 = vmatpush1.msra.mxu0 0.0
    %5122 = vmatprep.subr.mxu0 0.0
    %5123 = vmatpush1.msra.mxu0 0.0
    %5124 = vmatprep.subr.mxu0 0.0
    %5125 = vmatpush1.msra.mxu0 0.0
    %5126 = vmatprep.subr.mxu0 0.0
    %5127 = vmatpush1.msra.mxu0 0.0
    %5128 = vmatprep.subr.mxu0 0.0
    %5129 = vmatpush1.msra.mxu0 0.0
    %5130 = vmatprep.subr.mxu0 0.0
    %5131 = vmatpush1.msra.mxu0 0.0
    %5132 = vmatprep.subr.mxu0 0.0
    %5133 = vmatpush1.msra.mxu0 0.0
    %5134 = vmatprep.subr.mxu0 0.0
    %5135 = vmatpush1.msra.mxu0 0.0
    %5136 = vmatprep.subr.mxu0 0.0
    %5137 = vmatpush1.msra.mxu0 0.0
    %5138 = vmatprep.mubr.f32.mxu0 0.0
    %v5139 = vand.u32 %v4899, 4294901760
    %v5140 = vsub.f32 %v4899, %v5139
    %5141 = vmatmul.mubr.f32.gmra.mrb[0].mxu0 %v5140
    %v5142 = vpop.f32.mrb[0].mxu0
    %v5143 = vadd.f32 %v5063, %v5142
    %v5144 = vpop.f32.mrb[0].mxu0
    %5145 = vmatprep.mubr.f32.mxu0 0.0
    %v5146 = vand.u32 %v4902, 4294901760
    %v5147 = vsub.f32 %v4902, %v5146
    %5148 = vmatmul.mubr.f32.gmra.mrb[0].mxu0 %v5147
    %v5149 = vpop.f32.mrb[0].mxu0
    %v5150 = vadd.f32 %v5069, %v5149
    %v5151 = vpop.f32.mrb[0].mxu0
    %5152 = vdwg.mxu0
    %5153 = vmatprep.subr.mxu0 0.0
    %v5154 = vand.u32 %v4897, 4294901760
    %5155 = vmatpush1.msra.mxu0 %v5154
    %5156 = vmatprep.subr.mxu0 0.0
    %5157 = vmatpush1.msra.mxu0 0.0
    %5158 = vmatprep.subr.mxu0 0.0
    %5159 = vmatpush1.msra.mxu0 0.0
    %5160 = vmatprep.subr.mxu0 0.0
    %5161 = vmatpush1.msra.mxu0 0.0
    %5162 = vmatprep.subr.mxu0 0.0
    %5163 = vmatpush1.msra.mxu0 0.0
    %5164 = vmatprep.subr.mxu0 0.0
    %5165 = vmatpush1.msra.mxu0 0.0
    %5166 = vmatprep.subr.mxu0 0.0
    %5167 = vmatpush1.msra.mxu0 0.0
    %5168 = vmatprep.subr.mxu0 0.0
    %5169 = vmatpush1.msra.mxu0 0.0
    %5170 = vmatprep.subr.mxu0 0.0
    %5171 = vmatpush1.msra.mxu0 0.0
    %5172 = vmatprep.subr.mxu0 0.0
    %5173 = vmatpush1.msra.mxu0 0.0
    %5174 = vmatprep.subr.mxu0 0.0
    %5175 = vmatpush1.msra.mxu0 0.0
    %5176 = vmatprep.subr.mxu0 0.0
    %5177 = vmatpush1.msra.mxu0 0.0
    %5178 = vmatprep.subr.mxu0 0.0
    %5179 = vmatpush1.msra.mxu0 0.0
    %5180 = vmatprep.subr.mxu0 0.0
    %5181 = vmatpush1.msra.mxu0 0.0
    %5182 = vmatprep.subr.mxu0 0.0
    %5183 = vmatpush1.msra.mxu0 0.0
    %5184 = vmatprep.subr.mxu0 0.0
    %5185 = vmatpush1.msra.mxu0 0.0
    %5186 = vmatprep.subr.mxu0 0.0
    %5187 = vmatpush1.msra.mxu0 0.0
    %5188 = vmatprep.subr.mxu0 0.0
    %5189 = vmatpush1.msra.mxu0 0.0
    %5190 = vmatprep.subr.mxu0 0.0
    %5191 = vmatpush1.msra.mxu0 0.0
    %5192 = vmatprep.subr.mxu0 0.0
    %5193 = vmatpush1.msra.mxu0 0.0
    %5194 = vmatprep.subr.mxu0 0.0
    %5195 = vmatpush1.msra.mxu0 0.0
    %5196 = vmatprep.subr.mxu0 0.0
    %5197 = vmatpush1.msra.mxu0 0.0
    %5198 = vmatprep.subr.mxu0 0.0
    %5199 = vmatpush1.msra.mxu0 0.0
    %5200 = vmatprep.subr.mxu0 0.0
    %5201 = vmatpush1.msra.mxu0 0.0
    %5202 = vmatprep.subr.mxu0 0.0
    %5203 = vmatpush1.msra.mxu0 0.0
    %5204 = vmatprep.subr.mxu0 0.0
    %5205 = vmatpush1.msra.mxu0 0.0
    %5206 = vmatprep.subr.mxu0 0.0
    %5207 = vmatpush1.msra.mxu0 0.0
    %5208 = vmatprep.subr.mxu0 0.0
    %5209 = vmatpush1.msra.mxu0 0.0
    %5210 = vmatprep.subr.mxu0 0.0
    %5211 = vmatpush1.msra.mxu0 0.0
    %5212 = vmatprep.subr.mxu0 0.0
    %5213 = vmatpush1.msra.mxu0 0.0
    %5214 = vmatprep.subr.mxu0 0.0
    %5215 = vmatpush1.msra.mxu0 0.0
    %5216 = vmatprep.subr.mxu0 0.0
    %5217 = vmatpush1.msra.mxu0 0.0
    %5218 = vmatprep.mubr.f32.mxu0 0.0
    %v5219 = vand.u32 %v4899, 4294901760
    %v5220 = vsub.f32 %v4899, %v5219
    %v5221 = vand.u32 %v5220, 4294901760
    %5222 = vmatmul.mubr.f32.gmra.mrb[0].mxu0 %v5221
    %v5223 = vpop.f32.mrb[0].mxu0
    %v5224 = vadd.f32 %v5143, %v5223
    %v5225 = vpop.f32.mrb[0].mxu0
    %5226 = vmatprep.mubr.f32.mxu0 0.0
    %v5227 = vand.u32 %v4902, 4294901760
    %v5228 = vsub.f32 %v4902, %v5227
    %v5229 = vand.u32 %v5228, 4294901760
    %5230 = vmatmul.mubr.f32.gmra.mrb[0].mxu0 %v5229
    %v5231 = vpop.f32.mrb[0].mxu0
    %v5232 = vadd.f32 %v5150, %v5231
    %v5233 = vpop.f32.mrb[0].mxu0
    %5234 = vdwg.mxu0
    %5235 = vmatprep.subr.mxu0 0.0
    %v5236 = vand.u32 %v4897, 4294901760
    %v5237 = vsub.f32 %v4897, %v5236
    %v5238 = vand.u32 %v5237, 4294901760
    %5239 = vmatpush1.msra.mxu0 %v5238
    %5240 = vmatprep.subr.mxu0 0.0
    %5241 = vmatpush1.msra.mxu0 0.0
    %5242 = vmatprep.subr.mxu0 0.0
    %5243 = vmatpush1.msra.mxu0 0.0
    %5244 = vmatprep.subr.mxu0 0.0
    %5245 = vmatpush1.msra.mxu0 0.0
    %5246 = vmatprep.subr.mxu0 0.0
    %5247 = vmatpush1.msra.mxu0 0.0
    %5248 = vmatprep.subr.mxu0 0.0
    %5249 = vmatpush1.msra.mxu0 0.0
    %5250 = vmatprep.subr.mxu0 0.0
    %5251 = vmatpush1.msra.mxu0 0.0
    %5252 = vmatprep.subr.mxu0 0.0
    %5253 = vmatpush1.msra.mxu0 0.0
    %5254 = vmatprep.subr.mxu0 0.0
    %5255 = vmatpush1.msra.mxu0 0.0
    %5256 = vmatprep.subr.mxu0 0.0
    %5257 = vmatpush1.msra.mxu0 0.0
    %5258 = vmatprep.subr.mxu0 0.0
    %5259 = vmatpush1.msra.mxu0 0.0
    %5260 = vmatprep.subr.mxu0 0.0
    %5261 = vmatpush1.msra.mxu0 0.0
    %5262 = vmatprep.subr.mxu0 0.0
    %5263 = vmatpush1.msra.mxu0 0.0
    %5264 = vmatprep.subr.mxu0 0.0
    %5265 = vmatpush1.msra.mxu0 0.0
    %5266 = vmatprep.subr.mxu0 0.0
    %5267 = vmatpush1.msra.mxu0 0.0
    %5268 = vmatprep.subr.mxu0 0.0
    %5269 = vmatpush1.msra.mxu0 0.0
    %5270 = vmatprep.subr.mxu0 0.0
    %5271 = vmatpush1.msra.mxu0 0.0
    %5272 = vmatprep.subr.mxu0 0.0
    %5273 = vmatpush1.msra.mxu0 0.0
    %5274 = vmatprep.subr.mxu0 0.0
    %5275 = vmatpush1.msra.mxu0 0.0
    %5276 = vmatprep.subr.mxu0 0.0
    %5277 = vmatpush1.msra.mxu0 0.0
    %5278 = vmatprep.subr.mxu0 0.0
    %5279 = vmatpush1.msra.mxu0 0.0
    %5280 = vmatprep.subr.mxu0 0.0
    %5281 = vmatpush1.msra.mxu0 0.0
    %5282 = vmatprep.subr.mxu0 0.0
    %5283 = vmatpush1.msra.mxu0 0.0
    %5284 = vmatprep.subr.mxu0 0.0
    %5285 = vmatpush1.msra.mxu0 0.0
    %5286 = vmatprep.subr.mxu0 0.0
    %5287 = vmatpush1.msra.mxu0 0.0
    %5288 = vmatprep.subr.mxu0 0.0
    %5289 = vmatpush1.msra.mxu0 0.0
    %5290 = vmatprep.subr.mxu0 0.0
    %5291 = vmatpush1.msra.mxu0 0.0
    %5292 = vmatprep.subr.mxu0 0.0
    %5293 = vmatpush1.msra.mxu0 0.0
    %5294 = vmatprep.subr.mxu0 0.0
    %5295 = vmatpush1.msra.mxu0 0.0
    %5296 = vmatprep.subr.mxu0 0.0
    %5297 = vmatpush1.msra.mxu0 0.0
    %5298 = vmatprep.subr.mxu0 0.0
    %5299 = vmatpush1.msra.mxu0 0.0
    %5300 = vmatprep.subr.mxu0 0.0
    %5301 = vmatpush1.msra.mxu0 0.0
    %5302 = vmatprep.mubr.f32.mxu0 0.0
    %v5303 = vand.u32 %v4899, 4294901760
    %5304 = vmatmul.mubr.f32.gmra.mrb[0].mxu0 %v5303
    %v5305 = vpop.f32.mrb[0].mxu0
    %v5306 = vadd.f32 %v5224, %v5305
    %v5307 = vpop.f32.mrb[0].mxu0
    %5308 = vmatprep.mubr.f32.mxu0 0.0
    %v5309 = vand.u32 %v4902, 4294901760
    %5310 = vmatmul.mubr.f32.gmra.mrb[0].mxu0 %v5309
    %v5311 = vpop.f32.mrb[0].mxu0
    %v5312 = vadd.f32 %v5232, %v5311
    %v5313 = vpop.f32.mrb[0].mxu0
    %5314 = vdwg.mxu0
    %5315 = vmatprep.subr.mxu0 0.0
    %v5316 = vand.u32 %v4897, 4294901760
    %5317 = vmatpush1.msra.mxu0 %v5316
    %5318 = vmatprep.subr.mxu0 0.0
    %5319 = vmatpush1.msra.mxu0 0.0
    %5320 = vmatprep.subr.mxu0 0.0
    %5321 = vmatpush1.msra.mxu0 0.0
    %5322 = vmatprep.subr.mxu0 0.0
    %5323 = vmatpush1.msra.mxu0 0.0
    %5324 = vmatprep.subr.mxu0 0.0
    %5325 = vmatpush1.msra.mxu0 0.0
    %5326 = vmatprep.subr.mxu0 0.0
    %5327 = vmatpush1.msra.mxu0 0.0
    %5328 = vmatprep.subr.mxu0 0.0
    %5329 = vmatpush1.msra.mxu0 0.0
    %5330 = vmatprep.subr.mxu0 0.0
    %5331 = vmatpush1.msra.mxu0 0.0
    %5332 = vmatprep.subr.mxu0 0.0
    %5333 = vmatpush1.msra.mxu0 0.0
    %5334 = vmatprep.subr.mxu0 0.0
    %5335 = vmatpush1.msra.mxu0 0.0
    %5336 = vmatprep.subr.mxu0 0.0
    %5337 = vmatpush1.msra.mxu0 0.0
    %5338 = vmatprep.subr.mxu0 0.0
    %5339 = vmatpush1.msra.mxu0 0.0
    %5340 = vmatprep.subr.mxu0 0.0
    %5341 = vmatpush1.msra.mxu0 0.0
    %5342 = vmatprep.subr.mxu0 0.0
    %5343 = vmatpush1.msra.mxu0 0.0
    %5344 = vmatprep.subr.mxu0 0.0
    %5345 = vmatpush1.msra.mxu0 0.0
    %5346 = vmatprep.subr.mxu0 0.0
    %5347 = vmatpush1.msra.mxu0 0.0
    %5348 = vmatprep.subr.mxu0 0.0
    %5349 = vmatpush1.msra.mxu0 0.0
    %5350 = vmatprep.subr.mxu0 0.0
    %5351 = vmatpush1.msra.mxu0 0.0
    %5352 = vmatprep.subr.mxu0 0.0
    %5353 = vmatpush1.msra.mxu0 0.0
    %5354 = vmatprep.subr.mxu0 0.0
    %5355 = vmatpush1.msra.mxu0 0.0
    %5356 = vmatprep.subr.mxu0 0.0
    %5357 = vmatpush1.msra.mxu0 0.0
    %5358 = vmatprep.subr.mxu0 0.0
    %5359 = vmatpush1.msra.mxu0 0.0
    %5360 = vmatprep.subr.mxu0 0.0
    %5361 = vmatpush1.msra.mxu0 0.0
    %5362 = vmatprep.subr.mxu0 0.0
    %5363 = vmatpush1.msra.mxu0 0.0
    %5364 = vmatprep.subr.mxu0 0.0
    %5365 = vmatpush1.msra.mxu0 0.0
    %5366 = vmatprep.subr.mxu0 0.0
    %5367 = vmatpush1.msra.mxu0 0.0
    %5368 = vmatprep.subr.mxu0 0.0
    %5369 = vmatpush1.msra.mxu0 0.0
    %5370 = vmatprep.subr.mxu0 0.0
    %5371 = vmatpush1.msra.mxu0 0.0
    %5372 = vmatprep.subr.mxu0 0.0
    %5373 = vmatpush1.msra.mxu0 0.0
    %5374 = vmatprep.subr.mxu0 0.0
    %5375 = vmatpush1.msra.mxu0 0.0
    %5376 = vmatprep.subr.mxu0 0.0
    %5377 = vmatpush1.msra.mxu0 0.0
    %5378 = vmatprep.subr.mxu0 0.0
    %5379 = vmatpush1.msra.mxu0 0.0
    %5380 = vmatprep.mubr.f32.mxu0 0.0
    %v5381 = vand.u32 %v4899, 4294901760
    %5382 = vmatmul.mubr.f32.gmra.mrb[0].mxu0 %v5381
    %v5383 = vpop.f32.mrb[0].mxu0
    %v5384 = vadd.f32 %v5306, %v5383
    %v5385 = vpop.f32.mrb[0].mxu0
    %5386 = vmatprep.mubr.f32.mxu0 0.0
    %v5387 = vand.u32 %v4902, 4294901760
    %5388 = vmatmul.mubr.f32.gmra.mrb[0].mxu0 %v5387
    %v5389 = vpop.f32.mrb[0].mxu0
    %v5390 = vadd.f32 %v5312, %v5389
    %v5391 = vpop.f32.mrb[0].mxu0
    %5392 = vdwg.mxu0
    %v5393 = vadd.f32 %v3833, %v5384
    %v5394 = vadd.f32 %v3839, %v5390
    %5395 = vrot.lane.b32.xlu0 %v737, 104
    %v5396 = vpop.permute.xlu0 %5395
    %5397 = vrot.lane.b32.xlu0 %v738, 104
    %v5398 = vpop.permute.xlu0 %5397
    %5399 = vrot.lane.b32.xlu0 %v737, 72
    %v5400 = vpop.permute.xlu0 %5399
    %5401 = vrot.lane.b32.xlu0 %v738, 72
    %v5402 = vpop.permute.xlu0 %5401
    %v5403 = vsel %vm745, %v5396, 0
    %v5405 = vsel %vm745, %v5398, 0
    %v5407 = vsel %vm745, %v5400, 0
    %v5409 = vsel %vm745, %v5402, 0
    %5411 = vmatprep.subr.mxu0 0.0
    %v5412 = vand.u32 %v5407, 4294901760
    %5413 = vmatpush1.xpose.msra.mxu0 %v5412
    %5414 = vmatprep.subr.mxu0 0.0
    %v5415 = vand.u32 %v5409, 4294901760
    %5416 = vmatpush1.xpose.msra.mxu0 %v5415
    %5417 = vmatprep.subr.mxu0 0.0
    %5418 = vmatpush1.xpose.msra.mxu0 0.0
    %5419 = vmatprep.subr.mxu0 0.0
    %5420 = vmatpush1.xpose.msra.mxu0 0.0
    %5421 = vmatprep.subr.mxu0 0.0
    %5422 = vmatpush1.xpose.msra.mxu0 0.0
    %5423 = vmatprep.subr.mxu0 0.0
    %5424 = vmatpush1.xpose.msra.mxu0 0.0
    %5425 = vmatprep.subr.mxu0 0.0
    %5426 = vmatpush1.xpose.msra.mxu0 0.0
    %5427 = vmatprep.subr.mxu0 0.0
    %5428 = vmatpush1.xpose.msra.mxu0 0.0
    %5429 = vmatprep.subr.mxu0 0.0
    %5430 = vmatpush1.xpose.msra.mxu0 0.0
    %5431 = vmatprep.subr.mxu0 0.0
    %5432 = vmatpush1.xpose.msra.mxu0 0.0
    %5433 = vmatprep.subr.mxu0 0.0
    %5434 = vmatpush1.xpose.msra.mxu0 0.0
    %5435 = vmatprep.subr.mxu0 0.0
    %5436 = vmatpush1.xpose.msra.mxu0 0.0
    %5437 = vmatprep.subr.mxu0 0.0
    %5438 = vmatpush1.xpose.msra.mxu0 0.0
    %5439 = vmatprep.subr.mxu0 0.0
    %5440 = vmatpush1.xpose.msra.mxu0 0.0
    %5441 = vmatprep.subr.mxu0 0.0
    %5442 = vmatpush1.xpose.msra.mxu0 0.0
    %5443 = vmatprep.subr.mxu0 0.0
    %5444 = vmatpush1.xpose.msra.mxu0 0.0
    %5445 = vmatprep.subr.mxu0 0.0
    %5446 = vmatpush1.xpose.msra.mxu0 0.0
    %5447 = vmatprep.subr.mxu0 0.0
    %5448 = vmatpush1.xpose.msra.mxu0 0.0
    %5449 = vmatprep.subr.mxu0 0.0
    %5450 = vmatpush1.xpose.msra.mxu0 0.0
    %5451 = vmatprep.subr.mxu0 0.0
    %5452 = vmatpush1.xpose.msra.mxu0 0.0
    %5453 = vmatprep.subr.mxu0 0.0
    %5454 = vmatpush1.xpose.msra.mxu0 0.0
    %5455 = vmatprep.subr.mxu0 0.0
    %5456 = vmatpush1.xpose.msra.mxu0 0.0
    %5457 = vmatprep.subr.mxu0 0.0
    %5458 = vmatpush1.xpose.msra.mxu0 0.0
    %5459 = vmatprep.subr.mxu0 0.0
    %5460 = vmatpush1.xpose.msra.mxu0 0.0
    %5461 = vmatprep.subr.mxu0 0.0
    %5462 = vmatpush1.xpose.msra.mxu0 0.0
    %5463 = vmatprep.subr.mxu0 0.0
    %5464 = vmatpush1.xpose.msra.mxu0 0.0
    %5465 = vmatprep.subr.mxu0 0.0
    %5466 = vmatpush1.xpose.msra.mxu0 0.0
    %5467 = vmatprep.subr.mxu0 0.0
    %5468 = vmatpush1.xpose.msra.mxu0 0.0
    %5469 = vmatprep.subr.mxu0 0.0
    %5470 = vmatpush1.xpose.msra.mxu0 0.0
    %5471 = vmatprep.subr.mxu0 0.0
    %5472 = vmatpush1.xpose.msra.mxu0 0.0
    %5473 = vmatprep.subr.mxu0 0.0
    %5474 = vmatpush1.xpose.msra.mxu0 0.0
    %5475 = vmatprep.subr.mxu0 0.0
    %5476 = vmatpush1.xpose.msra.mxu0 0.0
    %5477 = vmatprep.mubr.f32.mxu0 0.0
    %v5478 = vand.u32 %v5403, 4294901760
    %v5479 = vsub.f32 %v5403, %v5478
    %v5480 = vand.u32 %v5479, 4294901760
    %v5481 = vsub.f32 %v5479, %v5480
    %v5482 = vand.u32 %v5481, 4294901760
    %5483 = vmatmul.mubr.f32.gmra.mrb[0].mxu0 %v5482
    %v5484 = vpop.f32.mrb[0].mxu0
    %v5485 = vadd.f32 %v102, %v5484
    %v5486 = vpop.f32.mrb[0].mxu0
    %5487 = vmatprep.mubr.f32.mxu0 0.0
    %v5488 = vand.u32 %v5405, 4294901760
    %v5489 = vsub.f32 %v5405, %v5488
    %v5490 = vand.u32 %v5489, 4294901760
    %v5491 = vsub.f32 %v5489, %v5490
    %v5492 = vand.u32 %v5491, 4294901760
    %5493 = vmatmul.mubr.f32.gmra.mrb[0].mxu0 %v5492
    %v5494 = vpop.f32.mrb[0].mxu0
    %v5495 = vadd.f32 %v103, %v5494
    %v5496 = vpop.f32.mrb[0].mxu0
    %5497 = vdwg.mxu0
    %5498 = vmatprep.subr.mxu0 0.0
    %v5499 = vand.u32 %v5407, 4294901760
    %v5500 = vsub.f32 %v5407, %v5499
    %v5501 = vand.u32 %v5500, 4294901760
    %v5502 = vsub.f32 %v5500, %v5501
    %v5503 = vand.u32 %v5502, 4294901760
    %5504 = vmatpush1.xpose.msra.mxu0 %v5503
    %5505 = vmatprep.subr.mxu0 0.0
    %v5506 = vand.u32 %v5409, 4294901760
    %v5507 = vsub.f32 %v5409, %v5506
    %v5508 = vand.u32 %v5507, 4294901760
    %v5509 = vsub.f32 %v5507, %v5508
    %v5510 = vand.u32 %v5509, 4294901760
    %5511 = vmatpush1.xpose.msra.mxu0 %v5510
    %5512 = vmatprep.subr.mxu0 0.0
    %5513 = vmatpush1.xpose.msra.mxu0 0.0
    %5514 = vmatprep.subr.mxu0 0.0
    %5515 = vmatpush1.xpose.msra.mxu0 0.0
    %5516 = vmatprep.subr.mxu0 0.0
    %5517 = vmatpush1.xpose.msra.mxu0 0.0
    %5518 = vmatprep.subr.mxu0 0.0
    %5519 = vmatpush1.xpose.msra.mxu0 0.0
    %5520 = vmatprep.subr.mxu0 0.0
    %5521 = vmatpush1.xpose.msra.mxu0 0.0
    %5522 = vmatprep.subr.mxu0 0.0
    %5523 = vmatpush1.xpose.msra.mxu0 0.0
    %5524 = vmatprep.subr.mxu0 0.0
    %5525 = vmatpush1.xpose.msra.mxu0 0.0
    %5526 = vmatprep.subr.mxu0 0.0
    %5527 = vmatpush1.xpose.msra.mxu0 0.0
    %5528 = vmatprep.subr.mxu0 0.0
    %5529 = vmatpush1.xpose.msra.mxu0 0.0
    %5530 = vmatprep.subr.mxu0 0.0
    %5531 = vmatpush1.xpose.msra.mxu0 0.0
    %5532 = vmatprep.subr.mxu0 0.0
    %5533 = vmatpush1.xpose.msra.mxu0 0.0
    %5534 = vmatprep.subr.mxu0 0.0
    %5535 = vmatpush1.xpose.msra.mxu0 0.0
    %5536 = vmatprep.subr.mxu0 0.0
    %5537 = vmatpush1.xpose.msra.mxu0 0.0
    %5538 = vmatprep.subr.mxu0 0.0
    %5539 = vmatpush1.xpose.msra.mxu0 0.0
    %5540 = vmatprep.subr.mxu0 0.0
    %5541 = vmatpush1.xpose.msra.mxu0 0.0
    %5542 = vmatprep.subr.mxu0 0.0
    %5543 = vmatpush1.xpose.msra.mxu0 0.0
    %5544 = vmatprep.subr.mxu0 0.0
    %5545 = vmatpush1.xpose.msra.mxu0 0.0
    %5546 = vmatprep.subr.mxu0 0.0
    %5547 = vmatpush1.xpose.msra.mxu0 0.0
    %5548 = vmatprep.subr.mxu0 0.0
    %5549 = vmatpush1.xpose.msra.mxu0 0.0
    %5550 = vmatprep.subr.mxu0 0.0
    %5551 = vmatpush1.xpose.msra.mxu0 0.0
    %5552 = vmatprep.subr.mxu0 0.0
    %5553 = vmatpush1.xpose.msra.mxu0 0.0
    %5554 = vmatprep.subr.mxu0 0.0
    %5555 = vmatpush1.xpose.msra.mxu0 0.0
    %5556 = vmatprep.subr.mxu0 0.0
    %5557 = vmatpush1.xpose.msra.mxu0 0.0
    %5558 = vmatprep.subr.mxu0 0.0
    %5559 = vmatpush1.xpose.msra.mxu0 0.0
    %5560 = vmatprep.subr.mxu0 0.0
    %5561 = vmatpush1.xpose.msra.mxu0 0.0
    %5562 = vmatprep.subr.mxu0 0.0
    %5563 = vmatpush1.xpose.msra.mxu0 0.0
    %5564 = vmatprep.subr.mxu0 0.0
    %5565 = vmatpush1.xpose.msra.mxu0 0.0
    %5566 = vmatprep.subr.mxu0 0.0
    %5567 = vmatpush1.xpose.msra.mxu0 0.0
    %5568 = vmatprep.subr.mxu0 0.0
    %5569 = vmatpush1.xpose.msra.mxu0 0.0
    %5570 = vmatprep.subr.mxu0 0.0
    %5571 = vmatpush1.xpose.msra.mxu0 0.0
    %5572 = vmatprep.mubr.f32.mxu0 0.0
    %v5573 = vand.u32 %v5403, 4294901760
    %5574 = vmatmul.mubr.f32.gmra.mrb[0].mxu0 %v5573
    %v5575 = vpop.f32.mrb[0].mxu0
    %v5576 = vadd.f32 %v5485, %v5575
    %v5577 = vpop.f32.mrb[0].mxu0
    %5578 = vmatprep.mubr.f32.mxu0 0.0
    %v5579 = vand.u32 %v5405, 4294901760
    %5580 = vmatmul.mubr.f32.gmra.mrb[0].mxu0 %v5579
    %v5581 = vpop.f32.mrb[0].mxu0
    %v5582 = vadd.f32 %v5495, %v5581
    %v5583 = vpop.f32.mrb[0].mxu0
    %5584 = vdwg.mxu0
    %5585 = vmatprep.subr.mxu0 0.0
    %v5586 = vand.u32 %v5407, 4294901760
    %v5587 = vsub.f32 %v5407, %v5586
    %5588 = vmatpush1.xpose.msra.mxu0 %v5587
    %5589 = vmatprep.subr.mxu0 0.0
    %v5590 = vand.u32 %v5409, 4294901760
    %v5591 = vsub.f32 %v5409, %v5590
    %5592 = vmatpush1.xpose.msra.mxu0 %v5591
    %5593 = vmatprep.subr.mxu0 0.0
    %5594 = vmatpush1.xpose.msra.mxu0 0.0
    %5595 = vmatprep.subr.mxu0 0.0
    %5596 = vmatpush1.xpose.msra.mxu0 0.0
    %5597 = vmatprep.subr.mxu0 0.0
    %5598 = vmatpush1.xpose.msra.mxu0 0.0
    %5599 = vmatprep.subr.mxu0 0.0
    %5600 = vmatpush1.xpose.msra.mxu0 0.0
    %5601 = vmatprep.subr.mxu0 0.0
    %5602 = vmatpush1.xpose.msra.mxu0 0.0
    %5603 = vmatprep.subr.mxu0 0.0
    %5604 = vmatpush1.xpose.msra.mxu0 0.0
    %5605 = vmatprep.subr.mxu0 0.0
    %5606 = vmatpush1.xpose.msra.mxu0 0.0
    %5607 = vmatprep.subr.mxu0 0.0
    %5608 = vmatpush1.xpose.msra.mxu0 0.0
    %5609 = vmatprep.subr.mxu0 0.0
    %5610 = vmatpush1.xpose.msra.mxu0 0.0
    %5611 = vmatprep.subr.mxu0 0.0
    %5612 = vmatpush1.xpose.msra.mxu0 0.0
    %5613 = vmatprep.subr.mxu0 0.0
    %5614 = vmatpush1.xpose.msra.mxu0 0.0
    %5615 = vmatprep.subr.mxu0 0.0
    %5616 = vmatpush1.xpose.msra.mxu0 0.0
    %5617 = vmatprep.subr.mxu0 0.0
    %5618 = vmatpush1.xpose.msra.mxu0 0.0
    %5619 = vmatprep.subr.mxu0 0.0
    %5620 = vmatpush1.xpose.msra.mxu0 0.0
    %5621 = vmatprep.subr.mxu0 0.0
    %5622 = vmatpush1.xpose.msra.mxu0 0.0
    %5623 = vmatprep.subr.mxu0 0.0
    %5624 = vmatpush1.xpose.msra.mxu0 0.0
    %5625 = vmatprep.subr.mxu0 0.0
    %5626 = vmatpush1.xpose.msra.mxu0 0.0
    %5627 = vmatprep.subr.mxu0 0.0
    %5628 = vmatpush1.xpose.msra.mxu0 0.0
    %5629 = vmatprep.subr.mxu0 0.0
    %5630 = vmatpush1.xpose.msra.mxu0 0.0
    %5631 = vmatprep.subr.mxu0 0.0
    %5632 = vmatpush1.xpose.msra.mxu0 0.0
    %5633 = vmatprep.subr.mxu0 0.0
    %5634 = vmatpush1.xpose.msra.mxu0 0.0
    %5635 = vmatprep.subr.mxu0 0.0
    %5636 = vmatpush1.xpose.msra.mxu0 0.0
    %5637 = vmatprep.subr.mxu0 0.0
    %5638 = vmatpush1.xpose.msra.mxu0 0.0
    %5639 = vmatprep.subr.mxu0 0.0
    %5640 = vmatpush1.xpose.msra.mxu0 0.0
    %5641 = vmatprep.subr.mxu0 0.0
    %5642 = vmatpush1.xpose.msra.mxu0 0.0
    %5643 = vmatprep.subr.mxu0 0.0
    %5644 = vmatpush1.xpose.msra.mxu0 0.0
    %5645 = vmatprep.subr.mxu0 0.0
    %5646 = vmatpush1.xpose.msra.mxu0 0.0
    %5647 = vmatprep.subr.mxu0 0.0
    %5648 = vmatpush1.xpose.msra.mxu0 0.0
    %5649 = vmatprep.subr.mxu0 0.0
    %5650 = vmatpush1.xpose.msra.mxu0 0.0
    %5651 = vmatprep.subr.mxu0 0.0
    %5652 = vmatpush1.xpose.msra.mxu0 0.0
    %5653 = vmatprep.mubr.f32.mxu0 0.0
    %v5654 = vand.u32 %v5403, 4294901760
    %v5655 = vsub.f32 %v5403, %v5654
    %5656 = vmatmul.mubr.f32.gmra.mrb[0].mxu0 %v5655
    %v5657 = vpop.f32.mrb[0].mxu0
    %v5658 = vadd.f32 %v5576, %v5657
    %v5659 = vpop.f32.mrb[0].mxu0
    %5660 = vmatprep.mubr.f32.mxu0 0.0
    %v5661 = vand.u32 %v5405, 4294901760
    %v5662 = vsub.f32 %v5405, %v5661
    %5663 = vmatmul.mubr.f32.gmra.mrb[0].mxu0 %v5662
    %v5664 = vpop.f32.mrb[0].mxu0
    %v5665 = vadd.f32 %v5582, %v5664
    %v5666 = vpop.f32.mrb[0].mxu0
    %5667 = vdwg.mxu0
    %5668 = vmatprep.subr.mxu0 0.0
    %v5669 = vand.u32 %v5407, 4294901760
    %5670 = vmatpush1.xpose.msra.mxu0 %v5669
    %5671 = vmatprep.subr.mxu0 0.0
    %v5672 = vand.u32 %v5409, 4294901760
    %5673 = vmatpush1.xpose.msra.mxu0 %v5672
    %5674 = vmatprep.subr.mxu0 0.0
    %5675 = vmatpush1.xpose.msra.mxu0 0.0
    %5676 = vmatprep.subr.mxu0 0.0
    %5677 = vmatpush1.xpose.msra.mxu0 0.0
    %5678 = vmatprep.subr.mxu0 0.0
    %5679 = vmatpush1.xpose.msra.mxu0 0.0
    %5680 = vmatprep.subr.mxu0 0.0
    %5681 = vmatpush1.xpose.msra.mxu0 0.0
    %5682 = vmatprep.subr.mxu0 0.0
    %5683 = vmatpush1.xpose.msra.mxu0 0.0
    %5684 = vmatprep.subr.mxu0 0.0
    %5685 = vmatpush1.xpose.msra.mxu0 0.0
    %5686 = vmatprep.subr.mxu0 0.0
    %5687 = vmatpush1.xpose.msra.mxu0 0.0
    %5688 = vmatprep.subr.mxu0 0.0
    %5689 = vmatpush1.xpose.msra.mxu0 0.0
    %5690 = vmatprep.subr.mxu0 0.0
    %5691 = vmatpush1.xpose.msra.mxu0 0.0
    %5692 = vmatprep.subr.mxu0 0.0
    %5693 = vmatpush1.xpose.msra.mxu0 0.0
    %5694 = vmatprep.subr.mxu0 0.0
    %5695 = vmatpush1.xpose.msra.mxu0 0.0
    %5696 = vmatprep.subr.mxu0 0.0
    %5697 = vmatpush1.xpose.msra.mxu0 0.0
    %5698 = vmatprep.subr.mxu0 0.0
    %5699 = vmatpush1.xpose.msra.mxu0 0.0
    %5700 = vmatprep.subr.mxu0 0.0
    %5701 = vmatpush1.xpose.msra.mxu0 0.0
    %5702 = vmatprep.subr.mxu0 0.0
    %5703 = vmatpush1.xpose.msra.mxu0 0.0
    %5704 = vmatprep.subr.mxu0 0.0
    %5705 = vmatpush1.xpose.msra.mxu0 0.0
    %5706 = vmatprep.subr.mxu0 0.0
    %5707 = vmatpush1.xpose.msra.mxu0 0.0
    %5708 = vmatprep.subr.mxu0 0.0
    %5709 = vmatpush1.xpose.msra.mxu0 0.0
    %5710 = vmatprep.subr.mxu0 0.0
    %5711 = vmatpush1.xpose.msra.mxu0 0.0
    %5712 = vmatprep.subr.mxu0 0.0
    %5713 = vmatpush1.xpose.msra.mxu0 0.0
    %5714 = vmatprep.subr.mxu0 0.0
    %5715 = vmatpush1.xpose.msra.mxu0 0.0
    %5716 = vmatprep.subr.mxu0 0.0
    %5717 = vmatpush1.xpose.msra.mxu0 0.0
    %5718 = vmatprep.subr.mxu0 0.0
    %5719 = vmatpush1.xpose.msra.mxu0 0.0
    %5720 = vmatprep.subr.mxu0 0.0
    %5721 = vmatpush1.xpose.msra.mxu0 0.0
    %5722 = vmatprep.subr.mxu0 0.0
    %5723 = vmatpush1.xpose.msra.mxu0 0.0
    %5724 = vmatprep.subr.mxu0 0.0
    %5725 = vmatpush1.xpose.msra.mxu0 0.0
    %5726 = vmatprep.subr.mxu0 0.0
    %5727 = vmatpush1.xpose.msra.mxu0 0.0
    %5728 = vmatprep.subr.mxu0 0.0
    %5729 = vmatpush1.xpose.msra.mxu0 0.0
    %5730 = vmatprep.subr.mxu0 0.0
    %5731 = vmatpush1.xpose.msra.mxu0 0.0
    %5732 = vmatprep.subr.mxu0 0.0
    %5733 = vmatpush1.xpose.msra.mxu0 0.0
    %5734 = vmatprep.mubr.f32.mxu0 0.0
    %v5735 = vand.u32 %v5403, 4294901760
    %v5736 = vsub.f32 %v5403, %v5735
    %v5737 = vand.u32 %v5736, 4294901760
    %5738 = vmatmul.mubr.f32.gmra.mrb[0].mxu0 %v5737
    %v5739 = vpop.f32.mrb[0].mxu0
    %v5740 = vadd.f32 %v5658, %v5739
    %v5741 = vpop.f32.mrb[0].mxu0
    %5742 = vmatprep.mubr.f32.mxu0 0.0
    %v5743 = vand.u32 %v5405, 4294901760
    %v5744 = vsub.f32 %v5405, %v5743
    %v5745 = vand.u32 %v5744, 4294901760
    %5746 = vmatmul.mubr.f32.gmra.mrb[0].mxu0 %v5745
    %v5747 = vpop.f32.mrb[0].mxu0
    %v5748 = vadd.f32 %v5665, %v5747
    %v5749 = vpop.f32.mrb[0].mxu0
    %5750 = vdwg.mxu0
    %5751 = vmatprep.subr.mxu0 0.0
    %v5752 = vand.u32 %v5407, 4294901760
    %v5753 = vsub.f32 %v5407, %v5752
    %v5754 = vand.u32 %v5753, 4294901760
    %5755 = vmatpush1.xpose.msra.mxu0 %v5754
    %5756 = vmatprep.subr.mxu0 0.0
    %v5757 = vand.u32 %v5409, 4294901760
    %v5758 = vsub.f32 %v5409, %v5757
    %v5759 = vand.u32 %v5758, 4294901760
    %5760 = vmatpush1.xpose.msra.mxu0 %v5759
    %5761 = vmatprep.subr.mxu0 0.0
    %5762 = vmatpush1.xpose.msra.mxu0 0.0
    %5763 = vmatprep.subr.mxu0 0.0
    %5764 = vmatpush1.xpose.msra.mxu0 0.0
    %5765 = vmatprep.subr.mxu0 0.0
    %5766 = vmatpush1.xpose.msra.mxu0 0.0
    %5767 = vmatprep.subr.mxu0 0.0
    %5768 = vmatpush1.xpose.msra.mxu0 0.0
    %5769 = vmatprep.subr.mxu0 0.0
    %5770 = vmatpush1.xpose.msra.mxu0 0.0
    %5771 = vmatprep.subr.mxu0 0.0
    %5772 = vmatpush1.xpose.msra.mxu0 0.0
    %5773 = vmatprep.subr.mxu0 0.0
    %5774 = vmatpush1.xpose.msra.mxu0 0.0
    %5775 = vmatprep.subr.mxu0 0.0
    %5776 = vmatpush1.xpose.msra.mxu0 0.0
    %5777 = vmatprep.subr.mxu0 0.0
    %5778 = vmatpush1.xpose.msra.mxu0 0.0
    %5779 = vmatprep.subr.mxu0 0.0
    %5780 = vmatpush1.xpose.msra.mxu0 0.0
    %5781 = vmatprep.subr.mxu0 0.0
    %5782 = vmatpush1.xpose.msra.mxu0 0.0
    %5783 = vmatprep.subr.mxu0 0.0
    %5784 = vmatpush1.xpose.msra.mxu0 0.0
    %5785 = vmatprep.subr.mxu0 0.0
    %5786 = vmatpush1.xpose.msra.mxu0 0.0
    %5787 = vmatprep.subr.mxu0 0.0
    %5788 = vmatpush1.xpose.msra.mxu0 0.0
    %5789 = vmatprep.subr.mxu0 0.0
    %5790 = vmatpush1.xpose.msra.mxu0 0.0
    %5791 = vmatprep.subr.mxu0 0.0
    %5792 = vmatpush1.xpose.msra.mxu0 0.0
    %5793 = vmatprep.subr.mxu0 0.0
    %5794 = vmatpush1.xpose.msra.mxu0 0.0
    %5795 = vmatprep.subr.mxu0 0.0
    %5796 = vmatpush1.xpose.msra.mxu0 0.0
    %5797 = vmatprep.subr.mxu0 0.0
    %5798 = vmatpush1.xpose.msra.mxu0 0.0
    %5799 = vmatprep.subr.mxu0 0.0
    %5800 = vmatpush1.xpose.msra.mxu0 0.0
    %5801 = vmatprep.subr.mxu0 0.0
    %5802 = vmatpush1.xpose.msra.mxu0 0.0
    %5803 = vmatprep.subr.mxu0 0.0
    %5804 = vmatpush1.xpose.msra.mxu0 0.0
    %5805 = vmatprep.subr.mxu0 0.0
    %5806 = vmatpush1.xpose.msra.mxu0 0.0
    %5807 = vmatprep.subr.mxu0 0.0
    %5808 = vmatpush1.xpose.msra.mxu0 0.0
    %5809 = vmatprep.subr.mxu0 0.0
    %5810 = vmatpush1.xpose.msra.mxu0 0.0
    %5811 = vmatprep.subr.mxu0 0.0
    %5812 = vmatpush1.xpose.msra.mxu0 0.0
    %5813 = vmatprep.subr.mxu0 0.0
    %5814 = vmatpush1.xpose.msra.mxu0 0.0
    %5815 = vmatprep.subr.mxu0 0.0
    %5816 = vmatpush1.xpose.msra.mxu0 0.0
    %5817 = vmatprep.subr.mxu0 0.0
    %5818 = vmatpush1.xpose.msra.mxu0 0.0
    %5819 = vmatprep.subr.mxu0 0.0
    %5820 = vmatpush1.xpose.msra.mxu0 0.0
    %5821 = vmatprep.mubr.f32.mxu0 0.0
    %v5822 = vand.u32 %v5403, 4294901760
    %5823 = vmatmul.mubr.f32.gmra.mrb[0].mxu0 %v5822
    %v5824 = vpop.f32.mrb[0].mxu0
    %v5825 = vadd.f32 %v5740, %v5824
    %v5826 = vpop.f32.mrb[0].mxu0
    %5827 = vmatprep.mubr.f32.mxu0 0.0
    %v5828 = vand.u32 %v5405, 4294901760
    %5829 = vmatmul.mubr.f32.gmra.mrb[0].mxu0 %v5828
    %v5830 = vpop.f32.mrb[0].mxu0
    %v5831 = vadd.f32 %v5748, %v5830
    %v5832 = vpop.f32.mrb[0].mxu0
    %5833 = vdwg.mxu0
    %5834 = vmatprep.subr.mxu0 0.0
    %v5835 = vand.u32 %v5407, 4294901760
    %5836 = vmatpush1.xpose.msra.mxu0 %v5835
    %5837 = vmatprep.subr.mxu0 0.0
    %v5838 = vand.u32 %v5409, 4294901760
    %5839 = vmatpush1.xpose.msra.mxu0 %v5838
    %5840 = vmatprep.subr.mxu0 0.0
    %5841 = vmatpush1.xpose.msra.mxu0 0.0
    %5842 = vmatprep.subr.mxu0 0.0
    %5843 = vmatpush1.xpose.msra.mxu0 0.0
    %5844 = vmatprep.subr.mxu0 0.0
    %5845 = vmatpush1.xpose.msra.mxu0 0.0
    %5846 = vmatprep.subr.mxu0 0.0
    %5847 = vmatpush1.xpose.msra.mxu0 0.0
    %5848 = vmatprep.subr.mxu0 0.0
    %5849 = vmatpush1.xpose.msra.mxu0 0.0
    %5850 = vmatprep.subr.mxu0 0.0
    %5851 = vmatpush1.xpose.msra.mxu0 0.0
    %5852 = vmatprep.subr.mxu0 0.0
    %5853 = vmatpush1.xpose.msra.mxu0 0.0
    %5854 = vmatprep.subr.mxu0 0.0
    %5855 = vmatpush1.xpose.msra.mxu0 0.0
    %5856 = vmatprep.subr.mxu0 0.0
    %5857 = vmatpush1.xpose.msra.mxu0 0.0
    %5858 = vmatprep.subr.mxu0 0.0
    %5859 = vmatpush1.xpose.msra.mxu0 0.0
    %5860 = vmatprep.subr.mxu0 0.0
    %5861 = vmatpush1.xpose.msra.mxu0 0.0
    %5862 = vmatprep.subr.mxu0 0.0
    %5863 = vmatpush1.xpose.msra.mxu0 0.0
    %5864 = vmatprep.subr.mxu0 0.0
    %5865 = vmatpush1.xpose.msra.mxu0 0.0
    %5866 = vmatprep.subr.mxu0 0.0
    %5867 = vmatpush1.xpose.msra.mxu0 0.0
    %5868 = vmatprep.subr.mxu0 0.0
    %5869 = vmatpush1.xpose.msra.mxu0 0.0
    %5870 = vmatprep.subr.mxu0 0.0
    %5871 = vmatpush1.xpose.msra.mxu0 0.0
    %5872 = vmatprep.subr.mxu0 0.0
    %5873 = vmatpush1.xpose.msra.mxu0 0.0
    %5874 = vmatprep.subr.mxu0 0.0
    %5875 = vmatpush1.xpose.msra.mxu0 0.0
    %5876 = vmatprep.subr.mxu0 0.0
    %5877 = vmatpush1.xpose.msra.mxu0 0.0
    %5878 = vmatprep.subr.mxu0 0.0
    %5879 = vmatpush1.xpose.msra.mxu0 0.0
    %5880 = vmatprep.subr.mxu0 0.0
    %5881 = vmatpush1.xpose.msra.mxu0 0.0
    %5882 = vmatprep.subr.mxu0 0.0
    %5883 = vmatpush1.xpose.msra.mxu0 0.0
    %5884 = vmatprep.subr.mxu0 0.0
    %5885 = vmatpush1.xpose.msra.mxu0 0.0
    %5886 = vmatprep.subr.mxu0 0.0
    %5887 = vmatpush1.xpose.msra.mxu0 0.0
    %5888 = vmatprep.subr.mxu0 0.0
    %5889 = vmatpush1.xpose.msra.mxu0 0.0
    %5890 = vmatprep.subr.mxu0 0.0
    %5891 = vmatpush1.xpose.msra.mxu0 0.0
    %5892 = vmatprep.subr.mxu0 0.0
    %5893 = vmatpush1.xpose.msra.mxu0 0.0
    %5894 = vmatprep.subr.mxu0 0.0
    %5895 = vmatpush1.xpose.msra.mxu0 0.0
    %5896 = vmatprep.subr.mxu0 0.0
    %5897 = vmatpush1.xpose.msra.mxu0 0.0
    %5898 = vmatprep.subr.mxu0 0.0
    %5899 = vmatpush1.xpose.msra.mxu0 0.0
    %5900 = vmatprep.mubr.f32.mxu0 0.0
    %v5901 = vand.u32 %v5403, 4294901760
    %5902 = vmatmul.mubr.f32.gmra.mrb[0].mxu0 %v5901
    %v5903 = vpop.f32.mrb[0].mxu0
    %v5904 = vadd.f32 %v5825, %v5903
    %v5905 = vpop.f32.mrb[0].mxu0
    %5906 = vmatprep.mubr.f32.mxu0 0.0
    %v5907 = vand.u32 %v5405, 4294901760
    %5908 = vmatmul.mubr.f32.gmra.mrb[0].mxu0 %v5907
    %v5909 = vpop.f32.mrb[0].mxu0
    %v5910 = vadd.f32 %v5831, %v5909
    %v5911 = vpop.f32.mrb[0].mxu0
    %5912 = vdwg.mxu0
    %v5913 = vsel %vm1256, %v5904, -inf
    %5914 = vmax.xlane.f32.xlu0 %v5913
    %v5915 = vpop.xlane.xlu0 %5914
    %v5916 = vsel %vm1256, %v5910, -inf
    %5917 = vmax.xlane.f32.xlu0 %v5916
    %v5918 = vpop.xlane.xlu0 %5917
    %v5919 = vsub.f32 %v5904, %v5915
    %v5920 = vsub.f32 %v5910, %v5918
    %v5921 = vmul.f32 %v5919, 1.442695
    %v5922 = vpow.pop %v5921
    %v5923 = vmul.f32 %v5920, 1.442695
    %v5924 = vpow.pop %v5923
    %v5925 = vsel %vm1256, %v5922, 0.0
    %5926 = vadd.xlane.f32.xlu0 %v5925
    %v5927 = vpop.xlane.xlu0 %5926
    %v5928 = vsel %vm1256, %v5924, 0.0
    %5929 = vadd.xlane.f32.xlu0 %v5928
    %v5930 = vpop.xlane.xlu0 %5929
    %5931 = vrot.lane.b32.xlu0 %v692, 40
    %v5932 = vpop.permute.xlu0 %5931
    %5933 = vrot.lane.b32.xlu0 %v699, 40
    %v5934 = vpop.permute.xlu0 %5933
    %v5938 = vsel %vm1256, %v5922, 0
    %v5941 = vsel %vm1256, %v5924, 0
    %5943 = vmatprep.subr.mxu0 0.0
    %v5944 = vand.u32 %v5932, 4294901760
    %5945 = vmatpush1.msra.mxu0 %v5944
    %5946 = vmatprep.subr.mxu0 0.0
    %v5947 = vand.u32 %v5934, 4294901760
    %5948 = vmatpush1.msra.mxu0 %v5947
    %5949 = vmatprep.subr.mxu0 0.0
    %5950 = vmatpush1.msra.mxu0 0.0
    %5951 = vmatprep.subr.mxu0 0.0
    %5952 = vmatpush1.msra.mxu0 0.0
    %5953 = vmatprep.subr.mxu0 0.0
    %5954 = vmatpush1.msra.mxu0 0.0
    %5955 = vmatprep.subr.mxu0 0.0
    %5956 = vmatpush1.msra.mxu0 0.0
    %5957 = vmatprep.subr.mxu0 0.0
    %5958 = vmatpush1.msra.mxu0 0.0
    %5959 = vmatprep.subr.mxu0 0.0
    %5960 = vmatpush1.msra.mxu0 0.0
    %5961 = vmatprep.subr.mxu0 0.0
    %5962 = vmatpush1.msra.mxu0 0.0
    %5963 = vmatprep.subr.mxu0 0.0
    %5964 = vmatpush1.msra.mxu0 0.0
    %5965 = vmatprep.subr.mxu0 0.0
    %5966 = vmatpush1.msra.mxu0 0.0
    %5967 = vmatprep.subr.mxu0 0.0
    %5968 = vmatpush1.msra.mxu0 0.0
    %5969 = vmatprep.subr.mxu0 0.0
    %5970 = vmatpush1.msra.mxu0 0.0
    %5971 = vmatprep.subr.mxu0 0.0
    %5972 = vmatpush1.msra.mxu0 0.0
    %5973 = vmatprep.subr.mxu0 0.0
    %5974 = vmatpush1.msra.mxu0 0.0
    %5975 = vmatprep.subr.mxu0 0.0
    %5976 = vmatpush1.msra.mxu0 0.0
    %5977 = vmatprep.subr.mxu0 0.0
    %5978 = vmatpush1.msra.mxu0 0.0
    %5979 = vmatprep.subr.mxu0 0.0
    %5980 = vmatpush1.msra.mxu0 0.0
    %5981 = vmatprep.subr.mxu0 0.0
    %5982 = vmatpush1.msra.mxu0 0.0
    %5983 = vmatprep.subr.mxu0 0.0
    %5984 = vmatpush1.msra.mxu0 0.0
    %5985 = vmatprep.subr.mxu0 0.0
    %5986 = vmatpush1.msra.mxu0 0.0
    %5987 = vmatprep.subr.mxu0 0.0
    %5988 = vmatpush1.msra.mxu0 0.0
    %5989 = vmatprep.subr.mxu0 0.0
    %5990 = vmatpush1.msra.mxu0 0.0
    %5991 = vmatprep.subr.mxu0 0.0
    %5992 = vmatpush1.msra.mxu0 0.0
    %5993 = vmatprep.subr.mxu0 0.0
    %5994 = vmatpush1.msra.mxu0 0.0
    %5995 = vmatprep.subr.mxu0 0.0
    %5996 = vmatpush1.msra.mxu0 0.0
    %5997 = vmatprep.subr.mxu0 0.0
    %5998 = vmatpush1.msra.mxu0 0.0
    %5999 = vmatprep.subr.mxu0 0.0
    %6000 = vmatpush1.msra.mxu0 0.0
    %6001 = vmatprep.subr.mxu0 0.0
    %6002 = vmatpush1.msra.mxu0 0.0
    %6003 = vmatprep.subr.mxu0 0.0
    %6004 = vmatpush1.msra.mxu0 0.0
    %6005 = vmatprep.subr.mxu0 0.0
    %6006 = vmatpush1.msra.mxu0 0.0
    %6007 = vmatprep.subr.mxu0 0.0
    %6008 = vmatpush1.msra.mxu0 0.0
    %6009 = vmatprep.mubr.f32.mxu0 0.0
    %v6010 = vand.u32 %v5938, 4294901760
    %v6011 = vsub.f32 %v5938, %v6010
    %v6012 = vand.u32 %v6011, 4294901760
    %v6013 = vsub.f32 %v6011, %v6012
    %v6014 = vand.u32 %v6013, 4294901760
    %6015 = vmatmul.mubr.f32.gmra.mrb[0].mxu0 %v6014
    %v6016 = vpop.f32.mrb[0].mxu0
    %v6017 = vadd.f32 0.0, %v6016
    %v6018 = vpop.f32.mrb[0].mxu0
    %6019 = vmatprep.mubr.f32.mxu0 0.0
    %v6020 = vand.u32 %v5941, 4294901760
    %v6021 = vsub.f32 %v5941, %v6020
    %v6022 = vand.u32 %v6021, 4294901760
    %v6023 = vsub.f32 %v6021, %v6022
    %v6024 = vand.u32 %v6023, 4294901760
    %6025 = vmatmul.mubr.f32.gmra.mrb[0].mxu0 %v6024
    %v6026 = vpop.f32.mrb[0].mxu0
    %v6027 = vadd.f32 0.0, %v6026
    %v6028 = vpop.f32.mrb[0].mxu0
    %6029 = vdwg.mxu0
    %6030 = vmatprep.subr.mxu0 0.0
    %v6031 = vand.u32 %v5932, 4294901760
    %v6032 = vsub.f32 %v5932, %v6031
    %v6033 = vand.u32 %v6032, 4294901760
    %v6034 = vsub.f32 %v6032, %v6033
    %v6035 = vand.u32 %v6034, 4294901760
    %6036 = vmatpush1.msra.mxu0 %v6035
    %6037 = vmatprep.subr.mxu0 0.0
    %v6038 = vand.u32 %v5934, 4294901760
    %v6039 = vsub.f32 %v5934, %v6038
    %v6040 = vand.u32 %v6039, 4294901760
    %v6041 = vsub.f32 %v6039, %v6040
    %v6042 = vand.u32 %v6041, 4294901760
    %6043 = vmatpush1.msra.mxu0 %v6042
    %6044 = vmatprep.subr.mxu0 0.0
    %6045 = vmatpush1.msra.mxu0 0.0
    %6046 = vmatprep.subr.mxu0 0.0
    %6047 = vmatpush1.msra.mxu0 0.0
    %6048 = vmatprep.subr.mxu0 0.0
    %6049 = vmatpush1.msra.mxu0 0.0
    %6050 = vmatprep.subr.mxu0 0.0
    %6051 = vmatpush1.msra.mxu0 0.0
    %6052 = vmatprep.subr.mxu0 0.0
    %6053 = vmatpush1.msra.mxu0 0.0
    %6054 = vmatprep.subr.mxu0 0.0
    %6055 = vmatpush1.msra.mxu0 0.0
    %6056 = vmatprep.subr.mxu0 0.0
    %6057 = vmatpush1.msra.mxu0 0.0
    %6058 = vmatprep.subr.mxu0 0.0
    %6059 = vmatpush1.msra.mxu0 0.0
    %6060 = vmatprep.subr.mxu0 0.0
    %6061 = vmatpush1.msra.mxu0 0.0
    %6062 = vmatprep.subr.mxu0 0.0
    %6063 = vmatpush1.msra.mxu0 0.0
    %6064 = vmatprep.subr.mxu0 0.0
    %6065 = vmatpush1.msra.mxu0 0.0
    %6066 = vmatprep.subr.mxu0 0.0
    %6067 = vmatpush1.msra.mxu0 0.0
    %6068 = vmatprep.subr.mxu0 0.0
    %6069 = vmatpush1.msra.mxu0 0.0
    %6070 = vmatprep.subr.mxu0 0.0
    %6071 = vmatpush1.msra.mxu0 0.0
    %6072 = vmatprep.subr.mxu0 0.0
    %6073 = vmatpush1.msra.mxu0 0.0
    %6074 = vmatprep.subr.mxu0 0.0
    %6075 = vmatpush1.msra.mxu0 0.0
    %6076 = vmatprep.subr.mxu0 0.0
    %6077 = vmatpush1.msra.mxu0 0.0
    %6078 = vmatprep.subr.mxu0 0.0
    %6079 = vmatpush1.msra.mxu0 0.0
    %6080 = vmatprep.subr.mxu0 0.0
    %6081 = vmatpush1.msra.mxu0 0.0
    %6082 = vmatprep.subr.mxu0 0.0
    %6083 = vmatpush1.msra.mxu0 0.0
    %6084 = vmatprep.subr.mxu0 0.0
    %6085 = vmatpush1.msra.mxu0 0.0
    %6086 = vmatprep.subr.mxu0 0.0
    %6087 = vmatpush1.msra.mxu0 0.0
    %6088 = vmatprep.subr.mxu0 0.0
    %6089 = vmatpush1.msra.mxu0 0.0
    %6090 = vmatprep.subr.mxu0 0.0
    %6091 = vmatpush1.msra.mxu0 0.0
    %6092 = vmatprep.subr.mxu0 0.0
    %6093 = vmatpush1.msra.mxu0 0.0
    %6094 = vmatprep.subr.mxu0 0.0
    %6095 = vmatpush1.msra.mxu0 0.0
    %6096 = vmatprep.subr.mxu0 0.0
    %6097 = vmatpush1.msra.mxu0 0.0
    %6098 = vmatprep.subr.mxu0 0.0
    %6099 = vmatpush1.msra.mxu0 0.0
    %6100 = vmatprep.subr.mxu0 0.0
    %6101 = vmatpush1.msra.mxu0 0.0
    %6102 = vmatprep.subr.mxu0 0.0
    %6103 = vmatpush1.msra.mxu0 0.0
    %6104 = vmatprep.mubr.f32.mxu0 0.0
    %v6105 = vand.u32 %v5938, 4294901760
    %6106 = vmatmul.mubr.f32.gmra.mrb[0].mxu0 %v6105
    %v6107 = vpop.f32.mrb[0].mxu0
    %v6108 = vadd.f32 %v6017, %v6107
    %v6109 = vpop.f32.mrb[0].mxu0
    %6110 = vmatprep.mubr.f32.mxu0 0.0
    %v6111 = vand.u32 %v5941, 4294901760
    %6112 = vmatmul.mubr.f32.gmra.mrb[0].mxu0 %v6111
    %v6113 = vpop.f32.mrb[0].mxu0
    %v6114 = vadd.f32 %v6027, %v6113
    %v6115 = vpop.f32.mrb[0].mxu0
    %6116 = vdwg.mxu0
    %6117 = vmatprep.subr.mxu0 0.0
    %v6118 = vand.u32 %v5932, 4294901760
    %v6119 = vsub.f32 %v5932, %v6118
    %6120 = vmatpush1.msra.mxu0 %v6119
    %6121 = vmatprep.subr.mxu0 0.0
    %v6122 = vand.u32 %v5934, 4294901760
    %v6123 = vsub.f32 %v5934, %v6122
    %6124 = vmatpush1.msra.mxu0 %v6123
    %6125 = vmatprep.subr.mxu0 0.0
    %6126 = vmatpush1.msra.mxu0 0.0
    %6127 = vmatprep.subr.mxu0 0.0
    %6128 = vmatpush1.msra.mxu0 0.0
    %6129 = vmatprep.subr.mxu0 0.0
    %6130 = vmatpush1.msra.mxu0 0.0
    %6131 = vmatprep.subr.mxu0 0.0
    %6132 = vmatpush1.msra.mxu0 0.0
    %6133 = vmatprep.subr.mxu0 0.0
    %6134 = vmatpush1.msra.mxu0 0.0
    %6135 = vmatprep.subr.mxu0 0.0
    %6136 = vmatpush1.msra.mxu0 0.0
    %6137 = vmatprep.subr.mxu0 0.0
    %6138 = vmatpush1.msra.mxu0 0.0
    %6139 = vmatprep.subr.mxu0 0.0
    %6140 = vmatpush1.msra.mxu0 0.0
    %6141 = vmatprep.subr.mxu0 0.0
    %6142 = vmatpush1.msra.mxu0 0.0
    %6143 = vmatprep.subr.mxu0 0.0
    %6144 = vmatpush1.msra.mxu0 0.0
    %6145 = vmatprep.subr.mxu0 0.0
    %6146 = vmatpush1.msra.mxu0 0.0
    %6147 = vmatprep.subr.mxu0 0.0
    %6148 = vmatpush1.msra.mxu0 0.0
    %6149 = vmatprep.subr.mxu0 0.0
    %6150 = vmatpush1.msra.mxu0 0.0
    %6151 = vmatprep.subr.mxu0 0.0
    %6152 = vmatpush1.msra.mxu0 0.0
    %6153 = vmatprep.subr.mxu0 0.0
    %6154 = vmatpush1.msra.mxu0 0.0
    %6155 = vmatprep.subr.mxu0 0.0
    %6156 = vmatpush1.msra.mxu0 0.0
    %6157 = vmatprep.subr.mxu0 0.0
    %6158 = vmatpush1.msra.mxu0 0.0
    %6159 = vmatprep.subr.mxu0 0.0
    %6160 = vmatpush1.msra.mxu0 0.0
    %6161 = vmatprep.subr.mxu0 0.0
    %6162 = vmatpush1.msra.mxu0 0.0
    %6163 = vmatprep.subr.mxu0 0.0
    %6164 = vmatpush1.msra.mxu0 0.0
    %6165 = vmatprep.subr.mxu0 0.0
    %6166 = vmatpush1.msra.mxu0 0.0
    %6167 = vmatprep.subr.mxu0 0.0
    %6168 = vmatpush1.msra.mxu0 0.0
    %6169 = vmatprep.subr.mxu0 0.0
    %6170 = vmatpush1.msra.mxu0 0.0
    %6171 = vmatprep.subr.mxu0 0.0
    %6172 = vmatpush1.msra.mxu0 0.0
    %6173 = vmatprep.subr.mxu0 0.0
    %6174 = vmatpush1.msra.mxu0 0.0
    %6175 = vmatprep.subr.mxu0 0.0
    %6176 = vmatpush1.msra.mxu0 0.0
    %6177 = vmatprep.subr.mxu0 0.0
    %6178 = vmatpush1.msra.mxu0 0.0
    %6179 = vmatprep.subr.mxu0 0.0
    %6180 = vmatpush1.msra.mxu0 0.0
    %6181 = vmatprep.subr.mxu0 0.0
    %6182 = vmatpush1.msra.mxu0 0.0
    %6183 = vmatprep.subr.mxu0 0.0
    %6184 = vmatpush1.msra.mxu0 0.0
    %6185 = vmatprep.mubr.f32.mxu0 0.0
    %v6186 = vand.u32 %v5938, 4294901760
    %v6187 = vsub.f32 %v5938, %v6186
    %6188 = vmatmul.mubr.f32.gmra.mrb[0].mxu0 %v6187
    %v6189 = vpop.f32.mrb[0].mxu0
    %v6190 = vadd.f32 %v6108, %v6189
    %v6191 = vpop.f32.mrb[0].mxu0
    %6192 = vmatprep.mubr.f32.mxu0 0.0
    %v6193 = vand.u32 %v5941, 4294901760
    %v6194 = vsub.f32 %v5941, %v6193
    %6195 = vmatmul.mubr.f32.gmra.mrb[0].mxu0 %v6194
    %v6196 = vpop.f32.mrb[0].mxu0
    %v6197 = vadd.f32 %v6114, %v6196
    %v6198 = vpop.f32.mrb[0].mxu0
    %6199 = vdwg.mxu0
    %6200 = vmatprep.subr.mxu0 0.0
    %v6201 = vand.u32 %v5932, 4294901760
    %6202 = vmatpush1.msra.mxu0 %v6201
    %6203 = vmatprep.subr.mxu0 0.0
    %v6204 = vand.u32 %v5934, 4294901760
    %6205 = vmatpush1.msra.mxu0 %v6204
    %6206 = vmatprep.subr.mxu0 0.0
    %6207 = vmatpush1.msra.mxu0 0.0
    %6208 = vmatprep.subr.mxu0 0.0
    %6209 = vmatpush1.msra.mxu0 0.0
    %6210 = vmatprep.subr.mxu0 0.0
    %6211 = vmatpush1.msra.mxu0 0.0
    %6212 = vmatprep.subr.mxu0 0.0
    %6213 = vmatpush1.msra.mxu0 0.0
    %6214 = vmatprep.subr.mxu0 0.0
    %6215 = vmatpush1.msra.mxu0 0.0
    %6216 = vmatprep.subr.mxu0 0.0
    %6217 = vmatpush1.msra.mxu0 0.0
    %6218 = vmatprep.subr.mxu0 0.0
    %6219 = vmatpush1.msra.mxu0 0.0
    %6220 = vmatprep.subr.mxu0 0.0
    %6221 = vmatpush1.msra.mxu0 0.0
    %6222 = vmatprep.subr.mxu0 0.0
    %6223 = vmatpush1.msra.mxu0 0.0
    %6224 = vmatprep.subr.mxu0 0.0
    %6225 = vmatpush1.msra.mxu0 0.0
    %6226 = vmatprep.subr.mxu0 0.0
    %6227 = vmatpush1.msra.mxu0 0.0
    %6228 = vmatprep.subr.mxu0 0.0
    %6229 = vmatpush1.msra.mxu0 0.0
    %6230 = vmatprep.subr.mxu0 0.0
    %6231 = vmatpush1.msra.mxu0 0.0
    %6232 = vmatprep.subr.mxu0 0.0
    %6233 = vmatpush1.msra.mxu0 0.0
    %6234 = vmatprep.subr.mxu0 0.0
    %6235 = vmatpush1.msra.mxu0 0.0
    %6236 = vmatprep.subr.mxu0 0.0
    %6237 = vmatpush1.msra.mxu0 0.0
    %6238 = vmatprep.subr.mxu0 0.0
    %6239 = vmatpush1.msra.mxu0 0.0
    %6240 = vmatprep.subr.mxu0 0.0
    %6241 = vmatpush1.msra.mxu0 0.0
    %6242 = vmatprep.subr.mxu0 0.0
    %6243 = vmatpush1.msra.mxu0 0.0
    %6244 = vmatprep.subr.mxu0 0.0
    %6245 = vmatpush1.msra.mxu0 0.0
    %6246 = vmatprep.subr.mxu0 0.0
    %6247 = vmatpush1.msra.mxu0 0.0
    %6248 = vmatprep.subr.mxu0 0.0
    %6249 = vmatpush1.msra.mxu0 0.0
    %6250 = vmatprep.subr.mxu0 0.0
    %6251 = vmatpush1.msra.mxu0 0.0
    %6252 = vmatprep.subr.mxu0 0.0
    %6253 = vmatpush1.msra.mxu0 0.0
    %6254 = vmatprep.subr.mxu0 0.0
    %6255 = vmatpush1.msra.mxu0 0.0
    %6256 = vmatprep.subr.mxu0 0.0
    %6257 = vmatpush1.msra.mxu0 0.0
    %6258 = vmatprep.subr.mxu0 0.0
    %6259 = vmatpush1.msra.mxu0 0.0
    %6260 = vmatprep.subr.mxu0 0.0
    %6261 = vmatpush1.msra.mxu0 0.0
    %6262 = vmatprep.subr.mxu0 0.0
    %6263 = vmatpush1.msra.mxu0 0.0
    %6264 = vmatprep.subr.mxu0 0.0
    %6265 = vmatpush1.msra.mxu0 0.0
    %6266 = vmatprep.mubr.f32.mxu0 0.0
    %v6267 = vand.u32 %v5938, 4294901760
    %v6268 = vsub.f32 %v5938, %v6267
    %v6269 = vand.u32 %v6268, 4294901760
    %6270 = vmatmul.mubr.f32.gmra.mrb[0].mxu0 %v6269
    %v6271 = vpop.f32.mrb[0].mxu0
    %v6272 = vadd.f32 %v6190, %v6271
    %v6273 = vpop.f32.mrb[0].mxu0
    %6274 = vmatprep.mubr.f32.mxu0 0.0
    %v6275 = vand.u32 %v5941, 4294901760
    %v6276 = vsub.f32 %v5941, %v6275
    %v6277 = vand.u32 %v6276, 4294901760
    %6278 = vmatmul.mubr.f32.gmra.mrb[0].mxu0 %v6277
    %v6279 = vpop.f32.mrb[0].mxu0
    %v6280 = vadd.f32 %v6197, %v6279
    %v6281 = vpop.f32.mrb[0].mxu0
    %6282 = vdwg.mxu0
    %6283 = vmatprep.subr.mxu0 0.0
    %v6284 = vand.u32 %v5932, 4294901760
    %v6285 = vsub.f32 %v5932, %v6284
    %v6286 = vand.u32 %v6285, 4294901760
    %6287 = vmatpush1.msra.mxu0 %v6286
    %6288 = vmatprep.subr.mxu0 0.0
    %v6289 = vand.u32 %v5934, 4294901760
    %v6290 = vsub.f32 %v5934, %v6289
    %v6291 = vand.u32 %v6290, 4294901760
    %6292 = vmatpush1.msra.mxu0 %v6291
    %6293 = vmatprep.subr.mxu0 0.0
    %6294 = vmatpush1.msra.mxu0 0.0
    %6295 = vmatprep.subr.mxu0 0.0
    %6296 = vmatpush1.msra.mxu0 0.0
    %6297 = vmatprep.subr.mxu0 0.0
    %6298 = vmatpush1.msra.mxu0 0.0
    %6299 = vmatprep.subr.mxu0 0.0
    %6300 = vmatpush1.msra.mxu0 0.0
    %6301 = vmatprep.subr.mxu0 0.0
    %6302 = vmatpush1.msra.mxu0 0.0
    %6303 = vmatprep.subr.mxu0 0.0
    %6304 = vmatpush1.msra.mxu0 0.0
    %6305 = vmatprep.subr.mxu0 0.0
    %6306 = vmatpush1.msra.mxu0 0.0
    %6307 = vmatprep.subr.mxu0 0.0
    %6308 = vmatpush1.msra.mxu0 0.0
    %6309 = vmatprep.subr.mxu0 0.0
    %6310 = vmatpush1.msra.mxu0 0.0
    %6311 = vmatprep.subr.mxu0 0.0
    %6312 = vmatpush1.msra.mxu0 0.0
    %6313 = vmatprep.subr.mxu0 0.0
    %6314 = vmatpush1.msra.mxu0 0.0
    %6315 = vmatprep.subr.mxu0 0.0
    %6316 = vmatpush1.msra.mxu0 0.0
    %6317 = vmatprep.subr.mxu0 0.0
    %6318 = vmatpush1.msra.mxu0 0.0
    %6319 = vmatprep.subr.mxu0 0.0
    %6320 = vmatpush1.msra.mxu0 0.0
    %6321 = vmatprep.subr.mxu0 0.0
    %6322 = vmatpush1.msra.mxu0 0.0
    %6323 = vmatprep.subr.mxu0 0.0
    %6324 = vmatpush1.msra.mxu0 0.0
    %6325 = vmatprep.subr.mxu0 0.0
    %6326 = vmatpush1.msra.mxu0 0.0
    %6327 = vmatprep.subr.mxu0 0.0
    %6328 = vmatpush1.msra.mxu0 0.0
    %6329 = vmatprep.subr.mxu0 0.0
    %6330 = vmatpush1.msra.mxu0 0.0
    %6331 = vmatprep.subr.mxu0 0.0
    %6332 = vmatpush1.msra.mxu0 0.0
    %6333 = vmatprep.subr.mxu0 0.0
    %6334 = vmatpush1.msra.mxu0 0.0
    %6335 = vmatprep.subr.mxu0 0.0
    %6336 = vmatpush1.msra.mxu0 0.0
    %6337 = vmatprep.subr.mxu0 0.0
    %6338 = vmatpush1.msra.mxu0 0.0
    %6339 = vmatprep.subr.mxu0 0.0
    %6340 = vmatpush1.msra.mxu0 0.0
    %6341 = vmatprep.subr.mxu0 0.0
    %6342 = vmatpush1.msra.mxu0 0.0
    %6343 = vmatprep.subr.mxu0 0.0
    %6344 = vmatpush1.msra.mxu0 0.0
    %6345 = vmatprep.subr.mxu0 0.0
    %6346 = vmatpush1.msra.mxu0 0.0
    %6347 = vmatprep.subr.mxu0 0.0
    %6348 = vmatpush1.msra.mxu0 0.0
    %6349 = vmatprep.subr.mxu0 0.0
    %6350 = vmatpush1.msra.mxu0 0.0
    %6351 = vmatprep.subr.mxu0 0.0
    %6352 = vmatpush1.msra.mxu0 0.0
    %6353 = vmatprep.mubr.f32.mxu0 0.0
    %v6354 = vand.u32 %v5938, 4294901760
    %6355 = vmatmul.mubr.f32.gmra.mrb[0].mxu0 %v6354
    %v6356 = vpop.f32.mrb[0].mxu0
    %v6357 = vadd.f32 %v6272, %v6356
    %v6358 = vpop.f32.mrb[0].mxu0
    %6359 = vmatprep.mubr.f32.mxu0 0.0
    %v6360 = vand.u32 %v5941, 4294901760
    %6361 = vmatmul.mubr.f32.gmra.mrb[0].mxu0 %v6360
    %v6362 = vpop.f32.mrb[0].mxu0
    %v6363 = vadd.f32 %v6280, %v6362
    %v6364 = vpop.f32.mrb[0].mxu0
    %6365 = vdwg.mxu0
    %6366 = vmatprep.subr.mxu0 0.0
    %v6367 = vand.u32 %v5932, 4294901760
    %6368 = vmatpush1.msra.mxu0 %v6367
    %6369 = vmatprep.subr.mxu0 0.0
    %v6370 = vand.u32 %v5934, 4294901760
    %6371 = vmatpush1.msra.mxu0 %v6370
    %6372 = vmatprep.subr.mxu0 0.0
    %6373 = vmatpush1.msra.mxu0 0.0
    %6374 = vmatprep.subr.mxu0 0.0
    %6375 = vmatpush1.msra.mxu0 0.0
    %6376 = vmatprep.subr.mxu0 0.0
    %6377 = vmatpush1.msra.mxu0 0.0
    %6378 = vmatprep.subr.mxu0 0.0
    %6379 = vmatpush1.msra.mxu0 0.0
    %6380 = vmatprep.subr.mxu0 0.0
    %6381 = vmatpush1.msra.mxu0 0.0
    %6382 = vmatprep.subr.mxu0 0.0
    %6383 = vmatpush1.msra.mxu0 0.0
    %6384 = vmatprep.subr.mxu0 0.0
    %6385 = vmatpush1.msra.mxu0 0.0
    %6386 = vmatprep.subr.mxu0 0.0
    %6387 = vmatpush1.msra.mxu0 0.0
    %6388 = vmatprep.subr.mxu0 0.0
    %6389 = vmatpush1.msra.mxu0 0.0
    %6390 = vmatprep.subr.mxu0 0.0
    %6391 = vmatpush1.msra.mxu0 0.0
    %6392 = vmatprep.subr.mxu0 0.0
    %6393 = vmatpush1.msra.mxu0 0.0
    %6394 = vmatprep.subr.mxu0 0.0
    %6395 = vmatpush1.msra.mxu0 0.0
    %6396 = vmatprep.subr.mxu0 0.0
    %6397 = vmatpush1.msra.mxu0 0.0
    %6398 = vmatprep.subr.mxu0 0.0
    %6399 = vmatpush1.msra.mxu0 0.0
    %6400 = vmatprep.subr.mxu0 0.0
    %6401 = vmatpush1.msra.mxu0 0.0
    %6402 = vmatprep.subr.mxu0 0.0
    %6403 = vmatpush1.msra.mxu0 0.0
    %6404 = vmatprep.subr.mxu0 0.0
    %6405 = vmatpush1.msra.mxu0 0.0
    %6406 = vmatprep.subr.mxu0 0.0
    %6407 = vmatpush1.msra.mxu0 0.0
    %6408 = vmatprep.subr.mxu0 0.0
    %6409 = vmatpush1.msra.mxu0 0.0
    %6410 = vmatprep.subr.mxu0 0.0
    %6411 = vmatpush1.msra.mxu0 0.0
    %6412 = vmatprep.subr.mxu0 0.0
    %6413 = vmatpush1.msra.mxu0 0.0
    %6414 = vmatprep.subr.mxu0 0.0
    %6415 = vmatpush1.msra.mxu0 0.0
    %6416 = vmatprep.subr.mxu0 0.0
    %6417 = vmatpush1.msra.mxu0 0.0
    %6418 = vmatprep.subr.mxu0 0.0
    %6419 = vmatpush1.msra.mxu0 0.0
    %6420 = vmatprep.subr.mxu0 0.0
    %6421 = vmatpush1.msra.mxu0 0.0
    %6422 = vmatprep.subr.mxu0 0.0
    %6423 = vmatpush1.msra.mxu0 0.0
    %6424 = vmatprep.subr.mxu0 0.0
    %6425 = vmatpush1.msra.mxu0 0.0
    %6426 = vmatprep.subr.mxu0 0.0
    %6427 = vmatpush1.msra.mxu0 0.0
    %6428 = vmatprep.subr.mxu0 0.0
    %6429 = vmatpush1.msra.mxu0 0.0
    %6430 = vmatprep.subr.mxu0 0.0
    %6431 = vmatpush1.msra.mxu0 0.0
    %6432 = vmatprep.mubr.f32.mxu0 0.0
    %v6433 = vand.u32 %v5938, 4294901760
    %6434 = vmatmul.mubr.f32.gmra.mrb[0].mxu0 %v6433
    %v6435 = vpop.f32.mrb[0].mxu0
    %v6436 = vadd.f32 %v6357, %v6435
    %v6437 = vpop.f32.mrb[0].mxu0
    %6438 = vmatprep.mubr.f32.mxu0 0.0
    %v6439 = vand.u32 %v5941, 4294901760
    %6440 = vmatmul.mubr.f32.gmra.mrb[0].mxu0 %v6439
    %v6441 = vpop.f32.mrb[0].mxu0
    %v6442 = vadd.f32 %v6363, %v6441
    %v6443 = vpop.f32.mrb[0].mxu0
    %6444 = vdwg.mxu0
    %v6445 = vrcp.pop %v5927
    %v6446 = vmul.f32 %v6436, %v6445
    %v6447 = vrcp.pop %v5930
    %v6448 = vmul.f32 %v6442, %v6447
    %s6449 = scalar_lea.vmem [#allocation7], 24
    %v6450 = vld [vmem:[%s6449] sm:$0xff]
    %v6452 = vsel %vm745, %v6446, 0
    %v6455 = vsel %vm745, %v6448, 0
    %6457 = vmatprep.subr.mxu0 0.0
    %v6458 = vand.u32 %v6450, 4294901760
    %6459 = vmatpush1.msra.mxu0 %v6458
    %6460 = vmatprep.subr.mxu0 0.0
    %6461 = vmatpush1.msra.mxu0 0.0
    %6462 = vmatprep.subr.mxu0 0.0
    %6463 = vmatpush1.msra.mxu0 0.0
    %6464 = vmatprep.subr.mxu0 0.0
    %6465 = vmatpush1.msra.mxu0 0.0
    %6466 = vmatprep.subr.mxu0 0.0
    %6467 = vmatpush1.msra.mxu0 0.0
    %6468 = vmatprep.subr.mxu0 0.0
    %6469 = vmatpush1.msra.mxu0 0.0
    %6470 = vmatprep.subr.mxu0 0.0
    %6471 = vmatpush1.msra.mxu0 0.0
    %6472 = vmatprep.subr.mxu0 0.0
    %6473 = vmatpush1.msra.mxu0 0.0
    %6474 = vmatprep.subr.mxu0 0.0
    %6475 = vmatpush1.msra.mxu0 0.0
    %6476 = vmatprep.subr.mxu0 0.0
    %6477 = vmatpush1.msra.mxu0 0.0
    %6478 = vmatprep.subr.mxu0 0.0
    %6479 = vmatpush1.msra.mxu0 0.0
    %6480 = vmatprep.subr.mxu0 0.0
    %6481 = vmatpush1.msra.mxu0 0.0
    %6482 = vmatprep.subr.mxu0 0.0
    %6483 = vmatpush1.msra.mxu0 0.0
    %6484 = vmatprep.subr.mxu0 0.0
    %6485 = vmatpush1.msra.mxu0 0.0
    %6486 = vmatprep.subr.mxu0 0.0
    %6487 = vmatpush1.msra.mxu0 0.0
    %6488 = vmatprep.subr.mxu0 0.0
    %6489 = vmatpush1.msra.mxu0 0.0
    %6490 = vmatprep.subr.mxu0 0.0
    %6491 = vmatpush1.msra.mxu0 0.0
    %6492 = vmatprep.subr.mxu0 0.0
    %6493 = vmatpush1.msra.mxu0 0.0
    %6494 = vmatprep.subr.mxu0 0.0
    %6495 = vmatpush1.msra.mxu0 0.0
    %6496 = vmatprep.subr.mxu0 0.0
    %6497 = vmatpush1.msra.mxu0 0.0
    %6498 = vmatprep.subr.mxu0 0.0
    %6499 = vmatpush1.msra.mxu0 0.0
    %6500 = vmatprep.subr.mxu0 0.0
    %6501 = vmatpush1.msra.mxu0 0.0
    %6502 = vmatprep.subr.mxu0 0.0
    %6503 = vmatpush1.msra.mxu0 0.0
    %6504 = vmatprep.subr.mxu0 0.0
    %6505 = vmatpush1.msra.mxu0 0.0
    %6506 = vmatprep.subr.mxu0 0.0
    %6507 = vmatpush1.msra.mxu0 0.0
    %6508 = vmatprep.subr.mxu0 0.0
    %6509 = vmatpush1.msra.mxu0 0.0
    %6510 = vmatprep.subr.mxu0 0.0
    %6511 = vmatpush1.msra.mxu0 0.0
    %6512 = vmatprep.subr.mxu0 0.0
    %6513 = vmatpush1.msra.mxu0 0.0
    %6514 = vmatprep.subr.mxu0 0.0
    %6515 = vmatpush1.msra.mxu0 0.0
    %6516 = vmatprep.subr.mxu0 0.0
    %6517 = vmatpush1.msra.mxu0 0.0
    %6518 = vmatprep.subr.mxu0 0.0
    %6519 = vmatpush1.msra.mxu0 0.0
    %6520 = vmatprep.subr.mxu0 0.0
    %6521 = vmatpush1.msra.mxu0 0.0
    %6522 = vmatprep.mubr.f32.mxu0 0.0
    %v6523 = vand.u32 %v6452, 4294901760
    %v6524 = vsub.f32 %v6452, %v6523
    %v6525 = vand.u32 %v6524, 4294901760
    %v6526 = vsub.f32 %v6524, %v6525
    %v6527 = vand.u32 %v6526, 4294901760
    %6528 = vmatmul.mubr.f32.gmra.mrb[0].mxu0 %v6527
    %v6529 = vpop.f32.mrb[0].mxu0
    %v6530 = vadd.f32 0.0, %v6529
    %v6531 = vpop.f32.mrb[0].mxu0
    %6532 = vmatprep.mubr.f32.mxu0 0.0
    %v6533 = vand.u32 %v6455, 4294901760
    %v6534 = vsub.f32 %v6455, %v6533
    %v6535 = vand.u32 %v6534, 4294901760
    %v6536 = vsub.f32 %v6534, %v6535
    %v6537 = vand.u32 %v6536, 4294901760
    %6538 = vmatmul.mubr.f32.gmra.mrb[0].mxu0 %v6537
    %v6539 = vpop.f32.mrb[0].mxu0
    %v6540 = vadd.f32 0.0, %v6539
    %v6541 = vpop.f32.mrb[0].mxu0
    %6542 = vdwg.mxu0
    %6543 = vmatprep.subr.mxu0 0.0
    %v6544 = vand.u32 %v6450, 4294901760
    %v6545 = vsub.f32 %v6450, %v6544
    %v6546 = vand.u32 %v6545, 4294901760
    %v6547 = vsub.f32 %v6545, %v6546
    %v6548 = vand.u32 %v6547, 4294901760
    %6549 = vmatpush1.msra.mxu0 %v6548
    %6550 = vmatprep.subr.mxu0 0.0
    %6551 = vmatpush1.msra.mxu0 0.0
    %6552 = vmatprep.subr.mxu0 0.0
    %6553 = vmatpush1.msra.mxu0 0.0
    %6554 = vmatprep.subr.mxu0 0.0
    %6555 = vmatpush1.msra.mxu0 0.0
    %6556 = vmatprep.subr.mxu0 0.0
    %6557 = vmatpush1.msra.mxu0 0.0
    %6558 = vmatprep.subr.mxu0 0.0
    %6559 = vmatpush1.msra.mxu0 0.0
    %6560 = vmatprep.subr.mxu0 0.0
    %6561 = vmatpush1.msra.mxu0 0.0
    %6562 = vmatprep.subr.mxu0 0.0
    %6563 = vmatpush1.msra.mxu0 0.0
    %6564 = vmatprep.subr.mxu0 0.0
    %6565 = vmatpush1.msra.mxu0 0.0
    %6566 = vmatprep.subr.mxu0 0.0
    %6567 = vmatpush1.msra.mxu0 0.0
    %6568 = vmatprep.subr.mxu0 0.0
    %6569 = vmatpush1.msra.mxu0 0.0
    %6570 = vmatprep.subr.mxu0 0.0
    %6571 = vmatpush1.msra.mxu0 0.0
    %6572 = vmatprep.subr.mxu0 0.0
    %6573 = vmatpush1.msra.mxu0 0.0
    %6574 = vmatprep.subr.mxu0 0.0
    %6575 = vmatpush1.msra.mxu0 0.0
    %6576 = vmatprep.subr.mxu0 0.0
    %6577 = vmatpush1.msra.mxu0 0.0
    %6578 = vmatprep.subr.mxu0 0.0
    %6579 = vmatpush1.msra.mxu0 0.0
    %6580 = vmatprep.subr.mxu0 0.0
    %6581 = vmatpush1.msra.mxu0 0.0
    %6582 = vmatprep.subr.mxu0 0.0
    %6583 = vmatpush1.msra.mxu0 0.0
    %6584 = vmatprep.subr.mxu0 0.0
    %6585 = vmatpush1.msra.mxu0 0.0
    %6586 = vmatprep.subr.mxu0 0.0
    %6587 = vmatpush1.msra.mxu0 0.0
    %6588 = vmatprep.subr.mxu0 0.0
    %6589 = vmatpush1.msra.mxu0 0.0
    %6590 = vmatprep.subr.mxu0 0.0
    %6591 = vmatpush1.msra.mxu0 0.0
    %6592 = vmatprep.subr.mxu0 0.0
    %6593 = vmatpush1.msra.mxu0 0.0
    %6594 = vmatprep.subr.mxu0 0.0
    %6595 = vmatpush1.msra.mxu0 0.0
    %6596 = vmatprep.subr.mxu0 0.0
    %6597 = vmatpush1.msra.mxu0 0.0
    %6598 = vmatprep.subr.mxu0 0.0
    %6599 = vmatpush1.msra.mxu0 0.0
    %6600 = vmatprep.subr.mxu0 0.0
    %6601 = vmatpush1.msra.mxu0 0.0
    %6602 = vmatprep.subr.mxu0 0.0
    %6603 = vmatpush1.msra.mxu0 0.0
    %6604 = vmatprep.subr.mxu0 0.0
    %6605 = vmatpush1.msra.mxu0 0.0
    %6606 = vmatprep.subr.mxu0 0.0
    %6607 = vmatpush1.msra.mxu0 0.0
    %6608 = vmatprep.subr.mxu0 0.0
    %6609 = vmatpush1.msra.mxu0 0.0
    %6610 = vmatprep.subr.mxu0 0.0
    %6611 = vmatpush1.msra.mxu0 0.0
    %6612 = vmatprep.mubr.f32.mxu0 0.0
    %v6613 = vand.u32 %v6452, 4294901760
    %6614 = vmatmul.mubr.f32.gmra.mrb[0].mxu0 %v6613
    %v6615 = vpop.f32.mrb[0].mxu0
    %v6616 = vadd.f32 %v6530, %v6615
    %v6617 = vpop.f32.mrb[0].mxu0
    %6618 = vmatprep.mubr.f32.mxu0 0.0
    %v6619 = vand.u32 %v6455, 4294901760
    %6620 = vmatmul.mubr.f32.gmra.mrb[0].mxu0 %v6619
    %v6621 = vpop.f32.mrb[0].mxu0
    %v6622 = vadd.f32 %v6540, %v6621
    %v6623 = vpop.f32.mrb[0].mxu0
    %6624 = vdwg.mxu0
    %6625 = vmatprep.subr.mxu0 0.0
    %v6626 = vand.u32 %v6450, 4294901760
    %v6627 = vsub.f32 %v6450, %v6626
    %6628 = vmatpush1.msra.mxu0 %v6627
    %6629 = vmatprep.subr.mxu0 0.0
    %6630 = vmatpush1.msra.mxu0 0.0
    %6631 = vmatprep.subr.mxu0 0.0
    %6632 = vmatpush1.msra.mxu0 0.0
    %6633 = vmatprep.subr.mxu0 0.0
    %6634 = vmatpush1.msra.mxu0 0.0
    %6635 = vmatprep.subr.mxu0 0.0
    %6636 = vmatpush1.msra.mxu0 0.0
    %6637 = vmatprep.subr.mxu0 0.0
    %6638 = vmatpush1.msra.mxu0 0.0
    %6639 = vmatprep.subr.mxu0 0.0
    %6640 = vmatpush1.msra.mxu0 0.0
    %6641 = vmatprep.subr.mxu0 0.0
    %6642 = vmatpush1.msra.mxu0 0.0
    %6643 = vmatprep.subr.mxu0 0.0
    %6644 = vmatpush1.msra.mxu0 0.0
    %6645 = vmatprep.subr.mxu0 0.0
    %6646 = vmatpush1.msra.mxu0 0.0
    %6647 = vmatprep.subr.mxu0 0.0
    %6648 = vmatpush1.msra.mxu0 0.0
    %6649 = vmatprep.subr.mxu0 0.0
    %6650 = vmatpush1.msra.mxu0 0.0
    %6651 = vmatprep.subr.mxu0 0.0
    %6652 = vmatpush1.msra.mxu0 0.0
    %6653 = vmatprep.subr.mxu0 0.0
    %6654 = vmatpush1.msra.mxu0 0.0
    %6655 = vmatprep.subr.mxu0 0.0
    %6656 = vmatpush1.msra.mxu0 0.0
    %6657 = vmatprep.subr.mxu0 0.0
    %6658 = vmatpush1.msra.mxu0 0.0
    %6659 = vmatprep.subr.mxu0 0.0
    %6660 = vmatpush1.msra.mxu0 0.0
    %6661 = vmatprep.subr.mxu0 0.0
    %6662 = vmatpush1.msra.mxu0 0.0
    %6663 = vmatprep.subr.mxu0 0.0
    %6664 = vmatpush1.msra.mxu0 0.0
    %6665 = vmatprep.subr.mxu0 0.0
    %6666 = vmatpush1.msra.mxu0 0.0
    %6667 = vmatprep.subr.mxu0 0.0
    %6668 = vmatpush1.msra.mxu0 0.0
    %6669 = vmatprep.subr.mxu0 0.0
    %6670 = vmatpush1.msra.mxu0 0.0
    %6671 = vmatprep.subr.mxu0 0.0
    %6672 = vmatpush1.msra.mxu0 0.0
    %6673 = vmatprep.subr.mxu0 0.0
    %6674 = vmatpush1.msra.mxu0 0.0
    %6675 = vmatprep.subr.mxu0 0.0
    %6676 = vmatpush1.msra.mxu0 0.0
    %6677 = vmatprep.subr.mxu0 0.0
    %6678 = vmatpush1.msra.mxu0 0.0
    %6679 = vmatprep.subr.mxu0 0.0
    %6680 = vmatpush1.msra.mxu0 0.0
    %6681 = vmatprep.subr.mxu0 0.0
    %6682 = vmatpush1.msra.mxu0 0.0
    %6683 = vmatprep.subr.mxu0 0.0
    %6684 = vmatpush1.msra.mxu0 0.0
    %6685 = vmatprep.subr.mxu0 0.0
    %6686 = vmatpush1.msra.mxu0 0.0
    %6687 = vmatprep.subr.mxu0 0.0
    %6688 = vmatpush1.msra.mxu0 0.0
    %6689 = vmatprep.subr.mxu0 0.0
    %6690 = vmatpush1.msra.mxu0 0.0
    %6691 = vmatprep.mubr.f32.mxu0 0.0
    %v6692 = vand.u32 %v6452, 4294901760
    %v6693 = vsub.f32 %v6452, %v6692
    %6694 = vmatmul.mubr.f32.gmra.mrb[0].mxu0 %v6693
    %v6695 = vpop.f32.mrb[0].mxu0
    %v6696 = vadd.f32 %v6616, %v6695
    %v6697 = vpop.f32.mrb[0].mxu0
    %6698 = vmatprep.mubr.f32.mxu0 0.0
    %v6699 = vand.u32 %v6455, 4294901760
    %v6700 = vsub.f32 %v6455, %v6699
    %6701 = vmatmul.mubr.f32.gmra.mrb[0].mxu0 %v6700
    %v6702 = vpop.f32.mrb[0].mxu0
    %v6703 = vadd.f32 %v6622, %v6702
    %v6704 = vpop.f32.mrb[0].mxu0
    %6705 = vdwg.mxu0
    %6706 = vmatprep.subr.mxu0 0.0
    %v6707 = vand.u32 %v6450, 4294901760
    %6708 = vmatpush1.msra.mxu0 %v6707
    %6709 = vmatprep.subr.mxu0 0.0
    %6710 = vmatpush1.msra.mxu0 0.0
    %6711 = vmatprep.subr.mxu0 0.0
    %6712 = vmatpush1.msra.mxu0 0.0
    %6713 = vmatprep.subr.mxu0 0.0
    %6714 = vmatpush1.msra.mxu0 0.0
    %6715 = vmatprep.subr.mxu0 0.0
    %6716 = vmatpush1.msra.mxu0 0.0
    %6717 = vmatprep.subr.mxu0 0.0
    %6718 = vmatpush1.msra.mxu0 0.0
    %6719 = vmatprep.subr.mxu0 0.0
    %6720 = vmatpush1.msra.mxu0 0.0
    %6721 = vmatprep.subr.mxu0 0.0
    %6722 = vmatpush1.msra.mxu0 0.0
    %6723 = vmatprep.subr.mxu0 0.0
    %6724 = vmatpush1.msra.mxu0 0.0
    %6725 = vmatprep.subr.mxu0 0.0
    %6726 = vmatpush1.msra.mxu0 0.0
    %6727 = vmatprep.subr.mxu0 0.0
    %6728 = vmatpush1.msra.mxu0 0.0
    %6729 = vmatprep.subr.mxu0 0.0
    %6730 = vmatpush1.msra.mxu0 0.0
    %6731 = vmatprep.subr.mxu0 0.0
    %6732 = vmatpush1.msra.mxu0 0.0
    %6733 = vmatprep.subr.mxu0 0.0
    %6734 = vmatpush1.msra.mxu0 0.0
    %6735 = vmatprep.subr.mxu0 0.0
    %6736 = vmatpush1.msra.mxu0 0.0
    %6737 = vmatprep.subr.mxu0 0.0
    %6738 = vmatpush1.msra.mxu0 0.0
    %6739 = vmatprep.subr.mxu0 0.0
    %6740 = vmatpush1.msra.mxu0 0.0
    %6741 = vmatprep.subr.mxu0 0.0
    %6742 = vmatpush1.msra.mxu0 0.0
    %6743 = vmatprep.subr.mxu0 0.0
    %6744 = vmatpush1.msra.mxu0 0.0
    %6745 = vmatprep.subr.mxu0 0.0
    %6746 = vmatpush1.msra.mxu0 0.0
    %6747 = vmatprep.subr.mxu0 0.0
    %6748 = vmatpush1.msra.mxu0 0.0
    %6749 = vmatprep.subr.mxu0 0.0
    %6750 = vmatpush1.msra.mxu0 0.0
    %6751 = vmatprep.subr.mxu0 0.0
    %6752 = vmatpush1.msra.mxu0 0.0
    %6753 = vmatprep.subr.mxu0 0.0
    %6754 = vmatpush1.msra.mxu0 0.0
    %6755 = vmatprep.subr.mxu0 0.0
    %6756 = vmatpush1.msra.mxu0 0.0
    %6757 = vmatprep.subr.mxu0 0.0
    %6758 = vmatpush1.msra.mxu0 0.0
    %6759 = vmatprep.subr.mxu0 0.0
    %6760 = vmatpush1.msra.mxu0 0.0
    %6761 = vmatprep.subr.mxu0 0.0
    %6762 = vmatpush1.msra.mxu0 0.0
    %6763 = vmatprep.subr.mxu0 0.0
    %6764 = vmatpush1.msra.mxu0 0.0
    %6765 = vmatprep.subr.mxu0 0.0
    %6766 = vmatpush1.msra.mxu0 0.0
    %6767 = vmatprep.subr.mxu0 0.0
    %6768 = vmatpush1.msra.mxu0 0.0
    %6769 = vmatprep.subr.mxu0 0.0
    %6770 = vmatpush1.msra.mxu0 0.0
    %6771 = vmatprep.mubr.f32.mxu0 0.0
    %v6772 = vand.u32 %v6452, 4294901760
    %v6773 = vsub.f32 %v6452, %v6772
    %v6774 = vand.u32 %v6773, 4294901760
    %6775 = vmatmul.mubr.f32.gmra.mrb[0].mxu0 %v6774
    %v6776 = vpop.f32.mrb[0].mxu0
    %v6777 = vadd.f32 %v6696, %v6776
    %v6778 = vpop.f32.mrb[0].mxu0
    %6779 = vmatprep.mubr.f32.mxu0 0.0
    %v6780 = vand.u32 %v6455, 4294901760
    %v6781 = vsub.f32 %v6455, %v6780
    %v6782 = vand.u32 %v6781, 4294901760
    %6783 = vmatmul.mubr.f32.gmra.mrb[0].mxu0 %v6782
    %v6784 = vpop.f32.mrb[0].mxu0
    %v6785 = vadd.f32 %v6703, %v6784
    %v6786 = vpop.f32.mrb[0].mxu0
    %6787 = vdwg.mxu0
    %6788 = vmatprep.subr.mxu0 0.0
    %v6789 = vand.u32 %v6450, 4294901760
    %v6790 = vsub.f32 %v6450, %v6789
    %v6791 = vand.u32 %v6790, 4294901760
    %6792 = vmatpush1.msra.mxu0 %v6791
    %6793 = vmatprep.subr.mxu0 0.0
    %6794 = vmatpush1.msra.mxu0 0.0
    %6795 = vmatprep.subr.mxu0 0.0
    %6796 = vmatpush1.msra.mxu0 0.0
    %6797 = vmatprep.subr.mxu0 0.0
    %6798 = vmatpush1.msra.mxu0 0.0
    %6799 = vmatprep.subr.mxu0 0.0
    %6800 = vmatpush1.msra.mxu0 0.0
    %6801 = vmatprep.subr.mxu0 0.0
    %6802 = vmatpush1.msra.mxu0 0.0
    %6803 = vmatprep.subr.mxu0 0.0
    %6804 = vmatpush1.msra.mxu0 0.0
    %6805 = vmatprep.subr.mxu0 0.0
    %6806 = vmatpush1.msra.mxu0 0.0
    %6807 = vmatprep.subr.mxu0 0.0
    %6808 = vmatpush1.msra.mxu0 0.0
    %6809 = vmatprep.subr.mxu0 0.0
    %6810 = vmatpush1.msra.mxu0 0.0
    %6811 = vmatprep.subr.mxu0 0.0
    %6812 = vmatpush1.msra.mxu0 0.0
    %6813 = vmatprep.subr.mxu0 0.0
    %6814 = vmatpush1.msra.mxu0 0.0
    %6815 = vmatprep.subr.mxu0 0.0
    %6816 = vmatpush1.msra.mxu0 0.0
    %6817 = vmatprep.subr.mxu0 0.0
    %6818 = vmatpush1.msra.mxu0 0.0
    %6819 = vmatprep.subr.mxu0 0.0
    %6820 = vmatpush1.msra.mxu0 0.0
    %6821 = vmatprep.subr.mxu0 0.0
    %6822 = vmatpush1.msra.mxu0 0.0
    %6823 = vmatprep.subr.mxu0 0.0
    %6824 = vmatpush1.msra.mxu0 0.0
    %6825 = vmatprep.subr.mxu0 0.0
    %6826 = vmatpush1.msra.mxu0 0.0
    %6827 = vmatprep.subr.mxu0 0.0
    %6828 = vmatpush1.msra.mxu0 0.0
    %6829 = vmatprep.subr.mxu0 0.0
    %6830 = vmatpush1.msra.mxu0 0.0
    %6831 = vmatprep.subr.mxu0 0.0
    %6832 = vmatpush1.msra.mxu0 0.0
    %6833 = vmatprep.subr.mxu0 0.0
    %6834 = vmatpush1.msra.mxu0 0.0
    %6835 = vmatprep.subr.mxu0 0.0
    %6836 = vmatpush1.msra.mxu0 0.0
    %6837 = vmatprep.subr.mxu0 0.0
    %6838 = vmatpush1.msra.mxu0 0.0
    %6839 = vmatprep.subr.mxu0 0.0
    %6840 = vmatpush1.msra.mxu0 0.0
    %6841 = vmatprep.subr.mxu0 0.0
    %6842 = vmatpush1.msra.mxu0 0.0
    %6843 = vmatprep.subr.mxu0 0.0
    %6844 = vmatpush1.msra.mxu0 0.0
    %6845 = vmatprep.subr.mxu0 0.0
    %6846 = vmatpush1.msra.mxu0 0.0
    %6847 = vmatprep.subr.mxu0 0.0
    %6848 = vmatpush1.msra.mxu0 0.0
    %6849 = vmatprep.subr.mxu0 0.0
    %6850 = vmatpush1.msra.mxu0 0.0
    %6851 = vmatprep.subr.mxu0 0.0
    %6852 = vmatpush1.msra.mxu0 0.0
    %6853 = vmatprep.subr.mxu0 0.0
    %6854 = vmatpush1.msra.mxu0 0.0
    %6855 = vmatprep.mubr.f32.mxu0 0.0
    %v6856 = vand.u32 %v6452, 4294901760
    %6857 = vmatmul.mubr.f32.gmra.mrb[0].mxu0 %v6856
    %v6858 = vpop.f32.mrb[0].mxu0
    %v6859 = vadd.f32 %v6777, %v6858
    %v6860 = vpop.f32.mrb[0].mxu0
    %6861 = vmatprep.mubr.f32.mxu0 0.0
    %v6862 = vand.u32 %v6455, 4294901760
    %6863 = vmatmul.mubr.f32.gmra.mrb[0].mxu0 %v6862
    %v6864 = vpop.f32.mrb[0].mxu0
    %v6865 = vadd.f32 %v6785, %v6864
    %v6866 = vpop.f32.mrb[0].mxu0
    %6867 = vdwg.mxu0
    %6868 = vmatprep.subr.mxu0 0.0
    %v6869 = vand.u32 %v6450, 4294901760
    %6870 = vmatpush1.msra.mxu0 %v6869
    %6871 = vmatprep.subr.mxu0 0.0
    %6872 = vmatpush1.msra.mxu0 0.0
    %6873 = vmatprep.subr.mxu0 0.0
    %6874 = vmatpush1.msra.mxu0 0.0
    %6875 = vmatprep.subr.mxu0 0.0
    %6876 = vmatpush1.msra.mxu0 0.0
    %6877 = vmatprep.subr.mxu0 0.0
    %6878 = vmatpush1.msra.mxu0 0.0
    %6879 = vmatprep.subr.mxu0 0.0
    %6880 = vmatpush1.msra.mxu0 0.0
    %6881 = vmatprep.subr.mxu0 0.0
    %6882 = vmatpush1.msra.mxu0 0.0
    %6883 = vmatprep.subr.mxu0 0.0
    %6884 = vmatpush1.msra.mxu0 0.0
    %6885 = vmatprep.subr.mxu0 0.0
    %6886 = vmatpush1.msra.mxu0 0.0
    %6887 = vmatprep.subr.mxu0 0.0
    %6888 = vmatpush1.msra.mxu0 0.0
    %6889 = vmatprep.subr.mxu0 0.0
    %6890 = vmatpush1.msra.mxu0 0.0
    %6891 = vmatprep.subr.mxu0 0.0
    %6892 = vmatpush1.msra.mxu0 0.0
    %6893 = vmatprep.subr.mxu0 0.0
    %6894 = vmatpush1.msra.mxu0 0.0
    %6895 = vmatprep.subr.mxu0 0.0
    %6896 = vmatpush1.msra.mxu0 0.0
    %6897 = vmatprep.subr.mxu0 0.0
    %6898 = vmatpush1.msra.mxu0 0.0
    %6899 = vmatprep.subr.mxu0 0.0
    %6900 = vmatpush1.msra.mxu0 0.0
    %6901 = vmatprep.subr.mxu0 0.0
    %6902 = vmatpush1.msra.mxu0 0.0
    %6903 = vmatprep.subr.mxu0 0.0
    %6904 = vmatpush1.msra.mxu0 0.0
    %6905 = vmatprep.subr.mxu0 0.0
    %6906 = vmatpush1.msra.mxu0 0.0
    %6907 = vmatprep.subr.mxu0 0.0
    %6908 = vmatpush1.msra.mxu0 0.0
    %6909 = vmatprep.subr.mxu0 0.0
    %6910 = vmatpush1.msra.mxu0 0.0
    %6911 = vmatprep.subr.mxu0 0.0
    %6912 = vmatpush1.msra.mxu0 0.0
    %6913 = vmatprep.subr.mxu0 0.0
    %6914 = vmatpush1.msra.mxu0 0.0
    %6915 = vmatprep.subr.mxu0 0.0
    %6916 = vmatpush1.msra.mxu0 0.0
    %6917 = vmatprep.subr.mxu0 0.0
    %6918 = vmatpush1.msra.mxu0 0.0
    %6919 = vmatprep.subr.mxu0 0.0
    %6920 = vmatpush1.msra.mxu0 0.0
    %6921 = vmatprep.subr.mxu0 0.0
    %6922 = vmatpush1.msra.mxu0 0.0
    %6923 = vmatprep.subr.mxu0 0.0
    %6924 = vmatpush1.msra.mxu0 0.0
    %6925 = vmatprep.subr.mxu0 0.0
    %6926 = vmatpush1.msra.mxu0 0.0
    %6927 = vmatprep.subr.mxu0 0.0
    %6928 = vmatpush1.msra.mxu0 0.0
    %6929 = vmatprep.subr.mxu0 0.0
    %6930 = vmatpush1.msra.mxu0 0.0
    %6931 = vmatprep.subr.mxu0 0.0
    %6932 = vmatpush1.msra.mxu0 0.0
    %6933 = vmatprep.mubr.f32.mxu0 0.0
    %v6934 = vand.u32 %v6452, 4294901760
    %6935 = vmatmul.mubr.f32.gmra.mrb[0].mxu0 %v6934
    %v6936 = vpop.f32.mrb[0].mxu0
    %v6937 = vadd.f32 %v6859, %v6936
    %v6938 = vpop.f32.mrb[0].mxu0
    %6939 = vmatprep.mubr.f32.mxu0 0.0
    %v6940 = vand.u32 %v6455, 4294901760
    %6941 = vmatmul.mubr.f32.gmra.mrb[0].mxu0 %v6940
    %v6942 = vpop.f32.mrb[0].mxu0
    %v6943 = vadd.f32 %v6865, %v6942
    %v6944 = vpop.f32.mrb[0].mxu0
    %6945 = vdwg.mxu0
    %v6946 = vadd.f32 %v5393, %v6937
    %v6947 = vadd.f32 %v5394, %v6943
    %6948 = vst [vmem:[#allocation11] sm:$0xff] %v6946
    %6949 = vst [vmem:[#allocation11 + $0x8] sm:$0xff] %v6947
    // Predicated region
    $region46: #{tpu_custom_call.1} parent=1 // pred_check
      _
    $region47: #{tpu_custom_call.1} parent=1 // pred_check_branch
      %6951 = sbr.rel (0) target = $region49
    $region48: #{tpu_custom_call.1} parent=1 // pred_region
      %s6953 = ssub.s32 256, 256
      %6954 = vsyncadd [#allocation4], %s6953
      %s6955 = sshll.u32 [#allocation11], 4
      %s6956 = int_to_ptr.vmem [resolvable:$true] %s6955
      %6961 = dma.vmem_to_hbm [thread:$0]  %s6956, 256, %s6, [#allocation4], 128, 128, 8
    $region49: #{tpu_custom_call.1} parent=1 // pred_fallthru
      _
    // Predicated region
    $region50: #{tpu_custom_call.1} parent=1 // pred_check
      _
    $region51: #{tpu_custom_call.1} parent=1 // pred_check_branch
      %6963 = sbr.rel (0) target = $region53
    $region52: #{tpu_custom_call.1} parent=1 // pred_region
      %6964 = dma.done [#allocation4], 256
    $region53: #{tpu_custom_call.1} parent=1 // pred_fallthru
      _
    %6965 = vsyncpa [#allocation3], 1
    %6966 = vsyncpa [#allocation6], 1
    %6967 = vsyncpa [#allocation9], 1
    %6968 = vsyncpa [#allocation4], 1

</llo_original>
